<compile_context>
chip_gen: v7x
topology: tpu7x:2x2x1
jax: 0.10.0
libtpu: 0.0.40
codegen_flags: <defaults>
</compile_context>

<pallas_src>
import functools
import math

import jax
import jax.numpy as jnp
from jax.experimental import pallas as pl
from jax.experimental.pallas import tpu as pltpu

BF16 = jnp.bfloat16


# ----------------------------------------------------------------------------
# In-kernel helpers.  Weight arguments are *Refs*; they are loaded (ref[...])
# at the point of use so the LLO scheduler interleaves vld with MXU pushes and
# weight live ranges stay short (vreg-pressure friendly).
# ----------------------------------------------------------------------------
def _gelu(x):
    # TODO(synk): tanh approximation; PyTorch F.gelu default is exact erf
    # (max abs deviation ~1e-3).
    c = math.sqrt(2.0 / math.pi)
    return 0.5 * x * (1.0 + jnp.tanh(c * (x + 0.044715 * x * x * x)))


def _layer_norm(x, g_ref, b_ref, eps=1e-5):
    mu = jnp.mean(x, axis=-1, keepdims=True)
    xc = x - mu
    var = jnp.mean(xc * xc, axis=-1, keepdims=True)
    return xc * jax.lax.rsqrt(var + eps) * g_ref[...] + b_ref[...]


def _matmul(x, w_ref, b_ref=None):
    """bf16 MXU matmul with f32 accumulation; x: (M, K), w_ref: (K, N)."""
    y = jnp.dot(x.astype(BF16), w_ref[...].astype(BF16),
                preferred_element_type=jnp.float32)
    if b_ref is not None:
        y = y + b_ref[...]
    return y


def _mha(xq, xkv, p, nhead, d_model, bb):
    """nn.MultiheadAttention (batch_first, no mask, eval) over Bb sequences.

    xq: (Bb*Sq, d) f32, xkv: (Bb*Sk, d) f32 -> (Bb*Sq, d) f32.
    Fused QKV projection over all rows; score/AV matmuls batched over Bb;
    head outputs lane-concatenated -> one full-depth (d, d) bf16 out-proj.
    """
    mq = xq.shape[0]
    mk = xkv.shape[0]
    sq = mq // bb
    sk = mk // bb
    dh = d_model // nhead
    scale = 1.0 / math.sqrt(dh)

    if "wqkv" in p:                                    # self-attention: fused QKV
        qkv = _matmul(xq, p["wqkv"], p["bqkv"])        # (M, 3D) f32
        q = qkv[:, :d_model]
        k = qkv[:, d_model:2 * d_model]
        v = qkv[:, 2 * d_model:]
    else:                                              # cross-attention: Q | fused KV
        q = _matmul(xq, p["wq"], p["bq"])
        kv = _matmul(xkv, p["wkv"], p["bkv"])
        k = kv[:, :d_model]
        v = kv[:, d_model:]

    q = (q * scale).reshape(bb, sq, d_model)           # scale in f32
    k = k.reshape(bb, sk, d_model)
    v = v.reshape(bb, sk, d_model)

    heads = []
    for h in range(nhead):                             # static unroll, all on-chip
        sl = slice(h * dh, (h + 1) * dh)
        qh = q[:, :, sl].astype(BF16)
        kh = k[:, :, sl].astype(BF16)
        vh = v[:, :, sl].astype(BF16)
        s = jnp.einsum('bqd,bkd->bqk', qh, kh,
                       preferred_element_type=jnp.float32)          # (Bb, Sq, Sk)
        m = jnp.max(s, axis=-1, keepdims=True)
        e = jnp.exp(s - m)
        inv = pl.reciprocal(jnp.sum(e, axis=-1, keepdims=True), approx=True)
        heads.append(jnp.einsum('bqk,bkd->bqd', (e * inv).astype(BF16), vh,
                                preferred_element_type=jnp.float32))  # (Bb, Sq, dh)

    o = jnp.concatenate(heads, axis=-1).reshape(mq, d_model)         # (M, D)
    return _matmul(o, p["wo"], p["bo"])


def _encoder_layer(x, p, nhead, d_model, bb):
    # PyTorch defaults: post-norm, relu FFN, eval-mode dropout.
    sa = _mha(x, x, p["attn"], nhead, d_model, bb)
    x = _layer_norm(x + sa, p["ln1_g"], p["ln1_b"])
    ff = _matmul(jnp.maximum(_matmul(x, p["ff1_w"], p["ff1_b"]), 0.0),
                 p["ff2_w"], p["ff2_b"])
    return _layer_norm(x + ff, p["ln2_g"], p["ln2_b"])


def _decoder_layer(x, mem, p, nhead, d_model, bb):
    sa = _mha(x, x, p["self_attn"], nhead, d_model, bb)
    x = _layer_norm(x + sa, p["ln1_g"], p["ln1_b"])
    ca = _mha(x, mem, p["cross_attn"], nhead, d_model, bb)
    x = _layer_norm(x + ca, p["ln2_g"], p["ln2_b"])
    ff = _matmul(jnp.maximum(_matmul(x, p["ff1_w"], p["ff1_b"]), 0.0),
                 p["ff2_w"], p["ff2_b"])
    return _layer_norm(x + ff, p["ln3_g"], p["ln3_b"])


# ----------------------------------------------------------------------------
# The single fused kernel: one grid step == Bb batch elements
# ----------------------------------------------------------------------------
def _fused_kernel(*refs, treedef, nhead, d_model, bb, tp):
    x_ref = refs[0]
    o_ref = refs[-1]
    param_refs = refs[1:-1]
    # Tree of REFS (not values): weights are loaded at their point of use.
    p = jax.tree_util.tree_unflatten(treedef, list(param_refs))

    m = bb * tp
    x = x_ref[...].reshape(m, x_ref.shape[-1])             # (Bb*Tp, Cin*K) f32

    # conv (im2col matmul) + ActDropNormCNN1D (LN -> GELU, dropout = identity)
    h = _matmul(x, p["conv_w"], p["conv_b"])
    h = _gelu(_layer_norm(h, p["cnn_ln_g"], p["cnn_ln_b"]))

    # dense: Linear -> LN -> GELU -> Linear -> LN -> GELU
    h = _gelu(_layer_norm(_matmul(h, p["d1_w"], p["d1_b"]),
                          p["d1_ln_g"], p["d1_ln_b"]))
    h = _gelu(_layer_norm(_matmul(h, p["d2_w"], p["d2_b"]),
                          p["d2_ln_g"], p["d2_ln_b"]))

    # nn.Transformer(src=h, tgt=h), batch_first, no masks
    mem = h
    for lp in p["enc_layers"]:
        mem = _encoder_layer(mem, lp, nhead, d_model, bb)
    mem = _layer_norm(mem, p["enc_norm_g"], p["enc_norm_b"])

    out = h
    for lp in p["dec_layers"]:
        out = _decoder_layer(out, mem, lp, nhead, d_model, bb)
    out = _layer_norm(out, p["dec_norm_g"], p["dec_norm_b"])

    # head: LN -> GELU -> (dropout) -> Linear -> log_softmax over classes.
    # The class dim is padded to a lane-dense width host-side; padded columns
    # carry -1e30 bias -> exp() == 0 -> log_softmax over valid classes is exact.
    out = _gelu(_layer_norm(out, p["ln2_g"], p["ln2_b"]))
    logits = _matmul(out, p["fc_w"], p["fc_b"])             # (M, NC_PAD)
    mx = jnp.max(logits, axis=-1, keepdims=True)
    z = logits - mx
    lse = jnp.log(jnp.sum(jnp.exp(z), axis=-1, keepdims=True))
    o_ref[...] = (z - lse).reshape(bb, tp, logits.shape[-1])


# ----------------------------------------------------------------------------
# Forward wrapper
# ----------------------------------------------------------------------------
def _pick_bb(B, Tp, target_rows=256):
    """Largest batch block with Bb | B and Bb*Tp <= target_rows, preferring
    >= 2 grid steps so both v7x TensorCores get work."""
    divs = [d for d in range(1, B + 1) if B % d == 0]
    fit = [d for d in divs if d * Tp <= target_rows] or [1]
    bb = max(fit)
    if B // bb < 2:
        two_step = [d for d in fit if B // d >= 2]
        if two_step:
            bb = max(two_step)
    return bb


def forward(params, x, cfg):
    """x: (B, 1, N_FEATS_IN, T) f32 -> (T', B, NUM_CLASSES) log-probs."""
    B = x.shape[0]
    x = x[:, 0]                                            # squeeze(1): (B, Cin, T)
    K, S, P = 10, 2, 4
    T = x.shape[-1]
    Tp = (T + 2 * P - K) // S + 1

    # im2col for Conv1d(k=10, s=2, p=4) — tiny (B, Tp, Cin*K) slab, kept in XLA.
    # TODO(synk): for long T fold this gather into the fused kernel via strided
    # pl.ds loads from the padded input.
    xp = jnp.pad(x, ((0, 0), (0, 0), (P, P)))
    idx = jnp.arange(Tp)[:, None] * S + jnp.arange(K)[None, :]       # (Tp, K)
    patches = xp[:, :, idx]                                          # (B, Cin, Tp, K)
    patches = patches.transpose(0, 2, 1, 3).reshape(B, Tp, -1)       # (B, Tp, Cin*K)

    flat, treedef = jax.tree_util.tree_flatten(params)
    nc = cfg["NUM_CLASSES"]
    nc_pad = params["fc_w"].shape[1]                       # lane-dense padded width
    cink = patches.shape[-1]

    bb = _pick_bb(B, Tp)                                   # Bb*Tp rows per MXU pass
    grid = (B // bb,)

    in_specs = [pl.BlockSpec((bb, Tp, cink), lambda b: (b, 0, 0))]
    # All parameter leaves are 2D and VMEM-resident (block == full array).
    in_specs += [pl.BlockSpec(w.shape, lambda b: (0, 0)) for w in flat]

    out = pl.pallas_call(
        functools.partial(_fused_kernel, treedef=treedef,
                          nhead=cfg["NHEAD"], d_model=cfg["D_MODEL"],
                          bb=bb, tp=Tp),
        grid=grid,
        out_shape=jax.ShapeDtypeStruct((B, Tp, nc_pad), jnp.float32),
        in_specs=in_specs,
        out_specs=pl.BlockSpec((bb, Tp, nc_pad), lambda b: (b, 0, 0)),
        compiler_params=pltpu.CompilerParams(
            dimension_semantics=("parallel",)),            # batch grid -> both TCs
    )(patches, *flat)

    # slice away the lane-padding, then (B, T', NC) -> (T', B, NC).
    return jnp.transpose(out[..., :nc], (1, 0, 2))


# ----------------------------------------------------------------------------
# Deterministic parameter initialization (all leaves are 2D arrays)
# ----------------------------------------------------------------------------
def _dense_params(key, din, dout, w_dtype=BF16, scale=0.05):
    kw, kb = jax.random.split(key)
    w = (jax.random.normal(kw, (din, dout), jnp.float32) * scale).astype(w_dtype)
    b = jax.random.normal(kb, (1, dout), jnp.float32) * scale
    return w, b


def _ln_params(d):
    return jnp.ones((1, d), jnp.float32), jnp.zeros((1, d), jnp.float32)


def _self_attn_params(key, d):
    k1, k2 = jax.random.split(key)
    wqkv, bqkv = _dense_params(k1, d, 3 * d)
    wo, bo = _dense_params(k2, d, d)                       # bf16, full-depth out-proj
    return dict(wqkv=wqkv, bqkv=bqkv, wo=wo, bo=bo)


def _cross_attn_params(key, d):
    k1, k2, k3 = jax.random.split(key, 3)
    wq, bq = _dense_params(k1, d, d)
    wkv, bkv = _dense_params(k2, d, 2 * d)
    wo, bo = _dense_params(k3, d, d)
    return dict(wq=wq, bq=bq, wkv=wkv, bkv=bkv, wo=wo, bo=bo)


def _enc_layer_params(key, d, dff):
    k0, k1, k2 = jax.random.split(key, 3)
    ln1_g, ln1_b = _ln_params(d)
    ln2_g, ln2_b = _ln_params(d)
    f1w, f1b = _dense_params(k1, d, dff)
    f2w, f2b = _dense_params(k2, dff, d)
    return dict(attn=_self_attn_params(k0, d),
                ln1_g=ln1_g, ln1_b=ln1_b, ln2_g=ln2_g, ln2_b=ln2_b,
                ff1_w=f1w, ff1_b=f1b, ff2_w=f2w, ff2_b=f2b)


def _dec_layer_params(key, d, dff):
    k0, k1, k2, k3 = jax.random.split(key, 4)
    ln1_g, ln1_b = _ln_params(d)
    ln2_g, ln2_b = _ln_params(d)
    ln3_g, ln3_b = _ln_params(d)
    f1w, f1b = _dense_params(k2, d, dff)
    f2w, f2b = _dense_params(k3, dff, d)
    return dict(self_attn=_self_attn_params(k0, d),
                cross_attn=_cross_attn_params(k1, d),
                ln1_g=ln1_g, ln1_b=ln1_b, ln2_g=ln2_g, ln2_b=ln2_b,
                ln3_g=ln3_g, ln3_b=ln3_b,
                ff1_w=f1w, ff1_b=f1b, ff2_w=f2w, ff2_b=f2b)


def init_params(key, cfg):
    keys = jax.random.split(key, 6)
    cin, ccnn, dden = cfg["N_FEATS_IN"], cfg["N_FEATS_CNN"], cfg["N_FEATS_DENSE"]
    d, dff, nc = cfg["D_MODEL"], cfg["DIM_FFN"], cfg["NUM_CLASSES"]
    conv_w, conv_b = _dense_params(keys[0], cin * 10, ccnn)   # (Cin*K, Cout) im2col layout
    cnn_ln_g, cnn_ln_b = _ln_params(ccnn)
    d1_w, d1_b = _dense_params(keys[1], ccnn, dden)
    d1_ln_g, d1_ln_b = _ln_params(dden)
    d2_w, d2_b = _dense_params(keys[2], dden, dden)
    d2_ln_g, d2_ln_b = _ln_params(dden)
    enc_keys = jax.random.split(keys[3], cfg["ENC_LAYERS"])
    dec_keys = jax.random.split(keys[4], cfg["DEC_LAYERS"])
    enc_norm_g, enc_norm_b = _ln_params(d)
    dec_norm_g, dec_norm_b = _ln_params(d)
    ln2_g, ln2_b = _ln_params(d)
    # final classifier, padded to a lane-dense (multiple-of-128) class width:
    # zero weight columns + -1e30 bias keep the padded log-softmax exact.
    fc_w, fc_b = _dense_params(keys[5], d, nc)
    nc_pad = ((nc + 127) // 128) * 128
    fc_w = jnp.pad(fc_w, ((0, 0), (0, nc_pad - nc)))
    fc_b = jnp.pad(fc_b, ((0, 0), (0, nc_pad - nc)), constant_values=-1e30)
    return dict(
        conv_w=conv_w, conv_b=conv_b, cnn_ln_g=cnn_ln_g, cnn_ln_b=cnn_ln_b,
        d1_w=d1_w, d1_b=d1_b, d1_ln_g=d1_ln_g, d1_ln_b=d1_ln_b,
        d2_w=d2_w, d2_b=d2_b, d2_ln_g=d2_ln_g, d2_ln_b=d2_ln_b,
        enc_layers=[_enc_layer_params(k, d, dff) for k in enc_keys],
        dec_layers=[_dec_layer_params(k, d, dff) for k in dec_keys],
        enc_norm_g=enc_norm_g, enc_norm_b=enc_norm_b,
        dec_norm_g=dec_norm_g, dec_norm_b=dec_norm_b,
        ln2_g=ln2_g, ln2_b=ln2_b, fc_w=fc_w, fc_b=fc_b,
    )


# ----------------------------------------------------------------------------
if __name__ == "__main__":
    CFG = dict(
        N_FEATS_IN=16,
        N_FEATS_CNN=32,
        N_FEATS_DENSE=32,   # must equal D_MODEL (dense output feeds the transformer)
        D_MODEL=32,
        NHEAD=4,
        ENC_LAYERS=1,
        DEC_LAYERS=1,
        DIM_FFN=64,
        NUM_CLASSES=16,
        DROPOUT=0.0,        # eval mode: dropout is identity
    )

    key = jax.random.PRNGKey(0)
    k_param, k_x = jax.random.split(key)
    params = init_params(k_param, CFG)

    B, T = 4, 16
    x = jax.random.normal(k_x, (B, 1, CFG["N_FEATS_IN"], T), jnp.float32)

    fwd = jax.jit(functools.partial(forward, cfg=CFG))
    out = jax.block_until_ready(fwd(params, x))

    Tp = (T + 2 * 4 - 10) // 2 + 1
    assert out.shape == (Tp, B, CFG["NUM_CLASSES"]), out.shape
    assert bool(jnp.all(jnp.isfinite(out)))
    print("KERNEL_OK")
</pallas_src>

<mosaic_0001>
module attributes {stable_mosaic.version = 11 : i64} {
  func.func @_fused_kernel(%arg0: i32, %arg1: memref<2x8x160xf32, #tpu.memory_space<vmem>>, %arg2: memref<1x32xf32, #tpu.memory_space<vmem>>, %arg3: memref<1x32xf32, #tpu.memory_space<vmem>>, %arg4: memref<1x32xf32, #tpu.memory_space<vmem>>, %arg5: memref<160x32xbf16, #tpu.memory_space<vmem>>, %arg6: memref<1x32xf32, #tpu.memory_space<vmem>>, %arg7: memref<1x32xf32, #tpu.memory_space<vmem>>, %arg8: memref<1x32xf32, #tpu.memory_space<vmem>>, %arg9: memref<32x32xbf16, #tpu.memory_space<vmem>>, %arg10: memref<1x32xf32, #tpu.memory_space<vmem>>, %arg11: memref<1x32xf32, #tpu.memory_space<vmem>>, %arg12: memref<1x32xf32, #tpu.memory_space<vmem>>, %arg13: memref<32x32xbf16, #tpu.memory_space<vmem>>, %arg14: memref<1x64xf32, #tpu.memory_space<vmem>>, %arg15: memref<1x32xf32, #tpu.memory_space<vmem>>, %arg16: memref<1x32xf32, #tpu.memory_space<vmem>>, %arg17: memref<32x64xbf16, #tpu.memory_space<vmem>>, %arg18: memref<32x32xbf16, #tpu.memory_space<vmem>>, %arg19: memref<32x32xbf16, #tpu.memory_space<vmem>>, %arg20: memref<1x64xf32, #tpu.memory_space<vmem>>, %arg21: memref<32x64xbf16, #tpu.memory_space<vmem>>, %arg22: memref<1x32xf32, #tpu.memory_space<vmem>>, %arg23: memref<64x32xbf16, #tpu.memory_space<vmem>>, %arg24: memref<1x32xf32, #tpu.memory_space<vmem>>, %arg25: memref<1x32xf32, #tpu.memory_space<vmem>>, %arg26: memref<1x32xf32, #tpu.memory_space<vmem>>, %arg27: memref<1x32xf32, #tpu.memory_space<vmem>>, %arg28: memref<1x32xf32, #tpu.memory_space<vmem>>, %arg29: memref<1x32xf32, #tpu.memory_space<vmem>>, %arg30: memref<1x32xf32, #tpu.memory_space<vmem>>, %arg31: memref<1x96xf32, #tpu.memory_space<vmem>>, %arg32: memref<32x32xbf16, #tpu.memory_space<vmem>>, %arg33: memref<32x96xbf16, #tpu.memory_space<vmem>>, %arg34: memref<1x32xf32, #tpu.memory_space<vmem>>, %arg35: memref<1x32xf32, #tpu.memory_space<vmem>>, %arg36: memref<1x32xf32, #tpu.memory_space<vmem>>, %arg37: memref<1x96xf32, #tpu.memory_space<vmem>>, %arg38: memref<32x32xbf16, #tpu.memory_space<vmem>>, %arg39: memref<32x96xbf16, #tpu.memory_space<vmem>>, %arg40: memref<1x64xf32, #tpu.memory_space<vmem>>, %arg41: memref<32x64xbf16, #tpu.memory_space<vmem>>, %arg42: memref<1x32xf32, #tpu.memory_space<vmem>>, %arg43: memref<64x32xbf16, #tpu.memory_space<vmem>>, %arg44: memref<1x32xf32, #tpu.memory_space<vmem>>, %arg45: memref<1x32xf32, #tpu.memory_space<vmem>>, %arg46: memref<1x32xf32, #tpu.memory_space<vmem>>, %arg47: memref<1x32xf32, #tpu.memory_space<vmem>>, %arg48: memref<1x32xf32, #tpu.memory_space<vmem>>, %arg49: memref<1x32xf32, #tpu.memory_space<vmem>>, %arg50: memref<1x128xf32, #tpu.memory_space<vmem>>, %arg51: memref<32x128xbf16, #tpu.memory_space<vmem>>, %arg52: memref<1x32xf32, #tpu.memory_space<vmem>>, %arg53: memref<1x32xf32, #tpu.memory_space<vmem>>, %arg54: memref<2x8x128xf32, #tpu.memory_space<vmem>>) attributes {dimension_semantics = [#tpu.dimension_semantics<parallel>], iteration_bounds = array<i64: 2>, scalar_prefetch = 0 : i64, scratch_operands = 0 : i64, tpu.core_type = #tpu.core_type<tc>, window_params = [{transform_indices = @transform_0, window_bounds = array<i64: 2, 8, 160>}, {pipeline_mode = #tpu.pipeline_mode<synchronous>, transform_indices = @transform_1, window_bounds = array<i64: 1, 32>}, {pipeline_mode = #tpu.pipeline_mode<synchronous>, transform_indices = @transform_2, window_bounds = array<i64: 1, 32>}, {pipeline_mode = #tpu.pipeline_mode<synchronous>, transform_indices = @transform_3, window_bounds = array<i64: 1, 32>}, {pipeline_mode = #tpu.pipeline_mode<synchronous>, transform_indices = @transform_4, window_bounds = array<i64: 160, 32>}, {pipeline_mode = #tpu.pipeline_mode<synchronous>, transform_indices = @transform_5, window_bounds = array<i64: 1, 32>}, {pipeline_mode = #tpu.pipeline_mode<synchronous>, transform_indices = @transform_6, window_bounds = array<i64: 1, 32>}, {pipeline_mode = #tpu.pipeline_mode<synchronous>, transform_indices = @transform_7, window_bounds = array<i64: 1, 32>}, {pipeline_mode = #tpu.pipeline_mode<synchronous>, transform_indices = @transform_8, window_bounds = array<i64: 32, 32>}, {pipeline_mode = #tpu.pipeline_mode<synchronous>, transform_indices = @transform_9, window_bounds = array<i64: 1, 32>}, {pipeline_mode = #tpu.pipeline_mode<synchronous>, transform_indices = @transform_10, window_bounds = array<i64: 1, 32>}, {pipeline_mode = #tpu.pipeline_mode<synchronous>, transform_indices = @transform_11, window_bounds = array<i64: 1, 32>}, {pipeline_mode = #tpu.pipeline_mode<synchronous>, transform_indices = @transform_12, window_bounds = array<i64: 32, 32>}, {pipeline_mode = #tpu.pipeline_mode<synchronous>, transform_indices = @transform_13, window_bounds = array<i64: 1, 64>}, {pipeline_mode = #tpu.pipeline_mode<synchronous>, transform_indices = @transform_14, window_bounds = array<i64: 1, 32>}, {pipeline_mode = #tpu.pipeline_mode<synchronous>, transform_indices = @transform_15, window_bounds = array<i64: 1, 32>}, {pipeline_mode = #tpu.pipeline_mode<synchronous>, transform_indices = @transform_16, window_bounds = array<i64: 32, 64>}, {pipeline_mode = #tpu.pipeline_mode<synchronous>, transform_indices = @transform_17, window_bounds = array<i64: 32, 32>}, {pipeline_mode = #tpu.pipeline_mode<synchronous>, transform_indices = @transform_18, window_bounds = array<i64: 32, 32>}, {pipeline_mode = #tpu.pipeline_mode<synchronous>, transform_indices = @transform_19, window_bounds = array<i64: 1, 64>}, {pipeline_mode = #tpu.pipeline_mode<synchronous>, transform_indices = @transform_20, window_bounds = array<i64: 32, 64>}, {pipeline_mode = #tpu.pipeline_mode<synchronous>, transform_indices = @transform_21, window_bounds = array<i64: 1, 32>}, {pipeline_mode = #tpu.pipeline_mode<synchronous>, transform_indices = @transform_22, window_bounds = array<i64: 64, 32>}, {pipeline_mode = #tpu.pipeline_mode<synchronous>, transform_indices = @transform_23, window_bounds = array<i64: 1, 32>}, {pipeline_mode = #tpu.pipeline_mode<synchronous>, transform_indices = @transform_24, window_bounds = array<i64: 1, 32>}, {pipeline_mode = #tpu.pipeline_mode<synchronous>, transform_indices = @transform_25, window_bounds = array<i64: 1, 32>}, {pipeline_mode = #tpu.pipeline_mode<synchronous>, transform_indices = @transform_26, window_bounds = array<i64: 1, 32>}, {pipeline_mode = #tpu.pipeline_mode<synchronous>, transform_indices = @transform_27, window_bounds = array<i64: 1, 32>}, {pipeline_mode = #tpu.pipeline_mode<synchronous>, transform_indices = @transform_28, window_bounds = array<i64: 1, 32>}, {pipeline_mode = #tpu.pipeline_mode<synchronous>, transform_indices = @transform_29, window_bounds = array<i64: 1, 32>}, {pipeline_mode = #tpu.pipeline_mode<synchronous>, transform_indices = @transform_30, window_bounds = array<i64: 1, 96>}, {pipeline_mode = #tpu.pipeline_mode<synchronous>, transform_indices = @transform_31, window_bounds = array<i64: 32, 32>}, {pipeline_mode = #tpu.pipeline_mode<synchronous>, transform_indices = @transform_32, window_bounds = array<i64: 32, 96>}, {pipeline_mode = #tpu.pipeline_mode<synchronous>, transform_indices = @transform_33, window_bounds = array<i64: 1, 32>}, {pipeline_mode = #tpu.pipeline_mode<synchronous>, transform_indices = @transform_34, window_bounds = array<i64: 1, 32>}, {pipeline_mode = #tpu.pipeline_mode<synchronous>, transform_indices = @transform_35, window_bounds = array<i64: 1, 32>}, {pipeline_mode = #tpu.pipeline_mode<synchronous>, transform_indices = @transform_36, window_bounds = array<i64: 1, 96>}, {pipeline_mode = #tpu.pipeline_mode<synchronous>, transform_indices = @transform_37, window_bounds = array<i64: 32, 32>}, {pipeline_mode = #tpu.pipeline_mode<synchronous>, transform_indices = @transform_38, window_bounds = array<i64: 32, 96>}, {pipeline_mode = #tpu.pipeline_mode<synchronous>, transform_indices = @transform_39, window_bounds = array<i64: 1, 64>}, {pipeline_mode = #tpu.pipeline_mode<synchronous>, transform_indices = @transform_40, window_bounds = array<i64: 32, 64>}, {pipeline_mode = #tpu.pipeline_mode<synchronous>, transform_indices = @transform_41, window_bounds = array<i64: 1, 32>}, {pipeline_mode = #tpu.pipeline_mode<synchronous>, transform_indices = @transform_42, window_bounds = array<i64: 64, 32>}, {pipeline_mode = #tpu.pipeline_mode<synchronous>, transform_indices = @transform_43, window_bounds = array<i64: 1, 32>}, {pipeline_mode = #tpu.pipeline_mode<synchronous>, transform_indices = @transform_44, window_bounds = array<i64: 1, 32>}, {pipeline_mode = #tpu.pipeline_mode<synchronous>, transform_indices = @transform_45, window_bounds = array<i64: 1, 32>}, {pipeline_mode = #tpu.pipeline_mode<synchronous>, transform_indices = @transform_46, window_bounds = array<i64: 1, 32>}, {pipeline_mode = #tpu.pipeline_mode<synchronous>, transform_indices = @transform_47, window_bounds = array<i64: 1, 32>}, {pipeline_mode = #tpu.pipeline_mode<synchronous>, transform_indices = @transform_48, window_bounds = array<i64: 1, 32>}, {pipeline_mode = #tpu.pipeline_mode<synchronous>, transform_indices = @transform_49, window_bounds = array<i64: 1, 128>}, {pipeline_mode = #tpu.pipeline_mode<synchronous>, transform_indices = @transform_50, window_bounds = array<i64: 32, 128>}, {pipeline_mode = #tpu.pipeline_mode<synchronous>, transform_indices = @transform_51, window_bounds = array<i64: 1, 32>}, {pipeline_mode = #tpu.pipeline_mode<synchronous>, transform_indices = @transform_52, window_bounds = array<i64: 1, 32>}, {transform_indices = @transform_53, window_bounds = array<i64: 2, 8, 128>}]} {
    %c0 = arith.constant 0 : index
    %c0_0 = arith.constant 0 : index
    %c0_1 = arith.constant 0 : index
    %0 = vector.load %arg1[%c0, %c0_0, %c0_1] : memref<2x8x160xf32, #tpu.memory_space<vmem>>, vector<2x8x160xf32>
    %1 = vector.shape_cast %0 : vector<2x8x160xf32> to vector<16x160xf32>
    %2 = arith.truncf %1 : vector<16x160xf32> to vector<16x160xbf16>
    %c0_2 = arith.constant 0 : index
    %c0_3 = arith.constant 0 : index
    %3 = vector.load %arg5[%c0_2, %c0_3] : memref<160x32xbf16, #tpu.memory_space<vmem>>, vector<160x32xbf16>
    %cst = arith.constant dense<0.000000e+00> : vector<16x32xf32>
    %4 = tpu.matmul %2, %3, %cst {dimension_numbers = #tpu.dot_dimension_numbers<[1], [0], [0], [1], [0, 0, 1, 1], [], []>} : vector<16x160xbf16>, vector<160x32xbf16>, vector<16x32xf32> -> vector<16x32xf32>
    %c0_4 = arith.constant 0 : index
    %c0_5 = arith.constant 0 : index
    %5 = vector.load %arg4[%c0_4, %c0_5] : memref<1x32xf32, #tpu.memory_space<vmem>>, vector<1x32xf32>
    %6 = vector.broadcast %5 : vector<1x32xf32> to vector<16x32xf32>
    %7 = arith.addf %4, %6 : vector<16x32xf32>
    %cst_6 = arith.constant dense<0.000000e+00> : vector<16xf32>
    %8 = vector.multi_reduction <add>, %7, %cst_6 [1] : vector<16x32xf32> to vector<16xf32>
    %9 = vector.shape_cast %8 : vector<16xf32> to vector<16x1xf32>
    %cst_7 = arith.constant 3.200000e+01 : f32
    %10 = vector.broadcast %cst_7 : f32 to vector<16x1xf32>
    %11 = arith.divf %9, %10 : vector<16x1xf32>
    %12 = vector.broadcast %11 : vector<16x1xf32> to vector<16x32xf32>
    %13 = arith.subf %7, %12 : vector<16x32xf32>
    %14 = arith.mulf %13, %13 : vector<16x32xf32>
    %cst_8 = arith.constant dense<0.000000e+00> : vector<16xf32>
    %15 = vector.multi_reduction <add>, %14, %cst_8 [1] : vector<16x32xf32> to vector<16xf32>
    %16 = vector.shape_cast %15 : vector<16xf32> to vector<16x1xf32>
    %cst_9 = arith.constant 3.200000e+01 : f32
    %17 = vector.broadcast %cst_9 : f32 to vector<16x1xf32>
    %18 = arith.divf %16, %17 : vector<16x1xf32>
    %cst_10 = arith.constant 9.99999974E-6 : f32
    %19 = vector.broadcast %cst_10 : f32 to vector<16x1xf32>
    %20 = arith.addf %18, %19 : vector<16x1xf32>
    %21 = math.rsqrt %20 : vector<16x1xf32>
    %22 = vector.broadcast %21 : vector<16x1xf32> to vector<16x32xf32>
    %23 = arith.mulf %13, %22 : vector<16x32xf32>
    %c0_11 = arith.constant 0 : index
    %c0_12 = arith.constant 0 : index
    %24 = vector.load %arg3[%c0_11, %c0_12] : memref<1x32xf32, #tpu.memory_space<vmem>>, vector<1x32xf32>
    %25 = vector.broadcast %24 : vector<1x32xf32> to vector<16x32xf32>
    %26 = arith.mulf %23, %25 : vector<16x32xf32>
    %c0_13 = arith.constant 0 : index
    %c0_14 = arith.constant 0 : index
    %27 = vector.load %arg2[%c0_13, %c0_14] : memref<1x32xf32, #tpu.memory_space<vmem>>, vector<1x32xf32>
    %28 = vector.broadcast %27 : vector<1x32xf32> to vector<16x32xf32>
    %29 = arith.addf %26, %28 : vector<16x32xf32>
    %cst_15 = arith.constant 5.000000e-01 : f32
    %30 = vector.broadcast %cst_15 : f32 to vector<16x32xf32>
    %31 = arith.mulf %30, %29 : vector<16x32xf32>
    %cst_16 = arith.constant 4.471500e-02 : f32
    %32 = vector.broadcast %cst_16 : f32 to vector<16x32xf32>
    %33 = arith.mulf %32, %29 : vector<16x32xf32>
    %34 = arith.mulf %33, %29 : vector<16x32xf32>
    %35 = arith.mulf %34, %29 : vector<16x32xf32>
    %36 = arith.addf %29, %35 : vector<16x32xf32>
    %cst_17 = arith.constant 0.797884583 : f32
    %37 = vector.broadcast %cst_17 : f32 to vector<16x32xf32>
    %38 = arith.mulf %37, %36 : vector<16x32xf32>
    %39 = math.tanh %38 : vector<16x32xf32>
    %cst_18 = arith.constant 1.000000e+00 : f32
    %40 = vector.broadcast %cst_18 : f32 to vector<16x32xf32>
    %41 = arith.addf %40, %39 : vector<16x32xf32>
    %42 = arith.mulf %31, %41 : vector<16x32xf32>
    %43 = arith.truncf %42 : vector<16x32xf32> to vector<16x32xbf16>
    %c0_19 = arith.constant 0 : index
    %c0_20 = arith.constant 0 : index
    %44 = vector.load %arg9[%c0_19, %c0_20] : memref<32x32xbf16, #tpu.memory_space<vmem>>, vector<32x32xbf16>
    %cst_21 = arith.constant dense<0.000000e+00> : vector<16x32xf32>
    %45 = tpu.matmul %43, %44, %cst_21 {dimension_numbers = #tpu.dot_dimension_numbers<[1], [0], [0], [1], [0, 0, 1, 1], [], []>} : vector<16x32xbf16>, vector<32x32xbf16>, vector<16x32xf32> -> vector<16x32xf32>
    %c0_22 = arith.constant 0 : index
    %c0_23 = arith.constant 0 : index
    %46 = vector.load %arg6[%c0_22, %c0_23] : memref<1x32xf32, #tpu.memory_space<vmem>>, vector<1x32xf32>
    %47 = vector.broadcast %46 : vector<1x32xf32> to vector<16x32xf32>
    %48 = arith.addf %45, %47 : vector<16x32xf32>
    %cst_24 = arith.constant dense<0.000000e+00> : vector<16xf32>
    %49 = vector.multi_reduction <add>, %48, %cst_24 [1] : vector<16x32xf32> to vector<16xf32>
    %50 = vector.shape_cast %49 : vector<16xf32> to vector<16x1xf32>
    %cst_25 = arith.constant 3.200000e+01 : f32
    %51 = vector.broadcast %cst_25 : f32 to vector<16x1xf32>
    %52 = arith.divf %50, %51 : vector<16x1xf32>
    %53 = vector.broadcast %52 : vector<16x1xf32> to vector<16x32xf32>
    %54 = arith.subf %48, %53 : vector<16x32xf32>
    %55 = arith.mulf %54, %54 : vector<16x32xf32>
    %cst_26 = arith.constant dense<0.000000e+00> : vector<16xf32>
    %56 = vector.multi_reduction <add>, %55, %cst_26 [1] : vector<16x32xf32> to vector<16xf32>
    %57 = vector.shape_cast %56 : vector<16xf32> to vector<16x1xf32>
    %cst_27 = arith.constant 3.200000e+01 : f32
    %58 = vector.broadcast %cst_27 : f32 to vector<16x1xf32>
    %59 = arith.divf %57, %58 : vector<16x1xf32>
    %cst_28 = arith.constant 9.99999974E-6 : f32
    %60 = vector.broadcast %cst_28 : f32 to vector<16x1xf32>
    %61 = arith.addf %59, %60 : vector<16x1xf32>
    %62 = math.rsqrt %61 : vector<16x1xf32>
    %63 = vector.broadcast %62 : vector<16x1xf32> to vector<16x32xf32>
    %64 = arith.mulf %54, %63 : vector<16x32xf32>
    %c0_29 = arith.constant 0 : index
    %c0_30 = arith.constant 0 : index
    %65 = vector.load %arg8[%c0_29, %c0_30] : memref<1x32xf32, #tpu.memory_space<vmem>>, vector<1x32xf32>
    %66 = vector.broadcast %65 : vector<1x32xf32> to vector<16x32xf32>
    %67 = arith.mulf %64, %66 : vector<16x32xf32>
    %c0_31 = arith.constant 0 : index
    %c0_32 = arith.constant 0 : index
    %68 = vector.load %arg7[%c0_31, %c0_32] : memref<1x32xf32, #tpu.memory_space<vmem>>, vector<1x32xf32>
    %69 = vector.broadcast %68 : vector<1x32xf32> to vector<16x32xf32>
    %70 = arith.addf %67, %69 : vector<16x32xf32>
    %cst_33 = arith.constant 5.000000e-01 : f32
    %71 = vector.broadcast %cst_33 : f32 to vector<16x32xf32>
    %72 = arith.mulf %71, %70 : vector<16x32xf32>
    %cst_34 = arith.constant 4.471500e-02 : f32
    %73 = vector.broadcast %cst_34 : f32 to vector<16x32xf32>
    %74 = arith.mulf %73, %70 : vector<16x32xf32>
    %75 = arith.mulf %74, %70 : vector<16x32xf32>
    %76 = arith.mulf %75, %70 : vector<16x32xf32>
    %77 = arith.addf %70, %76 : vector<16x32xf32>
    %cst_35 = arith.constant 0.797884583 : f32
    %78 = vector.broadcast %cst_35 : f32 to vector<16x32xf32>
    %79 = arith.mulf %78, %77 : vector<16x32xf32>
    %80 = math.tanh %79 : vector<16x32xf32>
    %cst_36 = arith.constant 1.000000e+00 : f32
    %81 = vector.broadcast %cst_36 : f32 to vector<16x32xf32>
    %82 = arith.addf %81, %80 : vector<16x32xf32>
    %83 = arith.mulf %72, %82 : vector<16x32xf32>
    %84 = arith.truncf %83 : vector<16x32xf32> to vector<16x32xbf16>
    %c0_37 = arith.constant 0 : index
    %c0_38 = arith.constant 0 : index
    %85 = vector.load %arg13[%c0_37, %c0_38] : memref<32x32xbf16, #tpu.memory_space<vmem>>, vector<32x32xbf16>
    %cst_39 = arith.constant dense<0.000000e+00> : vector<16x32xf32>
    %86 = tpu.matmul %84, %85, %cst_39 {dimension_numbers = #tpu.dot_dimension_numbers<[1], [0], [0], [1], [0, 0, 1, 1], [], []>} : vector<16x32xbf16>, vector<32x32xbf16>, vector<16x32xf32> -> vector<16x32xf32>
    %c0_40 = arith.constant 0 : index
    %c0_41 = arith.constant 0 : index
    %87 = vector.load %arg10[%c0_40, %c0_41] : memref<1x32xf32, #tpu.memory_space<vmem>>, vector<1x32xf32>
    %88 = vector.broadcast %87 : vector<1x32xf32> to vector<16x32xf32>
    %89 = arith.addf %86, %88 : vector<16x32xf32>
    %cst_42 = arith.constant dense<0.000000e+00> : vector<16xf32>
    %90 = vector.multi_reduction <add>, %89, %cst_42 [1] : vector<16x32xf32> to vector<16xf32>
    %91 = vector.shape_cast %90 : vector<16xf32> to vector<16x1xf32>
    %cst_43 = arith.constant 3.200000e+01 : f32
    %92 = vector.broadcast %cst_43 : f32 to vector<16x1xf32>
    %93 = arith.divf %91, %92 : vector<16x1xf32>
    %94 = vector.broadcast %93 : vector<16x1xf32> to vector<16x32xf32>
    %95 = arith.subf %89, %94 : vector<16x32xf32>
    %96 = arith.mulf %95, %95 : vector<16x32xf32>
    %cst_44 = arith.constant dense<0.000000e+00> : vector<16xf32>
    %97 = vector.multi_reduction <add>, %96, %cst_44 [1] : vector<16x32xf32> to vector<16xf32>
    %98 = vector.shape_cast %97 : vector<16xf32> to vector<16x1xf32>
    %cst_45 = arith.constant 3.200000e+01 : f32
    %99 = vector.broadcast %cst_45 : f32 to vector<16x1xf32>
    %100 = arith.divf %98, %99 : vector<16x1xf32>
    %cst_46 = arith.constant 9.99999974E-6 : f32
    %101 = vector.broadcast %cst_46 : f32 to vector<16x1xf32>
    %102 = arith.addf %100, %101 : vector<16x1xf32>
    %103 = math.rsqrt %102 : vector<16x1xf32>
    %104 = vector.broadcast %103 : vector<16x1xf32> to vector<16x32xf32>
    %105 = arith.mulf %95, %104 : vector<16x32xf32>
    %c0_47 = arith.constant 0 : index
    %c0_48 = arith.constant 0 : index
    %106 = vector.load %arg12[%c0_47, %c0_48] : memref<1x32xf32, #tpu.memory_space<vmem>>, vector<1x32xf32>
    %107 = vector.broadcast %106 : vector<1x32xf32> to vector<16x32xf32>
    %108 = arith.mulf %105, %107 : vector<16x32xf32>
    %c0_49 = arith.constant 0 : index
    %c0_50 = arith.constant 0 : index
    %109 = vector.load %arg11[%c0_49, %c0_50] : memref<1x32xf32, #tpu.memory_space<vmem>>, vector<1x32xf32>
    %110 = vector.broadcast %109 : vector<1x32xf32> to vector<16x32xf32>
    %111 = arith.addf %108, %110 : vector<16x32xf32>
    %cst_51 = arith.constant 5.000000e-01 : f32
    %112 = vector.broadcast %cst_51 : f32 to vector<16x32xf32>
    %113 = arith.mulf %112, %111 : vector<16x32xf32>
    %cst_52 = arith.constant 4.471500e-02 : f32
    %114 = vector.broadcast %cst_52 : f32 to vector<16x32xf32>
    %115 = arith.mulf %114, %111 : vector<16x32xf32>
    %116 = arith.mulf %115, %111 : vector<16x32xf32>
    %117 = arith.mulf %116, %111 : vector<16x32xf32>
    %118 = arith.addf %111, %117 : vector<16x32xf32>
    %cst_53 = arith.constant 0.797884583 : f32
    %119 = vector.broadcast %cst_53 : f32 to vector<16x32xf32>
    %120 = arith.mulf %119, %118 : vector<16x32xf32>
    %121 = math.tanh %120 : vector<16x32xf32>
    %cst_54 = arith.constant 1.000000e+00 : f32
    %122 = vector.broadcast %cst_54 : f32 to vector<16x32xf32>
    %123 = arith.addf %122, %121 : vector<16x32xf32>
    %124 = arith.mulf %113, %123 : vector<16x32xf32>
    %125 = arith.truncf %124 : vector<16x32xf32> to vector<16x32xbf16>
    %c0_55 = arith.constant 0 : index
    %c0_56 = arith.constant 0 : index
    %126 = vector.load %arg39[%c0_55, %c0_56] : memref<32x96xbf16, #tpu.memory_space<vmem>>, vector<32x96xbf16>
    %cst_57 = arith.constant dense<0.000000e+00> : vector<16x96xf32>
    %127 = tpu.matmul %125, %126, %cst_57 {dimension_numbers = #tpu.dot_dimension_numbers<[1], [0], [0], [1], [0, 0, 1, 1], [], []>} : vector<16x32xbf16>, vector<32x96xbf16>, vector<16x96xf32> -> vector<16x96xf32>
    %c0_58 = arith.constant 0 : index
    %c0_59 = arith.constant 0 : index
    %128 = vector.load %arg37[%c0_58, %c0_59] : memref<1x96xf32, #tpu.memory_space<vmem>>, vector<1x96xf32>
    %129 = vector.broadcast %128 : vector<1x96xf32> to vector<16x96xf32>
    %130 = arith.addf %127, %129 : vector<16x96xf32>
    %131 = vector.extract_strided_slice %130 {offsets = [0, 0], sizes = [16, 32], strides = [1, 1]} : vector<16x96xf32> to vector<16x32xf32>
    %132 = vector.extract_strided_slice %130 {offsets = [0, 32], sizes = [16, 32], strides = [1, 1]} : vector<16x96xf32> to vector<16x32xf32>
    %133 = vector.extract_strided_slice %130 {offsets = [0, 64], sizes = [16, 32], strides = [1, 1]} : vector<16x96xf32> to vector<16x32xf32>
    %cst_60 = arith.constant 0.353553385 : f32
    %134 = vector.broadcast %cst_60 : f32 to vector<16x32xf32>
    %135 = arith.mulf %131, %134 : vector<16x32xf32>
    %136 = vector.shape_cast %135 : vector<16x32xf32> to vector<2x8x32xf32>
    %137 = vector.shape_cast %132 : vector<16x32xf32> to vector<2x8x32xf32>
    %138 = vector.shape_cast %133 : vector<16x32xf32> to vector<2x8x32xf32>
    %139 = vector.extract_strided_slice %136 {offsets = [0, 0, 0], sizes = [2, 8, 8], strides = [1, 1, 1]} : vector<2x8x32xf32> to vector<2x8x8xf32>
    %140 = arith.truncf %139 : vector<2x8x8xf32> to vector<2x8x8xbf16>
    %141 = vector.extract_strided_slice %137 {offsets = [0, 0, 0], sizes = [2, 8, 8], strides = [1, 1, 1]} : vector<2x8x32xf32> to vector<2x8x8xf32>
    %142 = arith.truncf %141 : vector<2x8x8xf32> to vector<2x8x8xbf16>
    %143 = vector.extract_strided_slice %138 {offsets = [0, 0, 0], sizes = [2, 8, 8], strides = [1, 1, 1]} : vector<2x8x32xf32> to vector<2x8x8xf32>
    %144 = arith.truncf %143 : vector<2x8x8xf32> to vector<2x8x8xbf16>
    "tpu.trace_start"() <{level = 10 : i32, message = "bqd,bkd->bqk"}> : () -> ()
    %cst_61 = arith.constant dense<0.000000e+00> : vector<2x8x8xf32>
    %145 = tpu.matmul %140, %142, %cst_61 {dimension_numbers = #tpu.dot_dimension_numbers<[2], [2], [1], [1], [0, 0, 0, 1, 1, 1], [0], [0]>} : vector<2x8x8xbf16>, vector<2x8x8xbf16>, vector<2x8x8xf32> -> vector<2x8x8xf32>
    "tpu.trace_stop"() : () -> ()
    %cst_62 = arith.constant dense<0xFF800000> : vector<2x8xf32>
    %146 = vector.multi_reduction <maximumf>, %145, %cst_62 [2] : vector<2x8x8xf32> to vector<2x8xf32>
    %147 = vector.shape_cast %146 : vector<2x8xf32> to vector<2x8x1xf32>
    %148 = vector.broadcast %147 : vector<2x8x1xf32> to vector<2x8x8xf32>
    %149 = arith.subf %145, %148 : vector<2x8x8xf32>
    %150 = math.exp %149 : vector<2x8x8xf32>
    %cst_63 = arith.constant dense<0.000000e+00> : vector<2x8xf32>
    %151 = vector.multi_reduction <add>, %150, %cst_63 [2] : vector<2x8x8xf32> to vector<2x8xf32>
    %152 = vector.shape_cast %151 : vector<2x8xf32> to vector<2x8x1xf32>
    %153 = tpu.reciprocal %152 {approx = true} : vector<2x8x1xf32> -> vector<2x8x1xf32>
    %154 = vector.broadcast %153 : vector<2x8x1xf32> to vector<2x8x8xf32>
    %155 = arith.mulf %150, %154 : vector<2x8x8xf32>
    %156 = arith.truncf %155 : vector<2x8x8xf32> to vector<2x8x8xbf16>
    "tpu.trace_start"() <{level = 10 : i32, message = "bqk,bkd->bqd"}> : () -> ()
    %cst_64 = arith.constant dense<0.000000e+00> : vector<2x8x8xf32>
    %157 = tpu.matmul %156, %144, %cst_64 {dimension_numbers = #tpu.dot_dimension_numbers<[2], [1], [1], [2], [0, 0, 0, 1, 1, 2], [0], [0]>} : vector<2x8x8xbf16>, vector<2x8x8xbf16>, vector<2x8x8xf32> -> vector<2x8x8xf32>
    "tpu.trace_stop"() : () -> ()
    %158 = vector.extract_strided_slice %136 {offsets = [0, 0, 8], sizes = [2, 8, 8], strides = [1, 1, 1]} : vector<2x8x32xf32> to vector<2x8x8xf32>
    %159 = arith.truncf %158 : vector<2x8x8xf32> to vector<2x8x8xbf16>
    %160 = vector.extract_strided_slice %137 {offsets = [0, 0, 8], sizes = [2, 8, 8], strides = [1, 1, 1]} : vector<2x8x32xf32> to vector<2x8x8xf32>
    %161 = arith.truncf %160 : vector<2x8x8xf32> to vector<2x8x8xbf16>
    %162 = vector.extract_strided_slice %138 {offsets = [0, 0, 8], sizes = [2, 8, 8], strides = [1, 1, 1]} : vector<2x8x32xf32> to vector<2x8x8xf32>
    %163 = arith.truncf %162 : vector<2x8x8xf32> to vector<2x8x8xbf16>
    "tpu.trace_start"() <{level = 10 : i32, message = "bqd,bkd->bqk"}> : () -> ()
    %cst_65 = arith.constant dense<0.000000e+00> : vector<2x8x8xf32>
    %164 = tpu.matmul %159, %161, %cst_65 {dimension_numbers = #tpu.dot_dimension_numbers<[2], [2], [1], [1], [0, 0, 0, 1, 1, 1], [0], [0]>} : vector<2x8x8xbf16>, vector<2x8x8xbf16>, vector<2x8x8xf32> -> vector<2x8x8xf32>
    "tpu.trace_stop"() : () -> ()
    %cst_66 = arith.constant dense<0xFF800000> : vector<2x8xf32>
    %165 = vector.multi_reduction <maximumf>, %164, %cst_66 [2] : vector<2x8x8xf32> to vector<2x8xf32>
    %166 = vector.shape_cast %165 : vector<2x8xf32> to vector<2x8x1xf32>
    %167 = vector.broadcast %166 : vector<2x8x1xf32> to vector<2x8x8xf32>
    %168 = arith.subf %164, %167 : vector<2x8x8xf32>
    %169 = math.exp %168 : vector<2x8x8xf32>
    %cst_67 = arith.constant dense<0.000000e+00> : vector<2x8xf32>
    %170 = vector.multi_reduction <add>, %169, %cst_67 [2] : vector<2x8x8xf32> to vector<2x8xf32>
    %171 = vector.shape_cast %170 : vector<2x8xf32> to vector<2x8x1xf32>
    %172 = tpu.reciprocal %171 {approx = true} : vector<2x8x1xf32> -> vector<2x8x1xf32>
    %173 = vector.broadcast %172 : vector<2x8x1xf32> to vector<2x8x8xf32>
    %174 = arith.mulf %169, %173 : vector<2x8x8xf32>
    %175 = arith.truncf %174 : vector<2x8x8xf32> to vector<2x8x8xbf16>
    "tpu.trace_start"() <{level = 10 : i32, message = "bqk,bkd->bqd"}> : () -> ()
    %cst_68 = arith.constant dense<0.000000e+00> : vector<2x8x8xf32>
    %176 = tpu.matmul %175, %163, %cst_68 {dimension_numbers = #tpu.dot_dimension_numbers<[2], [1], [1], [2], [0, 0, 0, 1, 1, 2], [0], [0]>} : vector<2x8x8xbf16>, vector<2x8x8xbf16>, vector<2x8x8xf32> -> vector<2x8x8xf32>
    "tpu.trace_stop"() : () -> ()
    %177 = vector.extract_strided_slice %136 {offsets = [0, 0, 16], sizes = [2, 8, 8], strides = [1, 1, 1]} : vector<2x8x32xf32> to vector<2x8x8xf32>
    %178 = arith.truncf %177 : vector<2x8x8xf32> to vector<2x8x8xbf16>
    %179 = vector.extract_strided_slice %137 {offsets = [0, 0, 16], sizes = [2, 8, 8], strides = [1, 1, 1]} : vector<2x8x32xf32> to vector<2x8x8xf32>
    %180 = arith.truncf %179 : vector<2x8x8xf32> to vector<2x8x8xbf16>
    %181 = vector.extract_strided_slice %138 {offsets = [0, 0, 16], sizes = [2, 8, 8], strides = [1, 1, 1]} : vector<2x8x32xf32> to vector<2x8x8xf32>
    %182 = arith.truncf %181 : vector<2x8x8xf32> to vector<2x8x8xbf16>
    "tpu.trace_start"() <{level = 10 : i32, message = "bqd,bkd->bqk"}> : () -> ()
    %cst_69 = arith.constant dense<0.000000e+00> : vector<2x8x8xf32>
    %183 = tpu.matmul %178, %180, %cst_69 {dimension_numbers = #tpu.dot_dimension_numbers<[2], [2], [1], [1], [0, 0, 0, 1, 1, 1], [0], [0]>} : vector<2x8x8xbf16>, vector<2x8x8xbf16>, vector<2x8x8xf32> -> vector<2x8x8xf32>
    "tpu.trace_stop"() : () -> ()
    %cst_70 = arith.constant dense<0xFF800000> : vector<2x8xf32>
    %184 = vector.multi_reduction <maximumf>, %183, %cst_70 [2] : vector<2x8x8xf32> to vector<2x8xf32>
    %185 = vector.shape_cast %184 : vector<2x8xf32> to vector<2x8x1xf32>
    %186 = vector.broadcast %185 : vector<2x8x1xf32> to vector<2x8x8xf32>
    %187 = arith.subf %183, %186 : vector<2x8x8xf32>
    %188 = math.exp %187 : vector<2x8x8xf32>
    %cst_71 = arith.constant dense<0.000000e+00> : vector<2x8xf32>
    %189 = vector.multi_reduction <add>, %188, %cst_71 [2] : vector<2x8x8xf32> to vector<2x8xf32>
    %190 = vector.shape_cast %189 : vector<2x8xf32> to vector<2x8x1xf32>
    %191 = tpu.reciprocal %190 {approx = true} : vector<2x8x1xf32> -> vector<2x8x1xf32>
    %192 = vector.broadcast %191 : vector<2x8x1xf32> to vector<2x8x8xf32>
    %193 = arith.mulf %188, %192 : vector<2x8x8xf32>
    %194 = arith.truncf %193 : vector<2x8x8xf32> to vector<2x8x8xbf16>
    "tpu.trace_start"() <{level = 10 : i32, message = "bqk,bkd->bqd"}> : () -> ()
    %cst_72 = arith.constant dense<0.000000e+00> : vector<2x8x8xf32>
    %195 = tpu.matmul %194, %182, %cst_72 {dimension_numbers = #tpu.dot_dimension_numbers<[2], [1], [1], [2], [0, 0, 0, 1, 1, 2], [0], [0]>} : vector<2x8x8xbf16>, vector<2x8x8xbf16>, vector<2x8x8xf32> -> vector<2x8x8xf32>
    "tpu.trace_stop"() : () -> ()
    %196 = vector.extract_strided_slice %136 {offsets = [0, 0, 24], sizes = [2, 8, 8], strides = [1, 1, 1]} : vector<2x8x32xf32> to vector<2x8x8xf32>
    %197 = arith.truncf %196 : vector<2x8x8xf32> to vector<2x8x8xbf16>
    %198 = vector.extract_strided_slice %137 {offsets = [0, 0, 24], sizes = [2, 8, 8], strides = [1, 1, 1]} : vector<2x8x32xf32> to vector<2x8x8xf32>
    %199 = arith.truncf %198 : vector<2x8x8xf32> to vector<2x8x8xbf16>
    %200 = vector.extract_strided_slice %138 {offsets = [0, 0, 24], sizes = [2, 8, 8], strides = [1, 1, 1]} : vector<2x8x32xf32> to vector<2x8x8xf32>
    %201 = arith.truncf %200 : vector<2x8x8xf32> to vector<2x8x8xbf16>
    "tpu.trace_start"() <{level = 10 : i32, message = "bqd,bkd->bqk"}> : () -> ()
    %cst_73 = arith.constant dense<0.000000e+00> : vector<2x8x8xf32>
    %202 = tpu.matmul %197, %199, %cst_73 {dimension_numbers = #tpu.dot_dimension_numbers<[2], [2], [1], [1], [0, 0, 0, 1, 1, 1], [0], [0]>} : vector<2x8x8xbf16>, vector<2x8x8xbf16>, vector<2x8x8xf32> -> vector<2x8x8xf32>
    "tpu.trace_stop"() : () -> ()
    %cst_74 = arith.constant dense<0xFF800000> : vector<2x8xf32>
    %203 = vector.multi_reduction <maximumf>, %202, %cst_74 [2] : vector<2x8x8xf32> to vector<2x8xf32>
    %204 = vector.shape_cast %203 : vector<2x8xf32> to vector<2x8x1xf32>
    %205 = vector.broadcast %204 : vector<2x8x1xf32> to vector<2x8x8xf32>
    %206 = arith.subf %202, %205 : vector<2x8x8xf32>
    %207 = math.exp %206 : vector<2x8x8xf32>
    %cst_75 = arith.constant dense<0.000000e+00> : vector<2x8xf32>
    %208 = vector.multi_reduction <add>, %207, %cst_75 [2] : vector<2x8x8xf32> to vector<2x8xf32>
    %209 = vector.shape_cast %208 : vector<2x8xf32> to vector<2x8x1xf32>
    %210 = tpu.reciprocal %209 {approx = true} : vector<2x8x1xf32> -> vector<2x8x1xf32>
    %211 = vector.broadcast %210 : vector<2x8x1xf32> to vector<2x8x8xf32>
    %212 = arith.mulf %207, %211 : vector<2x8x8xf32>
    %213 = arith.truncf %212 : vector<2x8x8xf32> to vector<2x8x8xbf16>
    "tpu.trace_start"() <{level = 10 : i32, message = "bqk,bkd->bqd"}> : () -> ()
    %cst_76 = arith.constant dense<0.000000e+00> : vector<2x8x8xf32>
    %214 = tpu.matmul %213, %201, %cst_76 {dimension_numbers = #tpu.dot_dimension_numbers<[2], [1], [1], [2], [0, 0, 0, 1, 1, 2], [0], [0]>} : vector<2x8x8xbf16>, vector<2x8x8xbf16>, vector<2x8x8xf32> -> vector<2x8x8xf32>
    "tpu.trace_stop"() : () -> ()
    %215 = tpu.concatenate %157, %176, %195, %214 in 2 : vector<2x8x8xf32>, vector<2x8x8xf32>, vector<2x8x8xf32>, vector<2x8x8xf32> -> vector<2x8x32xf32>
    %216 = vector.shape_cast %215 : vector<2x8x32xf32> to vector<16x32xf32>
    %217 = arith.truncf %216 : vector<16x32xf32> to vector<16x32xbf16>
    %c0_77 = arith.constant 0 : index
    %c0_78 = arith.constant 0 : index
    %218 = vector.load %arg38[%c0_77, %c0_78] : memref<32x32xbf16, #tpu.memory_space<vmem>>, vector<32x32xbf16>
    %cst_79 = arith.constant dense<0.000000e+00> : vector<16x32xf32>
    %219 = tpu.matmul %217, %218, %cst_79 {dimension_numbers = #tpu.dot_dimension_numbers<[1], [0], [0], [1], [0, 0, 1, 1], [], []>} : vector<16x32xbf16>, vector<32x32xbf16>, vector<16x32xf32> -> vector<16x32xf32>
    %c0_80 = arith.constant 0 : index
    %c0_81 = arith.constant 0 : index
    %220 = vector.load %arg36[%c0_80, %c0_81] : memref<1x32xf32, #tpu.memory_space<vmem>>, vector<1x32xf32>
    %221 = vector.broadcast %220 : vector<1x32xf32> to vector<16x32xf32>
    %222 = arith.addf %219, %221 : vector<16x32xf32>
    %223 = arith.addf %124, %222 : vector<16x32xf32>
    %cst_82 = arith.constant dense<0.000000e+00> : vector<16xf32>
    %224 = vector.multi_reduction <add>, %223, %cst_82 [1] : vector<16x32xf32> to vector<16xf32>
    %225 = vector.shape_cast %224 : vector<16xf32> to vector<16x1xf32>
    %cst_83 = arith.constant 3.200000e+01 : f32
    %226 = vector.broadcast %cst_83 : f32 to vector<16x1xf32>
    %227 = arith.divf %225, %226 : vector<16x1xf32>
    %228 = vector.broadcast %227 : vector<16x1xf32> to vector<16x32xf32>
    %229 = arith.subf %223, %228 : vector<16x32xf32>
    %230 = arith.mulf %229, %229 : vector<16x32xf32>
    %cst_84 = arith.constant dense<0.000000e+00> : vector<16xf32>
    %231 = vector.multi_reduction <add>, %230, %cst_84 [1] : vector<16x32xf32> to vector<16xf32>
    %232 = vector.shape_cast %231 : vector<16xf32> to vector<16x1xf32>
    %cst_85 = arith.constant 3.200000e+01 : f32
    %233 = vector.broadcast %cst_85 : f32 to vector<16x1xf32>
    %234 = arith.divf %232, %233 : vector<16x1xf32>
    %cst_86 = arith.constant 9.99999974E-6 : f32
    %235 = vector.broadcast %cst_86 : f32 to vector<16x1xf32>
    %236 = arith.addf %234, %235 : vector<16x1xf32>
    %237 = math.rsqrt %236 : vector<16x1xf32>
    %238 = vector.broadcast %237 : vector<16x1xf32> to vector<16x32xf32>
    %239 = arith.mulf %229, %238 : vector<16x32xf32>
    %c0_87 = arith.constant 0 : index
    %c0_88 = arith.constant 0 : index
    %240 = vector.load %arg45[%c0_87, %c0_88] : memref<1x32xf32, #tpu.memory_space<vmem>>, vector<1x32xf32>
    %241 = vector.broadcast %240 : vector<1x32xf32> to vector<16x32xf32>
    %242 = arith.mulf %239, %241 : vector<16x32xf32>
    %c0_89 = arith.constant 0 : index
    %c0_90 = arith.constant 0 : index
    %243 = vector.load %arg44[%c0_89, %c0_90] : memref<1x32xf32, #tpu.memory_space<vmem>>, vector<1x32xf32>
    %244 = vector.broadcast %243 : vector<1x32xf32> to vector<16x32xf32>
    %245 = arith.addf %242, %244 : vector<16x32xf32>
    %246 = arith.truncf %245 : vector<16x32xf32> to vector<16x32xbf16>
    %c0_91 = arith.constant 0 : index
    %c0_92 = arith.constant 0 : index
    %247 = vector.load %arg41[%c0_91, %c0_92] : memref<32x64xbf16, #tpu.memory_space<vmem>>, vector<32x64xbf16>
    %cst_93 = arith.constant dense<0.000000e+00> : vector<16x64xf32>
    %248 = tpu.matmul %246, %247, %cst_93 {dimension_numbers = #tpu.dot_dimension_numbers<[1], [0], [0], [1], [0, 0, 1, 1], [], []>} : vector<16x32xbf16>, vector<32x64xbf16>, vector<16x64xf32> -> vector<16x64xf32>
    %c0_94 = arith.constant 0 : index
    %c0_95 = arith.constant 0 : index
    %249 = vector.load %arg40[%c0_94, %c0_95] : memref<1x64xf32, #tpu.memory_space<vmem>>, vector<1x64xf32>
    %250 = vector.broadcast %249 : vector<1x64xf32> to vector<16x64xf32>
    %251 = arith.addf %248, %250 : vector<16x64xf32>
    %cst_96 = arith.constant 0.000000e+00 : f32
    %252 = vector.broadcast %cst_96 : f32 to vector<16x64xf32>
    %253 = arith.maximumf %251, %252 : vector<16x64xf32>
    %254 = arith.truncf %253 : vector<16x64xf32> to vector<16x64xbf16>
    %c0_97 = arith.constant 0 : index
    %c0_98 = arith.constant 0 : index
    %255 = vector.load %arg43[%c0_97, %c0_98] : memref<64x32xbf16, #tpu.memory_space<vmem>>, vector<64x32xbf16>
    %cst_99 = arith.constant dense<0.000000e+00> : vector<16x32xf32>
    %256 = tpu.matmul %254, %255, %cst_99 {dimension_numbers = #tpu.dot_dimension_numbers<[1], [0], [0], [1], [0, 0, 1, 1], [], []>} : vector<16x64xbf16>, vector<64x32xbf16>, vector<16x32xf32> -> vector<16x32xf32>
    %c0_100 = arith.constant 0 : index
    %c0_101 = arith.constant 0 : index
    %257 = vector.load %arg42[%c0_100, %c0_101] : memref<1x32xf32, #tpu.memory_space<vmem>>, vector<1x32xf32>
    %258 = vector.broadcast %257 : vector<1x32xf32> to vector<16x32xf32>
    %259 = arith.addf %256, %258 : vector<16x32xf32>
    %260 = arith.addf %245, %259 : vector<16x32xf32>
    %cst_102 = arith.constant dense<0.000000e+00> : vector<16xf32>
    %261 = vector.multi_reduction <add>, %260, %cst_102 [1] : vector<16x32xf32> to vector<16xf32>
    %262 = vector.shape_cast %261 : vector<16xf32> to vector<16x1xf32>
    %cst_103 = arith.constant 3.200000e+01 : f32
    %263 = vector.broadcast %cst_103 : f32 to vector<16x1xf32>
    %264 = arith.divf %262, %263 : vector<16x1xf32>
    %265 = vector.broadcast %264 : vector<16x1xf32> to vector<16x32xf32>
    %266 = arith.subf %260, %265 : vector<16x32xf32>
    %267 = arith.mulf %266, %266 : vector<16x32xf32>
    %cst_104 = arith.constant dense<0.000000e+00> : vector<16xf32>
    %268 = vector.multi_reduction <add>, %267, %cst_104 [1] : vector<16x32xf32> to vector<16xf32>
    %269 = vector.shape_cast %268 : vector<16xf32> to vector<16x1xf32>
    %cst_105 = arith.constant 3.200000e+01 : f32
    %270 = vector.broadcast %cst_105 : f32 to vector<16x1xf32>
    %271 = arith.divf %269, %270 : vector<16x1xf32>
    %cst_106 = arith.constant 9.99999974E-6 : f32
    %272 = vector.broadcast %cst_106 : f32 to vector<16x1xf32>
    %273 = arith.addf %271, %272 : vector<16x1xf32>
    %274 = math.rsqrt %273 : vector<16x1xf32>
    %275 = vector.broadcast %274 : vector<16x1xf32> to vector<16x32xf32>
    %276 = arith.mulf %266, %275 : vector<16x32xf32>
    %c0_107 = arith.constant 0 : index
    %c0_108 = arith.constant 0 : index
    %277 = vector.load %arg47[%c0_107, %c0_108] : memref<1x32xf32, #tpu.memory_space<vmem>>, vector<1x32xf32>
    %278 = vector.broadcast %277 : vector<1x32xf32> to vector<16x32xf32>
    %279 = arith.mulf %276, %278 : vector<16x32xf32>
    %c0_109 = arith.constant 0 : index
    %c0_110 = arith.constant 0 : index
    %280 = vector.load %arg46[%c0_109, %c0_110] : memref<1x32xf32, #tpu.memory_space<vmem>>, vector<1x32xf32>
    %281 = vector.broadcast %280 : vector<1x32xf32> to vector<16x32xf32>
    %282 = arith.addf %279, %281 : vector<16x32xf32>
    %cst_111 = arith.constant dense<0.000000e+00> : vector<16xf32>
    %283 = vector.multi_reduction <add>, %282, %cst_111 [1] : vector<16x32xf32> to vector<16xf32>
    %284 = vector.shape_cast %283 : vector<16xf32> to vector<16x1xf32>
    %cst_112 = arith.constant 3.200000e+01 : f32
    %285 = vector.broadcast %cst_112 : f32 to vector<16x1xf32>
    %286 = arith.divf %284, %285 : vector<16x1xf32>
    %287 = vector.broadcast %286 : vector<16x1xf32> to vector<16x32xf32>
    %288 = arith.subf %282, %287 : vector<16x32xf32>
    %289 = arith.mulf %288, %288 : vector<16x32xf32>
    %cst_113 = arith.constant dense<0.000000e+00> : vector<16xf32>
    %290 = vector.multi_reduction <add>, %289, %cst_113 [1] : vector<16x32xf32> to vector<16xf32>
    %291 = vector.shape_cast %290 : vector<16xf32> to vector<16x1xf32>
    %cst_114 = arith.constant 3.200000e+01 : f32
    %292 = vector.broadcast %cst_114 : f32 to vector<16x1xf32>
    %293 = arith.divf %291, %292 : vector<16x1xf32>
    %cst_115 = arith.constant 9.99999974E-6 : f32
    %294 = vector.broadcast %cst_115 : f32 to vector<16x1xf32>
    %295 = arith.addf %293, %294 : vector<16x1xf32>
    %296 = math.rsqrt %295 : vector<16x1xf32>
    %297 = vector.broadcast %296 : vector<16x1xf32> to vector<16x32xf32>
    %298 = arith.mulf %288, %297 : vector<16x32xf32>
    %c0_116 = arith.constant 0 : index
    %c0_117 = arith.constant 0 : index
    %299 = vector.load %arg49[%c0_116, %c0_117] : memref<1x32xf32, #tpu.memory_space<vmem>>, vector<1x32xf32>
    %300 = vector.broadcast %299 : vector<1x32xf32> to vector<16x32xf32>
    %301 = arith.mulf %298, %300 : vector<16x32xf32>
    %c0_118 = arith.constant 0 : index
    %c0_119 = arith.constant 0 : index
    %302 = vector.load %arg48[%c0_118, %c0_119] : memref<1x32xf32, #tpu.memory_space<vmem>>, vector<1x32xf32>
    %303 = vector.broadcast %302 : vector<1x32xf32> to vector<16x32xf32>
    %304 = arith.addf %301, %303 : vector<16x32xf32>
    %305 = arith.truncf %124 : vector<16x32xf32> to vector<16x32xbf16>
    %c0_120 = arith.constant 0 : index
    %c0_121 = arith.constant 0 : index
    %306 = vector.load %arg33[%c0_120, %c0_121] : memref<32x96xbf16, #tpu.memory_space<vmem>>, vector<32x96xbf16>
    %cst_122 = arith.constant dense<0.000000e+00> : vector<16x96xf32>
    %307 = tpu.matmul %305, %306, %cst_122 {dimension_numbers = #tpu.dot_dimension_numbers<[1], [0], [0], [1], [0, 0, 1, 1], [], []>} : vector<16x32xbf16>, vector<32x96xbf16>, vector<16x96xf32> -> vector<16x96xf32>
    %c0_123 = arith.constant 0 : index
    %c0_124 = arith.constant 0 : index
    %308 = vector.load %arg31[%c0_123, %c0_124] : memref<1x96xf32, #tpu.memory_space<vmem>>, vector<1x96xf32>
    %309 = vector.broadcast %308 : vector<1x96xf32> to vector<16x96xf32>
    %310 = arith.addf %307, %309 : vector<16x96xf32>
    %311 = vector.extract_strided_slice %310 {offsets = [0, 0], sizes = [16, 32], strides = [1, 1]} : vector<16x96xf32> to vector<16x32xf32>
    %312 = vector.extract_strided_slice %310 {offsets = [0, 32], sizes = [16, 32], strides = [1, 1]} : vector<16x96xf32> to vector<16x32xf32>
    %313 = vector.extract_strided_slice %310 {offsets = [0, 64], sizes = [16, 32], strides = [1, 1]} : vector<16x96xf32> to vector<16x32xf32>
    %cst_125 = arith.constant 0.353553385 : f32
    %314 = vector.broadcast %cst_125 : f32 to vector<16x32xf32>
    %315 = arith.mulf %311, %314 : vector<16x32xf32>
    %316 = vector.shape_cast %315 : vector<16x32xf32> to vector<2x8x32xf32>
    %317 = vector.shape_cast %312 : vector<16x32xf32> to vector<2x8x32xf32>
    %318 = vector.shape_cast %313 : vector<16x32xf32> to vector<2x8x32xf32>
    %319 = vector.extract_strided_slice %316 {offsets = [0, 0, 0], sizes = [2, 8, 8], strides = [1, 1, 1]} : vector<2x8x32xf32> to vector<2x8x8xf32>
    %320 = arith.truncf %319 : vector<2x8x8xf32> to vector<2x8x8xbf16>
    %321 = vector.extract_strided_slice %317 {offsets = [0, 0, 0], sizes = [2, 8, 8], strides = [1, 1, 1]} : vector<2x8x32xf32> to vector<2x8x8xf32>
    %322 = arith.truncf %321 : vector<2x8x8xf32> to vector<2x8x8xbf16>
    %323 = vector.extract_strided_slice %318 {offsets = [0, 0, 0], sizes = [2, 8, 8], strides = [1, 1, 1]} : vector<2x8x32xf32> to vector<2x8x8xf32>
    %324 = arith.truncf %323 : vector<2x8x8xf32> to vector<2x8x8xbf16>
    "tpu.trace_start"() <{level = 10 : i32, message = "bqd,bkd->bqk"}> : () -> ()
    %cst_126 = arith.constant dense<0.000000e+00> : vector<2x8x8xf32>
    %325 = tpu.matmul %320, %322, %cst_126 {dimension_numbers = #tpu.dot_dimension_numbers<[2], [2], [1], [1], [0, 0, 0, 1, 1, 1], [0], [0]>} : vector<2x8x8xbf16>, vector<2x8x8xbf16>, vector<2x8x8xf32> -> vector<2x8x8xf32>
    "tpu.trace_stop"() : () -> ()
    %cst_127 = arith.constant dense<0xFF800000> : vector<2x8xf32>
    %326 = vector.multi_reduction <maximumf>, %325, %cst_127 [2] : vector<2x8x8xf32> to vector<2x8xf32>
    %327 = vector.shape_cast %326 : vector<2x8xf32> to vector<2x8x1xf32>
    %328 = vector.broadcast %327 : vector<2x8x1xf32> to vector<2x8x8xf32>
    %329 = arith.subf %325, %328 : vector<2x8x8xf32>
    %330 = math.exp %329 : vector<2x8x8xf32>
    %cst_128 = arith.constant dense<0.000000e+00> : vector<2x8xf32>
    %331 = vector.multi_reduction <add>, %330, %cst_128 [2] : vector<2x8x8xf32> to vector<2x8xf32>
    %332 = vector.shape_cast %331 : vector<2x8xf32> to vector<2x8x1xf32>
    %333 = tpu.reciprocal %332 {approx = true} : vector<2x8x1xf32> -> vector<2x8x1xf32>
    %334 = vector.broadcast %333 : vector<2x8x1xf32> to vector<2x8x8xf32>
    %335 = arith.mulf %330, %334 : vector<2x8x8xf32>
    %336 = arith.truncf %335 : vector<2x8x8xf32> to vector<2x8x8xbf16>
    "tpu.trace_start"() <{level = 10 : i32, message = "bqk,bkd->bqd"}> : () -> ()
    %cst_129 = arith.constant dense<0.000000e+00> : vector<2x8x8xf32>
    %337 = tpu.matmul %336, %324, %cst_129 {dimension_numbers = #tpu.dot_dimension_numbers<[2], [1], [1], [2], [0, 0, 0, 1, 1, 2], [0], [0]>} : vector<2x8x8xbf16>, vector<2x8x8xbf16>, vector<2x8x8xf32> -> vector<2x8x8xf32>
    "tpu.trace_stop"() : () -> ()
    %338 = vector.extract_strided_slice %316 {offsets = [0, 0, 8], sizes = [2, 8, 8], strides = [1, 1, 1]} : vector<2x8x32xf32> to vector<2x8x8xf32>
    %339 = arith.truncf %338 : vector<2x8x8xf32> to vector<2x8x8xbf16>
    %340 = vector.extract_strided_slice %317 {offsets = [0, 0, 8], sizes = [2, 8, 8], strides = [1, 1, 1]} : vector<2x8x32xf32> to vector<2x8x8xf32>
    %341 = arith.truncf %340 : vector<2x8x8xf32> to vector<2x8x8xbf16>
    %342 = vector.extract_strided_slice %318 {offsets = [0, 0, 8], sizes = [2, 8, 8], strides = [1, 1, 1]} : vector<2x8x32xf32> to vector<2x8x8xf32>
    %343 = arith.truncf %342 : vector<2x8x8xf32> to vector<2x8x8xbf16>
    "tpu.trace_start"() <{level = 10 : i32, message = "bqd,bkd->bqk"}> : () -> ()
    %cst_130 = arith.constant dense<0.000000e+00> : vector<2x8x8xf32>
    %344 = tpu.matmul %339, %341, %cst_130 {dimension_numbers = #tpu.dot_dimension_numbers<[2], [2], [1], [1], [0, 0, 0, 1, 1, 1], [0], [0]>} : vector<2x8x8xbf16>, vector<2x8x8xbf16>, vector<2x8x8xf32> -> vector<2x8x8xf32>
    "tpu.trace_stop"() : () -> ()
    %cst_131 = arith.constant dense<0xFF800000> : vector<2x8xf32>
    %345 = vector.multi_reduction <maximumf>, %344, %cst_131 [2] : vector<2x8x8xf32> to vector<2x8xf32>
    %346 = vector.shape_cast %345 : vector<2x8xf32> to vector<2x8x1xf32>
    %347 = vector.broadcast %346 : vector<2x8x1xf32> to vector<2x8x8xf32>
    %348 = arith.subf %344, %347 : vector<2x8x8xf32>
    %349 = math.exp %348 : vector<2x8x8xf32>
    %cst_132 = arith.constant dense<0.000000e+00> : vector<2x8xf32>
    %350 = vector.multi_reduction <add>, %349, %cst_132 [2] : vector<2x8x8xf32> to vector<2x8xf32>
    %351 = vector.shape_cast %350 : vector<2x8xf32> to vector<2x8x1xf32>
    %352 = tpu.reciprocal %351 {approx = true} : vector<2x8x1xf32> -> vector<2x8x1xf32>
    %353 = vector.broadcast %352 : vector<2x8x1xf32> to vector<2x8x8xf32>
    %354 = arith.mulf %349, %353 : vector<2x8x8xf32>
    %355 = arith.truncf %354 : vector<2x8x8xf32> to vector<2x8x8xbf16>
    "tpu.trace_start"() <{level = 10 : i32, message = "bqk,bkd->bqd"}> : () -> ()
    %cst_133 = arith.constant dense<0.000000e+00> : vector<2x8x8xf32>
    %356 = tpu.matmul %355, %343, %cst_133 {dimension_numbers = #tpu.dot_dimension_numbers<[2], [1], [1], [2], [0, 0, 0, 1, 1, 2], [0], [0]>} : vector<2x8x8xbf16>, vector<2x8x8xbf16>, vector<2x8x8xf32> -> vector<2x8x8xf32>
    "tpu.trace_stop"() : () -> ()
    %357 = vector.extract_strided_slice %316 {offsets = [0, 0, 16], sizes = [2, 8, 8], strides = [1, 1, 1]} : vector<2x8x32xf32> to vector<2x8x8xf32>
    %358 = arith.truncf %357 : vector<2x8x8xf32> to vector<2x8x8xbf16>
    %359 = vector.extract_strided_slice %317 {offsets = [0, 0, 16], sizes = [2, 8, 8], strides = [1, 1, 1]} : vector<2x8x32xf32> to vector<2x8x8xf32>
    %360 = arith.truncf %359 : vector<2x8x8xf32> to vector<2x8x8xbf16>
    %361 = vector.extract_strided_slice %318 {offsets = [0, 0, 16], sizes = [2, 8, 8], strides = [1, 1, 1]} : vector<2x8x32xf32> to vector<2x8x8xf32>
    %362 = arith.truncf %361 : vector<2x8x8xf32> to vector<2x8x8xbf16>
    "tpu.trace_start"() <{level = 10 : i32, message = "bqd,bkd->bqk"}> : () -> ()
    %cst_134 = arith.constant dense<0.000000e+00> : vector<2x8x8xf32>
    %363 = tpu.matmul %358, %360, %cst_134 {dimension_numbers = #tpu.dot_dimension_numbers<[2], [2], [1], [1], [0, 0, 0, 1, 1, 1], [0], [0]>} : vector<2x8x8xbf16>, vector<2x8x8xbf16>, vector<2x8x8xf32> -> vector<2x8x8xf32>
    "tpu.trace_stop"() : () -> ()
    %cst_135 = arith.constant dense<0xFF800000> : vector<2x8xf32>
    %364 = vector.multi_reduction <maximumf>, %363, %cst_135 [2] : vector<2x8x8xf32> to vector<2x8xf32>
    %365 = vector.shape_cast %364 : vector<2x8xf32> to vector<2x8x1xf32>
    %366 = vector.broadcast %365 : vector<2x8x1xf32> to vector<2x8x8xf32>
    %367 = arith.subf %363, %366 : vector<2x8x8xf32>
    %368 = math.exp %367 : vector<2x8x8xf32>
    %cst_136 = arith.constant dense<0.000000e+00> : vector<2x8xf32>
    %369 = vector.multi_reduction <add>, %368, %cst_136 [2] : vector<2x8x8xf32> to vector<2x8xf32>
    %370 = vector.shape_cast %369 : vector<2x8xf32> to vector<2x8x1xf32>
    %371 = tpu.reciprocal %370 {approx = true} : vector<2x8x1xf32> -> vector<2x8x1xf32>
    %372 = vector.broadcast %371 : vector<2x8x1xf32> to vector<2x8x8xf32>
    %373 = arith.mulf %368, %372 : vector<2x8x8xf32>
    %374 = arith.truncf %373 : vector<2x8x8xf32> to vector<2x8x8xbf16>
    "tpu.trace_start"() <{level = 10 : i32, message = "bqk,bkd->bqd"}> : () -> ()
    %cst_137 = arith.constant dense<0.000000e+00> : vector<2x8x8xf32>
    %375 = tpu.matmul %374, %362, %cst_137 {dimension_numbers = #tpu.dot_dimension_numbers<[2], [1], [1], [2], [0, 0, 0, 1, 1, 2], [0], [0]>} : vector<2x8x8xbf16>, vector<2x8x8xbf16>, vector<2x8x8xf32> -> vector<2x8x8xf32>
    "tpu.trace_stop"() : () -> ()
    %376 = vector.extract_strided_slice %316 {offsets = [0, 0, 24], sizes = [2, 8, 8], strides = [1, 1, 1]} : vector<2x8x32xf32> to vector<2x8x8xf32>
    %377 = arith.truncf %376 : vector<2x8x8xf32> to vector<2x8x8xbf16>
    %378 = vector.extract_strided_slice %317 {offsets = [0, 0, 24], sizes = [2, 8, 8], strides = [1, 1, 1]} : vector<2x8x32xf32> to vector<2x8x8xf32>
    %379 = arith.truncf %378 : vector<2x8x8xf32> to vector<2x8x8xbf16>
    %380 = vector.extract_strided_slice %318 {offsets = [0, 0, 24], sizes = [2, 8, 8], strides = [1, 1, 1]} : vector<2x8x32xf32> to vector<2x8x8xf32>
    %381 = arith.truncf %380 : vector<2x8x8xf32> to vector<2x8x8xbf16>
    "tpu.trace_start"() <{level = 10 : i32, message = "bqd,bkd->bqk"}> : () -> ()
    %cst_138 = arith.constant dense<0.000000e+00> : vector<2x8x8xf32>
    %382 = tpu.matmul %377, %379, %cst_138 {dimension_numbers = #tpu.dot_dimension_numbers<[2], [2], [1], [1], [0, 0, 0, 1, 1, 1], [0], [0]>} : vector<2x8x8xbf16>, vector<2x8x8xbf16>, vector<2x8x8xf32> -> vector<2x8x8xf32>
    "tpu.trace_stop"() : () -> ()
    %cst_139 = arith.constant dense<0xFF800000> : vector<2x8xf32>
    %383 = vector.multi_reduction <maximumf>, %382, %cst_139 [2] : vector<2x8x8xf32> to vector<2x8xf32>
    %384 = vector.shape_cast %383 : vector<2x8xf32> to vector<2x8x1xf32>
    %385 = vector.broadcast %384 : vector<2x8x1xf32> to vector<2x8x8xf32>
    %386 = arith.subf %382, %385 : vector<2x8x8xf32>
    %387 = math.exp %386 : vector<2x8x8xf32>
    %cst_140 = arith.constant dense<0.000000e+00> : vector<2x8xf32>
    %388 = vector.multi_reduction <add>, %387, %cst_140 [2] : vector<2x8x8xf32> to vector<2x8xf32>
    %389 = vector.shape_cast %388 : vector<2x8xf32> to vector<2x8x1xf32>
    %390 = tpu.reciprocal %389 {approx = true} : vector<2x8x1xf32> -> vector<2x8x1xf32>
    %391 = vector.broadcast %390 : vector<2x8x1xf32> to vector<2x8x8xf32>
    %392 = arith.mulf %387, %391 : vector<2x8x8xf32>
    %393 = arith.truncf %392 : vector<2x8x8xf32> to vector<2x8x8xbf16>
    "tpu.trace_start"() <{level = 10 : i32, message = "bqk,bkd->bqd"}> : () -> ()
    %cst_141 = arith.constant dense<0.000000e+00> : vector<2x8x8xf32>
    %394 = tpu.matmul %393, %381, %cst_141 {dimension_numbers = #tpu.dot_dimension_numbers<[2], [1], [1], [2], [0, 0, 0, 1, 1, 2], [0], [0]>} : vector<2x8x8xbf16>, vector<2x8x8xbf16>, vector<2x8x8xf32> -> vector<2x8x8xf32>
    "tpu.trace_stop"() : () -> ()
    %395 = tpu.concatenate %337, %356, %375, %394 in 2 : vector<2x8x8xf32>, vector<2x8x8xf32>, vector<2x8x8xf32>, vector<2x8x8xf32> -> vector<2x8x32xf32>
    %396 = vector.shape_cast %395 : vector<2x8x32xf32> to vector<16x32xf32>
    %397 = arith.truncf %396 : vector<16x32xf32> to vector<16x32xbf16>
    %c0_142 = arith.constant 0 : index
    %c0_143 = arith.constant 0 : index
    %398 = vector.load %arg32[%c0_142, %c0_143] : memref<32x32xbf16, #tpu.memory_space<vmem>>, vector<32x32xbf16>
    %cst_144 = arith.constant dense<0.000000e+00> : vector<16x32xf32>
    %399 = tpu.matmul %397, %398, %cst_144 {dimension_numbers = #tpu.dot_dimension_numbers<[1], [0], [0], [1], [0, 0, 1, 1], [], []>} : vector<16x32xbf16>, vector<32x32xbf16>, vector<16x32xf32> -> vector<16x32xf32>
    %c0_145 = arith.constant 0 : index
    %c0_146 = arith.constant 0 : index
    %400 = vector.load %arg30[%c0_145, %c0_146] : memref<1x32xf32, #tpu.memory_space<vmem>>, vector<1x32xf32>
    %401 = vector.broadcast %400 : vector<1x32xf32> to vector<16x32xf32>
    %402 = arith.addf %399, %401 : vector<16x32xf32>
    %403 = arith.addf %124, %402 : vector<16x32xf32>
    %cst_147 = arith.constant dense<0.000000e+00> : vector<16xf32>
    %404 = vector.multi_reduction <add>, %403, %cst_147 [1] : vector<16x32xf32> to vector<16xf32>
    %405 = vector.shape_cast %404 : vector<16xf32> to vector<16x1xf32>
    %cst_148 = arith.constant 3.200000e+01 : f32
    %406 = vector.broadcast %cst_148 : f32 to vector<16x1xf32>
    %407 = arith.divf %405, %406 : vector<16x1xf32>
    %408 = vector.broadcast %407 : vector<16x1xf32> to vector<16x32xf32>
    %409 = arith.subf %403, %408 : vector<16x32xf32>
    %410 = arith.mulf %409, %409 : vector<16x32xf32>
    %cst_149 = arith.constant dense<0.000000e+00> : vector<16xf32>
    %411 = vector.multi_reduction <add>, %410, %cst_149 [1] : vector<16x32xf32> to vector<16xf32>
    %412 = vector.shape_cast %411 : vector<16xf32> to vector<16x1xf32>
    %cst_150 = arith.constant 3.200000e+01 : f32
    %413 = vector.broadcast %cst_150 : f32 to vector<16x1xf32>
    %414 = arith.divf %412, %413 : vector<16x1xf32>
    %cst_151 = arith.constant 9.99999974E-6 : f32
    %415 = vector.broadcast %cst_151 : f32 to vector<16x1xf32>
    %416 = arith.addf %414, %415 : vector<16x1xf32>
    %417 = math.rsqrt %416 : vector<16x1xf32>
    %418 = vector.broadcast %417 : vector<16x1xf32> to vector<16x32xf32>
    %419 = arith.mulf %409, %418 : vector<16x32xf32>
    %c0_152 = arith.constant 0 : index
    %c0_153 = arith.constant 0 : index
    %420 = vector.load %arg25[%c0_152, %c0_153] : memref<1x32xf32, #tpu.memory_space<vmem>>, vector<1x32xf32>
    %421 = vector.broadcast %420 : vector<1x32xf32> to vector<16x32xf32>
    %422 = arith.mulf %419, %421 : vector<16x32xf32>
    %c0_154 = arith.constant 0 : index
    %c0_155 = arith.constant 0 : index
    %423 = vector.load %arg24[%c0_154, %c0_155] : memref<1x32xf32, #tpu.memory_space<vmem>>, vector<1x32xf32>
    %424 = vector.broadcast %423 : vector<1x32xf32> to vector<16x32xf32>
    %425 = arith.addf %422, %424 : vector<16x32xf32>
    %426 = arith.truncf %425 : vector<16x32xf32> to vector<16x32xbf16>
    %c0_156 = arith.constant 0 : index
    %c0_157 = arith.constant 0 : index
    %427 = vector.load %arg19[%c0_156, %c0_157] : memref<32x32xbf16, #tpu.memory_space<vmem>>, vector<32x32xbf16>
    %cst_158 = arith.constant dense<0.000000e+00> : vector<16x32xf32>
    %428 = tpu.matmul %426, %427, %cst_158 {dimension_numbers = #tpu.dot_dimension_numbers<[1], [0], [0], [1], [0, 0, 1, 1], [], []>} : vector<16x32xbf16>, vector<32x32xbf16>, vector<16x32xf32> -> vector<16x32xf32>
    %c0_159 = arith.constant 0 : index
    %c0_160 = arith.constant 0 : index
    %429 = vector.load %arg16[%c0_159, %c0_160] : memref<1x32xf32, #tpu.memory_space<vmem>>, vector<1x32xf32>
    %430 = vector.broadcast %429 : vector<1x32xf32> to vector<16x32xf32>
    %431 = arith.addf %428, %430 : vector<16x32xf32>
    %432 = arith.truncf %304 : vector<16x32xf32> to vector<16x32xbf16>
    %c0_161 = arith.constant 0 : index
    %c0_162 = arith.constant 0 : index
    %433 = vector.load %arg17[%c0_161, %c0_162] : memref<32x64xbf16, #tpu.memory_space<vmem>>, vector<32x64xbf16>
    %cst_163 = arith.constant dense<0.000000e+00> : vector<16x64xf32>
    %434 = tpu.matmul %432, %433, %cst_163 {dimension_numbers = #tpu.dot_dimension_numbers<[1], [0], [0], [1], [0, 0, 1, 1], [], []>} : vector<16x32xbf16>, vector<32x64xbf16>, vector<16x64xf32> -> vector<16x64xf32>
    %c0_164 = arith.constant 0 : index
    %c0_165 = arith.constant 0 : index
    %435 = vector.load %arg14[%c0_164, %c0_165] : memref<1x64xf32, #tpu.memory_space<vmem>>, vector<1x64xf32>
    %436 = vector.broadcast %435 : vector<1x64xf32> to vector<16x64xf32>
    %437 = arith.addf %434, %436 : vector<16x64xf32>
    %438 = vector.extract_strided_slice %437 {offsets = [0, 0], sizes = [16, 32], strides = [1, 1]} : vector<16x64xf32> to vector<16x32xf32>
    %439 = vector.extract_strided_slice %437 {offsets = [0, 32], sizes = [16, 32], strides = [1, 1]} : vector<16x64xf32> to vector<16x32xf32>
    %cst_166 = arith.constant 0.353553385 : f32
    %440 = vector.broadcast %cst_166 : f32 to vector<16x32xf32>
    %441 = arith.mulf %431, %440 : vector<16x32xf32>
    %442 = vector.shape_cast %441 : vector<16x32xf32> to vector<2x8x32xf32>
    %443 = vector.shape_cast %438 : vector<16x32xf32> to vector<2x8x32xf32>
    %444 = vector.shape_cast %439 : vector<16x32xf32> to vector<2x8x32xf32>
    %445 = vector.extract_strided_slice %442 {offsets = [0, 0, 0], sizes = [2, 8, 8], strides = [1, 1, 1]} : vector<2x8x32xf32> to vector<2x8x8xf32>
    %446 = arith.truncf %445 : vector<2x8x8xf32> to vector<2x8x8xbf16>
    %447 = vector.extract_strided_slice %443 {offsets = [0, 0, 0], sizes = [2, 8, 8], strides = [1, 1, 1]} : vector<2x8x32xf32> to vector<2x8x8xf32>
    %448 = arith.truncf %447 : vector<2x8x8xf32> to vector<2x8x8xbf16>
    %449 = vector.extract_strided_slice %444 {offsets = [0, 0, 0], sizes = [2, 8, 8], strides = [1, 1, 1]} : vector<2x8x32xf32> to vector<2x8x8xf32>
    %450 = arith.truncf %449 : vector<2x8x8xf32> to vector<2x8x8xbf16>
    "tpu.trace_start"() <{level = 10 : i32, message = "bqd,bkd->bqk"}> : () -> ()
    %cst_167 = arith.constant dense<0.000000e+00> : vector<2x8x8xf32>
    %451 = tpu.matmul %446, %448, %cst_167 {dimension_numbers = #tpu.dot_dimension_numbers<[2], [2], [1], [1], [0, 0, 0, 1, 1, 1], [0], [0]>} : vector<2x8x8xbf16>, vector<2x8x8xbf16>, vector<2x8x8xf32> -> vector<2x8x8xf32>
    "tpu.trace_stop"() : () -> ()
    %cst_168 = arith.constant dense<0xFF800000> : vector<2x8xf32>
    %452 = vector.multi_reduction <maximumf>, %451, %cst_168 [2] : vector<2x8x8xf32> to vector<2x8xf32>
    %453 = vector.shape_cast %452 : vector<2x8xf32> to vector<2x8x1xf32>
    %454 = vector.broadcast %453 : vector<2x8x1xf32> to vector<2x8x8xf32>
    %455 = arith.subf %451, %454 : vector<2x8x8xf32>
    %456 = math.exp %455 : vector<2x8x8xf32>
    %cst_169 = arith.constant dense<0.000000e+00> : vector<2x8xf32>
    %457 = vector.multi_reduction <add>, %456, %cst_169 [2] : vector<2x8x8xf32> to vector<2x8xf32>
    %458 = vector.shape_cast %457 : vector<2x8xf32> to vector<2x8x1xf32>
    %459 = tpu.reciprocal %458 {approx = true} : vector<2x8x1xf32> -> vector<2x8x1xf32>
    %460 = vector.broadcast %459 : vector<2x8x1xf32> to vector<2x8x8xf32>
    %461 = arith.mulf %456, %460 : vector<2x8x8xf32>
    %462 = arith.truncf %461 : vector<2x8x8xf32> to vector<2x8x8xbf16>
    "tpu.trace_start"() <{level = 10 : i32, message = "bqk,bkd->bqd"}> : () -> ()
    %cst_170 = arith.constant dense<0.000000e+00> : vector<2x8x8xf32>
    %463 = tpu.matmul %462, %450, %cst_170 {dimension_numbers = #tpu.dot_dimension_numbers<[2], [1], [1], [2], [0, 0, 0, 1, 1, 2], [0], [0]>} : vector<2x8x8xbf16>, vector<2x8x8xbf16>, vector<2x8x8xf32> -> vector<2x8x8xf32>
    "tpu.trace_stop"() : () -> ()
    %464 = vector.extract_strided_slice %442 {offsets = [0, 0, 8], sizes = [2, 8, 8], strides = [1, 1, 1]} : vector<2x8x32xf32> to vector<2x8x8xf32>
    %465 = arith.truncf %464 : vector<2x8x8xf32> to vector<2x8x8xbf16>
    %466 = vector.extract_strided_slice %443 {offsets = [0, 0, 8], sizes = [2, 8, 8], strides = [1, 1, 1]} : vector<2x8x32xf32> to vector<2x8x8xf32>
    %467 = arith.truncf %466 : vector<2x8x8xf32> to vector<2x8x8xbf16>
    %468 = vector.extract_strided_slice %444 {offsets = [0, 0, 8], sizes = [2, 8, 8], strides = [1, 1, 1]} : vector<2x8x32xf32> to vector<2x8x8xf32>
    %469 = arith.truncf %468 : vector<2x8x8xf32> to vector<2x8x8xbf16>
    "tpu.trace_start"() <{level = 10 : i32, message = "bqd,bkd->bqk"}> : () -> ()
    %cst_171 = arith.constant dense<0.000000e+00> : vector<2x8x8xf32>
    %470 = tpu.matmul %465, %467, %cst_171 {dimension_numbers = #tpu.dot_dimension_numbers<[2], [2], [1], [1], [0, 0, 0, 1, 1, 1], [0], [0]>} : vector<2x8x8xbf16>, vector<2x8x8xbf16>, vector<2x8x8xf32> -> vector<2x8x8xf32>
    "tpu.trace_stop"() : () -> ()
    %cst_172 = arith.constant dense<0xFF800000> : vector<2x8xf32>
    %471 = vector.multi_reduction <maximumf>, %470, %cst_172 [2] : vector<2x8x8xf32> to vector<2x8xf32>
    %472 = vector.shape_cast %471 : vector<2x8xf32> to vector<2x8x1xf32>
    %473 = vector.broadcast %472 : vector<2x8x1xf32> to vector<2x8x8xf32>
    %474 = arith.subf %470, %473 : vector<2x8x8xf32>
    %475 = math.exp %474 : vector<2x8x8xf32>
    %cst_173 = arith.constant dense<0.000000e+00> : vector<2x8xf32>
    %476 = vector.multi_reduction <add>, %475, %cst_173 [2] : vector<2x8x8xf32> to vector<2x8xf32>
    %477 = vector.shape_cast %476 : vector<2x8xf32> to vector<2x8x1xf32>
    %478 = tpu.reciprocal %477 {approx = true} : vector<2x8x1xf32> -> vector<2x8x1xf32>
    %479 = vector.broadcast %478 : vector<2x8x1xf32> to vector<2x8x8xf32>
    %480 = arith.mulf %475, %479 : vector<2x8x8xf32>
    %481 = arith.truncf %480 : vector<2x8x8xf32> to vector<2x8x8xbf16>
    "tpu.trace_start"() <{level = 10 : i32, message = "bqk,bkd->bqd"}> : () -> ()
    %cst_174 = arith.constant dense<0.000000e+00> : vector<2x8x8xf32>
    %482 = tpu.matmul %481, %469, %cst_174 {dimension_numbers = #tpu.dot_dimension_numbers<[2], [1], [1], [2], [0, 0, 0, 1, 1, 2], [0], [0]>} : vector<2x8x8xbf16>, vector<2x8x8xbf16>, vector<2x8x8xf32> -> vector<2x8x8xf32>
    "tpu.trace_stop"() : () -> ()
    %483 = vector.extract_strided_slice %442 {offsets = [0, 0, 16], sizes = [2, 8, 8], strides = [1, 1, 1]} : vector<2x8x32xf32> to vector<2x8x8xf32>
    %484 = arith.truncf %483 : vector<2x8x8xf32> to vector<2x8x8xbf16>
    %485 = vector.extract_strided_slice %443 {offsets = [0, 0, 16], sizes = [2, 8, 8], strides = [1, 1, 1]} : vector<2x8x32xf32> to vector<2x8x8xf32>
    %486 = arith.truncf %485 : vector<2x8x8xf32> to vector<2x8x8xbf16>
    %487 = vector.extract_strided_slice %444 {offsets = [0, 0, 16], sizes = [2, 8, 8], strides = [1, 1, 1]} : vector<2x8x32xf32> to vector<2x8x8xf32>
    %488 = arith.truncf %487 : vector<2x8x8xf32> to vector<2x8x8xbf16>
    "tpu.trace_start"() <{level = 10 : i32, message = "bqd,bkd->bqk"}> : () -> ()
    %cst_175 = arith.constant dense<0.000000e+00> : vector<2x8x8xf32>
    %489 = tpu.matmul %484, %486, %cst_175 {dimension_numbers = #tpu.dot_dimension_numbers<[2], [2], [1], [1], [0, 0, 0, 1, 1, 1], [0], [0]>} : vector<2x8x8xbf16>, vector<2x8x8xbf16>, vector<2x8x8xf32> -> vector<2x8x8xf32>
    "tpu.trace_stop"() : () -> ()
    %cst_176 = arith.constant dense<0xFF800000> : vector<2x8xf32>
    %490 = vector.multi_reduction <maximumf>, %489, %cst_176 [2] : vector<2x8x8xf32> to vector<2x8xf32>
    %491 = vector.shape_cast %490 : vector<2x8xf32> to vector<2x8x1xf32>
    %492 = vector.broadcast %491 : vector<2x8x1xf32> to vector<2x8x8xf32>
    %493 = arith.subf %489, %492 : vector<2x8x8xf32>
    %494 = math.exp %493 : vector<2x8x8xf32>
    %cst_177 = arith.constant dense<0.000000e+00> : vector<2x8xf32>
    %495 = vector.multi_reduction <add>, %494, %cst_177 [2] : vector<2x8x8xf32> to vector<2x8xf32>
    %496 = vector.shape_cast %495 : vector<2x8xf32> to vector<2x8x1xf32>
    %497 = tpu.reciprocal %496 {approx = true} : vector<2x8x1xf32> -> vector<2x8x1xf32>
    %498 = vector.broadcast %497 : vector<2x8x1xf32> to vector<2x8x8xf32>
    %499 = arith.mulf %494, %498 : vector<2x8x8xf32>
    %500 = arith.truncf %499 : vector<2x8x8xf32> to vector<2x8x8xbf16>
    "tpu.trace_start"() <{level = 10 : i32, message = "bqk,bkd->bqd"}> : () -> ()
    %cst_178 = arith.constant dense<0.000000e+00> : vector<2x8x8xf32>
    %501 = tpu.matmul %500, %488, %cst_178 {dimension_numbers = #tpu.dot_dimension_numbers<[2], [1], [1], [2], [0, 0, 0, 1, 1, 2], [0], [0]>} : vector<2x8x8xbf16>, vector<2x8x8xbf16>, vector<2x8x8xf32> -> vector<2x8x8xf32>
    "tpu.trace_stop"() : () -> ()
    %502 = vector.extract_strided_slice %442 {offsets = [0, 0, 24], sizes = [2, 8, 8], strides = [1, 1, 1]} : vector<2x8x32xf32> to vector<2x8x8xf32>
    %503 = arith.truncf %502 : vector<2x8x8xf32> to vector<2x8x8xbf16>
    %504 = vector.extract_strided_slice %443 {offsets = [0, 0, 24], sizes = [2, 8, 8], strides = [1, 1, 1]} : vector<2x8x32xf32> to vector<2x8x8xf32>
    %505 = arith.truncf %504 : vector<2x8x8xf32> to vector<2x8x8xbf16>
    %506 = vector.extract_strided_slice %444 {offsets = [0, 0, 24], sizes = [2, 8, 8], strides = [1, 1, 1]} : vector<2x8x32xf32> to vector<2x8x8xf32>
    %507 = arith.truncf %506 : vector<2x8x8xf32> to vector<2x8x8xbf16>
    "tpu.trace_start"() <{level = 10 : i32, message = "bqd,bkd->bqk"}> : () -> ()
    %cst_179 = arith.constant dense<0.000000e+00> : vector<2x8x8xf32>
    %508 = tpu.matmul %503, %505, %cst_179 {dimension_numbers = #tpu.dot_dimension_numbers<[2], [2], [1], [1], [0, 0, 0, 1, 1, 1], [0], [0]>} : vector<2x8x8xbf16>, vector<2x8x8xbf16>, vector<2x8x8xf32> -> vector<2x8x8xf32>
    "tpu.trace_stop"() : () -> ()
    %cst_180 = arith.constant dense<0xFF800000> : vector<2x8xf32>
    %509 = vector.multi_reduction <maximumf>, %508, %cst_180 [2] : vector<2x8x8xf32> to vector<2x8xf32>
    %510 = vector.shape_cast %509 : vector<2x8xf32> to vector<2x8x1xf32>
    %511 = vector.broadcast %510 : vector<2x8x1xf32> to vector<2x8x8xf32>
    %512 = arith.subf %508, %511 : vector<2x8x8xf32>
    %513 = math.exp %512 : vector<2x8x8xf32>
    %cst_181 = arith.constant dense<0.000000e+00> : vector<2x8xf32>
    %514 = vector.multi_reduction <add>, %513, %cst_181 [2] : vector<2x8x8xf32> to vector<2x8xf32>
    %515 = vector.shape_cast %514 : vector<2x8xf32> to vector<2x8x1xf32>
    %516 = tpu.reciprocal %515 {approx = true} : vector<2x8x1xf32> -> vector<2x8x1xf32>
    %517 = vector.broadcast %516 : vector<2x8x1xf32> to vector<2x8x8xf32>
    %518 = arith.mulf %513, %517 : vector<2x8x8xf32>
    %519 = arith.truncf %518 : vector<2x8x8xf32> to vector<2x8x8xbf16>
    "tpu.trace_start"() <{level = 10 : i32, message = "bqk,bkd->bqd"}> : () -> ()
    %cst_182 = arith.constant dense<0.000000e+00> : vector<2x8x8xf32>
    %520 = tpu.matmul %519, %507, %cst_182 {dimension_numbers = #tpu.dot_dimension_numbers<[2], [1], [1], [2], [0, 0, 0, 1, 1, 2], [0], [0]>} : vector<2x8x8xbf16>, vector<2x8x8xbf16>, vector<2x8x8xf32> -> vector<2x8x8xf32>
    "tpu.trace_stop"() : () -> ()
    %521 = tpu.concatenate %463, %482, %501, %520 in 2 : vector<2x8x8xf32>, vector<2x8x8xf32>, vector<2x8x8xf32>, vector<2x8x8xf32> -> vector<2x8x32xf32>
    %522 = vector.shape_cast %521 : vector<2x8x32xf32> to vector<16x32xf32>
    %523 = arith.truncf %522 : vector<16x32xf32> to vector<16x32xbf16>
    %c0_183 = arith.constant 0 : index
    %c0_184 = arith.constant 0 : index
    %524 = vector.load %arg18[%c0_183, %c0_184] : memref<32x32xbf16, #tpu.memory_space<vmem>>, vector<32x32xbf16>
    %cst_185 = arith.constant dense<0.000000e+00> : vector<16x32xf32>
    %525 = tpu.matmul %523, %524, %cst_185 {dimension_numbers = #tpu.dot_dimension_numbers<[1], [0], [0], [1], [0, 0, 1, 1], [], []>} : vector<16x32xbf16>, vector<32x32xbf16>, vector<16x32xf32> -> vector<16x32xf32>
    %c0_186 = arith.constant 0 : index
    %c0_187 = arith.constant 0 : index
    %526 = vector.load %arg15[%c0_186, %c0_187] : memref<1x32xf32, #tpu.memory_space<vmem>>, vector<1x32xf32>
    %527 = vector.broadcast %526 : vector<1x32xf32> to vector<16x32xf32>
    %528 = arith.addf %525, %527 : vector<16x32xf32>
    %529 = arith.addf %425, %528 : vector<16x32xf32>
    %cst_188 = arith.constant dense<0.000000e+00> : vector<16xf32>
    %530 = vector.multi_reduction <add>, %529, %cst_188 [1] : vector<16x32xf32> to vector<16xf32>
    %531 = vector.shape_cast %530 : vector<16xf32> to vector<16x1xf32>
    %cst_189 = arith.constant 3.200000e+01 : f32
    %532 = vector.broadcast %cst_189 : f32 to vector<16x1xf32>
    %533 = arith.divf %531, %532 : vector<16x1xf32>
    %534 = vector.broadcast %533 : vector<16x1xf32> to vector<16x32xf32>
    %535 = arith.subf %529, %534 : vector<16x32xf32>
    %536 = arith.mulf %535, %535 : vector<16x32xf32>
    %cst_190 = arith.constant dense<0.000000e+00> : vector<16xf32>
    %537 = vector.multi_reduction <add>, %536, %cst_190 [1] : vector<16x32xf32> to vector<16xf32>
    %538 = vector.shape_cast %537 : vector<16xf32> to vector<16x1xf32>
    %cst_191 = arith.constant 3.200000e+01 : f32
    %539 = vector.broadcast %cst_191 : f32 to vector<16x1xf32>
    %540 = arith.divf %538, %539 : vector<16x1xf32>
    %cst_192 = arith.constant 9.99999974E-6 : f32
    %541 = vector.broadcast %cst_192 : f32 to vector<16x1xf32>
    %542 = arith.addf %540, %541 : vector<16x1xf32>
    %543 = math.rsqrt %542 : vector<16x1xf32>
    %544 = vector.broadcast %543 : vector<16x1xf32> to vector<16x32xf32>
    %545 = arith.mulf %535, %544 : vector<16x32xf32>
    %c0_193 = arith.constant 0 : index
    %c0_194 = arith.constant 0 : index
    %546 = vector.load %arg27[%c0_193, %c0_194] : memref<1x32xf32, #tpu.memory_space<vmem>>, vector<1x32xf32>
    %547 = vector.broadcast %546 : vector<1x32xf32> to vector<16x32xf32>
    %548 = arith.mulf %545, %547 : vector<16x32xf32>
    %c0_195 = arith.constant 0 : index
    %c0_196 = arith.constant 0 : index
    %549 = vector.load %arg26[%c0_195, %c0_196] : memref<1x32xf32, #tpu.memory_space<vmem>>, vector<1x32xf32>
    %550 = vector.broadcast %549 : vector<1x32xf32> to vector<16x32xf32>
    %551 = arith.addf %548, %550 : vector<16x32xf32>
    %552 = arith.truncf %551 : vector<16x32xf32> to vector<16x32xbf16>
    %c0_197 = arith.constant 0 : index
    %c0_198 = arith.constant 0 : index
    %553 = vector.load %arg21[%c0_197, %c0_198] : memref<32x64xbf16, #tpu.memory_space<vmem>>, vector<32x64xbf16>
    %cst_199 = arith.constant dense<0.000000e+00> : vector<16x64xf32>
    %554 = tpu.matmul %552, %553, %cst_199 {dimension_numbers = #tpu.dot_dimension_numbers<[1], [0], [0], [1], [0, 0, 1, 1], [], []>} : vector<16x32xbf16>, vector<32x64xbf16>, vector<16x64xf32> -> vector<16x64xf32>
    %c0_200 = arith.constant 0 : index
    %c0_201 = arith.constant 0 : index
    %555 = vector.load %arg20[%c0_200, %c0_201] : memref<1x64xf32, #tpu.memory_space<vmem>>, vector<1x64xf32>
    %556 = vector.broadcast %555 : vector<1x64xf32> to vector<16x64xf32>
    %557 = arith.addf %554, %556 : vector<16x64xf32>
    %cst_202 = arith.constant 0.000000e+00 : f32
    %558 = vector.broadcast %cst_202 : f32 to vector<16x64xf32>
    %559 = arith.maximumf %557, %558 : vector<16x64xf32>
    %560 = arith.truncf %559 : vector<16x64xf32> to vector<16x64xbf16>
    %c0_203 = arith.constant 0 : index
    %c0_204 = arith.constant 0 : index
    %561 = vector.load %arg23[%c0_203, %c0_204] : memref<64x32xbf16, #tpu.memory_space<vmem>>, vector<64x32xbf16>
    %cst_205 = arith.constant dense<0.000000e+00> : vector<16x32xf32>
    %562 = tpu.matmul %560, %561, %cst_205 {dimension_numbers = #tpu.dot_dimension_numbers<[1], [0], [0], [1], [0, 0, 1, 1], [], []>} : vector<16x64xbf16>, vector<64x32xbf16>, vector<16x32xf32> -> vector<16x32xf32>
    %c0_206 = arith.constant 0 : index
    %c0_207 = arith.constant 0 : index
    %563 = vector.load %arg22[%c0_206, %c0_207] : memref<1x32xf32, #tpu.memory_space<vmem>>, vector<1x32xf32>
    %564 = vector.broadcast %563 : vector<1x32xf32> to vector<16x32xf32>
    %565 = arith.addf %562, %564 : vector<16x32xf32>
    %566 = arith.addf %551, %565 : vector<16x32xf32>
    %cst_208 = arith.constant dense<0.000000e+00> : vector<16xf32>
    %567 = vector.multi_reduction <add>, %566, %cst_208 [1] : vector<16x32xf32> to vector<16xf32>
    %568 = vector.shape_cast %567 : vector<16xf32> to vector<16x1xf32>
    %cst_209 = arith.constant 3.200000e+01 : f32
    %569 = vector.broadcast %cst_209 : f32 to vector<16x1xf32>
    %570 = arith.divf %568, %569 : vector<16x1xf32>
    %571 = vector.broadcast %570 : vector<16x1xf32> to vector<16x32xf32>
    %572 = arith.subf %566, %571 : vector<16x32xf32>
    %573 = arith.mulf %572, %572 : vector<16x32xf32>
    %cst_210 = arith.constant dense<0.000000e+00> : vector<16xf32>
    %574 = vector.multi_reduction <add>, %573, %cst_210 [1] : vector<16x32xf32> to vector<16xf32>
    %575 = vector.shape_cast %574 : vector<16xf32> to vector<16x1xf32>
    %cst_211 = arith.constant 3.200000e+01 : f32
    %576 = vector.broadcast %cst_211 : f32 to vector<16x1xf32>
    %577 = arith.divf %575, %576 : vector<16x1xf32>
    %cst_212 = arith.constant 9.99999974E-6 : f32
    %578 = vector.broadcast %cst_212 : f32 to vector<16x1xf32>
    %579 = arith.addf %577, %578 : vector<16x1xf32>
    %580 = math.rsqrt %579 : vector<16x1xf32>
    %581 = vector.broadcast %580 : vector<16x1xf32> to vector<16x32xf32>
    %582 = arith.mulf %572, %581 : vector<16x32xf32>
    %c0_213 = arith.constant 0 : index
    %c0_214 = arith.constant 0 : index
    %583 = vector.load %arg29[%c0_213, %c0_214] : memref<1x32xf32, #tpu.memory_space<vmem>>, vector<1x32xf32>
    %584 = vector.broadcast %583 : vector<1x32xf32> to vector<16x32xf32>
    %585 = arith.mulf %582, %584 : vector<16x32xf32>
    %c0_215 = arith.constant 0 : index
    %c0_216 = arith.constant 0 : index
    %586 = vector.load %arg28[%c0_215, %c0_216] : memref<1x32xf32, #tpu.memory_space<vmem>>, vector<1x32xf32>
    %587 = vector.broadcast %586 : vector<1x32xf32> to vector<16x32xf32>
    %588 = arith.addf %585, %587 : vector<16x32xf32>
    %cst_217 = arith.constant dense<0.000000e+00> : vector<16xf32>
    %589 = vector.multi_reduction <add>, %588, %cst_217 [1] : vector<16x32xf32> to vector<16xf32>
    %590 = vector.shape_cast %589 : vector<16xf32> to vector<16x1xf32>
    %cst_218 = arith.constant 3.200000e+01 : f32
    %591 = vector.broadcast %cst_218 : f32 to vector<16x1xf32>
    %592 = arith.divf %590, %591 : vector<16x1xf32>
    %593 = vector.broadcast %592 : vector<16x1xf32> to vector<16x32xf32>
    %594 = arith.subf %588, %593 : vector<16x32xf32>
    %595 = arith.mulf %594, %594 : vector<16x32xf32>
    %cst_219 = arith.constant dense<0.000000e+00> : vector<16xf32>
    %596 = vector.multi_reduction <add>, %595, %cst_219 [1] : vector<16x32xf32> to vector<16xf32>
    %597 = vector.shape_cast %596 : vector<16xf32> to vector<16x1xf32>
    %cst_220 = arith.constant 3.200000e+01 : f32
    %598 = vector.broadcast %cst_220 : f32 to vector<16x1xf32>
    %599 = arith.divf %597, %598 : vector<16x1xf32>
    %cst_221 = arith.constant 9.99999974E-6 : f32
    %600 = vector.broadcast %cst_221 : f32 to vector<16x1xf32>
    %601 = arith.addf %599, %600 : vector<16x1xf32>
    %602 = math.rsqrt %601 : vector<16x1xf32>
    %603 = vector.broadcast %602 : vector<16x1xf32> to vector<16x32xf32>
    %604 = arith.mulf %594, %603 : vector<16x32xf32>
    %c0_222 = arith.constant 0 : index
    %c0_223 = arith.constant 0 : index
    %605 = vector.load %arg35[%c0_222, %c0_223] : memref<1x32xf32, #tpu.memory_space<vmem>>, vector<1x32xf32>
    %606 = vector.broadcast %605 : vector<1x32xf32> to vector<16x32xf32>
    %607 = arith.mulf %604, %606 : vector<16x32xf32>
    %c0_224 = arith.constant 0 : index
    %c0_225 = arith.constant 0 : index
    %608 = vector.load %arg34[%c0_224, %c0_225] : memref<1x32xf32, #tpu.memory_space<vmem>>, vector<1x32xf32>
    %609 = vector.broadcast %608 : vector<1x32xf32> to vector<16x32xf32>
    %610 = arith.addf %607, %609 : vector<16x32xf32>
    %cst_226 = arith.constant dense<0.000000e+00> : vector<16xf32>
    %611 = vector.multi_reduction <add>, %610, %cst_226 [1] : vector<16x32xf32> to vector<16xf32>
    %612 = vector.shape_cast %611 : vector<16xf32> to vector<16x1xf32>
    %cst_227 = arith.constant 3.200000e+01 : f32
    %613 = vector.broadcast %cst_227 : f32 to vector<16x1xf32>
    %614 = arith.divf %612, %613 : vector<16x1xf32>
    %615 = vector.broadcast %614 : vector<16x1xf32> to vector<16x32xf32>
    %616 = arith.subf %610, %615 : vector<16x32xf32>
    %617 = arith.mulf %616, %616 : vector<16x32xf32>
    %cst_228 = arith.constant dense<0.000000e+00> : vector<16xf32>
    %618 = vector.multi_reduction <add>, %617, %cst_228 [1] : vector<16x32xf32> to vector<16xf32>
    %619 = vector.shape_cast %618 : vector<16xf32> to vector<16x1xf32>
    %cst_229 = arith.constant 3.200000e+01 : f32
    %620 = vector.broadcast %cst_229 : f32 to vector<16x1xf32>
    %621 = arith.divf %619, %620 : vector<16x1xf32>
    %cst_230 = arith.constant 9.99999974E-6 : f32
    %622 = vector.broadcast %cst_230 : f32 to vector<16x1xf32>
    %623 = arith.addf %621, %622 : vector<16x1xf32>
    %624 = math.rsqrt %623 : vector<16x1xf32>
    %625 = vector.broadcast %624 : vector<16x1xf32> to vector<16x32xf32>
    %626 = arith.mulf %616, %625 : vector<16x32xf32>
    %c0_231 = arith.constant 0 : index
    %c0_232 = arith.constant 0 : index
    %627 = vector.load %arg53[%c0_231, %c0_232] : memref<1x32xf32, #tpu.memory_space<vmem>>, vector<1x32xf32>
    %628 = vector.broadcast %627 : vector<1x32xf32> to vector<16x32xf32>
    %629 = arith.mulf %626, %628 : vector<16x32xf32>
    %c0_233 = arith.constant 0 : index
    %c0_234 = arith.constant 0 : index
    %630 = vector.load %arg52[%c0_233, %c0_234] : memref<1x32xf32, #tpu.memory_space<vmem>>, vector<1x32xf32>
    %631 = vector.broadcast %630 : vector<1x32xf32> to vector<16x32xf32>
    %632 = arith.addf %629, %631 : vector<16x32xf32>
    %cst_235 = arith.constant 5.000000e-01 : f32
    %633 = vector.broadcast %cst_235 : f32 to vector<16x32xf32>
    %634 = arith.mulf %633, %632 : vector<16x32xf32>
    %cst_236 = arith.constant 4.471500e-02 : f32
    %635 = vector.broadcast %cst_236 : f32 to vector<16x32xf32>
    %636 = arith.mulf %635, %632 : vector<16x32xf32>
    %637 = arith.mulf %636, %632 : vector<16x32xf32>
    %638 = arith.mulf %637, %632 : vector<16x32xf32>
    %639 = arith.addf %632, %638 : vector<16x32xf32>
    %cst_237 = arith.constant 0.797884583 : f32
    %640 = vector.broadcast %cst_237 : f32 to vector<16x32xf32>
    %641 = arith.mulf %640, %639 : vector<16x32xf32>
    %642 = math.tanh %641 : vector<16x32xf32>
    %cst_238 = arith.constant 1.000000e+00 : f32
    %643 = vector.broadcast %cst_238 : f32 to vector<16x32xf32>
    %644 = arith.addf %643, %642 : vector<16x32xf32>
    %645 = arith.mulf %634, %644 : vector<16x32xf32>
    %646 = arith.truncf %645 : vector<16x32xf32> to vector<16x32xbf16>
    %c0_239 = arith.constant 0 : index
    %c0_240 = arith.constant 0 : index
    %647 = vector.load %arg51[%c0_239, %c0_240] : memref<32x128xbf16, #tpu.memory_space<vmem>>, vector<32x128xbf16>
    %cst_241 = arith.constant dense<0.000000e+00> : vector<16x128xf32>
    %648 = tpu.matmul %646, %647, %cst_241 {dimension_numbers = #tpu.dot_dimension_numbers<[1], [0], [0], [1], [0, 0, 1, 1], [], []>} : vector<16x32xbf16>, vector<32x128xbf16>, vector<16x128xf32> -> vector<16x128xf32>
    %c0_242 = arith.constant 0 : index
    %c0_243 = arith.constant 0 : index
    %649 = vector.load %arg50[%c0_242, %c0_243] : memref<1x128xf32, #tpu.memory_space<vmem>>, vector<1x128xf32>
    %650 = vector.broadcast %649 : vector<1x128xf32> to vector<16x128xf32>
    %651 = arith.addf %648, %650 : vector<16x128xf32>
    %cst_244 = arith.constant dense<0xFF800000> : vector<16xf32>
    %652 = vector.multi_reduction <maximumf>, %651, %cst_244 [1] : vector<16x128xf32> to vector<16xf32>
    %653 = vector.shape_cast %652 : vector<16xf32> to vector<16x1xf32>
    %654 = vector.broadcast %653 : vector<16x1xf32> to vector<16x128xf32>
    %655 = arith.subf %651, %654 : vector<16x128xf32>
    %656 = math.exp %655 : vector<16x128xf32>
    %cst_245 = arith.constant dense<0.000000e+00> : vector<16xf32>
    %657 = vector.multi_reduction <add>, %656, %cst_245 [1] : vector<16x128xf32> to vector<16xf32>
    %658 = vector.shape_cast %657 : vector<16xf32> to vector<16x1xf32>
    %659 = math.log %658 : vector<16x1xf32>
    %660 = vector.broadcast %659 : vector<16x1xf32> to vector<16x128xf32>
    %661 = arith.subf %655, %660 : vector<16x128xf32>
    %662 = vector.shape_cast %661 : vector<16x128xf32> to vector<2x8x128xf32>
    %c0_246 = arith.constant 0 : index
    %c0_247 = arith.constant 0 : index
    %c0_248 = arith.constant 0 : index
    %663 = vector.load %arg54[%c0_246, %c0_247, %c0_248] : memref<2x8x128xf32, #tpu.memory_space<vmem>>, vector<2x8x128xf32>
    tpu.vector_store %arg54[%c0_246, %c0_247, %c0_248], %662 {strides = array<i32>} : memref<2x8x128xf32, #tpu.memory_space<vmem>>, vector<2x8x128xf32>,
    return
  }
  func.func @transform_0(%arg0: i32) -> (i32, i32, i32) {
    %c0_i32 = arith.constant 0 : i32
    %c0_i32_0 = arith.constant 0 : i32
    %c0_i32_1 = arith.constant 0 : i32
    return %arg0, %c0_i32, %c0_i32_0 : i32, i32, i32
  }
  func.func @transform_1(%arg0: i32) -> (i32, i32) {
    %c0_i32 = arith.constant 0 : i32
    %c0_i32_0 = arith.constant 0 : i32
    %c0_i32_1 = arith.constant 0 : i32
    return %c0_i32, %c0_i32_0 : i32, i32
  }
  func.func @transform_2(%arg0: i32) -> (i32, i32) {
    %c0_i32 = arith.constant 0 : i32
    %c0_i32_0 = arith.constant 0 : i32
    %c0_i32_1 = arith.constant 0 : i32
    return %c0_i32, %c0_i32_0 : i32, i32
  }
  func.func @transform_3(%arg0: i32) -> (i32, i32) {
    %c0_i32 = arith.constant 0 : i32
    %c0_i32_0 = arith.constant 0 : i32
    %c0_i32_1 = arith.constant 0 : i32
    return %c0_i32, %c0_i32_0 : i32, i32
  }
  func.func @transform_4(%arg0: i32) -> (i32, i32) {
    %c0_i32 = arith.constant 0 : i32
    %c0_i32_0 = arith.constant 0 : i32
    %c0_i32_1 = arith.constant 0 : i32
    return %c0_i32, %c0_i32_0 : i32, i32
  }
  func.func @transform_5(%arg0: i32) -> (i32, i32) {
    %c0_i32 = arith.constant 0 : i32
    %c0_i32_0 = arith.constant 0 : i32
    %c0_i32_1 = arith.constant 0 : i32
    return %c0_i32, %c0_i32_0 : i32, i32
  }
  func.func @transform_6(%arg0: i32) -> (i32, i32) {
    %c0_i32 = arith.constant 0 : i32
    %c0_i32_0 = arith.constant 0 : i32
    %c0_i32_1 = arith.constant 0 : i32
    return %c0_i32, %c0_i32_0 : i32, i32
  }
  func.func @transform_7(%arg0: i32) -> (i32, i32) {
    %c0_i32 = arith.constant 0 : i32
    %c0_i32_0 = arith.constant 0 : i32
    %c0_i32_1 = arith.constant 0 : i32
    return %c0_i32, %c0_i32_0 : i32, i32
  }
  func.func @transform_8(%arg0: i32) -> (i32, i32) {
    %c0_i32 = arith.constant 0 : i32
    %c0_i32_0 = arith.constant 0 : i32
    %c0_i32_1 = arith.constant 0 : i32
    return %c0_i32, %c0_i32_0 : i32, i32
  }
  func.func @transform_9(%arg0: i32) -> (i32, i32) {
    %c0_i32 = arith.constant 0 : i32
    %c0_i32_0 = arith.constant 0 : i32
    %c0_i32_1 = arith.constant 0 : i32
    return %c0_i32, %c0_i32_0 : i32, i32
  }
  func.func @transform_10(%arg0: i32) -> (i32, i32) {
    %c0_i32 = arith.constant 0 : i32
    %c0_i32_0 = arith.constant 0 : i32
    %c0_i32_1 = arith.constant 0 : i32
    return %c0_i32, %c0_i32_0 : i32, i32
  }
  func.func @transform_11(%arg0: i32) -> (i32, i32) {
    %c0_i32 = arith.constant 0 : i32
    %c0_i32_0 = arith.constant 0 : i32
    %c0_i32_1 = arith.constant 0 : i32
    return %c0_i32, %c0_i32_0 : i32, i32
  }
  func.func @transform_12(%arg0: i32) -> (i32, i32) {
    %c0_i32 = arith.constant 0 : i32
    %c0_i32_0 = arith.constant 0 : i32
    %c0_i32_1 = arith.constant 0 : i32
    return %c0_i32, %c0_i32_0 : i32, i32
  }
  func.func @transform_13(%arg0: i32) -> (i32, i32) {
    %c0_i32 = arith.constant 0 : i32
    %c0_i32_0 = arith.constant 0 : i32
    %c0_i32_1 = arith.constant 0 : i32
    return %c0_i32, %c0_i32_0 : i32, i32
  }
  func.func @transform_14(%arg0: i32) -> (i32, i32) {
    %c0_i32 = arith.constant 0 : i32
    %c0_i32_0 = arith.constant 0 : i32
    %c0_i32_1 = arith.constant 0 : i32
    return %c0_i32, %c0_i32_0 : i32, i32
  }
  func.func @transform_15(%arg0: i32) -> (i32, i32) {
    %c0_i32 = arith.constant 0 : i32
    %c0_i32_0 = arith.constant 0 : i32
    %c0_i32_1 = arith.constant 0 : i32
    return %c0_i32, %c0_i32_0 : i32, i32
  }
  func.func @transform_16(%arg0: i32) -> (i32, i32) {
    %c0_i32 = arith.constant 0 : i32
    %c0_i32_0 = arith.constant 0 : i32
    %c0_i32_1 = arith.constant 0 : i32
    return %c0_i32, %c0_i32_0 : i32, i32
  }
  func.func @transform_17(%arg0: i32) -> (i32, i32) {
    %c0_i32 = arith.constant 0 : i32
    %c0_i32_0 = arith.constant 0 : i32
    %c0_i32_1 = arith.constant 0 : i32
    return %c0_i32, %c0_i32_0 : i32, i32
  }
  func.func @transform_18(%arg0: i32) -> (i32, i32) {
    %c0_i32 = arith.constant 0 : i32
    %c0_i32_0 = arith.constant 0 : i32
    %c0_i32_1 = arith.constant 0 : i32
    return %c0_i32, %c0_i32_0 : i32, i32
  }
  func.func @transform_19(%arg0: i32) -> (i32, i32) {
    %c0_i32 = arith.constant 0 : i32
    %c0_i32_0 = arith.constant 0 : i32
    %c0_i32_1 = arith.constant 0 : i32
    return %c0_i32, %c0_i32_0 : i32, i32
  }
  func.func @transform_20(%arg0: i32) -> (i32, i32) {
    %c0_i32 = arith.constant 0 : i32
    %c0_i32_0 = arith.constant 0 : i32
    %c0_i32_1 = arith.constant 0 : i32
    return %c0_i32, %c0_i32_0 : i32, i32
  }
  func.func @transform_21(%arg0: i32) -> (i32, i32) {
    %c0_i32 = arith.constant 0 : i32
    %c0_i32_0 = arith.constant 0 : i32
    %c0_i32_1 = arith.constant 0 : i32
    return %c0_i32, %c0_i32_0 : i32, i32
  }
  func.func @transform_22(%arg0: i32) -> (i32, i32) {
    %c0_i32 = arith.constant 0 : i32
    %c0_i32_0 = arith.constant 0 : i32
    %c0_i32_1 = arith.constant 0 : i32
    return %c0_i32, %c0_i32_0 : i32, i32
  }
  func.func @transform_23(%arg0: i32) -> (i32, i32) {
    %c0_i32 = arith.constant 0 : i32
    %c0_i32_0 = arith.constant 0 : i32
    %c0_i32_1 = arith.constant 0 : i32
    return %c0_i32, %c0_i32_0 : i32, i32
  }
  func.func @transform_24(%arg0: i32) -> (i32, i32) {
    %c0_i32 = arith.constant 0 : i32
    %c0_i32_0 = arith.constant 0 : i32
    %c0_i32_1 = arith.constant 0 : i32
    return %c0_i32, %c0_i32_0 : i32, i32
  }
  func.func @transform_25(%arg0: i32) -> (i32, i32) {
    %c0_i32 = arith.constant 0 : i32
    %c0_i32_0 = arith.constant 0 : i32
    %c0_i32_1 = arith.constant 0 : i32
    return %c0_i32, %c0_i32_0 : i32, i32
  }
  func.func @transform_26(%arg0: i32) -> (i32, i32) {
    %c0_i32 = arith.constant 0 : i32
    %c0_i32_0 = arith.constant 0 : i32
    %c0_i32_1 = arith.constant 0 : i32
    return %c0_i32, %c0_i32_0 : i32, i32
  }
  func.func @transform_27(%arg0: i32) -> (i32, i32) {
    %c0_i32 = arith.constant 0 : i32
    %c0_i32_0 = arith.constant 0 : i32
    %c0_i32_1 = arith.constant 0 : i32
    return %c0_i32, %c0_i32_0 : i32, i32
  }
  func.func @transform_28(%arg0: i32) -> (i32, i32) {
    %c0_i32 = arith.constant 0 : i32
    %c0_i32_0 = arith.constant 0 : i32
    %c0_i32_1 = arith.constant 0 : i32
    return %c0_i32, %c0_i32_0 : i32, i32
  }
  func.func @transform_29(%arg0: i32) -> (i32, i32) {
    %c0_i32 = arith.constant 0 : i32
    %c0_i32_0 = arith.constant 0 : i32
    %c0_i32_1 = arith.constant 0 : i32
    return %c0_i32, %c0_i32_0 : i32, i32
  }
  func.func @transform_30(%arg0: i32) -> (i32, i32) {
    %c0_i32 = arith.constant 0 : i32
    %c0_i32_0 = arith.constant 0 : i32
    %c0_i32_1 = arith.constant 0 : i32
    return %c0_i32, %c0_i32_0 : i32, i32
  }
  func.func @transform_31(%arg0: i32) -> (i32, i32) {
    %c0_i32 = arith.constant 0 : i32
    %c0_i32_0 = arith.constant 0 : i32
    %c0_i32_1 = arith.constant 0 : i32
    return %c0_i32, %c0_i32_0 : i32, i32
  }
  func.func @transform_32(%arg0: i32) -> (i32, i32) {
    %c0_i32 = arith.constant 0 : i32
    %c0_i32_0 = arith.constant 0 : i32
    %c0_i32_1 = arith.constant 0 : i32
    return %c0_i32, %c0_i32_0 : i32, i32
  }
  func.func @transform_33(%arg0: i32) -> (i32, i32) {
    %c0_i32 = arith.constant 0 : i32
    %c0_i32_0 = arith.constant 0 : i32
    %c0_i32_1 = arith.constant 0 : i32
    return %c0_i32, %c0_i32_0 : i32, i32
  }
  func.func @transform_34(%arg0: i32) -> (i32, i32) {
    %c0_i32 = arith.constant 0 : i32
    %c0_i32_0 = arith.constant 0 : i32
    %c0_i32_1 = arith.constant 0 : i32
    return %c0_i32, %c0_i32_0 : i32, i32
  }
  func.func @transform_35(%arg0: i32) -> (i32, i32) {
    %c0_i32 = arith.constant 0 : i32
    %c0_i32_0 = arith.constant 0 : i32
    %c0_i32_1 = arith.constant 0 : i32
    return %c0_i32, %c0_i32_0 : i32, i32
  }
  func.func @transform_36(%arg0: i32) -> (i32, i32) {
    %c0_i32 = arith.constant 0 : i32
    %c0_i32_0 = arith.constant 0 : i32
    %c0_i32_1 = arith.constant 0 : i32
    return %c0_i32, %c0_i32_0 : i32, i32
  }
  func.func @transform_37(%arg0: i32) -> (i32, i32) {
    %c0_i32 = arith.constant 0 : i32
    %c0_i32_0 = arith.constant 0 : i32
    %c0_i32_1 = arith.constant 0 : i32
    return %c0_i32, %c0_i32_0 : i32, i32
  }
  func.func @transform_38(%arg0: i32) -> (i32, i32) {
    %c0_i32 = arith.constant 0 : i32
    %c0_i32_0 = arith.constant 0 : i32
    %c0_i32_1 = arith.constant 0 : i32
    return %c0_i32, %c0_i32_0 : i32, i32
  }
  func.func @transform_39(%arg0: i32) -> (i32, i32) {
    %c0_i32 = arith.constant 0 : i32
    %c0_i32_0 = arith.constant 0 : i32
    %c0_i32_1 = arith.constant 0 : i32
    return %c0_i32, %c0_i32_0 : i32, i32
  }
  func.func @transform_40(%arg0: i32) -> (i32, i32) {
    %c0_i32 = arith.constant 0 : i32
    %c0_i32_0 = arith.constant 0 : i32
    %c0_i32_1 = arith.constant 0 : i32
    return %c0_i32, %c0_i32_0 : i32, i32
  }
  func.func @transform_41(%arg0: i32) -> (i32, i32) {
    %c0_i32 = arith.constant 0 : i32
    %c0_i32_0 = arith.constant 0 : i32
    %c0_i32_1 = arith.constant 0 : i32
    return %c0_i32, %c0_i32_0 : i32, i32
  }
  func.func @transform_42(%arg0: i32) -> (i32, i32) {
    %c0_i32 = arith.constant 0 : i32
    %c0_i32_0 = arith.constant 0 : i32
    %c0_i32_1 = arith.constant 0 : i32
    return %c0_i32, %c0_i32_0 : i32, i32
  }
  func.func @transform_43(%arg0: i32) -> (i32, i32) {
    %c0_i32 = arith.constant 0 : i32
    %c0_i32_0 = arith.constant 0 : i32
    %c0_i32_1 = arith.constant 0 : i32
    return %c0_i32, %c0_i32_0 : i32, i32
  }
  func.func @transform_44(%arg0: i32) -> (i32, i32) {
    %c0_i32 = arith.constant 0 : i32
    %c0_i32_0 = arith.constant 0 : i32
    %c0_i32_1 = arith.constant 0 : i32
    return %c0_i32, %c0_i32_0 : i32, i32
  }
  func.func @transform_45(%arg0: i32) -> (i32, i32) {
    %c0_i32 = arith.constant 0 : i32
    %c0_i32_0 = arith.constant 0 : i32
    %c0_i32_1 = arith.constant 0 : i32
    return %c0_i32, %c0_i32_0 : i32, i32
  }
  func.func @transform_46(%arg0: i32) -> (i32, i32) {
    %c0_i32 = arith.constant 0 : i32
    %c0_i32_0 = arith.constant 0 : i32
    %c0_i32_1 = arith.constant 0 : i32
    return %c0_i32, %c0_i32_0 : i32, i32
  }
  func.func @transform_47(%arg0: i32) -> (i32, i32) {
    %c0_i32 = arith.constant 0 : i32
    %c0_i32_0 = arith.constant 0 : i32
    %c0_i32_1 = arith.constant 0 : i32
    return %c0_i32, %c0_i32_0 : i32, i32
  }
  func.func @transform_48(%arg0: i32) -> (i32, i32) {
    %c0_i32 = arith.constant 0 : i32
    %c0_i32_0 = arith.constant 0 : i32
    %c0_i32_1 = arith.constant 0 : i32
    return %c0_i32, %c0_i32_0 : i32, i32
  }
  func.func @transform_49(%arg0: i32) -> (i32, i32) {
    %c0_i32 = arith.constant 0 : i32
    %c0_i32_0 = arith.constant 0 : i32
    %c0_i32_1 = arith.constant 0 : i32
    return %c0_i32, %c0_i32_0 : i32, i32
  }
  func.func @transform_50(%arg0: i32) -> (i32, i32) {
    %c0_i32 = arith.constant 0 : i32
    %c0_i32_0 = arith.constant 0 : i32
    %c0_i32_1 = arith.constant 0 : i32
    return %c0_i32, %c0_i32_0 : i32, i32
  }
  func.func @transform_51(%arg0: i32) -> (i32, i32) {
    %c0_i32 = arith.constant 0 : i32
    %c0_i32_0 = arith.constant 0 : i32
    %c0_i32_1 = arith.constant 0 : i32
    return %c0_i32, %c0_i32_0 : i32, i32
  }
  func.func @transform_52(%arg0: i32) -> (i32, i32) {
    %c0_i32 = arith.constant 0 : i32
    %c0_i32_0 = arith.constant 0 : i32
    %c0_i32_1 = arith.constant 0 : i32
    return %c0_i32, %c0_i32_0 : i32, i32
  }
  func.func @transform_53(%arg0: i32) -> (i32, i32, i32) {
    %c0_i32 = arith.constant 0 : i32
    %c0_i32_0 = arith.constant 0 : i32
    %c0_i32_1 = arith.constant 0 : i32
    return %arg0, %c0_i32, %c0_i32_0 : i32, i32, i32
  }
}

</mosaic_0001>

<llo_original>
// kernel: forward.1
$region0: #{forward.1}
  #allocation0 [shape = 'u32[]', space=smem, size = 0x4, offset = 0x4, fixed_abs, tag = 'smem constant byte address 0x4 - core index']
  #allocation1 [shape = 'u32[144,128]{1,0:T(1,128)}', space=vmem, size = 0x12000, scoped, tag = 'internal scratch']
  %s0 = inlined_call_operand.smem [shape: u32[54], index: -1, kind: input, shape index: {}]
  %s1 = sld [smem:[%s0]]
  %s2 = scalar_lea.smem %s0, 1
  %s3 = sld [smem:[%s2]]
  %s4 = scalar_lea.smem %s0, 2
  %s5 = sld [smem:[%s4]]
  %s6 = scalar_lea.smem %s0, 3
  %s7 = sld [smem:[%s6]]
  %s8 = scalar_lea.smem %s0, 4
  %s9 = sld [smem:[%s8]]
  %s10 = scalar_lea.smem %s0, 5
  %s11 = sld [smem:[%s10]]
  %s12 = scalar_lea.smem %s0, 6
  %s13 = sld [smem:[%s12]]
  %s14 = scalar_lea.smem %s0, 7
  %s15 = sld [smem:[%s14]]
  %s16 = scalar_lea.smem %s0, 8
  %s17 = sld [smem:[%s16]]
  %s18 = scalar_lea.smem %s0, 9
  %s19 = sld [smem:[%s18]]
  %s20 = scalar_lea.smem %s0, 10
  %s21 = sld [smem:[%s20]]
  %s22 = scalar_lea.smem %s0, 11
  %s23 = sld [smem:[%s22]]
  %s24 = scalar_lea.smem %s0, 12
  %s25 = sld [smem:[%s24]]
  %s26 = scalar_lea.smem %s0, 13
  %s27 = sld [smem:[%s26]]
  %s28 = scalar_lea.smem %s0, 14
  %s29 = sld [smem:[%s28]]
  %s30 = scalar_lea.smem %s0, 15
  %s31 = sld [smem:[%s30]]
  %s32 = scalar_lea.smem %s0, 16
  %s33 = sld [smem:[%s32]]
  %s34 = scalar_lea.smem %s0, 17
  %s35 = sld [smem:[%s34]]
  %s36 = scalar_lea.smem %s0, 18
  %s37 = sld [smem:[%s36]]
  %s38 = scalar_lea.smem %s0, 19
  %s39 = sld [smem:[%s38]]
  %s40 = scalar_lea.smem %s0, 20
  %s41 = sld [smem:[%s40]]
  %s42 = scalar_lea.smem %s0, 21
  %s43 = sld [smem:[%s42]]
  %s44 = scalar_lea.smem %s0, 22
  %s45 = sld [smem:[%s44]]
  %s46 = scalar_lea.smem %s0, 23
  %s47 = sld [smem:[%s46]]
  %s48 = scalar_lea.smem %s0, 24
  %s49 = sld [smem:[%s48]]
  %s50 = scalar_lea.smem %s0, 25
  %s51 = sld [smem:[%s50]]
  %s52 = scalar_lea.smem %s0, 26
  %s53 = sld [smem:[%s52]]
  %s54 = scalar_lea.smem %s0, 27
  %s55 = sld [smem:[%s54]]
  %s56 = scalar_lea.smem %s0, 28
  %s57 = sld [smem:[%s56]]
  %s58 = scalar_lea.smem %s0, 29
  %s59 = sld [smem:[%s58]]
  %s60 = scalar_lea.smem %s0, 30
  %s61 = sld [smem:[%s60]]
  %s62 = scalar_lea.smem %s0, 31
  %s63 = sld [smem:[%s62]]
  %s64 = scalar_lea.smem %s0, 32
  %s65 = sld [smem:[%s64]]
  %s66 = scalar_lea.smem %s0, 33
  %s67 = sld [smem:[%s66]]
  %s68 = scalar_lea.smem %s0, 34
  %s69 = sld [smem:[%s68]]
  %s70 = scalar_lea.smem %s0, 35
  %s71 = sld [smem:[%s70]]
  %s72 = scalar_lea.smem %s0, 36
  %s73 = sld [smem:[%s72]]
  %s74 = scalar_lea.smem %s0, 37
  %s75 = sld [smem:[%s74]]
  %s76 = scalar_lea.smem %s0, 38
  %s77 = sld [smem:[%s76]]
  %s78 = scalar_lea.smem %s0, 39
  %s79 = sld [smem:[%s78]]
  %s80 = scalar_lea.smem %s0, 40
  %s81 = sld [smem:[%s80]]
  %s82 = scalar_lea.smem %s0, 41
  %s83 = sld [smem:[%s82]]
  %s84 = scalar_lea.smem %s0, 42
  %s85 = sld [smem:[%s84]]
  %s86 = scalar_lea.smem %s0, 43
  %s87 = sld [smem:[%s86]]
  %s88 = scalar_lea.smem %s0, 44
  %s89 = sld [smem:[%s88]]
  %s90 = scalar_lea.smem %s0, 45
  %s91 = sld [smem:[%s90]]
  %s92 = scalar_lea.smem %s0, 46
  %s93 = sld [smem:[%s92]]
  %s94 = scalar_lea.smem %s0, 47
  %s95 = sld [smem:[%s94]]
  %s96 = scalar_lea.smem %s0, 48
  %s97 = sld [smem:[%s96]]
  %s98 = scalar_lea.smem %s0, 49
  %s99 = sld [smem:[%s98]]
  %s100 = scalar_lea.smem %s0, 50
  %s101 = sld [smem:[%s100]]
  %s102 = scalar_lea.smem %s0, 51
  %s103 = sld [smem:[%s102]]
  %s104 = scalar_lea.smem %s0, 52
  %s105 = sld [smem:[%s104]]
  %s106 = scalar_lea.smem %s0, 53
  %s107 = sld [smem:[%s106]]
  %s108 = sld [smem:[#allocation0]]
  $region293: #{forward.1} parent=0
    _
  %s110 = ssub.s32 1, %s108
  %s111 = scalar_select 0, %s110, %s108
  $region1: #{forward.1} parent=0
    #allocation2 [shape = 'u8[512]{0}', space=vmem, size = 0x400, scoped, tag = 'input window, operand 36, single buffered']
    #allocation3 [shape = 's32[2]{0}', space=sflag, size = 0x8, scoped, tag = 'scoped memory for forward.1']
    #allocation4 [shape = 'u8[512]{0}', space=vmem, size = 0x400, scoped, tag = 'input window, operand 39, single buffered']
    #allocation5 [shape = 's32[1]{0}', space=sflag, size = 0x4, scoped, tag = 'scoped memory for forward.1']
    #allocation6 [shape = 'u8[512]{0}', space=vmem, size = 0x400, scoped, tag = 'input window, operand 41, single buffered']
    #allocation7 [shape = 'u8[512]{0}', space=vmem, size = 0x400, scoped, tag = 'input window, operand 43, single buffered']
    #allocation8 [shape = 's32[1]{0}', space=sflag, size = 0x4, scoped, tag = 'scoped memory for forward.1']
    #allocation9 [shape = 'u8[512]{0}', space=vmem, size = 0x400, scoped, tag = 'input window, operand 44, single buffered']
    #allocation10 [shape = 'u8[512]{0}', space=vmem, size = 0x400, scoped, tag = 'input window, operand 45, single buffered']
    #allocation11 [shape = 's32[1]{0}', space=sflag, size = 0x4, scoped, tag = 'scoped memory for forward.1']
    #allocation12 [shape = 'u8[512]{0}', space=vmem, size = 0x400, scoped, tag = 'input window, operand 46, single buffered']
    #allocation13 [shape = 'u8[512]{0}', space=vmem, size = 0x400, scoped, tag = 'input window, operand 47, single buffered']
    #allocation14 [shape = 's32[1]{0}', space=sflag, size = 0x4, scoped, tag = 'scoped memory for forward.1']
    #allocation15 [shape = 'u8[512]{0}', space=vmem, size = 0x400, scoped, tag = 'input window, operand 48, single buffered']
    #allocation16 [shape = 'u8[512]{0}', space=vmem, size = 0x400, scoped, tag = 'input window, operand 49, single buffered']
    #allocation17 [shape = 's32[1]{0}', space=sflag, size = 0x4, scoped, tag = 'scoped memory for forward.1']
    #allocation18 [shape = 'u8[512]{0}', space=vmem, size = 0x400, scoped, tag = 'input window, operand 51, single buffered']
    #allocation19 [shape = 'u8[512]{0}', space=vmem, size = 0x400, scoped, tag = 'input window, operand 52, single buffered']
    #allocation20 [shape = 's32[1]{0}', space=sflag, size = 0x4, scoped, tag = 'scoped memory for forward.1']
    %112 = vsyncpa [#allocation3], 0
    %113 = vsyncpa [#allocation5], 0
    %114 = vsyncpa [#allocation8], 0
    %115 = vsyncpa [#allocation11], 0
    %116 = vsyncpa [#allocation14], 0
    %117 = vsyncpa [#allocation17], 0
    %118 = vsyncpa [#allocation20], 0
    loop: start=0, step=1, limit=4
    $region2: #{forward.1} parent=1 // loop_pre_header
      _
    $region3: #{forward.1} parent=1 // loop_header
      %s120 = sphi 0, %s124
      %p121 = scmp.ge.s32.totalorder %s120, 4
      %s130 = sphi 0, %s132
      %s133 = sphi 0, %s130
      %s134 = sphi 0, %s133
      %s150 = sphi 0, %s134
      %s154 = sphi 0, %s154
      %s156 = sphi 0, %s154
      %s157 = sphi 0, %s156
      %s171 = sphi 0, %s157
      %s175 = sphi 0, %s175
      %s177 = sphi 0, %s175
      %s178 = sphi 0, %s177
      %s192 = sphi 0, %s178
      %s196 = sphi 0, %s196
      %s198 = sphi 0, %s196
      %s199 = sphi 0, %s198
      %s213 = sphi 0, %s199
      %s217 = sphi 0, %s217
      %s219 = sphi 0, %s217
      %s220 = sphi 0, %s219
      %s234 = sphi 0, %s220
      %s238 = sphi 0, %s238
      %s240 = sphi 0, %s238
      %s241 = sphi 0, %s240
      %s255 = sphi 0, %s241
      %s259 = sphi 0, %s259
      %s261 = sphi 0, %s259
      %s262 = sphi 0, %s261
      %s276 = sphi 0, %s262
      %s280 = sphi 0, %s280
      %s282 = sphi 0, %s280
      %s283 = sphi 0, %s282
      %s297 = sphi 0, %s283
      %s301 = sphi 0, %s301
      %s303 = sphi 0, %s301
      %s304 = sphi 0, %s303
      %s318 = sphi 0, %s304
      %s322 = sphi 0, %s322
      %s324 = sphi 0, %s322
      %s325 = sphi 0, %s324
      %s339 = sphi 0, %s325
      %s343 = sphi 0, %s343
      %s345 = sphi 0, %s343
      %s346 = sphi 0, %s345
      %s360 = sphi 0, %s346
      %s364 = sphi 0, %s364
      %s366 = sphi 0, %s364
      %s367 = sphi 0, %s366
      %s381 = sphi 0, %s367
      %s385 = sphi 0, %s385
      %s387 = sphi 0, %s385
      %s388 = sphi 0, %s387
      %s402 = sphi 0, %s388
      %s406 = sphi 0, %s406
      %s408 = sphi 0, %s406
      %s409 = sphi 0, %s408
      %s423 = sphi 0, %s409
      %s427 = sphi 0, %s427
      %s429 = sphi 0, %s427
      %s430 = sphi 0, %s429
      %s444 = sphi 0, %s430
      %s448 = sphi 0, %s448
      %s450 = sphi 0, %s448
      %s451 = sphi 0, %s450
      %s465 = sphi 0, %s451
      %s469 = sphi 0, %s469
      %s471 = sphi 0, %s469
      %s472 = sphi 0, %s471
      %s486 = sphi 0, %s472
      %s490 = sphi 0, %s490
      %s492 = sphi 0, %s490
      %s493 = sphi 0, %s492
      %s507 = sphi 0, %s493
      %s511 = sphi 0, %s511
      %s513 = sphi 0, %s511
      %s514 = sphi 0, %s513
      %s528 = sphi 0, %s514
      %s532 = sphi 0, %s532
      %s534 = sphi 0, %s532
      %s535 = sphi 0, %s534
      %s549 = sphi 0, %s535
      %s553 = sphi 0, %s553
      %s555 = sphi 0, %s553
      %s556 = sphi 0, %s555
      %s570 = sphi 0, %s556
      %s574 = sphi 0, %s574
      %s576 = sphi 0, %s574
      %s577 = sphi 0, %s576
      %s591 = sphi 0, %s577
      %s595 = sphi 0, %s595
      %s597 = sphi 0, %s595
      %s598 = sphi 0, %s597
      %s612 = sphi 0, %s598
      %s616 = sphi 0, %s616
      %s618 = sphi 0, %s616
      %s619 = sphi 0, %s618
      %s633 = sphi 0, %s619
      %s637 = sphi 0, %s637
      %s639 = sphi 0, %s637
      %s640 = sphi 0, %s639
      %s654 = sphi 0, %s640
      %s658 = sphi 0, %s658
      %s660 = sphi 0, %s658
      %s661 = sphi 0, %s660
      %s675 = sphi 0, %s661
      %s679 = sphi 0, %s679
      %s681 = sphi 0, %s679
      %s682 = sphi 0, %s681
      %s696 = sphi 0, %s682
      %s700 = sphi 0, %s700
      %s702 = sphi 0, %s700
      %s703 = sphi 0, %s702
      %s717 = sphi 0, %s703
      %s721 = sphi 0, %s721
      %s723 = sphi 0, %s721
      %s724 = sphi 0, %s723
      %s738 = sphi 0, %s724
      %s742 = sphi 0, %s742
      %s744 = sphi 0, %s742
      %s745 = sphi 0, %s744
      %s759 = sphi 0, %s745
      %s763 = sphi 0, %s763
      %s765 = sphi 0, %s763
      %s766 = sphi 0, %s765
      %s780 = sphi 0, %s766
      %s784 = sphi 0, %s784
      %s786 = sphi 0, %s784
      %s787 = sphi 0, %s786
      %s801 = sphi 0, %s787
      %s805 = sphi 0, %s805
      %s807 = sphi 0, %s805
      %s808 = sphi 0, %s807
      %s822 = sphi 0, %s808
      %s826 = sphi 0, %s826
      %s828 = sphi 0, %s826
      %s829 = sphi 0, %s828
      %s843 = sphi 0, %s829
      %s847 = sphi 0, %s847
      %s849 = sphi 0, %s847
      %s850 = sphi 0, %s849
      %s864 = sphi 0, %s850
      %s868 = sphi 0, %s868
      %s870 = sphi 0, %s868
      %s871 = sphi 0, %s870
      %s885 = sphi 0, %s871
      %s889 = sphi 0, %s889
      %s891 = sphi 0, %s889
      %s892 = sphi 0, %s891
      %s906 = sphi 0, %s892
      %s910 = sphi 0, %s910
      %s912 = sphi 0, %s910
      %s913 = sphi 0, %s912
      %s927 = sphi 0, %s913
      %s931 = sphi 0, %s931
      %s933 = sphi 0, %s931
      %s934 = sphi 0, %s933
      %s948 = sphi 0, %s934
      %s952 = sphi 0, %s952
      %s954 = sphi 0, %s952
      %s955 = sphi 0, %s954
      %s969 = sphi 0, %s955
      %s973 = sphi 0, %s973
      %s975 = sphi 0, %s973
      %s976 = sphi 0, %s975
      %s990 = sphi 0, %s976
      %s994 = sphi 0, %s994
      %s996 = sphi 0, %s994
      %s997 = sphi 0, %s996
      %s1011 = sphi 0, %s997
      %s1015 = sphi 0, %s1015
      %s1017 = sphi 0, %s1015
      %s1018 = sphi 0, %s1017
      %s1032 = sphi 0, %s1018
      %s1036 = sphi 0, %s1036
      %s1038 = sphi 0, %s1036
      %s1039 = sphi 0, %s1038
      %s1053 = sphi 0, %s1039
      %s1057 = sphi 0, %s1057
      %s1059 = sphi 0, %s1057
      %s1060 = sphi 0, %s1059
      %s1074 = sphi 0, %s1060
      %s1078 = sphi 0, %s1078
      %s1080 = sphi 0, %s1078
      %s1081 = sphi 0, %s1080
      %s1095 = sphi 0, %s1081
      %s1099 = sphi 0, %s1099
      %s1101 = sphi 0, %s1099
      %s1102 = sphi 0, %s1101
      %s1116 = sphi 0, %s1102
      %s1120 = sphi 0, %s1120
      %s1122 = sphi 0, %s1120
      %s1123 = sphi 0, %s1122
      %s1137 = sphi 0, %s1123
      %s1141 = sphi 0, %s1141
      %s1143 = sphi 0, %s1141
      %s1144 = sphi 0, %s1143
      %s1158 = sphi 0, %s1144
      %s1162 = sphi 0, %s1162
      %s1164 = sphi 0, %s1162
      %s1165 = sphi 0, %s1164
      %s1179 = sphi 0, %s1165
      %s1183 = sphi 0, %s1183
      %s1185 = sphi 0, %s1183
      %s1186 = sphi 0, %s1185
      %s1200 = sphi 0, %s1186
      %s1204 = sphi 0, %s1204
      %s1206 = sphi 0, %s1204
      %s1207 = sphi 0, %s1206
      %s1221 = sphi 0, %s1207
      %s1225 = sphi 0, %s1225
      %s1227 = sphi 0, %s1225
      %s1228 = sphi 0, %s1227
      %s1242 = sphi 0, %s1228
      %s1248 = sphi 0, %s1250
      %s1251 = sphi 0, %s1248
      %s1252 = sphi 0, %s1251
      %s1268 = sphi 0, %s1252
    $region4: #{forward.1} parent=1 // loop_header_branch
      %123 = sbr.rel (%p121) target = $region8
    $region5: #{forward.1} parent=1 // loop_body
      %s125 = ssub.s32 %s120, 1
      %s126 = ssub.s32 %s120, 2
      %s127 = sadd.s32 %s120, 1
      %s128 = ssub.s32 %s120, %s127
      %p129 = scmp.eq.s32.totalorder %s128, 0
      %s131 = sadd.s32 %s130, 1
      %s132 = scalar_select %p129, %s130, %s131
      %p135 = pneg %p129
      %p136 = scmp.eq.s32.totalorder %s120, 1
      %p137 = por %p135, %p136
      %p138 = scmp.ne.s32.totalorder %s130, %s133
      %p139 = scmp.eq.s32.totalorder %s120, 0
      %p140 = por %p138, %p139
      %p141 = scmp.ne.s32.totalorder %s130, %s133
      %p142 = scmp.eq.s32.totalorder %s125, 1
      %p143 = por %p141, %p142
      %p144 = scmp.ne.s32.totalorder %s133, %s134
      %p145 = scmp.eq.s32.totalorder %s125, 0
      %p146 = por %p144, %p145
      %p147 = scmp.ne.s32.totalorder %s133, %s134
      %p148 = scmp.eq.s32.totalorder %s126, 1
      %p149 = por %p147, %p148
      %p151 = scmp.ne.s32.totalorder %s134, %s150
      %p152 = scmp.eq.s32.totalorder %s126, 0
      %p153 = por %p151, %p152
      %s155 = sadd.s32 %s154, 1
      %p158 = scmp.eq.s32.totalorder %s120, 1
      %p159 = scmp.ne.s32.totalorder %s154, %s156
      %p160 = scmp.eq.s32.totalorder %s120, 0
      %p161 = por %p159, %p160
      %p162 = scmp.ne.s32.totalorder %s154, %s156
      %p163 = scmp.eq.s32.totalorder %s125, 1
      %p164 = por %p162, %p163
      %p165 = scmp.ne.s32.totalorder %s156, %s157
      %p166 = scmp.eq.s32.totalorder %s125, 0
      %p167 = por %p165, %p166
      %p168 = scmp.ne.s32.totalorder %s156, %s157
      %p169 = scmp.eq.s32.totalorder %s126, 1
      %p170 = por %p168, %p169
      %p172 = scmp.ne.s32.totalorder %s157, %s171
      %p173 = scmp.eq.s32.totalorder %s126, 0
      %p174 = por %p172, %p173
      %s176 = sadd.s32 %s175, 1
      %p179 = scmp.eq.s32.totalorder %s120, 1
      %p180 = scmp.ne.s32.totalorder %s175, %s177
      %p181 = scmp.eq.s32.totalorder %s120, 0
      %p182 = por %p180, %p181
      %p183 = scmp.ne.s32.totalorder %s175, %s177
      %p184 = scmp.eq.s32.totalorder %s125, 1
      %p185 = por %p183, %p184
      %p186 = scmp.ne.s32.totalorder %s177, %s178
      %p187 = scmp.eq.s32.totalorder %s125, 0
      %p188 = por %p186, %p187
      %p189 = scmp.ne.s32.totalorder %s177, %s178
      %p190 = scmp.eq.s32.totalorder %s126, 1
      %p191 = por %p189, %p190
      %p193 = scmp.ne.s32.totalorder %s178, %s192
      %p194 = scmp.eq.s32.totalorder %s126, 0
      %p195 = por %p193, %p194
      %s197 = sadd.s32 %s196, 1
      %p200 = scmp.eq.s32.totalorder %s120, 1
      %p201 = scmp.ne.s32.totalorder %s196, %s198
      %p202 = scmp.eq.s32.totalorder %s120, 0
      %p203 = por %p201, %p202
      %p204 = scmp.ne.s32.totalorder %s196, %s198
      %p205 = scmp.eq.s32.totalorder %s125, 1
      %p206 = por %p204, %p205
      %p207 = scmp.ne.s32.totalorder %s198, %s199
      %p208 = scmp.eq.s32.totalorder %s125, 0
      %p209 = por %p207, %p208
      %p210 = scmp.ne.s32.totalorder %s198, %s199
      %p211 = scmp.eq.s32.totalorder %s126, 1
      %p212 = por %p210, %p211
      %p214 = scmp.ne.s32.totalorder %s199, %s213
      %p215 = scmp.eq.s32.totalorder %s126, 0
      %p216 = por %p214, %p215
      %s218 = sadd.s32 %s217, 1
      %p221 = scmp.eq.s32.totalorder %s120, 1
      %p222 = scmp.ne.s32.totalorder %s217, %s219
      %p223 = scmp.eq.s32.totalorder %s120, 0
      %p224 = por %p222, %p223
      %p225 = scmp.ne.s32.totalorder %s217, %s219
      %p226 = scmp.eq.s32.totalorder %s125, 1
      %p227 = por %p225, %p226
      %p228 = scmp.ne.s32.totalorder %s219, %s220
      %p229 = scmp.eq.s32.totalorder %s125, 0
      %p230 = por %p228, %p229
      %p231 = scmp.ne.s32.totalorder %s219, %s220
      %p232 = scmp.eq.s32.totalorder %s126, 1
      %p233 = por %p231, %p232
      %p235 = scmp.ne.s32.totalorder %s220, %s234
      %p236 = scmp.eq.s32.totalorder %s126, 0
      %p237 = por %p235, %p236
      %s239 = sadd.s32 %s238, 1
      %p242 = scmp.eq.s32.totalorder %s120, 1
      %p243 = scmp.ne.s32.totalorder %s238, %s240
      %p244 = scmp.eq.s32.totalorder %s120, 0
      %p245 = por %p243, %p244
      %p246 = scmp.ne.s32.totalorder %s238, %s240
      %p247 = scmp.eq.s32.totalorder %s125, 1
      %p248 = por %p246, %p247
      %p249 = scmp.ne.s32.totalorder %s240, %s241
      %p250 = scmp.eq.s32.totalorder %s125, 0
      %p251 = por %p249, %p250
      %p252 = scmp.ne.s32.totalorder %s240, %s241
      %p253 = scmp.eq.s32.totalorder %s126, 1
      %p254 = por %p252, %p253
      %p256 = scmp.ne.s32.totalorder %s241, %s255
      %p257 = scmp.eq.s32.totalorder %s126, 0
      %p258 = por %p256, %p257
      %s260 = sadd.s32 %s259, 1
      %p263 = scmp.eq.s32.totalorder %s120, 1
      %p264 = scmp.ne.s32.totalorder %s259, %s261
      %p265 = scmp.eq.s32.totalorder %s120, 0
      %p266 = por %p264, %p265
      %p267 = scmp.ne.s32.totalorder %s259, %s261
      %p268 = scmp.eq.s32.totalorder %s125, 1
      %p269 = por %p267, %p268
      %p270 = scmp.ne.s32.totalorder %s261, %s262
      %p271 = scmp.eq.s32.totalorder %s125, 0
      %p272 = por %p270, %p271
      %p273 = scmp.ne.s32.totalorder %s261, %s262
      %p274 = scmp.eq.s32.totalorder %s126, 1
      %p275 = por %p273, %p274
      %p277 = scmp.ne.s32.totalorder %s262, %s276
      %p278 = scmp.eq.s32.totalorder %s126, 0
      %p279 = por %p277, %p278
      %s281 = sadd.s32 %s280, 1
      %p284 = scmp.eq.s32.totalorder %s120, 1
      %p285 = scmp.ne.s32.totalorder %s280, %s282
      %p286 = scmp.eq.s32.totalorder %s120, 0
      %p287 = por %p285, %p286
      %p288 = scmp.ne.s32.totalorder %s280, %s282
      %p289 = scmp.eq.s32.totalorder %s125, 1
      %p290 = por %p288, %p289
      %p291 = scmp.ne.s32.totalorder %s282, %s283
      %p292 = scmp.eq.s32.totalorder %s125, 0
      %p293 = por %p291, %p292
      %p294 = scmp.ne.s32.totalorder %s282, %s283
      %p295 = scmp.eq.s32.totalorder %s126, 1
      %p296 = por %p294, %p295
      %p298 = scmp.ne.s32.totalorder %s283, %s297
      %p299 = scmp.eq.s32.totalorder %s126, 0
      %p300 = por %p298, %p299
      %s302 = sadd.s32 %s301, 1
      %p305 = scmp.eq.s32.totalorder %s120, 1
      %p306 = scmp.ne.s32.totalorder %s301, %s303
      %p307 = scmp.eq.s32.totalorder %s120, 0
      %p308 = por %p306, %p307
      %p309 = scmp.ne.s32.totalorder %s301, %s303
      %p310 = scmp.eq.s32.totalorder %s125, 1
      %p311 = por %p309, %p310
      %p312 = scmp.ne.s32.totalorder %s303, %s304
      %p313 = scmp.eq.s32.totalorder %s125, 0
      %p314 = por %p312, %p313
      %p315 = scmp.ne.s32.totalorder %s303, %s304
      %p316 = scmp.eq.s32.totalorder %s126, 1
      %p317 = por %p315, %p316
      %p319 = scmp.ne.s32.totalorder %s304, %s318
      %p320 = scmp.eq.s32.totalorder %s126, 0
      %p321 = por %p319, %p320
      %s323 = sadd.s32 %s322, 1
      %p326 = scmp.eq.s32.totalorder %s120, 1
      %p327 = scmp.ne.s32.totalorder %s322, %s324
      %p328 = scmp.eq.s32.totalorder %s120, 0
      %p329 = por %p327, %p328
      %p330 = scmp.ne.s32.totalorder %s322, %s324
      %p331 = scmp.eq.s32.totalorder %s125, 1
      %p332 = por %p330, %p331
      %p333 = scmp.ne.s32.totalorder %s324, %s325
      %p334 = scmp.eq.s32.totalorder %s125, 0
      %p335 = por %p333, %p334
      %p336 = scmp.ne.s32.totalorder %s324, %s325
      %p337 = scmp.eq.s32.totalorder %s126, 1
      %p338 = por %p336, %p337
      %p340 = scmp.ne.s32.totalorder %s325, %s339
      %p341 = scmp.eq.s32.totalorder %s126, 0
      %p342 = por %p340, %p341
      %s344 = sadd.s32 %s343, 1
      %p347 = scmp.eq.s32.totalorder %s120, 1
      %p348 = scmp.ne.s32.totalorder %s343, %s345
      %p349 = scmp.eq.s32.totalorder %s120, 0
      %p350 = por %p348, %p349
      %p351 = scmp.ne.s32.totalorder %s343, %s345
      %p352 = scmp.eq.s32.totalorder %s125, 1
      %p353 = por %p351, %p352
      %p354 = scmp.ne.s32.totalorder %s345, %s346
      %p355 = scmp.eq.s32.totalorder %s125, 0
      %p356 = por %p354, %p355
      %p357 = scmp.ne.s32.totalorder %s345, %s346
      %p358 = scmp.eq.s32.totalorder %s126, 1
      %p359 = por %p357, %p358
      %p361 = scmp.ne.s32.totalorder %s346, %s360
      %p362 = scmp.eq.s32.totalorder %s126, 0
      %p363 = por %p361, %p362
      %s365 = sadd.s32 %s364, 1
      %p368 = scmp.eq.s32.totalorder %s120, 1
      %p369 = scmp.ne.s32.totalorder %s364, %s366
      %p370 = scmp.eq.s32.totalorder %s120, 0
      %p371 = por %p369, %p370
      %p372 = scmp.ne.s32.totalorder %s364, %s366
      %p373 = scmp.eq.s32.totalorder %s125, 1
      %p374 = por %p372, %p373
      %p375 = scmp.ne.s32.totalorder %s366, %s367
      %p376 = scmp.eq.s32.totalorder %s125, 0
      %p377 = por %p375, %p376
      %p378 = scmp.ne.s32.totalorder %s366, %s367
      %p379 = scmp.eq.s32.totalorder %s126, 1
      %p380 = por %p378, %p379
      %p382 = scmp.ne.s32.totalorder %s367, %s381
      %p383 = scmp.eq.s32.totalorder %s126, 0
      %p384 = por %p382, %p383
      %s386 = sadd.s32 %s385, 1
      %p389 = scmp.eq.s32.totalorder %s120, 1
      %p390 = scmp.ne.s32.totalorder %s385, %s387
      %p391 = scmp.eq.s32.totalorder %s120, 0
      %p392 = por %p390, %p391
      %p393 = scmp.ne.s32.totalorder %s385, %s387
      %p394 = scmp.eq.s32.totalorder %s125, 1
      %p395 = por %p393, %p394
      %p396 = scmp.ne.s32.totalorder %s387, %s388
      %p397 = scmp.eq.s32.totalorder %s125, 0
      %p398 = por %p396, %p397
      %p399 = scmp.ne.s32.totalorder %s387, %s388
      %p400 = scmp.eq.s32.totalorder %s126, 1
      %p401 = por %p399, %p400
      %p403 = scmp.ne.s32.totalorder %s388, %s402
      %p404 = scmp.eq.s32.totalorder %s126, 0
      %p405 = por %p403, %p404
      %s407 = sadd.s32 %s406, 1
      %p410 = scmp.eq.s32.totalorder %s120, 1
      %p411 = scmp.ne.s32.totalorder %s406, %s408
      %p412 = scmp.eq.s32.totalorder %s120, 0
      %p413 = por %p411, %p412
      %p414 = scmp.ne.s32.totalorder %s406, %s408
      %p415 = scmp.eq.s32.totalorder %s125, 1
      %p416 = por %p414, %p415
      %p417 = scmp.ne.s32.totalorder %s408, %s409
      %p418 = scmp.eq.s32.totalorder %s125, 0
      %p419 = por %p417, %p418
      %p420 = scmp.ne.s32.totalorder %s408, %s409
      %p421 = scmp.eq.s32.totalorder %s126, 1
      %p422 = por %p420, %p421
      %p424 = scmp.ne.s32.totalorder %s409, %s423
      %p425 = scmp.eq.s32.totalorder %s126, 0
      %p426 = por %p424, %p425
      %s428 = sadd.s32 %s427, 1
      %p431 = scmp.eq.s32.totalorder %s120, 1
      %p432 = scmp.ne.s32.totalorder %s427, %s429
      %p433 = scmp.eq.s32.totalorder %s120, 0
      %p434 = por %p432, %p433
      %p435 = scmp.ne.s32.totalorder %s427, %s429
      %p436 = scmp.eq.s32.totalorder %s125, 1
      %p437 = por %p435, %p436
      %p438 = scmp.ne.s32.totalorder %s429, %s430
      %p439 = scmp.eq.s32.totalorder %s125, 0
      %p440 = por %p438, %p439
      %p441 = scmp.ne.s32.totalorder %s429, %s430
      %p442 = scmp.eq.s32.totalorder %s126, 1
      %p443 = por %p441, %p442
      %p445 = scmp.ne.s32.totalorder %s430, %s444
      %p446 = scmp.eq.s32.totalorder %s126, 0
      %p447 = por %p445, %p446
      %s449 = sadd.s32 %s448, 1
      %p452 = scmp.eq.s32.totalorder %s120, 1
      %p453 = scmp.ne.s32.totalorder %s448, %s450
      %p454 = scmp.eq.s32.totalorder %s120, 0
      %p455 = por %p453, %p454
      %p456 = scmp.ne.s32.totalorder %s448, %s450
      %p457 = scmp.eq.s32.totalorder %s125, 1
      %p458 = por %p456, %p457
      %p459 = scmp.ne.s32.totalorder %s450, %s451
      %p460 = scmp.eq.s32.totalorder %s125, 0
      %p461 = por %p459, %p460
      %p462 = scmp.ne.s32.totalorder %s450, %s451
      %p463 = scmp.eq.s32.totalorder %s126, 1
      %p464 = por %p462, %p463
      %p466 = scmp.ne.s32.totalorder %s451, %s465
      %p467 = scmp.eq.s32.totalorder %s126, 0
      %p468 = por %p466, %p467
      %s470 = sadd.s32 %s469, 1
      %p473 = scmp.eq.s32.totalorder %s120, 1
      %p474 = scmp.ne.s32.totalorder %s469, %s471
      %p475 = scmp.eq.s32.totalorder %s120, 0
      %p476 = por %p474, %p475
      %p477 = scmp.ne.s32.totalorder %s469, %s471
      %p478 = scmp.eq.s32.totalorder %s125, 1
      %p479 = por %p477, %p478
      %p480 = scmp.ne.s32.totalorder %s471, %s472
      %p481 = scmp.eq.s32.totalorder %s125, 0
      %p482 = por %p480, %p481
      %p483 = scmp.ne.s32.totalorder %s471, %s472
      %p484 = scmp.eq.s32.totalorder %s126, 1
      %p485 = por %p483, %p484
      %p487 = scmp.ne.s32.totalorder %s472, %s486
      %p488 = scmp.eq.s32.totalorder %s126, 0
      %p489 = por %p487, %p488
      %s491 = sadd.s32 %s490, 1
      %p494 = scmp.eq.s32.totalorder %s120, 1
      %p495 = scmp.ne.s32.totalorder %s490, %s492
      %p496 = scmp.eq.s32.totalorder %s120, 0
      %p497 = por %p495, %p496
      %p498 = scmp.ne.s32.totalorder %s490, %s492
      %p499 = scmp.eq.s32.totalorder %s125, 1
      %p500 = por %p498, %p499
      %p501 = scmp.ne.s32.totalorder %s492, %s493
      %p502 = scmp.eq.s32.totalorder %s125, 0
      %p503 = por %p501, %p502
      %p504 = scmp.ne.s32.totalorder %s492, %s493
      %p505 = scmp.eq.s32.totalorder %s126, 1
      %p506 = por %p504, %p505
      %p508 = scmp.ne.s32.totalorder %s493, %s507
      %p509 = scmp.eq.s32.totalorder %s126, 0
      %p510 = por %p508, %p509
      %s512 = sadd.s32 %s511, 1
      %p515 = scmp.eq.s32.totalorder %s120, 1
      %p516 = scmp.ne.s32.totalorder %s511, %s513
      %p517 = scmp.eq.s32.totalorder %s120, 0
      %p518 = por %p516, %p517
      %p519 = scmp.ne.s32.totalorder %s511, %s513
      %p520 = scmp.eq.s32.totalorder %s125, 1
      %p521 = por %p519, %p520
      %p522 = scmp.ne.s32.totalorder %s513, %s514
      %p523 = scmp.eq.s32.totalorder %s125, 0
      %p524 = por %p522, %p523
      %p525 = scmp.ne.s32.totalorder %s513, %s514
      %p526 = scmp.eq.s32.totalorder %s126, 1
      %p527 = por %p525, %p526
      %p529 = scmp.ne.s32.totalorder %s514, %s528
      %p530 = scmp.eq.s32.totalorder %s126, 0
      %p531 = por %p529, %p530
      %s533 = sadd.s32 %s532, 1
      %p536 = scmp.eq.s32.totalorder %s120, 1
      %p537 = scmp.ne.s32.totalorder %s532, %s534
      %p538 = scmp.eq.s32.totalorder %s120, 0
      %p539 = por %p537, %p538
      %p540 = scmp.ne.s32.totalorder %s532, %s534
      %p541 = scmp.eq.s32.totalorder %s125, 1
      %p542 = por %p540, %p541
      %p543 = scmp.ne.s32.totalorder %s534, %s535
      %p544 = scmp.eq.s32.totalorder %s125, 0
      %p545 = por %p543, %p544
      %p546 = scmp.ne.s32.totalorder %s534, %s535
      %p547 = scmp.eq.s32.totalorder %s126, 1
      %p548 = por %p546, %p547
      %p550 = scmp.ne.s32.totalorder %s535, %s549
      %p551 = scmp.eq.s32.totalorder %s126, 0
      %p552 = por %p550, %p551
      %s554 = sadd.s32 %s553, 1
      %p557 = scmp.eq.s32.totalorder %s120, 1
      %p558 = scmp.ne.s32.totalorder %s553, %s555
      %p559 = scmp.eq.s32.totalorder %s120, 0
      %p560 = por %p558, %p559
      %p561 = scmp.ne.s32.totalorder %s553, %s555
      %p562 = scmp.eq.s32.totalorder %s125, 1
      %p563 = por %p561, %p562
      %p564 = scmp.ne.s32.totalorder %s555, %s556
      %p565 = scmp.eq.s32.totalorder %s125, 0
      %p566 = por %p564, %p565
      %p567 = scmp.ne.s32.totalorder %s555, %s556
      %p568 = scmp.eq.s32.totalorder %s126, 1
      %p569 = por %p567, %p568
      %p571 = scmp.ne.s32.totalorder %s556, %s570
      %p572 = scmp.eq.s32.totalorder %s126, 0
      %p573 = por %p571, %p572
      %s575 = sadd.s32 %s574, 1
      %p578 = scmp.eq.s32.totalorder %s120, 1
      %p579 = scmp.ne.s32.totalorder %s574, %s576
      %p580 = scmp.eq.s32.totalorder %s120, 0
      %p581 = por %p579, %p580
      %p582 = scmp.ne.s32.totalorder %s574, %s576
      %p583 = scmp.eq.s32.totalorder %s125, 1
      %p584 = por %p582, %p583
      %p585 = scmp.ne.s32.totalorder %s576, %s577
      %p586 = scmp.eq.s32.totalorder %s125, 0
      %p587 = por %p585, %p586
      %p588 = scmp.ne.s32.totalorder %s576, %s577
      %p589 = scmp.eq.s32.totalorder %s126, 1
      %p590 = por %p588, %p589
      %p592 = scmp.ne.s32.totalorder %s577, %s591
      %p593 = scmp.eq.s32.totalorder %s126, 0
      %p594 = por %p592, %p593
      %s596 = sadd.s32 %s595, 1
      %p599 = scmp.eq.s32.totalorder %s120, 1
      %p600 = scmp.ne.s32.totalorder %s595, %s597
      %p601 = scmp.eq.s32.totalorder %s120, 0
      %p602 = por %p600, %p601
      %p603 = scmp.ne.s32.totalorder %s595, %s597
      %p604 = scmp.eq.s32.totalorder %s125, 1
      %p605 = por %p603, %p604
      %p606 = scmp.ne.s32.totalorder %s597, %s598
      %p607 = scmp.eq.s32.totalorder %s125, 0
      %p608 = por %p606, %p607
      %p609 = scmp.ne.s32.totalorder %s597, %s598
      %p610 = scmp.eq.s32.totalorder %s126, 1
      %p611 = por %p609, %p610
      %p613 = scmp.ne.s32.totalorder %s598, %s612
      %p614 = scmp.eq.s32.totalorder %s126, 0
      %p615 = por %p613, %p614
      %s617 = sadd.s32 %s616, 1
      %p620 = scmp.eq.s32.totalorder %s120, 1
      %p621 = scmp.ne.s32.totalorder %s616, %s618
      %p622 = scmp.eq.s32.totalorder %s120, 0
      %p623 = por %p621, %p622
      %p624 = scmp.ne.s32.totalorder %s616, %s618
      %p625 = scmp.eq.s32.totalorder %s125, 1
      %p626 = por %p624, %p625
      %p627 = scmp.ne.s32.totalorder %s618, %s619
      %p628 = scmp.eq.s32.totalorder %s125, 0
      %p629 = por %p627, %p628
      %p630 = scmp.ne.s32.totalorder %s618, %s619
      %p631 = scmp.eq.s32.totalorder %s126, 1
      %p632 = por %p630, %p631
      %p634 = scmp.ne.s32.totalorder %s619, %s633
      %p635 = scmp.eq.s32.totalorder %s126, 0
      %p636 = por %p634, %p635
      %s638 = sadd.s32 %s637, 1
      %p641 = scmp.eq.s32.totalorder %s120, 1
      %p642 = scmp.ne.s32.totalorder %s637, %s639
      %p643 = scmp.eq.s32.totalorder %s120, 0
      %p644 = por %p642, %p643
      %p645 = scmp.ne.s32.totalorder %s637, %s639
      %p646 = scmp.eq.s32.totalorder %s125, 1
      %p647 = por %p645, %p646
      %p648 = scmp.ne.s32.totalorder %s639, %s640
      %p649 = scmp.eq.s32.totalorder %s125, 0
      %p650 = por %p648, %p649
      %p651 = scmp.ne.s32.totalorder %s639, %s640
      %p652 = scmp.eq.s32.totalorder %s126, 1
      %p653 = por %p651, %p652
      %p655 = scmp.ne.s32.totalorder %s640, %s654
      %p656 = scmp.eq.s32.totalorder %s126, 0
      %p657 = por %p655, %p656
      %s659 = sadd.s32 %s658, 1
      %p662 = scmp.eq.s32.totalorder %s120, 1
      %p663 = scmp.ne.s32.totalorder %s658, %s660
      %p664 = scmp.eq.s32.totalorder %s120, 0
      %p665 = por %p663, %p664
      %p666 = scmp.ne.s32.totalorder %s658, %s660
      %p667 = scmp.eq.s32.totalorder %s125, 1
      %p668 = por %p666, %p667
      %p669 = scmp.ne.s32.totalorder %s660, %s661
      %p670 = scmp.eq.s32.totalorder %s125, 0
      %p671 = por %p669, %p670
      %p672 = scmp.ne.s32.totalorder %s660, %s661
      %p673 = scmp.eq.s32.totalorder %s126, 1
      %p674 = por %p672, %p673
      %p676 = scmp.ne.s32.totalorder %s661, %s675
      %p677 = scmp.eq.s32.totalorder %s126, 0
      %p678 = por %p676, %p677
      %s680 = sadd.s32 %s679, 1
      %p683 = scmp.eq.s32.totalorder %s120, 1
      %p684 = scmp.ne.s32.totalorder %s679, %s681
      %p685 = scmp.eq.s32.totalorder %s120, 0
      %p686 = por %p684, %p685
      %p687 = scmp.ne.s32.totalorder %s679, %s681
      %p688 = scmp.eq.s32.totalorder %s125, 1
      %p689 = por %p687, %p688
      %p690 = scmp.ne.s32.totalorder %s681, %s682
      %p691 = scmp.eq.s32.totalorder %s125, 0
      %p692 = por %p690, %p691
      %p693 = scmp.ne.s32.totalorder %s681, %s682
      %p694 = scmp.eq.s32.totalorder %s126, 1
      %p695 = por %p693, %p694
      %p697 = scmp.ne.s32.totalorder %s682, %s696
      %p698 = scmp.eq.s32.totalorder %s126, 0
      %p699 = por %p697, %p698
      %s701 = sadd.s32 %s700, 1
      %p704 = scmp.eq.s32.totalorder %s120, 1
      %p705 = scmp.ne.s32.totalorder %s700, %s702
      %p706 = scmp.eq.s32.totalorder %s120, 0
      %p707 = por %p705, %p706
      %p708 = scmp.ne.s32.totalorder %s700, %s702
      %p709 = scmp.eq.s32.totalorder %s125, 1
      %p710 = por %p708, %p709
      %p711 = scmp.ne.s32.totalorder %s702, %s703
      %p712 = scmp.eq.s32.totalorder %s125, 0
      %p713 = por %p711, %p712
      %p714 = scmp.ne.s32.totalorder %s702, %s703
      %p715 = scmp.eq.s32.totalorder %s126, 1
      %p716 = por %p714, %p715
      %p718 = scmp.ne.s32.totalorder %s703, %s717
      %p719 = scmp.eq.s32.totalorder %s126, 0
      %p720 = por %p718, %p719
      %s722 = sadd.s32 %s721, 1
      %p725 = scmp.eq.s32.totalorder %s120, 1
      %p726 = scmp.ne.s32.totalorder %s721, %s723
      %p727 = scmp.eq.s32.totalorder %s120, 0
      %p728 = por %p726, %p727
      %p729 = scmp.ne.s32.totalorder %s721, %s723
      %p730 = scmp.eq.s32.totalorder %s125, 1
      %p731 = por %p729, %p730
      %p732 = scmp.ne.s32.totalorder %s723, %s724
      %p733 = scmp.eq.s32.totalorder %s125, 0
      %p734 = por %p732, %p733
      %p735 = scmp.ne.s32.totalorder %s723, %s724
      %p736 = scmp.eq.s32.totalorder %s126, 1
      %p737 = por %p735, %p736
      %p739 = scmp.ne.s32.totalorder %s724, %s738
      %p740 = scmp.eq.s32.totalorder %s126, 0
      %p741 = por %p739, %p740
      %s743 = sadd.s32 %s742, 1
      %p746 = scmp.eq.s32.totalorder %s120, 1
      %p747 = scmp.ne.s32.totalorder %s742, %s744
      %p748 = scmp.eq.s32.totalorder %s120, 0
      %p749 = por %p747, %p748
      %p750 = scmp.ne.s32.totalorder %s742, %s744
      %p751 = scmp.eq.s32.totalorder %s125, 1
      %p752 = por %p750, %p751
      %p753 = scmp.ne.s32.totalorder %s744, %s745
      %p754 = scmp.eq.s32.totalorder %s125, 0
      %p755 = por %p753, %p754
      %p756 = scmp.ne.s32.totalorder %s744, %s745
      %p757 = scmp.eq.s32.totalorder %s126, 1
      %p758 = por %p756, %p757
      %p760 = scmp.ne.s32.totalorder %s745, %s759
      %p761 = scmp.eq.s32.totalorder %s126, 0
      %p762 = por %p760, %p761
      %s764 = sadd.s32 %s763, 1
      %p767 = scmp.eq.s32.totalorder %s120, 1
      %p768 = scmp.ne.s32.totalorder %s763, %s765
      %p769 = scmp.eq.s32.totalorder %s120, 0
      %p770 = por %p768, %p769
      %p771 = scmp.ne.s32.totalorder %s763, %s765
      %p772 = scmp.eq.s32.totalorder %s125, 1
      %p773 = por %p771, %p772
      %p774 = scmp.ne.s32.totalorder %s765, %s766
      %p775 = scmp.eq.s32.totalorder %s125, 0
      %p776 = por %p774, %p775
      %p777 = scmp.ne.s32.totalorder %s765, %s766
      %p778 = scmp.eq.s32.totalorder %s126, 1
      %p779 = por %p777, %p778
      %p781 = scmp.ne.s32.totalorder %s766, %s780
      %p782 = scmp.eq.s32.totalorder %s126, 0
      %p783 = por %p781, %p782
      %s785 = sadd.s32 %s784, 1
      %p788 = scmp.eq.s32.totalorder %s120, 1
      %p789 = scmp.ne.s32.totalorder %s784, %s786
      %p790 = scmp.eq.s32.totalorder %s120, 0
      %p791 = por %p789, %p790
      %p792 = scmp.ne.s32.totalorder %s784, %s786
      %p793 = scmp.eq.s32.totalorder %s125, 1
      %p794 = por %p792, %p793
      %p795 = scmp.ne.s32.totalorder %s786, %s787
      %p796 = scmp.eq.s32.totalorder %s125, 0
      %p797 = por %p795, %p796
      %p798 = scmp.ne.s32.totalorder %s786, %s787
      %p799 = scmp.eq.s32.totalorder %s126, 1
      %p800 = por %p798, %p799
      %p802 = scmp.ne.s32.totalorder %s787, %s801
      %p803 = scmp.eq.s32.totalorder %s126, 0
      %p804 = por %p802, %p803
      %s806 = sadd.s32 %s805, 1
      %p809 = scmp.eq.s32.totalorder %s120, 1
      %p810 = scmp.ne.s32.totalorder %s805, %s807
      %p811 = scmp.eq.s32.totalorder %s120, 0
      %p812 = por %p810, %p811
      %p813 = scmp.ne.s32.totalorder %s805, %s807
      %p814 = scmp.eq.s32.totalorder %s125, 1
      %p815 = por %p813, %p814
      %p816 = scmp.ne.s32.totalorder %s807, %s808
      %p817 = scmp.eq.s32.totalorder %s125, 0
      %p818 = por %p816, %p817
      %p819 = scmp.ne.s32.totalorder %s807, %s808
      %p820 = scmp.eq.s32.totalorder %s126, 1
      %p821 = por %p819, %p820
      %p823 = scmp.ne.s32.totalorder %s808, %s822
      %p824 = scmp.eq.s32.totalorder %s126, 0
      %p825 = por %p823, %p824
      %s827 = sadd.s32 %s826, 1
      %p830 = scmp.eq.s32.totalorder %s120, 1
      %p831 = scmp.ne.s32.totalorder %s826, %s828
      %p832 = scmp.eq.s32.totalorder %s120, 0
      %p833 = por %p831, %p832
      %p834 = scmp.ne.s32.totalorder %s826, %s828
      %p835 = scmp.eq.s32.totalorder %s125, 1
      %p836 = por %p834, %p835
      %p837 = scmp.ne.s32.totalorder %s828, %s829
      %p838 = scmp.eq.s32.totalorder %s125, 0
      %p839 = por %p837, %p838
      %p840 = scmp.ne.s32.totalorder %s828, %s829
      %p841 = scmp.eq.s32.totalorder %s126, 1
      %p842 = por %p840, %p841
      %p844 = scmp.ne.s32.totalorder %s829, %s843
      %p845 = scmp.eq.s32.totalorder %s126, 0
      %p846 = por %p844, %p845
      %s848 = sadd.s32 %s847, 1
      %p851 = scmp.eq.s32.totalorder %s120, 1
      %p852 = scmp.ne.s32.totalorder %s847, %s849
      %p853 = scmp.eq.s32.totalorder %s120, 0
      %p854 = por %p852, %p853
      %p855 = scmp.ne.s32.totalorder %s847, %s849
      %p856 = scmp.eq.s32.totalorder %s125, 1
      %p857 = por %p855, %p856
      %p858 = scmp.ne.s32.totalorder %s849, %s850
      %p859 = scmp.eq.s32.totalorder %s125, 0
      %p860 = por %p858, %p859
      %p861 = scmp.ne.s32.totalorder %s849, %s850
      %p862 = scmp.eq.s32.totalorder %s126, 1
      %p863 = por %p861, %p862
      %p865 = scmp.ne.s32.totalorder %s850, %s864
      %p866 = scmp.eq.s32.totalorder %s126, 0
      %p867 = por %p865, %p866
      %s869 = sadd.s32 %s868, 1
      %p872 = scmp.eq.s32.totalorder %s120, 1
      %p873 = scmp.ne.s32.totalorder %s868, %s870
      %p874 = scmp.eq.s32.totalorder %s120, 0
      %p875 = por %p873, %p874
      %p876 = scmp.ne.s32.totalorder %s868, %s870
      %p877 = scmp.eq.s32.totalorder %s125, 1
      %p878 = por %p876, %p877
      %p879 = scmp.ne.s32.totalorder %s870, %s871
      %p880 = scmp.eq.s32.totalorder %s125, 0
      %p881 = por %p879, %p880
      %p882 = scmp.ne.s32.totalorder %s870, %s871
      %p883 = scmp.eq.s32.totalorder %s126, 1
      %p884 = por %p882, %p883
      %p886 = scmp.ne.s32.totalorder %s871, %s885
      %p887 = scmp.eq.s32.totalorder %s126, 0
      %p888 = por %p886, %p887
      %s890 = sadd.s32 %s889, 1
      %p893 = scmp.eq.s32.totalorder %s120, 1
      %p894 = scmp.ne.s32.totalorder %s889, %s891
      %p895 = scmp.eq.s32.totalorder %s120, 0
      %p896 = por %p894, %p895
      %p897 = scmp.ne.s32.totalorder %s889, %s891
      %p898 = scmp.eq.s32.totalorder %s125, 1
      %p899 = por %p897, %p898
      %p900 = scmp.ne.s32.totalorder %s891, %s892
      %p901 = scmp.eq.s32.totalorder %s125, 0
      %p902 = por %p900, %p901
      %p903 = scmp.ne.s32.totalorder %s891, %s892
      %p904 = scmp.eq.s32.totalorder %s126, 1
      %p905 = por %p903, %p904
      %p907 = scmp.ne.s32.totalorder %s892, %s906
      %p908 = scmp.eq.s32.totalorder %s126, 0
      %p909 = por %p907, %p908
      %s911 = sadd.s32 %s910, 1
      %p914 = scmp.eq.s32.totalorder %s120, 1
      %p915 = scmp.ne.s32.totalorder %s910, %s912
      %p916 = scmp.eq.s32.totalorder %s120, 0
      %p917 = por %p915, %p916
      %p918 = scmp.ne.s32.totalorder %s910, %s912
      %p919 = scmp.eq.s32.totalorder %s125, 1
      %p920 = por %p918, %p919
      %p921 = scmp.ne.s32.totalorder %s912, %s913
      %p922 = scmp.eq.s32.totalorder %s125, 0
      %p923 = por %p921, %p922
      %p924 = scmp.ne.s32.totalorder %s912, %s913
      %p925 = scmp.eq.s32.totalorder %s126, 1
      %p926 = por %p924, %p925
      %p928 = scmp.ne.s32.totalorder %s913, %s927
      %p929 = scmp.eq.s32.totalorder %s126, 0
      %p930 = por %p928, %p929
      %s932 = sadd.s32 %s931, 1
      %p935 = scmp.eq.s32.totalorder %s120, 1
      %p936 = scmp.ne.s32.totalorder %s931, %s933
      %p937 = scmp.eq.s32.totalorder %s120, 0
      %p938 = por %p936, %p937
      %p939 = scmp.ne.s32.totalorder %s931, %s933
      %p940 = scmp.eq.s32.totalorder %s125, 1
      %p941 = por %p939, %p940
      %p942 = scmp.ne.s32.totalorder %s933, %s934
      %p943 = scmp.eq.s32.totalorder %s125, 0
      %p944 = por %p942, %p943
      %p945 = scmp.ne.s32.totalorder %s933, %s934
      %p946 = scmp.eq.s32.totalorder %s126, 1
      %p947 = por %p945, %p946
      %p949 = scmp.ne.s32.totalorder %s934, %s948
      %p950 = scmp.eq.s32.totalorder %s126, 0
      %p951 = por %p949, %p950
      %s953 = sadd.s32 %s952, 1
      %p956 = scmp.eq.s32.totalorder %s120, 1
      %p957 = scmp.ne.s32.totalorder %s952, %s954
      %p958 = scmp.eq.s32.totalorder %s120, 0
      %p959 = por %p957, %p958
      %p960 = scmp.ne.s32.totalorder %s952, %s954
      %p961 = scmp.eq.s32.totalorder %s125, 1
      %p962 = por %p960, %p961
      %p963 = scmp.ne.s32.totalorder %s954, %s955
      %p964 = scmp.eq.s32.totalorder %s125, 0
      %p965 = por %p963, %p964
      %p966 = scmp.ne.s32.totalorder %s954, %s955
      %p967 = scmp.eq.s32.totalorder %s126, 1
      %p968 = por %p966, %p967
      %p970 = scmp.ne.s32.totalorder %s955, %s969
      %p971 = scmp.eq.s32.totalorder %s126, 0
      %p972 = por %p970, %p971
      %s974 = sadd.s32 %s973, 1
      %p977 = scmp.eq.s32.totalorder %s120, 1
      %p978 = scmp.ne.s32.totalorder %s973, %s975
      %p979 = scmp.eq.s32.totalorder %s120, 0
      %p980 = por %p978, %p979
      %p981 = scmp.ne.s32.totalorder %s973, %s975
      %p982 = scmp.eq.s32.totalorder %s125, 1
      %p983 = por %p981, %p982
      %p984 = scmp.ne.s32.totalorder %s975, %s976
      %p985 = scmp.eq.s32.totalorder %s125, 0
      %p986 = por %p984, %p985
      %p987 = scmp.ne.s32.totalorder %s975, %s976
      %p988 = scmp.eq.s32.totalorder %s126, 1
      %p989 = por %p987, %p988
      %p991 = scmp.ne.s32.totalorder %s976, %s990
      %p992 = scmp.eq.s32.totalorder %s126, 0
      %p993 = por %p991, %p992
      %s995 = sadd.s32 %s994, 1
      %p998 = scmp.eq.s32.totalorder %s120, 1
      %p999 = scmp.ne.s32.totalorder %s994, %s996
      %p1000 = scmp.eq.s32.totalorder %s120, 0
      %p1001 = por %p999, %p1000
      %p1002 = scmp.ne.s32.totalorder %s994, %s996
      %p1003 = scmp.eq.s32.totalorder %s125, 1
      %p1004 = por %p1002, %p1003
      %p1005 = scmp.ne.s32.totalorder %s996, %s997
      %p1006 = scmp.eq.s32.totalorder %s125, 0
      %p1007 = por %p1005, %p1006
      %p1008 = scmp.ne.s32.totalorder %s996, %s997
      %p1009 = scmp.eq.s32.totalorder %s126, 1
      %p1010 = por %p1008, %p1009
      %p1012 = scmp.ne.s32.totalorder %s997, %s1011
      %p1013 = scmp.eq.s32.totalorder %s126, 0
      %p1014 = por %p1012, %p1013
      %s1016 = sadd.s32 %s1015, 1
      %p1019 = scmp.eq.s32.totalorder %s120, 1
      %p1020 = scmp.ne.s32.totalorder %s1015, %s1017
      %p1021 = scmp.eq.s32.totalorder %s120, 0
      %p1022 = por %p1020, %p1021
      %p1023 = scmp.ne.s32.totalorder %s1015, %s1017
      %p1024 = scmp.eq.s32.totalorder %s125, 1
      %p1025 = por %p1023, %p1024
      %p1026 = scmp.ne.s32.totalorder %s1017, %s1018
      %p1027 = scmp.eq.s32.totalorder %s125, 0
      %p1028 = por %p1026, %p1027
      %p1029 = scmp.ne.s32.totalorder %s1017, %s1018
      %p1030 = scmp.eq.s32.totalorder %s126, 1
      %p1031 = por %p1029, %p1030
      %p1033 = scmp.ne.s32.totalorder %s1018, %s1032
      %p1034 = scmp.eq.s32.totalorder %s126, 0
      %p1035 = por %p1033, %p1034
      %s1037 = sadd.s32 %s1036, 1
      %p1040 = scmp.eq.s32.totalorder %s120, 1
      %p1041 = scmp.ne.s32.totalorder %s1036, %s1038
      %p1042 = scmp.eq.s32.totalorder %s120, 0
      %p1043 = por %p1041, %p1042
      %p1044 = scmp.ne.s32.totalorder %s1036, %s1038
      %p1045 = scmp.eq.s32.totalorder %s125, 1
      %p1046 = por %p1044, %p1045
      %p1047 = scmp.ne.s32.totalorder %s1038, %s1039
      %p1048 = scmp.eq.s32.totalorder %s125, 0
      %p1049 = por %p1047, %p1048
      %p1050 = scmp.ne.s32.totalorder %s1038, %s1039
      %p1051 = scmp.eq.s32.totalorder %s126, 1
      %p1052 = por %p1050, %p1051
      %p1054 = scmp.ne.s32.totalorder %s1039, %s1053
      %p1055 = scmp.eq.s32.totalorder %s126, 0
      %p1056 = por %p1054, %p1055
      %s1058 = sadd.s32 %s1057, 1
      %p1061 = scmp.eq.s32.totalorder %s120, 1
      %p1062 = scmp.ne.s32.totalorder %s1057, %s1059
      %p1063 = scmp.eq.s32.totalorder %s120, 0
      %p1064 = por %p1062, %p1063
      %p1065 = scmp.ne.s32.totalorder %s1057, %s1059
      %p1066 = scmp.eq.s32.totalorder %s125, 1
      %p1067 = por %p1065, %p1066
      %p1068 = scmp.ne.s32.totalorder %s1059, %s1060
      %p1069 = scmp.eq.s32.totalorder %s125, 0
      %p1070 = por %p1068, %p1069
      %p1071 = scmp.ne.s32.totalorder %s1059, %s1060
      %p1072 = scmp.eq.s32.totalorder %s126, 1
      %p1073 = por %p1071, %p1072
      %p1075 = scmp.ne.s32.totalorder %s1060, %s1074
      %p1076 = scmp.eq.s32.totalorder %s126, 0
      %p1077 = por %p1075, %p1076
      %s1079 = sadd.s32 %s1078, 1
      %p1082 = scmp.eq.s32.totalorder %s120, 1
      %p1083 = scmp.ne.s32.totalorder %s1078, %s1080
      %p1084 = scmp.eq.s32.totalorder %s120, 0
      %p1085 = por %p1083, %p1084
      %p1086 = scmp.ne.s32.totalorder %s1078, %s1080
      %p1087 = scmp.eq.s32.totalorder %s125, 1
      %p1088 = por %p1086, %p1087
      %p1089 = scmp.ne.s32.totalorder %s1080, %s1081
      %p1090 = scmp.eq.s32.totalorder %s125, 0
      %p1091 = por %p1089, %p1090
      %p1092 = scmp.ne.s32.totalorder %s1080, %s1081
      %p1093 = scmp.eq.s32.totalorder %s126, 1
      %p1094 = por %p1092, %p1093
      %p1096 = scmp.ne.s32.totalorder %s1081, %s1095
      %p1097 = scmp.eq.s32.totalorder %s126, 0
      %p1098 = por %p1096, %p1097
      %s1100 = sadd.s32 %s1099, 1
      %p1103 = scmp.eq.s32.totalorder %s120, 1
      %p1104 = scmp.ne.s32.totalorder %s1099, %s1101
      %p1105 = scmp.eq.s32.totalorder %s120, 0
      %p1106 = por %p1104, %p1105
      %p1107 = scmp.ne.s32.totalorder %s1099, %s1101
      %p1108 = scmp.eq.s32.totalorder %s125, 1
      %p1109 = por %p1107, %p1108
      %p1110 = scmp.ne.s32.totalorder %s1101, %s1102
      %p1111 = scmp.eq.s32.totalorder %s125, 0
      %p1112 = por %p1110, %p1111
      %p1113 = scmp.ne.s32.totalorder %s1101, %s1102
      %p1114 = scmp.eq.s32.totalorder %s126, 1
      %p1115 = por %p1113, %p1114
      %p1117 = scmp.ne.s32.totalorder %s1102, %s1116
      %p1118 = scmp.eq.s32.totalorder %s126, 0
      %p1119 = por %p1117, %p1118
      %s1121 = sadd.s32 %s1120, 1
      %p1124 = scmp.eq.s32.totalorder %s120, 1
      %p1125 = scmp.ne.s32.totalorder %s1120, %s1122
      %p1126 = scmp.eq.s32.totalorder %s120, 0
      %p1127 = por %p1125, %p1126
      %p1128 = scmp.ne.s32.totalorder %s1120, %s1122
      %p1129 = scmp.eq.s32.totalorder %s125, 1
      %p1130 = por %p1128, %p1129
      %p1131 = scmp.ne.s32.totalorder %s1122, %s1123
      %p1132 = scmp.eq.s32.totalorder %s125, 0
      %p1133 = por %p1131, %p1132
      %p1134 = scmp.ne.s32.totalorder %s1122, %s1123
      %p1135 = scmp.eq.s32.totalorder %s126, 1
      %p1136 = por %p1134, %p1135
      %p1138 = scmp.ne.s32.totalorder %s1123, %s1137
      %p1139 = scmp.eq.s32.totalorder %s126, 0
      %p1140 = por %p1138, %p1139
      %s1142 = sadd.s32 %s1141, 1
      %p1145 = scmp.eq.s32.totalorder %s120, 1
      %p1146 = scmp.ne.s32.totalorder %s1141, %s1143
      %p1147 = scmp.eq.s32.totalorder %s120, 0
      %p1148 = por %p1146, %p1147
      %p1149 = scmp.ne.s32.totalorder %s1141, %s1143
      %p1150 = scmp.eq.s32.totalorder %s125, 1
      %p1151 = por %p1149, %p1150
      %p1152 = scmp.ne.s32.totalorder %s1143, %s1144
      %p1153 = scmp.eq.s32.totalorder %s125, 0
      %p1154 = por %p1152, %p1153
      %p1155 = scmp.ne.s32.totalorder %s1143, %s1144
      %p1156 = scmp.eq.s32.totalorder %s126, 1
      %p1157 = por %p1155, %p1156
      %p1159 = scmp.ne.s32.totalorder %s1144, %s1158
      %p1160 = scmp.eq.s32.totalorder %s126, 0
      %p1161 = por %p1159, %p1160
      %s1163 = sadd.s32 %s1162, 1
      %p1166 = scmp.eq.s32.totalorder %s120, 1
      %p1167 = scmp.ne.s32.totalorder %s1162, %s1164
      %p1168 = scmp.eq.s32.totalorder %s120, 0
      %p1169 = por %p1167, %p1168
      %p1170 = scmp.ne.s32.totalorder %s1162, %s1164
      %p1171 = scmp.eq.s32.totalorder %s125, 1
      %p1172 = por %p1170, %p1171
      %p1173 = scmp.ne.s32.totalorder %s1164, %s1165
      %p1174 = scmp.eq.s32.totalorder %s125, 0
      %p1175 = por %p1173, %p1174
      %p1176 = scmp.ne.s32.totalorder %s1164, %s1165
      %p1177 = scmp.eq.s32.totalorder %s126, 1
      %p1178 = por %p1176, %p1177
      %p1180 = scmp.ne.s32.totalorder %s1165, %s1179
      %p1181 = scmp.eq.s32.totalorder %s126, 0
      %p1182 = por %p1180, %p1181
      %s1184 = sadd.s32 %s1183, 1
      %p1187 = scmp.eq.s32.totalorder %s120, 1
      %p1188 = scmp.ne.s32.totalorder %s1183, %s1185
      %p1189 = scmp.eq.s32.totalorder %s120, 0
      %p1190 = por %p1188, %p1189
      %p1191 = scmp.ne.s32.totalorder %s1183, %s1185
      %p1192 = scmp.eq.s32.totalorder %s125, 1
      %p1193 = por %p1191, %p1192
      %p1194 = scmp.ne.s32.totalorder %s1185, %s1186
      %p1195 = scmp.eq.s32.totalorder %s125, 0
      %p1196 = por %p1194, %p1195
      %p1197 = scmp.ne.s32.totalorder %s1185, %s1186
      %p1198 = scmp.eq.s32.totalorder %s126, 1
      %p1199 = por %p1197, %p1198
      %p1201 = scmp.ne.s32.totalorder %s1186, %s1200
      %p1202 = scmp.eq.s32.totalorder %s126, 0
      %p1203 = por %p1201, %p1202
      %s1205 = sadd.s32 %s1204, 1
      %p1208 = scmp.eq.s32.totalorder %s120, 1
      %p1209 = scmp.ne.s32.totalorder %s1204, %s1206
      %p1210 = scmp.eq.s32.totalorder %s120, 0
      %p1211 = por %p1209, %p1210
      %p1212 = scmp.ne.s32.totalorder %s1204, %s1206
      %p1213 = scmp.eq.s32.totalorder %s125, 1
      %p1214 = por %p1212, %p1213
      %p1215 = scmp.ne.s32.totalorder %s1206, %s1207
      %p1216 = scmp.eq.s32.totalorder %s125, 0
      %p1217 = por %p1215, %p1216
      %p1218 = scmp.ne.s32.totalorder %s1206, %s1207
      %p1219 = scmp.eq.s32.totalorder %s126, 1
      %p1220 = por %p1218, %p1219
      %p1222 = scmp.ne.s32.totalorder %s1207, %s1221
      %p1223 = scmp.eq.s32.totalorder %s126, 0
      %p1224 = por %p1222, %p1223
      %s1226 = sadd.s32 %s1225, 1
      %p1229 = scmp.eq.s32.totalorder %s120, 1
      %p1230 = scmp.ne.s32.totalorder %s1225, %s1227
      %p1231 = scmp.eq.s32.totalorder %s120, 0
      %p1232 = por %p1230, %p1231
      %p1233 = scmp.ne.s32.totalorder %s1225, %s1227
      %p1234 = scmp.eq.s32.totalorder %s125, 1
      %p1235 = por %p1233, %p1234
      %p1236 = scmp.ne.s32.totalorder %s1227, %s1228
      %p1237 = scmp.eq.s32.totalorder %s125, 0
      %p1238 = por %p1236, %p1237
      %p1239 = scmp.ne.s32.totalorder %s1227, %s1228
      %p1240 = scmp.eq.s32.totalorder %s126, 1
      %p1241 = por %p1239, %p1240
      %p1243 = scmp.ne.s32.totalorder %s1228, %s1242
      %p1244 = scmp.eq.s32.totalorder %s126, 0
      %p1245 = por %p1243, %p1244
      %s1246 = ssub.s32 %s120, %s127
      %p1247 = scmp.eq.s32.totalorder %s1246, 0
      %s1249 = sadd.s32 %s1248, 1
      %s1250 = scalar_select %p1247, %s1248, %s1249
      %p1253 = pneg %p1247
      %p1254 = scmp.eq.s32.totalorder %s120, 1
      %p1255 = por %p1253, %p1254
      %p1256 = scmp.ne.s32.totalorder %s1248, %s1251
      %p1257 = scmp.eq.s32.totalorder %s120, 0
      %p1258 = por %p1256, %p1257
      %p1259 = scmp.ne.s32.totalorder %s1248, %s1251
      %p1260 = scmp.eq.s32.totalorder %s125, 1
      %p1261 = por %p1259, %p1260
      %p1262 = scmp.ne.s32.totalorder %s1251, %s1252
      %p1263 = scmp.eq.s32.totalorder %s125, 0
      %p1264 = por %p1262, %p1263
      %p1265 = scmp.ne.s32.totalorder %s1251, %s1252
      %p1266 = scmp.eq.s32.totalorder %s126, 1
      %p1267 = por %p1265, %p1266
      %p1269 = scmp.ne.s32.totalorder %s1252, %s1268
      %p1270 = scmp.eq.s32.totalorder %s126, 0
      %p1271 = por %p1269, %p1270
      %p1272 = scmp.le.s32.totalorder 1, %s120
      %p1273 = scmp.lt.s32.totalorder %s120, 3
      %p1274 = pnand %p1272, %p1273
      %p1275 = pneg %p1274
      // Predicated region
      $region9: #{forward.1} parent=5 // pred_check
        _
      $region10: #{forward.1} parent=5 // pred_check_branch
        %1277 = sbr.rel (%p1274) target = $region12
      $region11: #{forward.1} parent=5 // pred_region
        %s1278 = ssub.s32 %s120, 1
        // Predicated region
        $region13: #{forward.1} parent=11 // pred_check
          %p1279 = pneg %p167
        $region14: #{forward.1} parent=11 // pred_check_branch
          %1281 = sbr.rel (%p1279) target = $region16
        $region15: #{forward.1} parent=11 // pred_region
          _
        $region16: #{forward.1} parent=11 // pred_fallthru
          _
        // Predicated region
        $region17: #{forward.1} parent=11 // pred_check
          %p1282 = pneg %p188
        $region18: #{forward.1} parent=11 // pred_check_branch
          %1284 = sbr.rel (%p1282) target = $region20
        $region19: #{forward.1} parent=11 // pred_region
          _
        $region20: #{forward.1} parent=11 // pred_fallthru
          _
        // Predicated region
        $region21: #{forward.1} parent=11 // pred_check
          %p1285 = pneg %p209
        $region22: #{forward.1} parent=11 // pred_check_branch
          %1287 = sbr.rel (%p1285) target = $region24
        $region23: #{forward.1} parent=11 // pred_region
          _
        $region24: #{forward.1} parent=11 // pred_fallthru
          _
        // Predicated region
        $region25: #{forward.1} parent=11 // pred_check
          %p1288 = pneg %p230
        $region26: #{forward.1} parent=11 // pred_check_branch
          %1290 = sbr.rel (%p1288) target = $region28
        $region27: #{forward.1} parent=11 // pred_region
          _
        $region28: #{forward.1} parent=11 // pred_fallthru
          _
        // Predicated region
        $region29: #{forward.1} parent=11 // pred_check
          %p1291 = pneg %p251
        $region30: #{forward.1} parent=11 // pred_check_branch
          %1293 = sbr.rel (%p1291) target = $region32
        $region31: #{forward.1} parent=11 // pred_region
          _
        $region32: #{forward.1} parent=11 // pred_fallthru
          _
        // Predicated region
        $region33: #{forward.1} parent=11 // pred_check
          %p1294 = pneg %p272
        $region34: #{forward.1} parent=11 // pred_check_branch
          %1296 = sbr.rel (%p1294) target = $region36
        $region35: #{forward.1} parent=11 // pred_region
          _
        $region36: #{forward.1} parent=11 // pred_fallthru
          _
        // Predicated region
        $region37: #{forward.1} parent=11 // pred_check
          %p1297 = pneg %p293
        $region38: #{forward.1} parent=11 // pred_check_branch
          %1299 = sbr.rel (%p1297) target = $region40
        $region39: #{forward.1} parent=11 // pred_region
          _
        $region40: #{forward.1} parent=11 // pred_fallthru
          _
        // Predicated region
        $region41: #{forward.1} parent=11 // pred_check
          %p1300 = pneg %p314
        $region42: #{forward.1} parent=11 // pred_check_branch
          %1302 = sbr.rel (%p1300) target = $region44
        $region43: #{forward.1} parent=11 // pred_region
          _
        $region44: #{forward.1} parent=11 // pred_fallthru
          _
        // Predicated region
        $region45: #{forward.1} parent=11 // pred_check
          %p1303 = pneg %p335
        $region46: #{forward.1} parent=11 // pred_check_branch
          %1305 = sbr.rel (%p1303) target = $region48
        $region47: #{forward.1} parent=11 // pred_region
          _
        $region48: #{forward.1} parent=11 // pred_fallthru
          _
        // Predicated region
        $region49: #{forward.1} parent=11 // pred_check
          %p1306 = pneg %p356
        $region50: #{forward.1} parent=11 // pred_check_branch
          %1308 = sbr.rel (%p1306) target = $region52
        $region51: #{forward.1} parent=11 // pred_region
          _
        $region52: #{forward.1} parent=11 // pred_fallthru
          _
        // Predicated region
        $region53: #{forward.1} parent=11 // pred_check
          %p1309 = pneg %p377
        $region54: #{forward.1} parent=11 // pred_check_branch
          %1311 = sbr.rel (%p1309) target = $region56
        $region55: #{forward.1} parent=11 // pred_region
          _
        $region56: #{forward.1} parent=11 // pred_fallthru
          _
        // Predicated region
        $region57: #{forward.1} parent=11 // pred_check
          %p1312 = pneg %p398
        $region58: #{forward.1} parent=11 // pred_check_branch
          %1314 = sbr.rel (%p1312) target = $region60
        $region59: #{forward.1} parent=11 // pred_region
          _
        $region60: #{forward.1} parent=11 // pred_fallthru
          _
        // Predicated region
        $region61: #{forward.1} parent=11 // pred_check
          %p1315 = pneg %p419
        $region62: #{forward.1} parent=11 // pred_check_branch
          %1317 = sbr.rel (%p1315) target = $region64
        $region63: #{forward.1} parent=11 // pred_region
          _
        $region64: #{forward.1} parent=11 // pred_fallthru
          _
        // Predicated region
        $region65: #{forward.1} parent=11 // pred_check
          %p1318 = pneg %p440
        $region66: #{forward.1} parent=11 // pred_check_branch
          %1320 = sbr.rel (%p1318) target = $region68
        $region67: #{forward.1} parent=11 // pred_region
          _
        $region68: #{forward.1} parent=11 // pred_fallthru
          _
        // Predicated region
        $region69: #{forward.1} parent=11 // pred_check
          %p1321 = pneg %p461
        $region70: #{forward.1} parent=11 // pred_check_branch
          %1323 = sbr.rel (%p1321) target = $region72
        $region71: #{forward.1} parent=11 // pred_region
          _
        $region72: #{forward.1} parent=11 // pred_fallthru
          _
        // Predicated region
        $region73: #{forward.1} parent=11 // pred_check
          %p1324 = pneg %p482
        $region74: #{forward.1} parent=11 // pred_check_branch
          %1326 = sbr.rel (%p1324) target = $region76
        $region75: #{forward.1} parent=11 // pred_region
          _
        $region76: #{forward.1} parent=11 // pred_fallthru
          _
        // Predicated region
        $region77: #{forward.1} parent=11 // pred_check
          %p1327 = pneg %p503
        $region78: #{forward.1} parent=11 // pred_check_branch
          %1329 = sbr.rel (%p1327) target = $region80
        $region79: #{forward.1} parent=11 // pred_region
          _
        $region80: #{forward.1} parent=11 // pred_fallthru
          _
        // Predicated region
        $region81: #{forward.1} parent=11 // pred_check
          %p1330 = pneg %p524
        $region82: #{forward.1} parent=11 // pred_check_branch
          %1332 = sbr.rel (%p1330) target = $region84
        $region83: #{forward.1} parent=11 // pred_region
          _
        $region84: #{forward.1} parent=11 // pred_fallthru
          _
        // Predicated region
        $region85: #{forward.1} parent=11 // pred_check
          %p1333 = pneg %p545
        $region86: #{forward.1} parent=11 // pred_check_branch
          %1335 = sbr.rel (%p1333) target = $region88
        $region87: #{forward.1} parent=11 // pred_region
          _
        $region88: #{forward.1} parent=11 // pred_fallthru
          _
        // Predicated region
        $region89: #{forward.1} parent=11 // pred_check
          %p1336 = pneg %p566
        $region90: #{forward.1} parent=11 // pred_check_branch
          %1338 = sbr.rel (%p1336) target = $region92
        $region91: #{forward.1} parent=11 // pred_region
          _
        $region92: #{forward.1} parent=11 // pred_fallthru
          _
        // Predicated region
        $region93: #{forward.1} parent=11 // pred_check
          %p1339 = pneg %p587
        $region94: #{forward.1} parent=11 // pred_check_branch
          %1341 = sbr.rel (%p1339) target = $region96
        $region95: #{forward.1} parent=11 // pred_region
          _
        $region96: #{forward.1} parent=11 // pred_fallthru
          _
        // Predicated region
        $region97: #{forward.1} parent=11 // pred_check
          %p1342 = pneg %p608
        $region98: #{forward.1} parent=11 // pred_check_branch
          %1344 = sbr.rel (%p1342) target = $region100
        $region99: #{forward.1} parent=11 // pred_region
          _
        $region100: #{forward.1} parent=11 // pred_fallthru
          _
        // Predicated region
        $region101: #{forward.1} parent=11 // pred_check
          %p1345 = pneg %p629
        $region102: #{forward.1} parent=11 // pred_check_branch
          %1347 = sbr.rel (%p1345) target = $region104
        $region103: #{forward.1} parent=11 // pred_region
          _
        $region104: #{forward.1} parent=11 // pred_fallthru
          _
        // Predicated region
        $region105: #{forward.1} parent=11 // pred_check
          %p1348 = pneg %p650
        $region106: #{forward.1} parent=11 // pred_check_branch
          %1350 = sbr.rel (%p1348) target = $region108
        $region107: #{forward.1} parent=11 // pred_region
          _
        $region108: #{forward.1} parent=11 // pred_fallthru
          _
        // Predicated region
        $region109: #{forward.1} parent=11 // pred_check
          %p1351 = pneg %p671
        $region110: #{forward.1} parent=11 // pred_check_branch
          %1353 = sbr.rel (%p1351) target = $region112
        $region111: #{forward.1} parent=11 // pred_region
          _
        $region112: #{forward.1} parent=11 // pred_fallthru
          _
        // Predicated region
        $region113: #{forward.1} parent=11 // pred_check
          %p1354 = pneg %p692
        $region114: #{forward.1} parent=11 // pred_check_branch
          %1356 = sbr.rel (%p1354) target = $region116
        $region115: #{forward.1} parent=11 // pred_region
          _
        $region116: #{forward.1} parent=11 // pred_fallthru
          _
        // Predicated region
        $region117: #{forward.1} parent=11 // pred_check
          %p1357 = pneg %p713
        $region118: #{forward.1} parent=11 // pred_check_branch
          %1359 = sbr.rel (%p1357) target = $region120
        $region119: #{forward.1} parent=11 // pred_region
          _
        $region120: #{forward.1} parent=11 // pred_fallthru
          _
        // Predicated region
        $region121: #{forward.1} parent=11 // pred_check
          %p1360 = pneg %p734
        $region122: #{forward.1} parent=11 // pred_check_branch
          %1362 = sbr.rel (%p1360) target = $region124
        $region123: #{forward.1} parent=11 // pred_region
          _
        $region124: #{forward.1} parent=11 // pred_fallthru
          _
        // Predicated region
        $region125: #{forward.1} parent=11 // pred_check
          %p1363 = pneg %p755
        $region126: #{forward.1} parent=11 // pred_check_branch
          %1365 = sbr.rel (%p1363) target = $region128
        $region127: #{forward.1} parent=11 // pred_region
          _
        $region128: #{forward.1} parent=11 // pred_fallthru
          _
        // Predicated region
        $region129: #{forward.1} parent=11 // pred_check
          %p1366 = pneg %p776
        $region130: #{forward.1} parent=11 // pred_check_branch
          %1368 = sbr.rel (%p1366) target = $region132
        $region131: #{forward.1} parent=11 // pred_region
          _
        $region132: #{forward.1} parent=11 // pred_fallthru
          _
        // Predicated region
        $region133: #{forward.1} parent=11 // pred_check
          %p1369 = pneg %p797
        $region134: #{forward.1} parent=11 // pred_check_branch
          %1371 = sbr.rel (%p1369) target = $region136
        $region135: #{forward.1} parent=11 // pred_region
          _
        $region136: #{forward.1} parent=11 // pred_fallthru
          _
        // Predicated region
        $region137: #{forward.1} parent=11 // pred_check
          %p1372 = pneg %p818
        $region138: #{forward.1} parent=11 // pred_check_branch
          %1374 = sbr.rel (%p1372) target = $region140
        $region139: #{forward.1} parent=11 // pred_region
          _
        $region140: #{forward.1} parent=11 // pred_fallthru
          _
        // Predicated region
        $region141: #{forward.1} parent=11 // pred_check
          %p1375 = pneg %p839
        $region142: #{forward.1} parent=11 // pred_check_branch
          %1377 = sbr.rel (%p1375) target = $region144
        $region143: #{forward.1} parent=11 // pred_region
          _
        $region144: #{forward.1} parent=11 // pred_fallthru
          _
        // Predicated region
        $region145: #{forward.1} parent=11 // pred_check
          %p1378 = pneg %p860
        $region146: #{forward.1} parent=11 // pred_check_branch
          %1380 = sbr.rel (%p1378) target = $region148
        $region147: #{forward.1} parent=11 // pred_region
          _
        $region148: #{forward.1} parent=11 // pred_fallthru
          _
        // Predicated region
        $region149: #{forward.1} parent=11 // pred_check
          %p1381 = pneg %p881
        $region150: #{forward.1} parent=11 // pred_check_branch
          %1383 = sbr.rel (%p1381) target = $region152
        $region151: #{forward.1} parent=11 // pred_region
          _
        $region152: #{forward.1} parent=11 // pred_fallthru
          _
        // Predicated region
        $region153: #{forward.1} parent=11 // pred_check
          %p1384 = pneg %p902
        $region154: #{forward.1} parent=11 // pred_check_branch
          %1386 = sbr.rel (%p1384) target = $region156
        $region155: #{forward.1} parent=11 // pred_region
          %s1388 = ssub.s32 16, 16
          %1389 = vsyncadd [#allocation3], %s1388
          %s1391 = sshll.u32 [#allocation2], 4
          %s1392 = int_to_ptr.vmem [resolvable:$true] %s1391
          %1394 = dma.hbm_to_vmem [thread:$0]  %s73, 16, %s1392, [#allocation3]
        $region156: #{forward.1} parent=11 // pred_fallthru
          _
        // Predicated region
        $region157: #{forward.1} parent=11 // pred_check
          %p1395 = pneg %p923
        $region158: #{forward.1} parent=11 // pred_check_branch
          %1397 = sbr.rel (%p1395) target = $region160
        $region159: #{forward.1} parent=11 // pred_region
          _
        $region160: #{forward.1} parent=11 // pred_fallthru
          _
        // Predicated region
        $region161: #{forward.1} parent=11 // pred_check
          %p1398 = pneg %p944
        $region162: #{forward.1} parent=11 // pred_check_branch
          %1400 = sbr.rel (%p1398) target = $region164
        $region163: #{forward.1} parent=11 // pred_region
          _
        $region164: #{forward.1} parent=11 // pred_fallthru
          _
        // Predicated region
        $region165: #{forward.1} parent=11 // pred_check
          %p1401 = pneg %p965
        $region166: #{forward.1} parent=11 // pred_check_branch
          %1403 = sbr.rel (%p1401) target = $region168
        $region167: #{forward.1} parent=11 // pred_region
          %s1405 = ssub.s32 16, 16
          %1406 = vsyncadd [#allocation5], %s1405
          %s1408 = sshll.u32 [#allocation4], 4
          %s1409 = int_to_ptr.vmem [resolvable:$true] %s1408
          %1411 = dma.hbm_to_vmem [thread:$0]  %s79, 16, %s1409, [#allocation5]
        $region168: #{forward.1} parent=11 // pred_fallthru
          _
        // Predicated region
        $region169: #{forward.1} parent=11 // pred_check
          %p1412 = pneg %p986
        $region170: #{forward.1} parent=11 // pred_check_branch
          %1414 = sbr.rel (%p1412) target = $region172
        $region171: #{forward.1} parent=11 // pred_region
          _
        $region172: #{forward.1} parent=11 // pred_fallthru
          _
        // Predicated region
        $region173: #{forward.1} parent=11 // pred_check
          %p1415 = pneg %p1007
        $region174: #{forward.1} parent=11 // pred_check_branch
          %1417 = sbr.rel (%p1415) target = $region176
        $region175: #{forward.1} parent=11 // pred_region
          %s1419 = ssub.s32 16, 16
          %1420 = vsyncadd [#allocation5], %s1419
          %s1422 = sshll.u32 [#allocation6], 4
          %s1423 = int_to_ptr.vmem [resolvable:$true] %s1422
          %1425 = dma.hbm_to_vmem [thread:$0]  %s83, 16, %s1423, [#allocation5]
        $region176: #{forward.1} parent=11 // pred_fallthru
          _
        // Predicated region
        $region177: #{forward.1} parent=11 // pred_check
          %p1426 = pneg %p1028
        $region178: #{forward.1} parent=11 // pred_check_branch
          %1428 = sbr.rel (%p1426) target = $region180
        $region179: #{forward.1} parent=11 // pred_region
          _
        $region180: #{forward.1} parent=11 // pred_fallthru
          _
        // Predicated region
        $region181: #{forward.1} parent=11 // pred_check
          %p1429 = pneg %p1049
        $region182: #{forward.1} parent=11 // pred_check_branch
          %1431 = sbr.rel (%p1429) target = $region184
        $region183: #{forward.1} parent=11 // pred_region
          %s1433 = ssub.s32 16, 16
          %1434 = vsyncadd [#allocation8], %s1433
          %s1436 = sshll.u32 [#allocation7], 4
          %s1437 = int_to_ptr.vmem [resolvable:$true] %s1436
          %1439 = dma.hbm_to_vmem [thread:$0]  %s87, 16, %s1437, [#allocation8]
        $region184: #{forward.1} parent=11 // pred_fallthru
          _
        // Predicated region
        $region185: #{forward.1} parent=11 // pred_check
          %p1440 = pneg %p1070
        $region186: #{forward.1} parent=11 // pred_check_branch
          %1442 = sbr.rel (%p1440) target = $region188
        $region187: #{forward.1} parent=11 // pred_region
          %s1444 = ssub.s32 16, 16
          %1445 = vsyncadd [#allocation8], %s1444
          %s1447 = sshll.u32 [#allocation9], 4
          %s1448 = int_to_ptr.vmem [resolvable:$true] %s1447
          %1450 = dma.hbm_to_vmem [thread:$0]  %s89, 16, %s1448, [#allocation8]
        $region188: #{forward.1} parent=11 // pred_fallthru
          _
        // Predicated region
        $region189: #{forward.1} parent=11 // pred_check
          %p1451 = pneg %p1091
        $region190: #{forward.1} parent=11 // pred_check_branch
          %1453 = sbr.rel (%p1451) target = $region192
        $region191: #{forward.1} parent=11 // pred_region
          %s1455 = ssub.s32 16, 16
          %1456 = vsyncadd [#allocation11], %s1455
          %s1458 = sshll.u32 [#allocation10], 4
          %s1459 = int_to_ptr.vmem [resolvable:$true] %s1458
          %1461 = dma.hbm_to_vmem [thread:$0]  %s91, 16, %s1459, [#allocation11]
        $region192: #{forward.1} parent=11 // pred_fallthru
          _
        // Predicated region
        $region193: #{forward.1} parent=11 // pred_check
          %p1462 = pneg %p1112
        $region194: #{forward.1} parent=11 // pred_check_branch
          %1464 = sbr.rel (%p1462) target = $region196
        $region195: #{forward.1} parent=11 // pred_region
          %s1466 = ssub.s32 16, 16
          %1467 = vsyncadd [#allocation11], %s1466
          %s1469 = sshll.u32 [#allocation12], 4
          %s1470 = int_to_ptr.vmem [resolvable:$true] %s1469
          %1472 = dma.hbm_to_vmem [thread:$0]  %s93, 16, %s1470, [#allocation11]
        $region196: #{forward.1} parent=11 // pred_fallthru
          _
        // Predicated region
        $region197: #{forward.1} parent=11 // pred_check
          %p1473 = pneg %p1133
        $region198: #{forward.1} parent=11 // pred_check_branch
          %1475 = sbr.rel (%p1473) target = $region200
        $region199: #{forward.1} parent=11 // pred_region
          %s1477 = ssub.s32 16, 16
          %1478 = vsyncadd [#allocation14], %s1477
          %s1480 = sshll.u32 [#allocation13], 4
          %s1481 = int_to_ptr.vmem [resolvable:$true] %s1480
          %1483 = dma.hbm_to_vmem [thread:$0]  %s95, 16, %s1481, [#allocation14]
        $region200: #{forward.1} parent=11 // pred_fallthru
          _
        // Predicated region
        $region201: #{forward.1} parent=11 // pred_check
          %p1484 = pneg %p1154
        $region202: #{forward.1} parent=11 // pred_check_branch
          %1486 = sbr.rel (%p1484) target = $region204
        $region203: #{forward.1} parent=11 // pred_region
          %s1488 = ssub.s32 16, 16
          %1489 = vsyncadd [#allocation14], %s1488
          %s1491 = sshll.u32 [#allocation15], 4
          %s1492 = int_to_ptr.vmem [resolvable:$true] %s1491
          %1494 = dma.hbm_to_vmem [thread:$0]  %s97, 16, %s1492, [#allocation14]
        $region204: #{forward.1} parent=11 // pred_fallthru
          _
        // Predicated region
        $region205: #{forward.1} parent=11 // pred_check
          %p1495 = pneg %p1175
        $region206: #{forward.1} parent=11 // pred_check_branch
          %1497 = sbr.rel (%p1495) target = $region208
        $region207: #{forward.1} parent=11 // pred_region
          %s1499 = ssub.s32 16, 16
          %1500 = vsyncadd [#allocation17], %s1499
          %s1502 = sshll.u32 [#allocation16], 4
          %s1503 = int_to_ptr.vmem [resolvable:$true] %s1502
          %1505 = dma.hbm_to_vmem [thread:$0]  %s99, 16, %s1503, [#allocation17]
        $region208: #{forward.1} parent=11 // pred_fallthru
          _
        // Predicated region
        $region209: #{forward.1} parent=11 // pred_check
          %p1506 = pneg %p1196
        $region210: #{forward.1} parent=11 // pred_check_branch
          %1508 = sbr.rel (%p1506) target = $region212
        $region211: #{forward.1} parent=11 // pred_region
          _
        $region212: #{forward.1} parent=11 // pred_fallthru
          _
        // Predicated region
        $region213: #{forward.1} parent=11 // pred_check
          %p1509 = pneg %p1217
        $region214: #{forward.1} parent=11 // pred_check_branch
          %1511 = sbr.rel (%p1509) target = $region216
        $region215: #{forward.1} parent=11 // pred_region
          %s1513 = ssub.s32 16, 16
          %1514 = vsyncadd [#allocation17], %s1513
          %s1516 = sshll.u32 [#allocation18], 4
          %s1517 = int_to_ptr.vmem [resolvable:$true] %s1516
          %1519 = dma.hbm_to_vmem [thread:$0]  %s103, 16, %s1517, [#allocation17]
        $region216: #{forward.1} parent=11 // pred_fallthru
          _
        // Predicated region
        $region217: #{forward.1} parent=11 // pred_check
          %p1520 = pneg %p1238
        $region218: #{forward.1} parent=11 // pred_check_branch
          %1522 = sbr.rel (%p1520) target = $region220
        $region219: #{forward.1} parent=11 // pred_region
          %s1524 = ssub.s32 16, 16
          %1525 = vsyncadd [#allocation20], %s1524
          %s1527 = sshll.u32 [#allocation19], 4
          %s1528 = int_to_ptr.vmem [resolvable:$true] %s1527
          %1530 = dma.hbm_to_vmem [thread:$0]  %s105, 16, %s1528, [#allocation20]
        $region220: #{forward.1} parent=11 // pred_fallthru
          _
      $region12: #{forward.1} parent=5 // pred_fallthru
        _
      %p1531 = scmp.lt.s32.totalorder %s120, 2
      // Predicated region
      $region221: #{forward.1} parent=5 // pred_check
        %p1532 = pneg %p1531
      $region222: #{forward.1} parent=5 // pred_check_branch
        %1534 = sbr.rel (%p1532) target = $region224
      $region223: #{forward.1} parent=5 // pred_region
        // Predicated region
        $region225: #{forward.1} parent=223 // pred_check
          %p1535 = pneg %p140
        $region226: #{forward.1} parent=223 // pred_check_branch
          %1537 = sbr.rel (%p1535) target = $region228
        $region227: #{forward.1} parent=223 // pred_region
          %s1538 = smul.u32 2, %s120
          %p1539 = scmp.lt.s32.totalorder %s1538, 3
          %s1540 = scalar_select %p1539, %s1538, 3
          %s1541 = smul.addr %s1540, 2
          %s1542 = smul.addr %s1541, 8
          %s1543 = scalar_lea.vmem %s1, %s1542
          %s1544 = smul.u32 2, %s120
        $region228: #{forward.1} parent=223 // pred_fallthru
          _
      $region224: #{forward.1} parent=5 // pred_fallthru
        _
      %p1545 = scmp.le.s32.totalorder 1, %s120
      %p1546 = scmp.lt.s32.totalorder %s120, 3
      %p1547 = pnand %p1545, %p1546
      %p1548 = pneg %p1547
      // Predicated region
      $region229: #{forward.1} parent=5 // pred_check
        _
      $region230: #{forward.1} parent=5 // pred_check_branch
        %1550 = sbr.rel (%p1547) target = $region232
      $region231: #{forward.1} parent=5 // pred_region
        %s1551 = ssub.s32 %s120, 1
        // Predicated region
        $region233: #{forward.1} parent=231 // pred_check
          %p1552 = pneg %p902
        $region234: #{forward.1} parent=231 // pred_check_branch
          %1554 = sbr.rel (%p1552) target = $region236
        $region235: #{forward.1} parent=231 // pred_region
          %1555 = dma.done [#allocation3], 16
        $region236: #{forward.1} parent=231 // pred_fallthru
          _
        // Predicated region
        $region237: #{forward.1} parent=231 // pred_check
          %p1556 = pneg %p965
        $region238: #{forward.1} parent=231 // pred_check_branch
          %1558 = sbr.rel (%p1556) target = $region240
        $region239: #{forward.1} parent=231 // pred_region
          %1559 = dma.done [#allocation5], 16
        $region240: #{forward.1} parent=231 // pred_fallthru
          _
        // Predicated region
        $region241: #{forward.1} parent=231 // pred_check
          %p1560 = pneg %p1007
        $region242: #{forward.1} parent=231 // pred_check_branch
          %1562 = sbr.rel (%p1560) target = $region244
        $region243: #{forward.1} parent=231 // pred_region
          %1563 = dma.done [#allocation5], 16
        $region244: #{forward.1} parent=231 // pred_fallthru
          _
        // Predicated region
        $region245: #{forward.1} parent=231 // pred_check
          %p1564 = pneg %p1049
        $region246: #{forward.1} parent=231 // pred_check_branch
          %1566 = sbr.rel (%p1564) target = $region248
        $region247: #{forward.1} parent=231 // pred_region
          %1567 = dma.done [#allocation8], 16
        $region248: #{forward.1} parent=231 // pred_fallthru
          _
        // Predicated region
        $region249: #{forward.1} parent=231 // pred_check
          %p1568 = pneg %p1070
        $region250: #{forward.1} parent=231 // pred_check_branch
          %1570 = sbr.rel (%p1568) target = $region252
        $region251: #{forward.1} parent=231 // pred_region
          %1571 = dma.done [#allocation8], 16
        $region252: #{forward.1} parent=231 // pred_fallthru
          _
        // Predicated region
        $region253: #{forward.1} parent=231 // pred_check
          %p1572 = pneg %p1091
        $region254: #{forward.1} parent=231 // pred_check_branch
          %1574 = sbr.rel (%p1572) target = $region256
        $region255: #{forward.1} parent=231 // pred_region
          %1575 = dma.done [#allocation11], 16
        $region256: #{forward.1} parent=231 // pred_fallthru
          _
        // Predicated region
        $region257: #{forward.1} parent=231 // pred_check
          %p1576 = pneg %p1112
        $region258: #{forward.1} parent=231 // pred_check_branch
          %1578 = sbr.rel (%p1576) target = $region260
        $region259: #{forward.1} parent=231 // pred_region
          %1579 = dma.done [#allocation11], 16
        $region260: #{forward.1} parent=231 // pred_fallthru
          _
        // Predicated region
        $region261: #{forward.1} parent=231 // pred_check
          %p1580 = pneg %p1133
        $region262: #{forward.1} parent=231 // pred_check_branch
          %1582 = sbr.rel (%p1580) target = $region264
        $region263: #{forward.1} parent=231 // pred_region
          %1583 = dma.done [#allocation14], 16
        $region264: #{forward.1} parent=231 // pred_fallthru
          _
        // Predicated region
        $region265: #{forward.1} parent=231 // pred_check
          %p1584 = pneg %p1154
        $region266: #{forward.1} parent=231 // pred_check_branch
          %1586 = sbr.rel (%p1584) target = $region268
        $region267: #{forward.1} parent=231 // pred_region
          %1587 = dma.done [#allocation14], 16
        $region268: #{forward.1} parent=231 // pred_fallthru
          _
        // Predicated region
        $region269: #{forward.1} parent=231 // pred_check
          %p1588 = pneg %p1175
        $region270: #{forward.1} parent=231 // pred_check_branch
          %1590 = sbr.rel (%p1588) target = $region272
        $region271: #{forward.1} parent=231 // pred_region
          %1591 = dma.done [#allocation17], 16
        $region272: #{forward.1} parent=231 // pred_fallthru
          _
        // Predicated region
        $region273: #{forward.1} parent=231 // pred_check
          %p1592 = pneg %p1217
        $region274: #{forward.1} parent=231 // pred_check_branch
          %1594 = sbr.rel (%p1592) target = $region276
        $region275: #{forward.1} parent=231 // pred_region
          %1595 = dma.done [#allocation17], 16
        $region276: #{forward.1} parent=231 // pred_fallthru
          _
        // Predicated region
        $region277: #{forward.1} parent=231 // pred_check
          %p1596 = pneg %p1238
        $region278: #{forward.1} parent=231 // pred_check_branch
          %1598 = sbr.rel (%p1596) target = $region280
        $region279: #{forward.1} parent=231 // pred_region
          %1599 = dma.done [#allocation20], 16
        $region280: #{forward.1} parent=231 // pred_fallthru
          _
        %s1600 = smul.u32 2, %s125
        %p1601 = scmp.lt.s32.totalorder %s1600, 3
        %s1602 = scalar_select %p1601, %s1600, 3
        %s1603 = smul.addr %s1602, 2
        %s1604 = smul.addr %s1603, 8
        %s1605 = scalar_lea.vmem %s1, %s1604
        %p1606 = pneg %p146
        %p1607 = pneg %p143
        %p1608 = pneg %p167
        %p1609 = pneg %p164
        %p1610 = pneg %p188
        %p1611 = pneg %p185
        %p1612 = pneg %p209
        %p1613 = pneg %p206
        %p1614 = pneg %p230
        %p1615 = pneg %p227
        %p1616 = pneg %p251
        %p1617 = pneg %p248
        %p1618 = pneg %p272
        %p1619 = pneg %p269
        %p1620 = pneg %p293
        %p1621 = pneg %p290
        %p1622 = pneg %p314
        %p1623 = pneg %p311
        %p1624 = pneg %p335
        %p1625 = pneg %p332
        %p1626 = pneg %p356
        %p1627 = pneg %p353
        %p1628 = pneg %p377
        %p1629 = pneg %p374
        %p1630 = pneg %p398
        %p1631 = pneg %p395
        %p1632 = pneg %p419
        %p1633 = pneg %p416
        %p1634 = pneg %p440
        %p1635 = pneg %p437
        %p1636 = pneg %p461
        %p1637 = pneg %p458
        %p1638 = pneg %p482
        %p1639 = pneg %p479
        %p1640 = pneg %p503
        %p1641 = pneg %p500
        %p1642 = pneg %p524
        %p1643 = pneg %p521
        %p1644 = pneg %p545
        %p1645 = pneg %p542
        %p1646 = pneg %p566
        %p1647 = pneg %p563
        %p1648 = pneg %p587
        %p1649 = pneg %p584
        %p1650 = pneg %p608
        %p1651 = pneg %p605
        %p1652 = pneg %p629
        %p1653 = pneg %p626
        %p1654 = pneg %p650
        %p1655 = pneg %p647
        %p1656 = pneg %p671
        %p1657 = pneg %p668
        %p1658 = pneg %p692
        %p1659 = pneg %p689
        %p1660 = pneg %p713
        %p1661 = pneg %p710
        %p1662 = pneg %p734
        %p1663 = pneg %p731
        %p1664 = pneg %p755
        %p1665 = pneg %p752
        %p1666 = pneg %p776
        %p1667 = pneg %p773
        %p1668 = pneg %p797
        %p1669 = pneg %p794
        %p1670 = pneg %p818
        %p1671 = pneg %p815
        %p1672 = pneg %p839
        %p1673 = pneg %p836
        %p1674 = pneg %p860
        %p1675 = pneg %p857
        %p1676 = pneg %p881
        %p1677 = pneg %p878
        %p1678 = pneg %p902
        %p1679 = pneg %p899
        %p1680 = pneg %p923
        %p1681 = pneg %p920
        %p1682 = pneg %p944
        %p1683 = pneg %p941
        %p1684 = pneg %p965
        %p1685 = pneg %p962
        %p1686 = pneg %p986
        %p1687 = pneg %p983
        %p1688 = pneg %p1007
        %p1689 = pneg %p1004
        %p1690 = pneg %p1028
        %p1691 = pneg %p1025
        %p1692 = pneg %p1049
        %p1693 = pneg %p1046
        %p1694 = pneg %p1070
        %p1695 = pneg %p1067
        %p1696 = pneg %p1091
        %p1697 = pneg %p1088
        %p1698 = pneg %p1112
        %p1699 = pneg %p1109
        %p1700 = pneg %p1133
        %p1701 = pneg %p1130
        %p1702 = pneg %p1154
        %p1703 = pneg %p1151
        %p1704 = pneg %p1175
        %p1705 = pneg %p1172
        %p1706 = pneg %p1196
        %p1707 = pneg %p1193
        %p1708 = pneg %p1217
        %p1709 = pneg %p1214
        %p1710 = pneg %p1238
        %p1711 = pneg %p1235
        %p1712 = pneg %p1264
        %p1713 = pneg %p1261
        %s1714 = smul.u32 2, %s125
        %p1715 = scmp.lt.s32.totalorder %s1714, 3
        %s1716 = scalar_select %p1715, %s1714, 3
        %s1717 = smul.addr %s1716, 8
        %s1718 = scalar_lea.vmem %s107, %s1717
        %s1719 = smul.u32 2, %s125
        %p1720 = scmp.lt.s32.totalorder %s1719, 3
        %s1721 = scalar_select %p1720, %s1719, 3
        %s1722 = smul.addr %s1721, 2
        %s1723 = smul.addr %s1722, 8
        %s1724 = scalar_lea.vmem %s1, %s1723
        %s1725 = smul.u32 2, %s125
        %s1726 = smul.u32 2, %s125
        %p1727 = scmp.lt.s32.totalorder %s1726, 3
        %s1728 = scalar_select %p1727, %s1726, 3
        %s1729 = smul.addr %s1728, 8
        %s1730 = scalar_lea.vmem %s107, %s1729
        %s1731 = smul.u32 2, %s125
        %v1733 = vld [vmem:[%s1724] sm:$0xff]
        %v1734 = vld [vmem:[%s1724 + $0x8] sm:$0xff]
        %v1735 = vld [vmem:[%s1724 + $0x10] sm:$0xff]
        %v1736 = vld [vmem:[%s1724 + $0x18] sm:$0xff]
        %v1737 = vpack.c.bf16 %v1735, %v1733
        %v1738 = vpack.c.bf16 %v1736, %v1734
        %v1739 = vld [vmem:[%s9] sm:$0xf]
        %v1740 = vld [vmem:[%s9 + $0x4] sm:$0xf]
        %v1741 = vld [vmem:[%s9 + $0x8] sm:$0xf]
        %v1742 = vld [vmem:[%s9 + $0xc] sm:$0xf]
        %v1743 = vld [vmem:[%s9 + $0x10] sm:$0xf]
        %v1744 = vld [vmem:[%s9 + $0x14] sm:$0xf]
        %v1745 = vld [vmem:[%s9 + $0x18] sm:$0xf]
        %v1746 = vld [vmem:[%s9 + $0x1c] sm:$0xf]
        %v1747 = vld [vmem:[%s9 + $0x20] sm:$0xf]
        %v1748 = vld [vmem:[%s9 + $0x24] sm:$0xf]
        %v1749 = vld [vmem:[%s9 + $0x28] sm:$0xf]
        %v1750 = vld [vmem:[%s9 + $0x2c] sm:$0xf]
        %v1751 = vld [vmem:[%s9 + $0x30] sm:$0xf]
        %v1752 = vld [vmem:[%s9 + $0x34] sm:$0xf]
        %v1753 = vld [vmem:[%s9 + $0x38] sm:$0xf]
        %v1754 = vld [vmem:[%s9 + $0x3c] sm:$0xf]
        %v1755 = vld [vmem:[%s9 + $0x40] sm:$0xf]
        %v1756 = vld [vmem:[%s9 + $0x44] sm:$0xf]
        %v1757 = vld [vmem:[%s9 + $0x48] sm:$0xf]
        %v1758 = vld [vmem:[%s9 + $0x4c] sm:$0xf]
        %v1759 = vld [vmem:[%s7] sm:$0x1]
        %v1761 = vlaneseq
        %v1762 = vshrl.u32 %v1761, 7
        %v1763 = vsub.s32 0, %v1762
        %v1764 = vrot.slane %v1759, %v1763
        %v1786 = vunpack.c.l.b16 %v1739
        %v1787 = vunpack.c.l.b16 %v1740
        %v1788 = vunpack.c.l.b16 %v1741
        %v1789 = vunpack.c.l.b16 %v1742
        %v1790 = vunpack.c.l.b16 %v1743
        %v1791 = vunpack.c.l.b16 %v1744
        %v1792 = vunpack.c.l.b16 %v1745
        %v1793 = vunpack.c.l.b16 %v1746
        %v1794 = vunpack.c.l.b16 %v1747
        %v1795 = vunpack.c.l.b16 %v1748
        %v1796 = vunpack.c.l.b16 %v1749
        %v1797 = vunpack.c.l.b16 %v1750
        %v1798 = vunpack.c.l.b16 %v1751
        %v1799 = vunpack.c.l.b16 %v1752
        %v1800 = vunpack.c.l.b16 %v1753
        %v1801 = vunpack.c.l.b16 %v1754
        %v1802 = vunpack.c.l.b16 %v1755
        %v1803 = vunpack.c.l.b16 %v1756
        %v1804 = vunpack.c.l.b16 %v1757
        %v1805 = vunpack.c.l.b16 %v1758
        %v1806 = vpack.c.b16 %v1787, %v1786
        %v1807 = vpack.c.b16 %v1789, %v1788
        %v1808 = vpack.c.b16 %v1791, %v1790
        %v1809 = vpack.c.b16 %v1793, %v1792
        %v1810 = vpack.c.b16 %v1795, %v1794
        %v1811 = vpack.c.b16 %v1797, %v1796
        %v1812 = vpack.c.b16 %v1799, %v1798
        %v1813 = vpack.c.b16 %v1801, %v1800
        %v1814 = vpack.c.b16 %v1803, %v1802
        %v1815 = vpack.c.b16 %v1805, %v1804
        %vm1826 = vcmask 261120
        %v1828 = vsel %vm1826, %v1738, 0
        %1830 = vmatprep.subr.bf16.mxu0 0
        %1831 = vmatpush1.bf16.msra.mxu0 %v1806
        %1832 = vmatprep.subr.bf16.mxu0 0
        %1833 = vmatpush1.bf16.msra.mxu0 %v1807
        %1834 = vmatprep.subr.bf16.mxu0 0
        %1835 = vmatpush1.bf16.msra.mxu0 %v1808
        %1836 = vmatprep.subr.bf16.mxu0 0
        %1837 = vmatpush1.bf16.msra.mxu0 %v1809
        %1838 = vmatprep.subr.bf16.mxu0 0
        %1839 = vmatpush1.bf16.msra.mxu0 %v1810
        %1840 = vmatprep.subr.bf16.mxu0 0
        %1841 = vmatpush1.bf16.msra.mxu0 %v1811
        %1842 = vmatprep.subr.bf16.mxu0 0
        %1843 = vmatpush1.bf16.msra.mxu0 %v1812
        %1844 = vmatprep.subr.bf16.mxu0 0
        %1845 = vmatpush1.bf16.msra.mxu0 %v1813
        %1846 = vmatprep.subr.bf16.mxu0 0
        %1847 = vmatpush1.bf16.msra.mxu0 %v1814
        %1848 = vmatprep.subr.bf16.mxu0 0
        %1849 = vmatpush1.bf16.msra.mxu0 %v1815
        %1850 = vmatprep.subr.bf16.mxu0 0
        %1851 = vmatpush1.bf16.msra.mxu0 0
        %1852 = vmatprep.subr.bf16.mxu0 0
        %1853 = vmatpush1.bf16.msra.mxu0 0
        %1854 = vmatprep.subr.bf16.mxu0 0
        %1855 = vmatpush1.bf16.msra.mxu0 0
        %1856 = vmatprep.subr.bf16.mxu0 0
        %1857 = vmatpush1.bf16.msra.mxu0 0
        %1858 = vmatprep.subr.bf16.mxu0 0
        %1859 = vmatpush1.bf16.msra.mxu0 0
        %1860 = vmatprep.subr.bf16.mxu0 0
        %1861 = vmatpush1.bf16.msra.mxu0 0
        %1862 = vmatprep.mubr.bf16.mxu0 %v1828
        %1863 = vmatmul.mubr.bf16.gmra.mrb[0].mxu0 %v1737
        %v1864 = vpop.f32.mrb[0].mxu0
        %v1865 = vadd.f32 %v1764, %v1864
        %v1866 = vpop.f32.mrb[0].mxu0
        %v1867 = vpop.f32.mrb[0].mxu0
        %v1868 = vadd.f32 %v1764, %v1867
        %v1869 = vpop.f32.mrb[0].mxu0
        %1870 = vdwg.mxu0
        %v1871 = vsel %vm1826, %v1865, 0.0
        %1872 = vadd.xlane.f32.xlu0 %v1871
        %v1873 = vpop.xlane.xlu0 %1872
        %v1874 = vsel %vm1826, %v1868, 0.0
        %1875 = vadd.xlane.f32.xlu0 %v1874
        %v1876 = vpop.xlane.xlu0 %1875
        %v1877 = vrcp.pop 32.0
        %v1878 = vmul.f32 %v1873, %v1877
        %v1879 = vmul.f32 %v1876, %v1877
        %v1880 = vsub.f32 %v1865, %v1878
        %v1881 = vsub.f32 %v1868, %v1879
        %v1882 = vmul.f32 %v1880, %v1880
        %v1883 = vmul.f32 %v1881, %v1881
        %v1884 = vsel %vm1826, %v1882, 0.0
        %1885 = vadd.xlane.f32.xlu0 %v1884
        %v1886 = vpop.xlane.xlu0 %1885
        %v1887 = vsel %vm1826, %v1883, 0.0
        %1888 = vadd.xlane.f32.xlu0 %v1887
        %v1889 = vpop.xlane.xlu0 %1888
        %v1890 = vmul.f32 %v1886, %v1877
        %v1891 = vmul.f32 %v1889, %v1877
        %v1892 = vadd.f32 %v1890, 1e-05
        %v1893 = vadd.f32 %v1891, 1e-05
        %v1894 = vrsqrt.pop %v1892
        %v1895 = vrsqrt.pop %v1893
        %v1896 = vmul.f32 %v1880, %v1894
        %v1897 = vmul.f32 %v1881, %v1895
        %v1898 = vld [vmem:[%s5] sm:$0x1]
        %v1900 = vlaneseq
        %v1901 = vshrl.u32 %v1900, 7
        %v1902 = vsub.s32 0, %v1901
        %v1903 = vrot.slane %v1898, %v1902
        %v1905 = vmul.f32 %v1896, %v1903
        %v1906 = vmul.f32 %v1897, %v1903
        %v1907 = vld [vmem:[%s3] sm:$0x1]
        %v1909 = vlaneseq
        %v1910 = vshrl.u32 %v1909, 7
        %v1911 = vsub.s32 0, %v1910
        %v1912 = vrot.slane %v1907, %v1911
        %v1914 = vadd.f32 %v1905, %v1912
        %v1915 = vadd.f32 %v1906, %v1912
        %v1916 = vmul.f32 %v1914, 0.5
        %v1917 = vmul.f32 %v1915, 0.5
        %v1918 = vmul.f32 %v1914, 0.044715
        %v1919 = vmul.f32 %v1915, 0.044715
        %v1920 = vmul.f32 %v1918, %v1914
        %v1921 = vmul.f32 %v1919, %v1915
        %v1922 = vmul.f32 %v1920, %v1914
        %v1923 = vmul.f32 %v1921, %v1915
        %v1924 = vadd.f32 %v1914, %v1922
        %v1925 = vadd.f32 %v1915, %v1923
        %v1926 = vmul.f32 %v1924, 0.7978846
        %v1927 = vmul.f32 %v1925, 0.7978846
        %v1928 = vtanh.pop %v1926
        %v1929 = vtanh.pop %v1927
        %v1930 = vadd.f32 %v1928, 1.0
        %v1931 = vadd.f32 %v1929, 1.0
        %v1932 = vmul.f32 %v1916, %v1930
        %v1933 = vmul.f32 %v1917, %v1931
        %v1934 = vpack.c.bf16 %v1933, %v1932
        %v1935 = vld [vmem:[%s17] sm:$0xf]
        %v1936 = vld [vmem:[%s17 + $0x4] sm:$0xf]
        %v1937 = vld [vmem:[%s17 + $0x8] sm:$0xf]
        %v1938 = vld [vmem:[%s17 + $0xc] sm:$0xf]
        %v1939 = vld [vmem:[%s11] sm:$0x1]
        %v1941 = vlaneseq
        %v1942 = vshrl.u32 %v1941, 7
        %v1943 = vsub.s32 0, %v1942
        %v1944 = vrot.slane %v1939, %v1943
        %v1950 = vunpack.c.l.b16 %v1935
        %v1951 = vunpack.c.l.b16 %v1936
        %v1952 = vunpack.c.l.b16 %v1937
        %v1953 = vunpack.c.l.b16 %v1938
        %v1954 = vpack.c.b16 %v1951, %v1950
        %v1955 = vpack.c.b16 %v1953, %v1952
        %v1959 = vsel %vm1826, %v1934, 0
        %1961 = vmatprep.subr.bf16.mxu0 0
        %1962 = vmatpush1.bf16.msra.mxu0 %v1954
        %1963 = vmatprep.subr.bf16.mxu0 0
        %1964 = vmatpush1.bf16.msra.mxu0 %v1955
        %1965 = vmatprep.subr.bf16.mxu0 0
        %1966 = vmatpush1.bf16.msra.mxu0 0
        %1967 = vmatprep.subr.bf16.mxu0 0
        %1968 = vmatpush1.bf16.msra.mxu0 0
        %1969 = vmatprep.subr.bf16.mxu0 0
        %1970 = vmatpush1.bf16.msra.mxu0 0
        %1971 = vmatprep.subr.bf16.mxu0 0
        %1972 = vmatpush1.bf16.msra.mxu0 0
        %1973 = vmatprep.subr.bf16.mxu0 0
        %1974 = vmatpush1.bf16.msra.mxu0 0
        %1975 = vmatprep.subr.bf16.mxu0 0
        %1976 = vmatpush1.bf16.msra.mxu0 0
        %1977 = vmatprep.subr.bf16.mxu0 0
        %1978 = vmatpush1.bf16.msra.mxu0 0
        %1979 = vmatprep.subr.bf16.mxu0 0
        %1980 = vmatpush1.bf16.msra.mxu0 0
        %1981 = vmatprep.subr.bf16.mxu0 0
        %1982 = vmatpush1.bf16.msra.mxu0 0
        %1983 = vmatprep.subr.bf16.mxu0 0
        %1984 = vmatpush1.bf16.msra.mxu0 0
        %1985 = vmatprep.subr.bf16.mxu0 0
        %1986 = vmatpush1.bf16.msra.mxu0 0
        %1987 = vmatprep.subr.bf16.mxu0 0
        %1988 = vmatpush1.bf16.msra.mxu0 0
        %1989 = vmatprep.subr.bf16.mxu0 0
        %1990 = vmatpush1.bf16.msra.mxu0 0
        %1991 = vmatprep.subr.bf16.mxu0 0
        %1992 = vmatpush1.bf16.msra.mxu0 0
        %1993 = vmatprep.mubr.bf16.mxu0 0
        %1994 = vmatmul.mubr.bf16.gmra.mrb[0].mxu0 %v1959
        %v1995 = vpop.f32.mrb[0].mxu0
        %v1996 = vadd.f32 %v1944, %v1995
        %v1997 = vpop.f32.mrb[0].mxu0
        %v1998 = vpop.f32.mrb[0].mxu0
        %v1999 = vadd.f32 %v1944, %v1998
        %v2000 = vpop.f32.mrb[0].mxu0
        %2001 = vdwg.mxu0
        %v2002 = vsel %vm1826, %v1996, 0.0
        %2003 = vadd.xlane.f32.xlu0 %v2002
        %v2004 = vpop.xlane.xlu0 %2003
        %v2005 = vsel %vm1826, %v1999, 0.0
        %2006 = vadd.xlane.f32.xlu0 %v2005
        %v2007 = vpop.xlane.xlu0 %2006
        %v2008 = vmul.f32 %v2004, %v1877
        %v2009 = vmul.f32 %v2007, %v1877
        %v2010 = vsub.f32 %v1996, %v2008
        %v2011 = vsub.f32 %v1999, %v2009
        %v2012 = vmul.f32 %v2010, %v2010
        %v2013 = vmul.f32 %v2011, %v2011
        %v2014 = vsel %vm1826, %v2012, 0.0
        %2015 = vadd.xlane.f32.xlu0 %v2014
        %v2016 = vpop.xlane.xlu0 %2015
        %v2017 = vsel %vm1826, %v2013, 0.0
        %2018 = vadd.xlane.f32.xlu0 %v2017
        %v2019 = vpop.xlane.xlu0 %2018
        %v2020 = vmul.f32 %v2016, %v1877
        %v2021 = vmul.f32 %v2019, %v1877
        %v2022 = vadd.f32 %v2020, 1e-05
        %v2023 = vadd.f32 %v2021, 1e-05
        %v2024 = vrsqrt.pop %v2022
        %v2025 = vrsqrt.pop %v2023
        %v2026 = vmul.f32 %v2010, %v2024
        %v2027 = vmul.f32 %v2011, %v2025
        %v2028 = vld [vmem:[%s15] sm:$0x1]
        %v2030 = vlaneseq
        %v2031 = vshrl.u32 %v2030, 7
        %v2032 = vsub.s32 0, %v2031
        %v2033 = vrot.slane %v2028, %v2032
        %v2035 = vmul.f32 %v2026, %v2033
        %v2036 = vmul.f32 %v2027, %v2033
        %v2037 = vld [vmem:[%s13] sm:$0x1]
        %v2039 = vlaneseq
        %v2040 = vshrl.u32 %v2039, 7
        %v2041 = vsub.s32 0, %v2040
        %v2042 = vrot.slane %v2037, %v2041
        %v2044 = vadd.f32 %v2035, %v2042
        %v2045 = vadd.f32 %v2036, %v2042
        %v2046 = vmul.f32 %v2044, 0.5
        %v2047 = vmul.f32 %v2045, 0.5
        %v2048 = vmul.f32 %v2044, 0.044715
        %v2049 = vmul.f32 %v2045, 0.044715
        %v2050 = vmul.f32 %v2048, %v2044
        %v2051 = vmul.f32 %v2049, %v2045
        %v2052 = vmul.f32 %v2050, %v2044
        %v2053 = vmul.f32 %v2051, %v2045
        %v2054 = vadd.f32 %v2044, %v2052
        %v2055 = vadd.f32 %v2045, %v2053
        %v2056 = vmul.f32 %v2054, 0.7978846
        %v2057 = vmul.f32 %v2055, 0.7978846
        %v2058 = vtanh.pop %v2056
        %v2059 = vtanh.pop %v2057
        %v2060 = vadd.f32 %v2058, 1.0
        %v2061 = vadd.f32 %v2059, 1.0
        %v2062 = vmul.f32 %v2046, %v2060
        %v2063 = vmul.f32 %v2047, %v2061
        %v2064 = vpack.c.bf16 %v2063, %v2062
        %v2065 = vld [vmem:[%s25] sm:$0xf]
        %v2066 = vld [vmem:[%s25 + $0x4] sm:$0xf]
        %v2067 = vld [vmem:[%s25 + $0x8] sm:$0xf]
        %v2068 = vld [vmem:[%s25 + $0xc] sm:$0xf]
        %v2069 = vld [vmem:[%s19] sm:$0x1]
        %v2071 = vlaneseq
        %v2072 = vshrl.u32 %v2071, 7
        %v2073 = vsub.s32 0, %v2072
        %v2074 = vrot.slane %v2069, %v2073
        %v2080 = vunpack.c.l.b16 %v2065
        %v2081 = vunpack.c.l.b16 %v2066
        %v2082 = vunpack.c.l.b16 %v2067
        %v2083 = vunpack.c.l.b16 %v2068
        %v2084 = vpack.c.b16 %v2081, %v2080
        %v2085 = vpack.c.b16 %v2083, %v2082
        %v2089 = vsel %vm1826, %v2064, 0
        %2091 = vmatprep.subr.bf16.mxu0 0
        %2092 = vmatpush1.bf16.msra.mxu0 %v2084
        %2093 = vmatprep.subr.bf16.mxu0 0
        %2094 = vmatpush1.bf16.msra.mxu0 %v2085
        %2095 = vmatprep.subr.bf16.mxu0 0
        %2096 = vmatpush1.bf16.msra.mxu0 0
        %2097 = vmatprep.subr.bf16.mxu0 0
        %2098 = vmatpush1.bf16.msra.mxu0 0
        %2099 = vmatprep.subr.bf16.mxu0 0
        %2100 = vmatpush1.bf16.msra.mxu0 0
        %2101 = vmatprep.subr.bf16.mxu0 0
        %2102 = vmatpush1.bf16.msra.mxu0 0
        %2103 = vmatprep.subr.bf16.mxu0 0
        %2104 = vmatpush1.bf16.msra.mxu0 0
        %2105 = vmatprep.subr.bf16.mxu0 0
        %2106 = vmatpush1.bf16.msra.mxu0 0
        %2107 = vmatprep.subr.bf16.mxu0 0
        %2108 = vmatpush1.bf16.msra.mxu0 0
        %2109 = vmatprep.subr.bf16.mxu0 0
        %2110 = vmatpush1.bf16.msra.mxu0 0
        %2111 = vmatprep.subr.bf16.mxu0 0
        %2112 = vmatpush1.bf16.msra.mxu0 0
        %2113 = vmatprep.subr.bf16.mxu0 0
        %2114 = vmatpush1.bf16.msra.mxu0 0
        %2115 = vmatprep.subr.bf16.mxu0 0
        %2116 = vmatpush1.bf16.msra.mxu0 0
        %2117 = vmatprep.subr.bf16.mxu0 0
        %2118 = vmatpush1.bf16.msra.mxu0 0
        %2119 = vmatprep.subr.bf16.mxu0 0
        %2120 = vmatpush1.bf16.msra.mxu0 0
        %2121 = vmatprep.subr.bf16.mxu0 0
        %2122 = vmatpush1.bf16.msra.mxu0 0
        %2123 = vmatprep.mubr.bf16.mxu0 0
        %2124 = vmatmul.mubr.bf16.gmra.mrb[0].mxu0 %v2089
        %v2125 = vpop.f32.mrb[0].mxu0
        %v2126 = vadd.f32 %v2074, %v2125
        %v2127 = vpop.f32.mrb[0].mxu0
        %v2128 = vpop.f32.mrb[0].mxu0
        %v2129 = vadd.f32 %v2074, %v2128
        %v2130 = vpop.f32.mrb[0].mxu0
        %2131 = vdwg.mxu0
        %v2132 = vsel %vm1826, %v2126, 0.0
        %2133 = vadd.xlane.f32.xlu0 %v2132
        %v2134 = vpop.xlane.xlu0 %2133
        %v2135 = vsel %vm1826, %v2129, 0.0
        %2136 = vadd.xlane.f32.xlu0 %v2135
        %v2137 = vpop.xlane.xlu0 %2136
        %v2138 = vmul.f32 %v2134, %v1877
        %v2139 = vmul.f32 %v2137, %v1877
        %v2140 = vsub.f32 %v2126, %v2138
        %v2141 = vsub.f32 %v2129, %v2139
        %v2142 = vmul.f32 %v2140, %v2140
        %v2143 = vmul.f32 %v2141, %v2141
        %v2144 = vsel %vm1826, %v2142, 0.0
        %2145 = vadd.xlane.f32.xlu0 %v2144
        %v2146 = vpop.xlane.xlu0 %2145
        %v2147 = vsel %vm1826, %v2143, 0.0
        %2148 = vadd.xlane.f32.xlu0 %v2147
        %v2149 = vpop.xlane.xlu0 %2148
        %v2150 = vmul.f32 %v2146, %v1877
        %v2151 = vmul.f32 %v2149, %v1877
        %v2152 = vadd.f32 %v2150, 1e-05
        %v2153 = vadd.f32 %v2151, 1e-05
        %v2154 = vrsqrt.pop %v2152
        %v2155 = vrsqrt.pop %v2153
        %v2156 = vmul.f32 %v2140, %v2154
        %v2157 = vmul.f32 %v2141, %v2155
        %v2158 = vld [vmem:[%s23] sm:$0x1]
        %v2160 = vlaneseq
        %v2161 = vshrl.u32 %v2160, 7
        %v2162 = vsub.s32 0, %v2161
        %v2163 = vrot.slane %v2158, %v2162
        %v2165 = vmul.f32 %v2156, %v2163
        %v2166 = vmul.f32 %v2157, %v2163
        %v2167 = vld [vmem:[%s21] sm:$0x1]
        %v2169 = vlaneseq
        %v2170 = vshrl.u32 %v2169, 7
        %v2171 = vsub.s32 0, %v2170
        %v2172 = vrot.slane %v2167, %v2171
        %v2174 = vadd.f32 %v2165, %v2172
        %v2175 = vadd.f32 %v2166, %v2172
        %v2176 = vmul.f32 %v2174, 0.5
        %v2177 = vmul.f32 %v2175, 0.5
        %v2178 = vmul.f32 %v2174, 0.044715
        %v2179 = vmul.f32 %v2175, 0.044715
        %v2180 = vmul.f32 %v2178, %v2174
        %v2181 = vmul.f32 %v2179, %v2175
        %v2182 = vmul.f32 %v2180, %v2174
        %v2183 = vmul.f32 %v2181, %v2175
        %v2184 = vadd.f32 %v2174, %v2182
        %v2185 = vadd.f32 %v2175, %v2183
        %v2186 = vmul.f32 %v2184, 0.7978846
        %v2187 = vmul.f32 %v2185, 0.7978846
        %v2188 = vtanh.pop %v2186
        %v2189 = vtanh.pop %v2187
        %v2190 = vadd.f32 %v2188, 1.0
        %v2191 = vadd.f32 %v2189, 1.0
        %v2192 = vmul.f32 %v2176, %v2190
        %v2193 = vmul.f32 %v2177, %v2191
        %v2194 = vpack.c.bf16 %v2193, %v2192
        %v2195 = vld [vmem:[%s77] sm:$0xf]
        %v2196 = vld [vmem:[%s77 + $0x4] sm:$0xf]
        %v2197 = vld [vmem:[%s77 + $0x8] sm:$0xf]
        %v2198 = vld [vmem:[%s77 + $0xc] sm:$0xf]
        %v2199 = vld [vmem:[#allocation2] sm:$0x1]
        %v2201 = vlaneseq
        %v2202 = vshrl.u32 %v2201, 7
        %v2203 = vsub.s32 0, %v2202
        %v2204 = vrot.slane %v2199, %v2203
        %v2210 = vunpack.c.l.b16 %v2195
        %v2211 = vunpack.c.l.b16 %v2196
        %v2212 = vunpack.c.l.b16 %v2197
        %v2213 = vunpack.c.l.b16 %v2198
        %v2214 = vpack.c.b16 %v2211, %v2210
        %v2215 = vpack.c.b16 %v2213, %v2212
        %v2219 = vsel %vm1826, %v2194, 0
        %2221 = vmatprep.subr.bf16.mxu0 0
        %2222 = vmatpush1.bf16.msra.mxu0 %v2214
        %2223 = vmatprep.subr.bf16.mxu0 0
        %2224 = vmatpush1.bf16.msra.mxu0 %v2215
        %2225 = vmatprep.subr.bf16.mxu0 0
        %2226 = vmatpush1.bf16.msra.mxu0 0
        %2227 = vmatprep.subr.bf16.mxu0 0
        %2228 = vmatpush1.bf16.msra.mxu0 0
        %2229 = vmatprep.subr.bf16.mxu0 0
        %2230 = vmatpush1.bf16.msra.mxu0 0
        %2231 = vmatprep.subr.bf16.mxu0 0
        %2232 = vmatpush1.bf16.msra.mxu0 0
        %2233 = vmatprep.subr.bf16.mxu0 0
        %2234 = vmatpush1.bf16.msra.mxu0 0
        %2235 = vmatprep.subr.bf16.mxu0 0
        %2236 = vmatpush1.bf16.msra.mxu0 0
        %2237 = vmatprep.subr.bf16.mxu0 0
        %2238 = vmatpush1.bf16.msra.mxu0 0
        %2239 = vmatprep.subr.bf16.mxu0 0
        %2240 = vmatpush1.bf16.msra.mxu0 0
        %2241 = vmatprep.subr.bf16.mxu0 0
        %2242 = vmatpush1.bf16.msra.mxu0 0
        %2243 = vmatprep.subr.bf16.mxu0 0
        %2244 = vmatpush1.bf16.msra.mxu0 0
        %2245 = vmatprep.subr.bf16.mxu0 0
        %2246 = vmatpush1.bf16.msra.mxu0 0
        %2247 = vmatprep.subr.bf16.mxu0 0
        %2248 = vmatpush1.bf16.msra.mxu0 0
        %2249 = vmatprep.subr.bf16.mxu0 0
        %2250 = vmatpush1.bf16.msra.mxu0 0
        %2251 = vmatprep.subr.bf16.mxu0 0
        %2252 = vmatpush1.bf16.msra.mxu0 0
        %2253 = vmatprep.mubr.bf16.mxu0 0
        %2254 = vmatmul.mubr.bf16.gmra.mrb[0].mxu0 %v2219
        %v2255 = vpop.f32.mrb[0].mxu0
        %v2256 = vadd.f32 %v2204, %v2255
        %v2257 = vpop.f32.mrb[0].mxu0
        %v2258 = vpop.f32.mrb[0].mxu0
        %v2259 = vadd.f32 %v2204, %v2258
        %v2260 = vpop.f32.mrb[0].mxu0
        %2261 = vdwg.mxu0
        %v2262 = vmul.f32 %v2256, 0.35355338
        %v2263 = vmul.f32 %v2259, 0.35355338
        %v2264 = vpack.c.bf16 %v2262, %v2262
        %v2265 = vpack.c.bf16 %v2263, %v2263
        %v2266 = vpack.c.bf16 %v2256, %v2256
        %v2267 = vpack.c.bf16 %v2259, %v2259
        %2269 = vrot.lane.b32.xlu0 %v2266, 96
        %v2270 = vpop.permute.xlu0 %2269
        %vm2271 = vcmask 64512
        %v2273 = vsel %vm2271, %v2264, 0
        %v2276 = vsel %vm2271, %v2270, 0
        %2278 = vmatprep.subr.bf16.mxu0 0
        %2279 = vmatpush1.bf16.xpose.msra.mxu0 %v2276
        %2280 = vmatprep.subr.bf16.mxu0 0
        %2281 = vmatpush1.bf16.xpose.msra.mxu0 0
        %2282 = vmatprep.subr.bf16.mxu0 0
        %2283 = vmatpush1.bf16.xpose.msra.mxu0 0
        %2284 = vmatprep.subr.bf16.mxu0 0
        %2285 = vmatpush1.bf16.xpose.msra.mxu0 0
        %2286 = vmatprep.subr.bf16.mxu0 0
        %2287 = vmatpush1.bf16.xpose.msra.mxu0 0
        %2288 = vmatprep.subr.bf16.mxu0 0
        %2289 = vmatpush1.bf16.xpose.msra.mxu0 0
        %2290 = vmatprep.subr.bf16.mxu0 0
        %2291 = vmatpush1.bf16.xpose.msra.mxu0 0
        %2292 = vmatprep.subr.bf16.mxu0 0
        %2293 = vmatpush1.bf16.xpose.msra.mxu0 0
        %2294 = vmatprep.subr.bf16.mxu0 0
        %2295 = vmatpush1.bf16.xpose.msra.mxu0 0
        %2296 = vmatprep.subr.bf16.mxu0 0
        %2297 = vmatpush1.bf16.xpose.msra.mxu0 0
        %2298 = vmatprep.subr.bf16.mxu0 0
        %2299 = vmatpush1.bf16.xpose.msra.mxu0 0
        %2300 = vmatprep.subr.bf16.mxu0 0
        %2301 = vmatpush1.bf16.xpose.msra.mxu0 0
        %2302 = vmatprep.subr.bf16.mxu0 0
        %2303 = vmatpush1.bf16.xpose.msra.mxu0 0
        %2304 = vmatprep.subr.bf16.mxu0 0
        %2305 = vmatpush1.bf16.xpose.msra.mxu0 0
        %2306 = vmatprep.subr.bf16.mxu0 0
        %2307 = vmatpush1.bf16.xpose.msra.mxu0 0
        %2308 = vmatprep.subr.bf16.mxu0 0
        %2309 = vmatpush1.bf16.xpose.msra.mxu0 0
        %2310 = vmatprep.mubr.bf16.mxu0 0
        %2311 = vmatmul.mubr.bf16.gmra.mrb[0].mxu0 %v2273
        %v2312 = vpop.f32.mrb[0].mxu0
        %v2313 = vadd.f32 0.0, %v2312
        %v2314 = vpop.f32.mrb[0].mxu0
        %v2315 = vpop.f32.mrb[0].mxu0
        %v2316 = vpop.f32.mrb[0].mxu0
        %2317 = vdwg.mxu0
        %2319 = vrot.lane.b32.xlu0 %v2267, 96
        %v2320 = vpop.permute.xlu0 %2319
        %v2322 = vsel %vm2271, %v2265, 0
        %v2325 = vsel %vm2271, %v2320, 0
        %2327 = vmatprep.subr.bf16.mxu0 0
        %2328 = vmatpush1.bf16.xpose.msra.mxu0 %v2325
        %2329 = vmatprep.subr.bf16.mxu0 0
        %2330 = vmatpush1.bf16.xpose.msra.mxu0 0
        %2331 = vmatprep.subr.bf16.mxu0 0
        %2332 = vmatpush1.bf16.xpose.msra.mxu0 0
        %2333 = vmatprep.subr.bf16.mxu0 0
        %2334 = vmatpush1.bf16.xpose.msra.mxu0 0
        %2335 = vmatprep.subr.bf16.mxu0 0
        %2336 = vmatpush1.bf16.xpose.msra.mxu0 0
        %2337 = vmatprep.subr.bf16.mxu0 0
        %2338 = vmatpush1.bf16.xpose.msra.mxu0 0
        %2339 = vmatprep.subr.bf16.mxu0 0
        %2340 = vmatpush1.bf16.xpose.msra.mxu0 0
        %2341 = vmatprep.subr.bf16.mxu0 0
        %2342 = vmatpush1.bf16.xpose.msra.mxu0 0
        %2343 = vmatprep.subr.bf16.mxu0 0
        %2344 = vmatpush1.bf16.xpose.msra.mxu0 0
        %2345 = vmatprep.subr.bf16.mxu0 0
        %2346 = vmatpush1.bf16.xpose.msra.mxu0 0
        %2347 = vmatprep.subr.bf16.mxu0 0
        %2348 = vmatpush1.bf16.xpose.msra.mxu0 0
        %2349 = vmatprep.subr.bf16.mxu0 0
        %2350 = vmatpush1.bf16.xpose.msra.mxu0 0
        %2351 = vmatprep.subr.bf16.mxu0 0
        %2352 = vmatpush1.bf16.xpose.msra.mxu0 0
        %2353 = vmatprep.subr.bf16.mxu0 0
        %2354 = vmatpush1.bf16.xpose.msra.mxu0 0
        %2355 = vmatprep.subr.bf16.mxu0 0
        %2356 = vmatpush1.bf16.xpose.msra.mxu0 0
        %2357 = vmatprep.subr.bf16.mxu0 0
        %2358 = vmatpush1.bf16.xpose.msra.mxu0 0
        %2359 = vmatprep.mubr.bf16.mxu0 0
        %2360 = vmatmul.mubr.bf16.gmra.mrb[0].mxu0 %v2322
        %v2361 = vpop.f32.mrb[0].mxu0
        %v2362 = vadd.f32 0.0, %v2361
        %v2363 = vpop.f32.mrb[0].mxu0
        %v2364 = vpop.f32.mrb[0].mxu0
        %v2365 = vpop.f32.mrb[0].mxu0
        %2366 = vdwg.mxu0
        %v2367 = vsel %vm2271, %v2313, -inf
        %2368 = vmax.xlane.f32.xlu0 %v2367
        %v2369 = vpop.xlane.xlu0 %2368
        %v2370 = vsel %vm2271, %v2362, -inf
        %2371 = vmax.xlane.f32.xlu0 %v2370
        %v2372 = vpop.xlane.xlu0 %2371
        %v2373 = vsub.f32 %v2313, %v2369
        %v2374 = vsub.f32 %v2362, %v2372
        %v2375 = vmul.f32 %v2373, 1.442695
        %v2376 = vpow.pop %v2375
        %v2377 = vmul.f32 %v2374, 1.442695
        %v2378 = vpow.pop %v2377
        %v2379 = vsel %vm2271, %v2376, 0.0
        %2380 = vadd.xlane.f32.xlu0 %v2379
        %v2381 = vpop.xlane.xlu0 %2380
        %v2382 = vsel %vm2271, %v2378, 0.0
        %2383 = vadd.xlane.f32.xlu0 %v2382
        %v2384 = vpop.xlane.xlu0 %2383
        %v2385 = vrcp.pop %v2381
        %v2386 = vrcp.pop %v2384
        %v2387 = vmul.f32 %v2376, %v2385
        %v2388 = vmul.f32 %v2378, %v2386
        %v2389 = vpack.c.bf16 %v2387, %v2387
        %v2390 = vpack.c.bf16 %v2388, %v2388
        %2391 = vrot.lane.b32.xlu0 %v2266, 64
        %v2392 = vpop.permute.xlu0 %2391
        %v2394 = vsel %vm2271, %v2389, 0
        %vm2396 = vcmask 1043456
        %v2398 = vsel %vm2396, %v2392, 0
        %2400 = vmatprep.subr.bf16.mxu0 0
        %2401 = vmatpush1.bf16.msra.mxu0 %v2398
        %2402 = vmatprep.subr.bf16.mxu0 0
        %2403 = vmatpush1.bf16.msra.mxu0 0
        %2404 = vmatprep.subr.bf16.mxu0 0
        %2405 = vmatpush1.bf16.msra.mxu0 0
        %2406 = vmatprep.subr.bf16.mxu0 0
        %2407 = vmatpush1.bf16.msra.mxu0 0
        %2408 = vmatprep.subr.bf16.mxu0 0
        %2409 = vmatpush1.bf16.msra.mxu0 0
        %2410 = vmatprep.subr.bf16.mxu0 0
        %2411 = vmatpush1.bf16.msra.mxu0 0
        %2412 = vmatprep.subr.bf16.mxu0 0
        %2413 = vmatpush1.bf16.msra.mxu0 0
        %2414 = vmatprep.subr.bf16.mxu0 0
        %2415 = vmatpush1.bf16.msra.mxu0 0
        %2416 = vmatprep.subr.bf16.mxu0 0
        %2417 = vmatpush1.bf16.msra.mxu0 0
        %2418 = vmatprep.subr.bf16.mxu0 0
        %2419 = vmatpush1.bf16.msra.mxu0 0
        %2420 = vmatprep.subr.bf16.mxu0 0
        %2421 = vmatpush1.bf16.msra.mxu0 0
        %2422 = vmatprep.subr.bf16.mxu0 0
        %2423 = vmatpush1.bf16.msra.mxu0 0
        %2424 = vmatprep.subr.bf16.mxu0 0
        %2425 = vmatpush1.bf16.msra.mxu0 0
        %2426 = vmatprep.subr.bf16.mxu0 0
        %2427 = vmatpush1.bf16.msra.mxu0 0
        %2428 = vmatprep.subr.bf16.mxu0 0
        %2429 = vmatpush1.bf16.msra.mxu0 0
        %2430 = vmatprep.subr.bf16.mxu0 0
        %2431 = vmatpush1.bf16.msra.mxu0 0
        %2432 = vmatprep.mubr.bf16.mxu0 0
        %2433 = vmatmul.mubr.bf16.gmra.mrb[0].mxu0 %v2394
        %v2434 = vpop.f32.mrb[0].mxu0
        %v2435 = vadd.f32 0.0, %v2434
        %v2436 = vpop.f32.mrb[0].mxu0
        %v2437 = vpop.f32.mrb[0].mxu0
        %v2438 = vpop.f32.mrb[0].mxu0
        %2439 = vdwg.mxu0
        %2440 = vrot.lane.b32.xlu0 %v2267, 64
        %v2441 = vpop.permute.xlu0 %2440
        %v2443 = vsel %vm2271, %v2390, 0
        %v2446 = vsel %vm2396, %v2441, 0
        %2448 = vmatprep.subr.bf16.mxu0 0
        %2449 = vmatpush1.bf16.msra.mxu0 %v2446
        %2450 = vmatprep.subr.bf16.mxu0 0
        %2451 = vmatpush1.bf16.msra.mxu0 0
        %2452 = vmatprep.subr.bf16.mxu0 0
        %2453 = vmatpush1.bf16.msra.mxu0 0
        %2454 = vmatprep.subr.bf16.mxu0 0
        %2455 = vmatpush1.bf16.msra.mxu0 0
        %2456 = vmatprep.subr.bf16.mxu0 0
        %2457 = vmatpush1.bf16.msra.mxu0 0
        %2458 = vmatprep.subr.bf16.mxu0 0
        %2459 = vmatpush1.bf16.msra.mxu0 0
        %2460 = vmatprep.subr.bf16.mxu0 0
        %2461 = vmatpush1.bf16.msra.mxu0 0
        %2462 = vmatprep.subr.bf16.mxu0 0
        %2463 = vmatpush1.bf16.msra.mxu0 0
        %2464 = vmatprep.subr.bf16.mxu0 0
        %2465 = vmatpush1.bf16.msra.mxu0 0
        %2466 = vmatprep.subr.bf16.mxu0 0
        %2467 = vmatpush1.bf16.msra.mxu0 0
        %2468 = vmatprep.subr.bf16.mxu0 0
        %2469 = vmatpush1.bf16.msra.mxu0 0
        %2470 = vmatprep.subr.bf16.mxu0 0
        %2471 = vmatpush1.bf16.msra.mxu0 0
        %2472 = vmatprep.subr.bf16.mxu0 0
        %2473 = vmatpush1.bf16.msra.mxu0 0
        %2474 = vmatprep.subr.bf16.mxu0 0
        %2475 = vmatpush1.bf16.msra.mxu0 0
        %2476 = vmatprep.subr.bf16.mxu0 0
        %2477 = vmatpush1.bf16.msra.mxu0 0
        %2478 = vmatprep.subr.bf16.mxu0 0
        %2479 = vmatpush1.bf16.msra.mxu0 0
        %2480 = vmatprep.mubr.bf16.mxu0 0
        %2481 = vmatmul.mubr.bf16.gmra.mrb[0].mxu0 %v2443
        %v2482 = vpop.f32.mrb[0].mxu0
        %v2483 = vadd.f32 0.0, %v2482
        %v2484 = vpop.f32.mrb[0].mxu0
        %v2485 = vpop.f32.mrb[0].mxu0
        %v2486 = vpop.f32.mrb[0].mxu0
        %2487 = vdwg.mxu0
        %2489 = vrot.lane.b32.xlu0 %v2264, 120
        %v2490 = vpop.permute.xlu0 %2489
        %2491 = vrot.lane.b32.xlu0 %v2266, 88
        %v2492 = vpop.permute.xlu0 %2491
        %v2494 = vsel %vm2271, %v2490, 0
        %v2497 = vsel %vm2271, %v2492, 0
        %2499 = vmatprep.subr.bf16.mxu0 0
        %2500 = vmatpush1.bf16.xpose.msra.mxu0 %v2497
        %2501 = vmatprep.subr.bf16.mxu0 0
        %2502 = vmatpush1.bf16.xpose.msra.mxu0 0
        %2503 = vmatprep.subr.bf16.mxu0 0
        %2504 = vmatpush1.bf16.xpose.msra.mxu0 0
        %2505 = vmatprep.subr.bf16.mxu0 0
        %2506 = vmatpush1.bf16.xpose.msra.mxu0 0
        %2507 = vmatprep.subr.bf16.mxu0 0
        %2508 = vmatpush1.bf16.xpose.msra.mxu0 0
        %2509 = vmatprep.subr.bf16.mxu0 0
        %2510 = vmatpush1.bf16.xpose.msra.mxu0 0
        %2511 = vmatprep.subr.bf16.mxu0 0
        %2512 = vmatpush1.bf16.xpose.msra.mxu0 0
        %2513 = vmatprep.subr.bf16.mxu0 0
        %2514 = vmatpush1.bf16.xpose.msra.mxu0 0
        %2515 = vmatprep.subr.bf16.mxu0 0
        %2516 = vmatpush1.bf16.xpose.msra.mxu0 0
        %2517 = vmatprep.subr.bf16.mxu0 0
        %2518 = vmatpush1.bf16.xpose.msra.mxu0 0
        %2519 = vmatprep.subr.bf16.mxu0 0
        %2520 = vmatpush1.bf16.xpose.msra.mxu0 0
        %2521 = vmatprep.subr.bf16.mxu0 0
        %2522 = vmatpush1.bf16.xpose.msra.mxu0 0
        %2523 = vmatprep.subr.bf16.mxu0 0
        %2524 = vmatpush1.bf16.xpose.msra.mxu0 0
        %2525 = vmatprep.subr.bf16.mxu0 0
        %2526 = vmatpush1.bf16.xpose.msra.mxu0 0
        %2527 = vmatprep.subr.bf16.mxu0 0
        %2528 = vmatpush1.bf16.xpose.msra.mxu0 0
        %2529 = vmatprep.subr.bf16.mxu0 0
        %2530 = vmatpush1.bf16.xpose.msra.mxu0 0
        %2531 = vmatprep.mubr.bf16.mxu0 0
        %2532 = vmatmul.mubr.bf16.gmra.mrb[0].mxu0 %v2494
        %v2533 = vpop.f32.mrb[0].mxu0
        %v2534 = vadd.f32 0.0, %v2533
        %v2535 = vpop.f32.mrb[0].mxu0
        %v2536 = vpop.f32.mrb[0].mxu0
        %v2537 = vpop.f32.mrb[0].mxu0
        %2538 = vdwg.mxu0
        %2540 = vrot.lane.b32.xlu0 %v2265, 120
        %v2541 = vpop.permute.xlu0 %2540
        %2542 = vrot.lane.b32.xlu0 %v2267, 88
        %v2543 = vpop.permute.xlu0 %2542
        %v2545 = vsel %vm2271, %v2541, 0
        %v2548 = vsel %vm2271, %v2543, 0
        %2550 = vmatprep.subr.bf16.mxu0 0
        %2551 = vmatpush1.bf16.xpose.msra.mxu0 %v2548
        %2552 = vmatprep.subr.bf16.mxu0 0
        %2553 = vmatpush1.bf16.xpose.msra.mxu0 0
        %2554 = vmatprep.subr.bf16.mxu0 0
        %2555 = vmatpush1.bf16.xpose.msra.mxu0 0
        %2556 = vmatprep.subr.bf16.mxu0 0
        %2557 = vmatpush1.bf16.xpose.msra.mxu0 0
        %2558 = vmatprep.subr.bf16.mxu0 0
        %2559 = vmatpush1.bf16.xpose.msra.mxu0 0
        %2560 = vmatprep.subr.bf16.mxu0 0
        %2561 = vmatpush1.bf16.xpose.msra.mxu0 0
        %2562 = vmatprep.subr.bf16.mxu0 0
        %2563 = vmatpush1.bf16.xpose.msra.mxu0 0
        %2564 = vmatprep.subr.bf16.mxu0 0
        %2565 = vmatpush1.bf16.xpose.msra.mxu0 0
        %2566 = vmatprep.subr.bf16.mxu0 0
        %2567 = vmatpush1.bf16.xpose.msra.mxu0 0
        %2568 = vmatprep.subr.bf16.mxu0 0
        %2569 = vmatpush1.bf16.xpose.msra.mxu0 0
        %2570 = vmatprep.subr.bf16.mxu0 0
        %2571 = vmatpush1.bf16.xpose.msra.mxu0 0
        %2572 = vmatprep.subr.bf16.mxu0 0
        %2573 = vmatpush1.bf16.xpose.msra.mxu0 0
        %2574 = vmatprep.subr.bf16.mxu0 0
        %2575 = vmatpush1.bf16.xpose.msra.mxu0 0
        %2576 = vmatprep.subr.bf16.mxu0 0
        %2577 = vmatpush1.bf16.xpose.msra.mxu0 0
        %2578 = vmatprep.subr.bf16.mxu0 0
        %2579 = vmatpush1.bf16.xpose.msra.mxu0 0
        %2580 = vmatprep.subr.bf16.mxu0 0
        %2581 = vmatpush1.bf16.xpose.msra.mxu0 0
        %2582 = vmatprep.mubr.bf16.mxu0 0
        %2583 = vmatmul.mubr.bf16.gmra.mrb[0].mxu0 %v2545
        %v2584 = vpop.f32.mrb[0].mxu0
        %v2585 = vadd.f32 0.0, %v2584
        %v2586 = vpop.f32.mrb[0].mxu0
        %v2587 = vpop.f32.mrb[0].mxu0
        %v2588 = vpop.f32.mrb[0].mxu0
        %2589 = vdwg.mxu0
        %v2590 = vsel %vm2271, %v2534, -inf
        %2591 = vmax.xlane.f32.xlu0 %v2590
        %v2592 = vpop.xlane.xlu0 %2591
        %v2593 = vsel %vm2271, %v2585, -inf
        %2594 = vmax.xlane.f32.xlu0 %v2593
        %v2595 = vpop.xlane.xlu0 %2594
        %v2596 = vsub.f32 %v2534, %v2592
        %v2597 = vsub.f32 %v2585, %v2595
        %v2598 = vmul.f32 %v2596, 1.442695
        %v2599 = vpow.pop %v2598
        %v2600 = vmul.f32 %v2597, 1.442695
        %v2601 = vpow.pop %v2600
        %v2602 = vsel %vm2271, %v2599, 0.0
        %2603 = vadd.xlane.f32.xlu0 %v2602
        %v2604 = vpop.xlane.xlu0 %2603
        %v2605 = vsel %vm2271, %v2601, 0.0
        %2606 = vadd.xlane.f32.xlu0 %v2605
        %v2607 = vpop.xlane.xlu0 %2606
        %v2608 = vrcp.pop %v2604
        %v2609 = vrcp.pop %v2607
        %v2610 = vmul.f32 %v2599, %v2608
        %v2611 = vmul.f32 %v2601, %v2609
        %v2612 = vpack.c.bf16 %v2610, %v2610
        %v2613 = vpack.c.bf16 %v2611, %v2611
        %2614 = vrot.lane.b32.xlu0 %v2266, 56
        %v2615 = vpop.permute.xlu0 %2614
        %v2617 = vsel %vm2271, %v2612, 0
        %v2620 = vsel %vm2396, %v2615, 0
        %2622 = vmatprep.subr.bf16.mxu0 0
        %2623 = vmatpush1.bf16.msra.mxu0 %v2620
        %2624 = vmatprep.subr.bf16.mxu0 0
        %2625 = vmatpush1.bf16.msra.mxu0 0
        %2626 = vmatprep.subr.bf16.mxu0 0
        %2627 = vmatpush1.bf16.msra.mxu0 0
        %2628 = vmatprep.subr.bf16.mxu0 0
        %2629 = vmatpush1.bf16.msra.mxu0 0
        %2630 = vmatprep.subr.bf16.mxu0 0
        %2631 = vmatpush1.bf16.msra.mxu0 0
        %2632 = vmatprep.subr.bf16.mxu0 0
        %2633 = vmatpush1.bf16.msra.mxu0 0
        %2634 = vmatprep.subr.bf16.mxu0 0
        %2635 = vmatpush1.bf16.msra.mxu0 0
        %2636 = vmatprep.subr.bf16.mxu0 0
        %2637 = vmatpush1.bf16.msra.mxu0 0
        %2638 = vmatprep.subr.bf16.mxu0 0
        %2639 = vmatpush1.bf16.msra.mxu0 0
        %2640 = vmatprep.subr.bf16.mxu0 0
        %2641 = vmatpush1.bf16.msra.mxu0 0
        %2642 = vmatprep.subr.bf16.mxu0 0
        %2643 = vmatpush1.bf16.msra.mxu0 0
        %2644 = vmatprep.subr.bf16.mxu0 0
        %2645 = vmatpush1.bf16.msra.mxu0 0
        %2646 = vmatprep.subr.bf16.mxu0 0
        %2647 = vmatpush1.bf16.msra.mxu0 0
        %2648 = vmatprep.subr.bf16.mxu0 0
        %2649 = vmatpush1.bf16.msra.mxu0 0
        %2650 = vmatprep.subr.bf16.mxu0 0
        %2651 = vmatpush1.bf16.msra.mxu0 0
        %2652 = vmatprep.subr.bf16.mxu0 0
        %2653 = vmatpush1.bf16.msra.mxu0 0
        %2654 = vmatprep.mubr.bf16.mxu0 0
        %2655 = vmatmul.mubr.bf16.gmra.mrb[0].mxu0 %v2617
        %v2656 = vpop.f32.mrb[0].mxu0
        %v2657 = vadd.f32 0.0, %v2656
        %v2658 = vpop.f32.mrb[0].mxu0
        %v2659 = vpop.f32.mrb[0].mxu0
        %v2660 = vpop.f32.mrb[0].mxu0
        %2661 = vdwg.mxu0
        %2662 = vrot.lane.b32.xlu0 %v2267, 56
        %v2663 = vpop.permute.xlu0 %2662
        %v2665 = vsel %vm2271, %v2613, 0
        %v2668 = vsel %vm2396, %v2663, 0
        %2670 = vmatprep.subr.bf16.mxu0 0
        %2671 = vmatpush1.bf16.msra.mxu0 %v2668
        %2672 = vmatprep.subr.bf16.mxu0 0
        %2673 = vmatpush1.bf16.msra.mxu0 0
        %2674 = vmatprep.subr.bf16.mxu0 0
        %2675 = vmatpush1.bf16.msra.mxu0 0
        %2676 = vmatprep.subr.bf16.mxu0 0
        %2677 = vmatpush1.bf16.msra.mxu0 0
        %2678 = vmatprep.subr.bf16.mxu0 0
        %2679 = vmatpush1.bf16.msra.mxu0 0
        %2680 = vmatprep.subr.bf16.mxu0 0
        %2681 = vmatpush1.bf16.msra.mxu0 0
        %2682 = vmatprep.subr.bf16.mxu0 0
        %2683 = vmatpush1.bf16.msra.mxu0 0
        %2684 = vmatprep.subr.bf16.mxu0 0
        %2685 = vmatpush1.bf16.msra.mxu0 0
        %2686 = vmatprep.subr.bf16.mxu0 0
        %2687 = vmatpush1.bf16.msra.mxu0 0
        %2688 = vmatprep.subr.bf16.mxu0 0
        %2689 = vmatpush1.bf16.msra.mxu0 0
        %2690 = vmatprep.subr.bf16.mxu0 0
        %2691 = vmatpush1.bf16.msra.mxu0 0
        %2692 = vmatprep.subr.bf16.mxu0 0
        %2693 = vmatpush1.bf16.msra.mxu0 0
        %2694 = vmatprep.subr.bf16.mxu0 0
        %2695 = vmatpush1.bf16.msra.mxu0 0
        %2696 = vmatprep.subr.bf16.mxu0 0
        %2697 = vmatpush1.bf16.msra.mxu0 0
        %2698 = vmatprep.subr.bf16.mxu0 0
        %2699 = vmatpush1.bf16.msra.mxu0 0
        %2700 = vmatprep.subr.bf16.mxu0 0
        %2701 = vmatpush1.bf16.msra.mxu0 0
        %2702 = vmatprep.mubr.bf16.mxu0 0
        %2703 = vmatmul.mubr.bf16.gmra.mrb[0].mxu0 %v2665
        %v2704 = vpop.f32.mrb[0].mxu0
        %v2705 = vadd.f32 0.0, %v2704
        %v2706 = vpop.f32.mrb[0].mxu0
        %v2707 = vpop.f32.mrb[0].mxu0
        %v2708 = vpop.f32.mrb[0].mxu0
        %2709 = vdwg.mxu0
        %2710 = vrot.lane.b32.xlu0 %v2264, 112
        %v2711 = vpop.permute.xlu0 %2710
        %2712 = vrot.lane.b32.xlu0 %v2266, 80
        %v2713 = vpop.permute.xlu0 %2712
        %v2715 = vsel %vm2271, %v2711, 0
        %v2718 = vsel %vm2271, %v2713, 0
        %2720 = vmatprep.subr.bf16.mxu0 0
        %2721 = vmatpush1.bf16.xpose.msra.mxu0 %v2718
        %2722 = vmatprep.subr.bf16.mxu0 0
        %2723 = vmatpush1.bf16.xpose.msra.mxu0 0
        %2724 = vmatprep.subr.bf16.mxu0 0
        %2725 = vmatpush1.bf16.xpose.msra.mxu0 0
        %2726 = vmatprep.subr.bf16.mxu0 0
        %2727 = vmatpush1.bf16.xpose.msra.mxu0 0
        %2728 = vmatprep.subr.bf16.mxu0 0
        %2729 = vmatpush1.bf16.xpose.msra.mxu0 0
        %2730 = vmatprep.subr.bf16.mxu0 0
        %2731 = vmatpush1.bf16.xpose.msra.mxu0 0
        %2732 = vmatprep.subr.bf16.mxu0 0
        %2733 = vmatpush1.bf16.xpose.msra.mxu0 0
        %2734 = vmatprep.subr.bf16.mxu0 0
        %2735 = vmatpush1.bf16.xpose.msra.mxu0 0
        %2736 = vmatprep.subr.bf16.mxu0 0
        %2737 = vmatpush1.bf16.xpose.msra.mxu0 0
        %2738 = vmatprep.subr.bf16.mxu0 0
        %2739 = vmatpush1.bf16.xpose.msra.mxu0 0
        %2740 = vmatprep.subr.bf16.mxu0 0
        %2741 = vmatpush1.bf16.xpose.msra.mxu0 0
        %2742 = vmatprep.subr.bf16.mxu0 0
        %2743 = vmatpush1.bf16.xpose.msra.mxu0 0
        %2744 = vmatprep.subr.bf16.mxu0 0
        %2745 = vmatpush1.bf16.xpose.msra.mxu0 0
        %2746 = vmatprep.subr.bf16.mxu0 0
        %2747 = vmatpush1.bf16.xpose.msra.mxu0 0
        %2748 = vmatprep.subr.bf16.mxu0 0
        %2749 = vmatpush1.bf16.xpose.msra.mxu0 0
        %2750 = vmatprep.subr.bf16.mxu0 0
        %2751 = vmatpush1.bf16.xpose.msra.mxu0 0
        %2752 = vmatprep.mubr.bf16.mxu0 0
        %2753 = vmatmul.mubr.bf16.gmra.mrb[0].mxu0 %v2715
        %v2754 = vpop.f32.mrb[0].mxu0
        %v2755 = vadd.f32 0.0, %v2754
        %v2756 = vpop.f32.mrb[0].mxu0
        %v2757 = vpop.f32.mrb[0].mxu0
        %v2758 = vpop.f32.mrb[0].mxu0
        %2759 = vdwg.mxu0
        %2760 = vrot.lane.b32.xlu0 %v2265, 112
        %v2761 = vpop.permute.xlu0 %2760
        %2762 = vrot.lane.b32.xlu0 %v2267, 80
        %v2763 = vpop.permute.xlu0 %2762
        %v2765 = vsel %vm2271, %v2761, 0
        %v2768 = vsel %vm2271, %v2763, 0
        %2770 = vmatprep.subr.bf16.mxu0 0
        %2771 = vmatpush1.bf16.xpose.msra.mxu0 %v2768
        %2772 = vmatprep.subr.bf16.mxu0 0
        %2773 = vmatpush1.bf16.xpose.msra.mxu0 0
        %2774 = vmatprep.subr.bf16.mxu0 0
        %2775 = vmatpush1.bf16.xpose.msra.mxu0 0
        %2776 = vmatprep.subr.bf16.mxu0 0
        %2777 = vmatpush1.bf16.xpose.msra.mxu0 0
        %2778 = vmatprep.subr.bf16.mxu0 0
        %2779 = vmatpush1.bf16.xpose.msra.mxu0 0
        %2780 = vmatprep.subr.bf16.mxu0 0
        %2781 = vmatpush1.bf16.xpose.msra.mxu0 0
        %2782 = vmatprep.subr.bf16.mxu0 0
        %2783 = vmatpush1.bf16.xpose.msra.mxu0 0
        %2784 = vmatprep.subr.bf16.mxu0 0
        %2785 = vmatpush1.bf16.xpose.msra.mxu0 0
        %2786 = vmatprep.subr.bf16.mxu0 0
        %2787 = vmatpush1.bf16.xpose.msra.mxu0 0
        %2788 = vmatprep.subr.bf16.mxu0 0
        %2789 = vmatpush1.bf16.xpose.msra.mxu0 0
        %2790 = vmatprep.subr.bf16.mxu0 0
        %2791 = vmatpush1.bf16.xpose.msra.mxu0 0
        %2792 = vmatprep.subr.bf16.mxu0 0
        %2793 = vmatpush1.bf16.xpose.msra.mxu0 0
        %2794 = vmatprep.subr.bf16.mxu0 0
        %2795 = vmatpush1.bf16.xpose.msra.mxu0 0
        %2796 = vmatprep.subr.bf16.mxu0 0
        %2797 = vmatpush1.bf16.xpose.msra.mxu0 0
        %2798 = vmatprep.subr.bf16.mxu0 0
        %2799 = vmatpush1.bf16.xpose.msra.mxu0 0
        %2800 = vmatprep.subr.bf16.mxu0 0
        %2801 = vmatpush1.bf16.xpose.msra.mxu0 0
        %2802 = vmatprep.mubr.bf16.mxu0 0
        %2803 = vmatmul.mubr.bf16.gmra.mrb[0].mxu0 %v2765
        %v2804 = vpop.f32.mrb[0].mxu0
        %v2805 = vadd.f32 0.0, %v2804
        %v2806 = vpop.f32.mrb[0].mxu0
        %v2807 = vpop.f32.mrb[0].mxu0
        %v2808 = vpop.f32.mrb[0].mxu0
        %2809 = vdwg.mxu0
        %v2810 = vsel %vm2271, %v2755, -inf
        %2811 = vmax.xlane.f32.xlu0 %v2810
        %v2812 = vpop.xlane.xlu0 %2811
        %v2813 = vsel %vm2271, %v2805, -inf
        %2814 = vmax.xlane.f32.xlu0 %v2813
        %v2815 = vpop.xlane.xlu0 %2814
        %v2816 = vsub.f32 %v2755, %v2812
        %v2817 = vsub.f32 %v2805, %v2815
        %v2818 = vmul.f32 %v2816, 1.442695
        %v2819 = vpow.pop %v2818
        %v2820 = vmul.f32 %v2817, 1.442695
        %v2821 = vpow.pop %v2820
        %v2822 = vsel %vm2271, %v2819, 0.0
        %2823 = vadd.xlane.f32.xlu0 %v2822
        %v2824 = vpop.xlane.xlu0 %2823
        %v2825 = vsel %vm2271, %v2821, 0.0
        %2826 = vadd.xlane.f32.xlu0 %v2825
        %v2827 = vpop.xlane.xlu0 %2826
        %v2828 = vrcp.pop %v2824
        %v2829 = vrcp.pop %v2827
        %v2830 = vmul.f32 %v2819, %v2828
        %v2831 = vmul.f32 %v2821, %v2829
        %v2832 = vpack.c.bf16 %v2830, %v2830
        %v2833 = vpack.c.bf16 %v2831, %v2831
        %2834 = vrot.lane.b32.xlu0 %v2266, 48
        %v2835 = vpop.permute.xlu0 %2834
        %v2837 = vsel %vm2271, %v2832, 0
        %v2840 = vsel %vm2396, %v2835, 0
        %2842 = vmatprep.subr.bf16.mxu0 0
        %2843 = vmatpush1.bf16.msra.mxu0 %v2840
        %2844 = vmatprep.subr.bf16.mxu0 0
        %2845 = vmatpush1.bf16.msra.mxu0 0
        %2846 = vmatprep.subr.bf16.mxu0 0
        %2847 = vmatpush1.bf16.msra.mxu0 0
        %2848 = vmatprep.subr.bf16.mxu0 0
        %2849 = vmatpush1.bf16.msra.mxu0 0
        %2850 = vmatprep.subr.bf16.mxu0 0
        %2851 = vmatpush1.bf16.msra.mxu0 0
        %2852 = vmatprep.subr.bf16.mxu0 0
        %2853 = vmatpush1.bf16.msra.mxu0 0
        %2854 = vmatprep.subr.bf16.mxu0 0
        %2855 = vmatpush1.bf16.msra.mxu0 0
        %2856 = vmatprep.subr.bf16.mxu0 0
        %2857 = vmatpush1.bf16.msra.mxu0 0
        %2858 = vmatprep.subr.bf16.mxu0 0
        %2859 = vmatpush1.bf16.msra.mxu0 0
        %2860 = vmatprep.subr.bf16.mxu0 0
        %2861 = vmatpush1.bf16.msra.mxu0 0
        %2862 = vmatprep.subr.bf16.mxu0 0
        %2863 = vmatpush1.bf16.msra.mxu0 0
        %2864 = vmatprep.subr.bf16.mxu0 0
        %2865 = vmatpush1.bf16.msra.mxu0 0
        %2866 = vmatprep.subr.bf16.mxu0 0
        %2867 = vmatpush1.bf16.msra.mxu0 0
        %2868 = vmatprep.subr.bf16.mxu0 0
        %2869 = vmatpush1.bf16.msra.mxu0 0
        %2870 = vmatprep.subr.bf16.mxu0 0
        %2871 = vmatpush1.bf16.msra.mxu0 0
        %2872 = vmatprep.subr.bf16.mxu0 0
        %2873 = vmatpush1.bf16.msra.mxu0 0
        %2874 = vmatprep.mubr.bf16.mxu0 0
        %2875 = vmatmul.mubr.bf16.gmra.mrb[0].mxu0 %v2837
        %v2876 = vpop.f32.mrb[0].mxu0
        %v2877 = vadd.f32 0.0, %v2876
        %v2878 = vpop.f32.mrb[0].mxu0
        %v2879 = vpop.f32.mrb[0].mxu0
        %v2880 = vpop.f32.mrb[0].mxu0
        %2881 = vdwg.mxu0
        %2882 = vrot.lane.b32.xlu0 %v2267, 48
        %v2883 = vpop.permute.xlu0 %2882
        %v2885 = vsel %vm2271, %v2833, 0
        %v2888 = vsel %vm2396, %v2883, 0
        %2890 = vmatprep.subr.bf16.mxu0 0
        %2891 = vmatpush1.bf16.msra.mxu0 %v2888
        %2892 = vmatprep.subr.bf16.mxu0 0
        %2893 = vmatpush1.bf16.msra.mxu0 0
        %2894 = vmatprep.subr.bf16.mxu0 0
        %2895 = vmatpush1.bf16.msra.mxu0 0
        %2896 = vmatprep.subr.bf16.mxu0 0
        %2897 = vmatpush1.bf16.msra.mxu0 0
        %2898 = vmatprep.subr.bf16.mxu0 0
        %2899 = vmatpush1.bf16.msra.mxu0 0
        %2900 = vmatprep.subr.bf16.mxu0 0
        %2901 = vmatpush1.bf16.msra.mxu0 0
        %2902 = vmatprep.subr.bf16.mxu0 0
        %2903 = vmatpush1.bf16.msra.mxu0 0
        %2904 = vmatprep.subr.bf16.mxu0 0
        %2905 = vmatpush1.bf16.msra.mxu0 0
        %2906 = vmatprep.subr.bf16.mxu0 0
        %2907 = vmatpush1.bf16.msra.mxu0 0
        %2908 = vmatprep.subr.bf16.mxu0 0
        %2909 = vmatpush1.bf16.msra.mxu0 0
        %2910 = vmatprep.subr.bf16.mxu0 0
        %2911 = vmatpush1.bf16.msra.mxu0 0
        %2912 = vmatprep.subr.bf16.mxu0 0
        %2913 = vmatpush1.bf16.msra.mxu0 0
        %2914 = vmatprep.subr.bf16.mxu0 0
        %2915 = vmatpush1.bf16.msra.mxu0 0
        %2916 = vmatprep.subr.bf16.mxu0 0
        %2917 = vmatpush1.bf16.msra.mxu0 0
        %2918 = vmatprep.subr.bf16.mxu0 0
        %2919 = vmatpush1.bf16.msra.mxu0 0
        %2920 = vmatprep.subr.bf16.mxu0 0
        %2921 = vmatpush1.bf16.msra.mxu0 0
        %2922 = vmatprep.mubr.bf16.mxu0 0
        %2923 = vmatmul.mubr.bf16.gmra.mrb[0].mxu0 %v2885
        %v2924 = vpop.f32.mrb[0].mxu0
        %v2925 = vadd.f32 0.0, %v2924
        %v2926 = vpop.f32.mrb[0].mxu0
        %v2927 = vpop.f32.mrb[0].mxu0
        %v2928 = vpop.f32.mrb[0].mxu0
        %2929 = vdwg.mxu0
        %2930 = vrot.lane.b32.xlu0 %v2264, 104
        %v2931 = vpop.permute.xlu0 %2930
        %2932 = vrot.lane.b32.xlu0 %v2266, 72
        %v2933 = vpop.permute.xlu0 %2932
        %v2935 = vsel %vm2271, %v2931, 0
        %v2938 = vsel %vm2271, %v2933, 0
        %2940 = vmatprep.subr.bf16.mxu0 0
        %2941 = vmatpush1.bf16.xpose.msra.mxu0 %v2938
        %2942 = vmatprep.subr.bf16.mxu0 0
        %2943 = vmatpush1.bf16.xpose.msra.mxu0 0
        %2944 = vmatprep.subr.bf16.mxu0 0
        %2945 = vmatpush1.bf16.xpose.msra.mxu0 0
        %2946 = vmatprep.subr.bf16.mxu0 0
        %2947 = vmatpush1.bf16.xpose.msra.mxu0 0
        %2948 = vmatprep.subr.bf16.mxu0 0
        %2949 = vmatpush1.bf16.xpose.msra.mxu0 0
        %2950 = vmatprep.subr.bf16.mxu0 0
        %2951 = vmatpush1.bf16.xpose.msra.mxu0 0
        %2952 = vmatprep.subr.bf16.mxu0 0
        %2953 = vmatpush1.bf16.xpose.msra.mxu0 0
        %2954 = vmatprep.subr.bf16.mxu0 0
        %2955 = vmatpush1.bf16.xpose.msra.mxu0 0
        %2956 = vmatprep.subr.bf16.mxu0 0
        %2957 = vmatpush1.bf16.xpose.msra.mxu0 0
        %2958 = vmatprep.subr.bf16.mxu0 0
        %2959 = vmatpush1.bf16.xpose.msra.mxu0 0
        %2960 = vmatprep.subr.bf16.mxu0 0
        %2961 = vmatpush1.bf16.xpose.msra.mxu0 0
        %2962 = vmatprep.subr.bf16.mxu0 0
        %2963 = vmatpush1.bf16.xpose.msra.mxu0 0
        %2964 = vmatprep.subr.bf16.mxu0 0
        %2965 = vmatpush1.bf16.xpose.msra.mxu0 0
        %2966 = vmatprep.subr.bf16.mxu0 0
        %2967 = vmatpush1.bf16.xpose.msra.mxu0 0
        %2968 = vmatprep.subr.bf16.mxu0 0
        %2969 = vmatpush1.bf16.xpose.msra.mxu0 0
        %2970 = vmatprep.subr.bf16.mxu0 0
        %2971 = vmatpush1.bf16.xpose.msra.mxu0 0
        %2972 = vmatprep.mubr.bf16.mxu0 0
        %2973 = vmatmul.mubr.bf16.gmra.mrb[0].mxu0 %v2935
        %v2974 = vpop.f32.mrb[0].mxu0
        %v2975 = vadd.f32 0.0, %v2974
        %v2976 = vpop.f32.mrb[0].mxu0
        %v2977 = vpop.f32.mrb[0].mxu0
        %v2978 = vpop.f32.mrb[0].mxu0
        %2979 = vdwg.mxu0
        %2980 = vrot.lane.b32.xlu0 %v2265, 104
        %v2981 = vpop.permute.xlu0 %2980
        %2982 = vrot.lane.b32.xlu0 %v2267, 72
        %v2983 = vpop.permute.xlu0 %2982
        %v2985 = vsel %vm2271, %v2981, 0
        %v2988 = vsel %vm2271, %v2983, 0
        %2990 = vmatprep.subr.bf16.mxu0 0
        %2991 = vmatpush1.bf16.xpose.msra.mxu0 %v2988
        %2992 = vmatprep.subr.bf16.mxu0 0
        %2993 = vmatpush1.bf16.xpose.msra.mxu0 0
        %2994 = vmatprep.subr.bf16.mxu0 0
        %2995 = vmatpush1.bf16.xpose.msra.mxu0 0
        %2996 = vmatprep.subr.bf16.mxu0 0
        %2997 = vmatpush1.bf16.xpose.msra.mxu0 0
        %2998 = vmatprep.subr.bf16.mxu0 0
        %2999 = vmatpush1.bf16.xpose.msra.mxu0 0
        %3000 = vmatprep.subr.bf16.mxu0 0
        %3001 = vmatpush1.bf16.xpose.msra.mxu0 0
        %3002 = vmatprep.subr.bf16.mxu0 0
        %3003 = vmatpush1.bf16.xpose.msra.mxu0 0
        %3004 = vmatprep.subr.bf16.mxu0 0
        %3005 = vmatpush1.bf16.xpose.msra.mxu0 0
        %3006 = vmatprep.subr.bf16.mxu0 0
        %3007 = vmatpush1.bf16.xpose.msra.mxu0 0
        %3008 = vmatprep.subr.bf16.mxu0 0
        %3009 = vmatpush1.bf16.xpose.msra.mxu0 0
        %3010 = vmatprep.subr.bf16.mxu0 0
        %3011 = vmatpush1.bf16.xpose.msra.mxu0 0
        %3012 = vmatprep.subr.bf16.mxu0 0
        %3013 = vmatpush1.bf16.xpose.msra.mxu0 0
        %3014 = vmatprep.subr.bf16.mxu0 0
        %3015 = vmatpush1.bf16.xpose.msra.mxu0 0
        %3016 = vmatprep.subr.bf16.mxu0 0
        %3017 = vmatpush1.bf16.xpose.msra.mxu0 0
        %3018 = vmatprep.subr.bf16.mxu0 0
        %3019 = vmatpush1.bf16.xpose.msra.mxu0 0
        %3020 = vmatprep.subr.bf16.mxu0 0
        %3021 = vmatpush1.bf16.xpose.msra.mxu0 0
        %3022 = vmatprep.mubr.bf16.mxu0 0
        %3023 = vmatmul.mubr.bf16.gmra.mrb[0].mxu0 %v2985
        %v3024 = vpop.f32.mrb[0].mxu0
        %v3025 = vadd.f32 0.0, %v3024
        %v3026 = vpop.f32.mrb[0].mxu0
        %v3027 = vpop.f32.mrb[0].mxu0
        %v3028 = vpop.f32.mrb[0].mxu0
        %3029 = vdwg.mxu0
        %v3030 = vsel %vm2271, %v2975, -inf
        %3031 = vmax.xlane.f32.xlu0 %v3030
        %v3032 = vpop.xlane.xlu0 %3031
        %v3033 = vsel %vm2271, %v3025, -inf
        %3034 = vmax.xlane.f32.xlu0 %v3033
        %v3035 = vpop.xlane.xlu0 %3034
        %v3036 = vsub.f32 %v2975, %v3032
        %v3037 = vsub.f32 %v3025, %v3035
        %v3038 = vmul.f32 %v3036, 1.442695
        %v3039 = vpow.pop %v3038
        %v3040 = vmul.f32 %v3037, 1.442695
        %v3041 = vpow.pop %v3040
        %v3042 = vsel %vm2271, %v3039, 0.0
        %3043 = vadd.xlane.f32.xlu0 %v3042
        %v3044 = vpop.xlane.xlu0 %3043
        %v3045 = vsel %vm2271, %v3041, 0.0
        %3046 = vadd.xlane.f32.xlu0 %v3045
        %v3047 = vpop.xlane.xlu0 %3046
        %v3048 = vrcp.pop %v3044
        %v3049 = vrcp.pop %v3047
        %v3050 = vmul.f32 %v3039, %v3048
        %v3051 = vmul.f32 %v3041, %v3049
        %v3052 = vpack.c.bf16 %v3050, %v3050
        %v3053 = vpack.c.bf16 %v3051, %v3051
        %3054 = vrot.lane.b32.xlu0 %v2266, 40
        %v3055 = vpop.permute.xlu0 %3054
        %v3057 = vsel %vm2271, %v3052, 0
        %v3060 = vsel %vm2396, %v3055, 0
        %3062 = vmatprep.subr.bf16.mxu0 0
        %3063 = vmatpush1.bf16.msra.mxu0 %v3060
        %3064 = vmatprep.subr.bf16.mxu0 0
        %3065 = vmatpush1.bf16.msra.mxu0 0
        %3066 = vmatprep.subr.bf16.mxu0 0
        %3067 = vmatpush1.bf16.msra.mxu0 0
        %3068 = vmatprep.subr.bf16.mxu0 0
        %3069 = vmatpush1.bf16.msra.mxu0 0
        %3070 = vmatprep.subr.bf16.mxu0 0
        %3071 = vmatpush1.bf16.msra.mxu0 0
        %3072 = vmatprep.subr.bf16.mxu0 0
        %3073 = vmatpush1.bf16.msra.mxu0 0
        %3074 = vmatprep.subr.bf16.mxu0 0
        %3075 = vmatpush1.bf16.msra.mxu0 0
        %3076 = vmatprep.subr.bf16.mxu0 0
        %3077 = vmatpush1.bf16.msra.mxu0 0
        %3078 = vmatprep.subr.bf16.mxu0 0
        %3079 = vmatpush1.bf16.msra.mxu0 0
        %3080 = vmatprep.subr.bf16.mxu0 0
        %3081 = vmatpush1.bf16.msra.mxu0 0
        %3082 = vmatprep.subr.bf16.mxu0 0
        %3083 = vmatpush1.bf16.msra.mxu0 0
        %3084 = vmatprep.subr.bf16.mxu0 0
        %3085 = vmatpush1.bf16.msra.mxu0 0
        %3086 = vmatprep.subr.bf16.mxu0 0
        %3087 = vmatpush1.bf16.msra.mxu0 0
        %3088 = vmatprep.subr.bf16.mxu0 0
        %3089 = vmatpush1.bf16.msra.mxu0 0
        %3090 = vmatprep.subr.bf16.mxu0 0
        %3091 = vmatpush1.bf16.msra.mxu0 0
        %3092 = vmatprep.subr.bf16.mxu0 0
        %3093 = vmatpush1.bf16.msra.mxu0 0
        %3094 = vmatprep.mubr.bf16.mxu0 0
        %3095 = vmatmul.mubr.bf16.gmra.mrb[0].mxu0 %v3057
        %v3096 = vpop.f32.mrb[0].mxu0
        %v3097 = vadd.f32 0.0, %v3096
        %v3098 = vpop.f32.mrb[0].mxu0
        %v3099 = vpop.f32.mrb[0].mxu0
        %v3100 = vpop.f32.mrb[0].mxu0
        %3101 = vdwg.mxu0
        %3102 = vrot.lane.b32.xlu0 %v2267, 40
        %v3103 = vpop.permute.xlu0 %3102
        %v3105 = vsel %vm2271, %v3053, 0
        %v3108 = vsel %vm2396, %v3103, 0
        %3110 = vmatprep.subr.bf16.mxu0 0
        %3111 = vmatpush1.bf16.msra.mxu0 %v3108
        %3112 = vmatprep.subr.bf16.mxu0 0
        %3113 = vmatpush1.bf16.msra.mxu0 0
        %3114 = vmatprep.subr.bf16.mxu0 0
        %3115 = vmatpush1.bf16.msra.mxu0 0
        %3116 = vmatprep.subr.bf16.mxu0 0
        %3117 = vmatpush1.bf16.msra.mxu0 0
        %3118 = vmatprep.subr.bf16.mxu0 0
        %3119 = vmatpush1.bf16.msra.mxu0 0
        %3120 = vmatprep.subr.bf16.mxu0 0
        %3121 = vmatpush1.bf16.msra.mxu0 0
        %3122 = vmatprep.subr.bf16.mxu0 0
        %3123 = vmatpush1.bf16.msra.mxu0 0
        %3124 = vmatprep.subr.bf16.mxu0 0
        %3125 = vmatpush1.bf16.msra.mxu0 0
        %3126 = vmatprep.subr.bf16.mxu0 0
        %3127 = vmatpush1.bf16.msra.mxu0 0
        %3128 = vmatprep.subr.bf16.mxu0 0
        %3129 = vmatpush1.bf16.msra.mxu0 0
        %3130 = vmatprep.subr.bf16.mxu0 0
        %3131 = vmatpush1.bf16.msra.mxu0 0
        %3132 = vmatprep.subr.bf16.mxu0 0
        %3133 = vmatpush1.bf16.msra.mxu0 0
        %3134 = vmatprep.subr.bf16.mxu0 0
        %3135 = vmatpush1.bf16.msra.mxu0 0
        %3136 = vmatprep.subr.bf16.mxu0 0
        %3137 = vmatpush1.bf16.msra.mxu0 0
        %3138 = vmatprep.subr.bf16.mxu0 0
        %3139 = vmatpush1.bf16.msra.mxu0 0
        %3140 = vmatprep.subr.bf16.mxu0 0
        %3141 = vmatpush1.bf16.msra.mxu0 0
        %3142 = vmatprep.mubr.bf16.mxu0 0
        %3143 = vmatmul.mubr.bf16.gmra.mrb[0].mxu0 %v3105
        %v3144 = vpop.f32.mrb[0].mxu0
        %v3145 = vadd.f32 0.0, %v3144
        %v3146 = vpop.f32.mrb[0].mxu0
        %v3147 = vpop.f32.mrb[0].mxu0
        %v3148 = vpop.f32.mrb[0].mxu0
        %3149 = vdwg.mxu0
        %3152 = vrot.lane.b32.xlu0 %v2657, 8
        %v3153 = vpop.permute.xlu0 %3152
        %3154 = vrot.lane.b32.xlu0 %v2705, 8
        %v3155 = vpop.permute.xlu0 %3154
        %3160 = vrot.lane.b32.xlu0 %v2877, 16
        %v3161 = vpop.permute.xlu0 %3160
        %3162 = vrot.lane.b32.xlu0 %v2925, 16
        %v3163 = vpop.permute.xlu0 %3162
        %3168 = vrot.lane.b32.xlu0 %v3097, 24
        %v3169 = vpop.permute.xlu0 %3168
        %3170 = vrot.lane.b32.xlu0 %v3145, 24
        %v3171 = vpop.permute.xlu0 %3170
        %v3174 = vsel %vm2271, %v2435, %v3153
        %v3175 = vsel %vm2271, %v2483, %v3155
        %vm3176 = vcmask 130048
        %v3177 = vsel %vm3176, %v3174, %v3161
        %v3178 = vsel %vm3176, %v3175, %v3163
        %vm3179 = vcmask 195584
        %v3180 = vsel %vm3179, %v3177, %v3169
        %v3181 = vsel %vm3179, %v3178, %v3171
        %v3182 = vpack.c.bf16 %v3181, %v3180
        %v3183 = vld [vmem:[%s75] sm:$0xf]
        %v3184 = vld [vmem:[%s75 + $0x4] sm:$0xf]
        %v3185 = vld [vmem:[%s75 + $0x8] sm:$0xf]
        %v3186 = vld [vmem:[%s75 + $0xc] sm:$0xf]
        %v3187 = vld [vmem:[%s71] sm:$0x1]
        %v3189 = vlaneseq
        %v3190 = vshrl.u32 %v3189, 7
        %v3191 = vsub.s32 0, %v3190
        %v3192 = vrot.slane %v3187, %v3191
        %v3198 = vunpack.c.l.b16 %v3183
        %v3199 = vunpack.c.l.b16 %v3184
        %v3200 = vunpack.c.l.b16 %v3185
        %v3201 = vunpack.c.l.b16 %v3186
        %v3202 = vpack.c.b16 %v3199, %v3198
        %v3203 = vpack.c.b16 %v3201, %v3200
        %v3207 = vsel %vm1826, %v3182, 0
        %3209 = vmatprep.subr.bf16.mxu0 0
        %3210 = vmatpush1.bf16.msra.mxu0 %v3202
        %3211 = vmatprep.subr.bf16.mxu0 0
        %3212 = vmatpush1.bf16.msra.mxu0 %v3203
        %3213 = vmatprep.subr.bf16.mxu0 0
        %3214 = vmatpush1.bf16.msra.mxu0 0
        %3215 = vmatprep.subr.bf16.mxu0 0
        %3216 = vmatpush1.bf16.msra.mxu0 0
        %3217 = vmatprep.subr.bf16.mxu0 0
        %3218 = vmatpush1.bf16.msra.mxu0 0
        %3219 = vmatprep.subr.bf16.mxu0 0
        %3220 = vmatpush1.bf16.msra.mxu0 0
        %3221 = vmatprep.subr.bf16.mxu0 0
        %3222 = vmatpush1.bf16.msra.mxu0 0
        %3223 = vmatprep.subr.bf16.mxu0 0
        %3224 = vmatpush1.bf16.msra.mxu0 0
        %3225 = vmatprep.subr.bf16.mxu0 0
        %3226 = vmatpush1.bf16.msra.mxu0 0
        %3227 = vmatprep.subr.bf16.mxu0 0
        %3228 = vmatpush1.bf16.msra.mxu0 0
        %3229 = vmatprep.subr.bf16.mxu0 0
        %3230 = vmatpush1.bf16.msra.mxu0 0
        %3231 = vmatprep.subr.bf16.mxu0 0
        %3232 = vmatpush1.bf16.msra.mxu0 0
        %3233 = vmatprep.subr.bf16.mxu0 0
        %3234 = vmatpush1.bf16.msra.mxu0 0
        %3235 = vmatprep.subr.bf16.mxu0 0
        %3236 = vmatpush1.bf16.msra.mxu0 0
        %3237 = vmatprep.subr.bf16.mxu0 0
        %3238 = vmatpush1.bf16.msra.mxu0 0
        %3239 = vmatprep.subr.bf16.mxu0 0
        %3240 = vmatpush1.bf16.msra.mxu0 0
        %3241 = vmatprep.mubr.bf16.mxu0 0
        %3242 = vmatmul.mubr.bf16.gmra.mrb[0].mxu0 %v3207
        %v3243 = vpop.f32.mrb[0].mxu0
        %v3244 = vadd.f32 %v3192, %v3243
        %v3245 = vpop.f32.mrb[0].mxu0
        %v3246 = vpop.f32.mrb[0].mxu0
        %v3247 = vadd.f32 %v3192, %v3246
        %v3248 = vpop.f32.mrb[0].mxu0
        %3249 = vdwg.mxu0
        %v3250 = vadd.f32 %v2192, %v3244
        %v3251 = vadd.f32 %v2193, %v3247
        %v3252 = vsel %vm1826, %v3250, 0.0
        %3253 = vadd.xlane.f32.xlu0 %v3252
        %v3254 = vpop.xlane.xlu0 %3253
        %v3255 = vsel %vm1826, %v3251, 0.0
        %3256 = vadd.xlane.f32.xlu0 %v3255
        %v3257 = vpop.xlane.xlu0 %3256
        %v3258 = vmul.f32 %v3254, %v1877
        %v3259 = vmul.f32 %v3257, %v1877
        %v3260 = vsub.f32 %v3250, %v3258
        %v3261 = vsub.f32 %v3251, %v3259
        %v3262 = vmul.f32 %v3260, %v3260
        %v3263 = vmul.f32 %v3261, %v3261
        %v3264 = vsel %vm1826, %v3262, 0.0
        %3265 = vadd.xlane.f32.xlu0 %v3264
        %v3266 = vpop.xlane.xlu0 %3265
        %v3267 = vsel %vm1826, %v3263, 0.0
        %3268 = vadd.xlane.f32.xlu0 %v3267
        %v3269 = vpop.xlane.xlu0 %3268
        %v3270 = vmul.f32 %v3266, %v1877
        %v3271 = vmul.f32 %v3269, %v1877
        %v3272 = vadd.f32 %v3270, 1e-05
        %v3273 = vadd.f32 %v3271, 1e-05
        %v3274 = vrsqrt.pop %v3272
        %v3275 = vrsqrt.pop %v3273
        %v3276 = vmul.f32 %v3260, %v3274
        %v3277 = vmul.f32 %v3261, %v3275
        %v3278 = vld [vmem:[#allocation9] sm:$0x1]
        %v3280 = vlaneseq
        %v3281 = vshrl.u32 %v3280, 7
        %v3282 = vsub.s32 0, %v3281
        %v3283 = vrot.slane %v3278, %v3282
        %v3285 = vmul.f32 %v3276, %v3283
        %v3286 = vmul.f32 %v3277, %v3283
        %v3287 = vld [vmem:[#allocation7] sm:$0x1]
        %v3289 = vlaneseq
        %v3290 = vshrl.u32 %v3289, 7
        %v3291 = vsub.s32 0, %v3290
        %v3292 = vrot.slane %v3287, %v3291
        %v3294 = vadd.f32 %v3285, %v3292
        %v3295 = vadd.f32 %v3286, %v3292
        %v3296 = vpack.c.bf16 %v3295, %v3294
        %v3297 = vld [vmem:[%s81] sm:$0xf]
        %v3298 = vld [vmem:[%s81 + $0x4] sm:$0xf]
        %v3299 = vld [vmem:[%s81 + $0x8] sm:$0xf]
        %v3300 = vld [vmem:[%s81 + $0xc] sm:$0xf]
        %v3301 = vld [vmem:[#allocation4] sm:$0x1]
        %v3303 = vlaneseq
        %v3304 = vshrl.u32 %v3303, 7
        %v3305 = vsub.s32 0, %v3304
        %v3306 = vrot.slane %v3301, %v3305
        %v3312 = vunpack.c.l.b16 %v3297
        %v3313 = vunpack.c.l.b16 %v3298
        %v3314 = vunpack.c.l.b16 %v3299
        %v3315 = vunpack.c.l.b16 %v3300
        %v3316 = vpack.c.b16 %v3313, %v3312
        %v3317 = vpack.c.b16 %v3315, %v3314
        %v3321 = vsel %vm1826, %v3296, 0
        %3323 = vmatprep.subr.bf16.mxu0 0
        %3324 = vmatpush1.bf16.msra.mxu0 %v3316
        %3325 = vmatprep.subr.bf16.mxu0 0
        %3326 = vmatpush1.bf16.msra.mxu0 %v3317
        %3327 = vmatprep.subr.bf16.mxu0 0
        %3328 = vmatpush1.bf16.msra.mxu0 0
        %3329 = vmatprep.subr.bf16.mxu0 0
        %3330 = vmatpush1.bf16.msra.mxu0 0
        %3331 = vmatprep.subr.bf16.mxu0 0
        %3332 = vmatpush1.bf16.msra.mxu0 0
        %3333 = vmatprep.subr.bf16.mxu0 0
        %3334 = vmatpush1.bf16.msra.mxu0 0
        %3335 = vmatprep.subr.bf16.mxu0 0
        %3336 = vmatpush1.bf16.msra.mxu0 0
        %3337 = vmatprep.subr.bf16.mxu0 0
        %3338 = vmatpush1.bf16.msra.mxu0 0
        %3339 = vmatprep.subr.bf16.mxu0 0
        %3340 = vmatpush1.bf16.msra.mxu0 0
        %3341 = vmatprep.subr.bf16.mxu0 0
        %3342 = vmatpush1.bf16.msra.mxu0 0
        %3343 = vmatprep.subr.bf16.mxu0 0
        %3344 = vmatpush1.bf16.msra.mxu0 0
        %3345 = vmatprep.subr.bf16.mxu0 0
        %3346 = vmatpush1.bf16.msra.mxu0 0
        %3347 = vmatprep.subr.bf16.mxu0 0
        %3348 = vmatpush1.bf16.msra.mxu0 0
        %3349 = vmatprep.subr.bf16.mxu0 0
        %3350 = vmatpush1.bf16.msra.mxu0 0
        %3351 = vmatprep.subr.bf16.mxu0 0
        %3352 = vmatpush1.bf16.msra.mxu0 0
        %3353 = vmatprep.subr.bf16.mxu0 0
        %3354 = vmatpush1.bf16.msra.mxu0 0
        %3355 = vmatprep.mubr.bf16.mxu0 0
        %3356 = vmatmul.mubr.bf16.gmra.mrb[0].mxu0 %v3321
        %v3357 = vpop.f32.mrb[0].mxu0
        %v3358 = vadd.f32 %v3306, %v3357
        %v3359 = vpop.f32.mrb[0].mxu0
        %v3360 = vpop.f32.mrb[0].mxu0
        %v3361 = vadd.f32 %v3306, %v3360
        %v3362 = vpop.f32.mrb[0].mxu0
        %3363 = vdwg.mxu0
        %v3364 = vmax.f32 %v3358, 0.0
        %v3365 = vmax.f32 %v3361, 0.0
        %v3366 = vpack.c.bf16 %v3365, %v3364
        %v3367 = vld [vmem:[%s85] sm:$0xf]
        %v3368 = vld [vmem:[%s85 + $0x4] sm:$0xf]
        %v3369 = vld [vmem:[%s85 + $0x8] sm:$0xf]
        %v3370 = vld [vmem:[%s85 + $0xc] sm:$0xf]
        %v3371 = vld [vmem:[%s85 + $0x10] sm:$0xf]
        %v3372 = vld [vmem:[%s85 + $0x14] sm:$0xf]
        %v3373 = vld [vmem:[%s85 + $0x18] sm:$0xf]
        %v3374 = vld [vmem:[%s85 + $0x1c] sm:$0xf]
        %v3375 = vld [vmem:[#allocation6] sm:$0x1]
        %v3377 = vlaneseq
        %v3378 = vshrl.u32 %v3377, 7
        %v3379 = vsub.s32 0, %v3378
        %v3380 = vrot.slane %v3375, %v3379
        %v3390 = vunpack.c.l.b16 %v3367
        %v3391 = vunpack.c.l.b16 %v3368
        %v3392 = vunpack.c.l.b16 %v3369
        %v3393 = vunpack.c.l.b16 %v3370
        %v3394 = vunpack.c.l.b16 %v3371
        %v3395 = vunpack.c.l.b16 %v3372
        %v3396 = vunpack.c.l.b16 %v3373
        %v3397 = vunpack.c.l.b16 %v3374
        %v3398 = vpack.c.b16 %v3391, %v3390
        %v3399 = vpack.c.b16 %v3393, %v3392
        %v3400 = vpack.c.b16 %v3395, %v3394
        %v3401 = vpack.c.b16 %v3397, %v3396
        %vm3406 = vcmask 523264
        %v3408 = vsel %vm3406, %v3366, 0
        %3410 = vmatprep.subr.bf16.mxu0 0
        %3411 = vmatpush1.bf16.msra.mxu0 %v3398
        %3412 = vmatprep.subr.bf16.mxu0 0
        %3413 = vmatpush1.bf16.msra.mxu0 %v3399
        %3414 = vmatprep.subr.bf16.mxu0 0
        %3415 = vmatpush1.bf16.msra.mxu0 %v3400
        %3416 = vmatprep.subr.bf16.mxu0 0
        %3417 = vmatpush1.bf16.msra.mxu0 %v3401
        %3418 = vmatprep.subr.bf16.mxu0 0
        %3419 = vmatpush1.bf16.msra.mxu0 0
        %3420 = vmatprep.subr.bf16.mxu0 0
        %3421 = vmatpush1.bf16.msra.mxu0 0
        %3422 = vmatprep.subr.bf16.mxu0 0
        %3423 = vmatpush1.bf16.msra.mxu0 0
        %3424 = vmatprep.subr.bf16.mxu0 0
        %3425 = vmatpush1.bf16.msra.mxu0 0
        %3426 = vmatprep.subr.bf16.mxu0 0
        %3427 = vmatpush1.bf16.msra.mxu0 0
        %3428 = vmatprep.subr.bf16.mxu0 0
        %3429 = vmatpush1.bf16.msra.mxu0 0
        %3430 = vmatprep.subr.bf16.mxu0 0
        %3431 = vmatpush1.bf16.msra.mxu0 0
        %3432 = vmatprep.subr.bf16.mxu0 0
        %3433 = vmatpush1.bf16.msra.mxu0 0
        %3434 = vmatprep.subr.bf16.mxu0 0
        %3435 = vmatpush1.bf16.msra.mxu0 0
        %3436 = vmatprep.subr.bf16.mxu0 0
        %3437 = vmatpush1.bf16.msra.mxu0 0
        %3438 = vmatprep.subr.bf16.mxu0 0
        %3439 = vmatpush1.bf16.msra.mxu0 0
        %3440 = vmatprep.subr.bf16.mxu0 0
        %3441 = vmatpush1.bf16.msra.mxu0 0
        %3442 = vmatprep.mubr.bf16.mxu0 0
        %3443 = vmatmul.mubr.bf16.gmra.mrb[0].mxu0 %v3408
        %v3444 = vpop.f32.mrb[0].mxu0
        %v3445 = vadd.f32 %v3380, %v3444
        %v3446 = vpop.f32.mrb[0].mxu0
        %v3447 = vpop.f32.mrb[0].mxu0
        %v3448 = vadd.f32 %v3380, %v3447
        %v3449 = vpop.f32.mrb[0].mxu0
        %3450 = vdwg.mxu0
        %v3451 = vadd.f32 %v3294, %v3445
        %v3452 = vadd.f32 %v3295, %v3448
        %v3453 = vsel %vm1826, %v3451, 0.0
        %3454 = vadd.xlane.f32.xlu0 %v3453
        %v3455 = vpop.xlane.xlu0 %3454
        %v3456 = vsel %vm1826, %v3452, 0.0
        %3457 = vadd.xlane.f32.xlu0 %v3456
        %v3458 = vpop.xlane.xlu0 %3457
        %v3459 = vmul.f32 %v3455, %v1877
        %v3460 = vmul.f32 %v3458, %v1877
        %v3461 = vsub.f32 %v3451, %v3459
        %v3462 = vsub.f32 %v3452, %v3460
        %v3463 = vmul.f32 %v3461, %v3461
        %v3464 = vmul.f32 %v3462, %v3462
        %v3465 = vsel %vm1826, %v3463, 0.0
        %3466 = vadd.xlane.f32.xlu0 %v3465
        %v3467 = vpop.xlane.xlu0 %3466
        %v3468 = vsel %vm1826, %v3464, 0.0
        %3469 = vadd.xlane.f32.xlu0 %v3468
        %v3470 = vpop.xlane.xlu0 %3469
        %v3471 = vmul.f32 %v3467, %v1877
        %v3472 = vmul.f32 %v3470, %v1877
        %v3473 = vadd.f32 %v3471, 1e-05
        %v3474 = vadd.f32 %v3472, 1e-05
        %v3475 = vrsqrt.pop %v3473
        %v3476 = vrsqrt.pop %v3474
        %v3477 = vmul.f32 %v3461, %v3475
        %v3478 = vmul.f32 %v3462, %v3476
        %v3479 = vld [vmem:[#allocation12] sm:$0x1]
        %v3481 = vlaneseq
        %v3482 = vshrl.u32 %v3481, 7
        %v3483 = vsub.s32 0, %v3482
        %v3484 = vrot.slane %v3479, %v3483
        %v3486 = vmul.f32 %v3477, %v3484
        %v3487 = vmul.f32 %v3478, %v3484
        %v3488 = vld [vmem:[#allocation10] sm:$0x1]
        %v3490 = vlaneseq
        %v3491 = vshrl.u32 %v3490, 7
        %v3492 = vsub.s32 0, %v3491
        %v3493 = vrot.slane %v3488, %v3492
        %v3495 = vadd.f32 %v3486, %v3493
        %v3496 = vadd.f32 %v3487, %v3493
        %v3497 = vsel %vm1826, %v3495, 0.0
        %3498 = vadd.xlane.f32.xlu0 %v3497
        %v3499 = vpop.xlane.xlu0 %3498
        %v3500 = vsel %vm1826, %v3496, 0.0
        %3501 = vadd.xlane.f32.xlu0 %v3500
        %v3502 = vpop.xlane.xlu0 %3501
        %v3503 = vmul.f32 %v3499, %v1877
        %v3504 = vmul.f32 %v3502, %v1877
        %v3505 = vsub.f32 %v3495, %v3503
        %v3506 = vsub.f32 %v3496, %v3504
        %v3507 = vmul.f32 %v3505, %v3505
        %v3508 = vmul.f32 %v3506, %v3506
        %v3509 = vsel %vm1826, %v3507, 0.0
        %3510 = vadd.xlane.f32.xlu0 %v3509
        %v3511 = vpop.xlane.xlu0 %3510
        %v3512 = vsel %vm1826, %v3508, 0.0
        %3513 = vadd.xlane.f32.xlu0 %v3512
        %v3514 = vpop.xlane.xlu0 %3513
        %v3515 = vmul.f32 %v3511, %v1877
        %v3516 = vmul.f32 %v3514, %v1877
        %v3517 = vadd.f32 %v3515, 1e-05
        %v3518 = vadd.f32 %v3516, 1e-05
        %v3519 = vrsqrt.pop %v3517
        %v3520 = vrsqrt.pop %v3518
        %v3521 = vmul.f32 %v3505, %v3519
        %v3522 = vmul.f32 %v3506, %v3520
        %v3523 = vld [vmem:[#allocation15] sm:$0x1]
        %v3525 = vlaneseq
        %v3526 = vshrl.u32 %v3525, 7
        %v3527 = vsub.s32 0, %v3526
        %v3528 = vrot.slane %v3523, %v3527
        %v3530 = vmul.f32 %v3521, %v3528
        %v3531 = vmul.f32 %v3522, %v3528
        %v3532 = vld [vmem:[#allocation13] sm:$0x1]
        %v3534 = vlaneseq
        %v3535 = vshrl.u32 %v3534, 7
        %v3536 = vsub.s32 0, %v3535
        %v3537 = vrot.slane %v3532, %v3536
        %v3539 = vadd.f32 %v3530, %v3537
        %v3540 = vadd.f32 %v3531, %v3537
        %v3541 = vld [vmem:[%s65] sm:$0xf]
        %v3542 = vld [vmem:[%s65 + $0x4] sm:$0xf]
        %v3543 = vld [vmem:[%s65 + $0x8] sm:$0xf]
        %v3544 = vld [vmem:[%s65 + $0xc] sm:$0xf]
        %v3545 = vld [vmem:[%s61] sm:$0x1]
        %v3547 = vlaneseq
        %v3548 = vshrl.u32 %v3547, 7
        %v3549 = vsub.s32 0, %v3548
        %v3550 = vrot.slane %v3545, %v3549
        %v3556 = vunpack.c.l.b16 %v3541
        %v3557 = vunpack.c.l.b16 %v3542
        %v3558 = vunpack.c.l.b16 %v3543
        %v3559 = vunpack.c.l.b16 %v3544
        %v3560 = vpack.c.b16 %v3557, %v3556
        %v3561 = vpack.c.b16 %v3559, %v3558
        %3564 = vmatprep.subr.bf16.mxu0 0
        %3565 = vmatpush1.bf16.msra.mxu0 %v3560
        %3566 = vmatprep.subr.bf16.mxu0 0
        %3567 = vmatpush1.bf16.msra.mxu0 %v3561
        %3568 = vmatprep.subr.bf16.mxu0 0
        %3569 = vmatpush1.bf16.msra.mxu0 0
        %3570 = vmatprep.subr.bf16.mxu0 0
        %3571 = vmatpush1.bf16.msra.mxu0 0
        %3572 = vmatprep.subr.bf16.mxu0 0
        %3573 = vmatpush1.bf16.msra.mxu0 0
        %3574 = vmatprep.subr.bf16.mxu0 0
        %3575 = vmatpush1.bf16.msra.mxu0 0
        %3576 = vmatprep.subr.bf16.mxu0 0
        %3577 = vmatpush1.bf16.msra.mxu0 0
        %3578 = vmatprep.subr.bf16.mxu0 0
        %3579 = vmatpush1.bf16.msra.mxu0 0
        %3580 = vmatprep.subr.bf16.mxu0 0
        %3581 = vmatpush1.bf16.msra.mxu0 0
        %3582 = vmatprep.subr.bf16.mxu0 0
        %3583 = vmatpush1.bf16.msra.mxu0 0
        %3584 = vmatprep.subr.bf16.mxu0 0
        %3585 = vmatpush1.bf16.msra.mxu0 0
        %3586 = vmatprep.subr.bf16.mxu0 0
        %3587 = vmatpush1.bf16.msra.mxu0 0
        %3588 = vmatprep.subr.bf16.mxu0 0
        %3589 = vmatpush1.bf16.msra.mxu0 0
        %3590 = vmatprep.subr.bf16.mxu0 0
        %3591 = vmatpush1.bf16.msra.mxu0 0
        %3592 = vmatprep.subr.bf16.mxu0 0
        %3593 = vmatpush1.bf16.msra.mxu0 0
        %3594 = vmatprep.subr.bf16.mxu0 0
        %3595 = vmatpush1.bf16.msra.mxu0 0
        %3596 = vmatprep.mubr.bf16.mxu0 0
        %3597 = vmatmul.mubr.bf16.gmra.mrb[0].mxu0 %v2219
        %v3598 = vpop.f32.mrb[0].mxu0
        %v3599 = vadd.f32 %v3550, %v3598
        %v3600 = vpop.f32.mrb[0].mxu0
        %v3601 = vpop.f32.mrb[0].mxu0
        %v3602 = vadd.f32 %v3550, %v3601
        %v3603 = vpop.f32.mrb[0].mxu0
        %3604 = vdwg.mxu0
        %v3605 = vmul.f32 %v3599, 0.35355338
        %v3606 = vmul.f32 %v3602, 0.35355338
        %v3607 = vpack.c.bf16 %v3605, %v3605
        %v3608 = vpack.c.bf16 %v3606, %v3606
        %v3609 = vpack.c.bf16 %v3599, %v3599
        %v3610 = vpack.c.bf16 %v3602, %v3602
        %3612 = vrot.lane.b32.xlu0 %v3609, 96
        %v3613 = vpop.permute.xlu0 %3612
        %v3615 = vsel %vm2271, %v3607, 0
        %v3618 = vsel %vm2271, %v3613, 0
        %3620 = vmatprep.subr.bf16.mxu0 0
        %3621 = vmatpush1.bf16.xpose.msra.mxu0 %v3618
        %3622 = vmatprep.subr.bf16.mxu0 0
        %3623 = vmatpush1.bf16.xpose.msra.mxu0 0
        %3624 = vmatprep.subr.bf16.mxu0 0
        %3625 = vmatpush1.bf16.xpose.msra.mxu0 0
        %3626 = vmatprep.subr.bf16.mxu0 0
        %3627 = vmatpush1.bf16.xpose.msra.mxu0 0
        %3628 = vmatprep.subr.bf16.mxu0 0
        %3629 = vmatpush1.bf16.xpose.msra.mxu0 0
        %3630 = vmatprep.subr.bf16.mxu0 0
        %3631 = vmatpush1.bf16.xpose.msra.mxu0 0
        %3632 = vmatprep.subr.bf16.mxu0 0
        %3633 = vmatpush1.bf16.xpose.msra.mxu0 0
        %3634 = vmatprep.subr.bf16.mxu0 0
        %3635 = vmatpush1.bf16.xpose.msra.mxu0 0
        %3636 = vmatprep.subr.bf16.mxu0 0
        %3637 = vmatpush1.bf16.xpose.msra.mxu0 0
        %3638 = vmatprep.subr.bf16.mxu0 0
        %3639 = vmatpush1.bf16.xpose.msra.mxu0 0
        %3640 = vmatprep.subr.bf16.mxu0 0
        %3641 = vmatpush1.bf16.xpose.msra.mxu0 0
        %3642 = vmatprep.subr.bf16.mxu0 0
        %3643 = vmatpush1.bf16.xpose.msra.mxu0 0
        %3644 = vmatprep.subr.bf16.mxu0 0
        %3645 = vmatpush1.bf16.xpose.msra.mxu0 0
        %3646 = vmatprep.subr.bf16.mxu0 0
        %3647 = vmatpush1.bf16.xpose.msra.mxu0 0
        %3648 = vmatprep.subr.bf16.mxu0 0
        %3649 = vmatpush1.bf16.xpose.msra.mxu0 0
        %3650 = vmatprep.subr.bf16.mxu0 0
        %3651 = vmatpush1.bf16.xpose.msra.mxu0 0
        %3652 = vmatprep.mubr.bf16.mxu0 0
        %3653 = vmatmul.mubr.bf16.gmra.mrb[0].mxu0 %v3615
        %v3654 = vpop.f32.mrb[0].mxu0
        %v3655 = vadd.f32 0.0, %v3654
        %v3656 = vpop.f32.mrb[0].mxu0
        %v3657 = vpop.f32.mrb[0].mxu0
        %v3658 = vpop.f32.mrb[0].mxu0
        %3659 = vdwg.mxu0
        %3661 = vrot.lane.b32.xlu0 %v3610, 96
        %v3662 = vpop.permute.xlu0 %3661
        %v3664 = vsel %vm2271, %v3608, 0
        %v3667 = vsel %vm2271, %v3662, 0
        %3669 = vmatprep.subr.bf16.mxu0 0
        %3670 = vmatpush1.bf16.xpose.msra.mxu0 %v3667
        %3671 = vmatprep.subr.bf16.mxu0 0
        %3672 = vmatpush1.bf16.xpose.msra.mxu0 0
        %3673 = vmatprep.subr.bf16.mxu0 0
        %3674 = vmatpush1.bf16.xpose.msra.mxu0 0
        %3675 = vmatprep.subr.bf16.mxu0 0
        %3676 = vmatpush1.bf16.xpose.msra.mxu0 0
        %3677 = vmatprep.subr.bf16.mxu0 0
        %3678 = vmatpush1.bf16.xpose.msra.mxu0 0
        %3679 = vmatprep.subr.bf16.mxu0 0
        %3680 = vmatpush1.bf16.xpose.msra.mxu0 0
        %3681 = vmatprep.subr.bf16.mxu0 0
        %3682 = vmatpush1.bf16.xpose.msra.mxu0 0
        %3683 = vmatprep.subr.bf16.mxu0 0
        %3684 = vmatpush1.bf16.xpose.msra.mxu0 0
        %3685 = vmatprep.subr.bf16.mxu0 0
        %3686 = vmatpush1.bf16.xpose.msra.mxu0 0
        %3687 = vmatprep.subr.bf16.mxu0 0
        %3688 = vmatpush1.bf16.xpose.msra.mxu0 0
        %3689 = vmatprep.subr.bf16.mxu0 0
        %3690 = vmatpush1.bf16.xpose.msra.mxu0 0
        %3691 = vmatprep.subr.bf16.mxu0 0
        %3692 = vmatpush1.bf16.xpose.msra.mxu0 0
        %3693 = vmatprep.subr.bf16.mxu0 0
        %3694 = vmatpush1.bf16.xpose.msra.mxu0 0
        %3695 = vmatprep.subr.bf16.mxu0 0
        %3696 = vmatpush1.bf16.xpose.msra.mxu0 0
        %3697 = vmatprep.subr.bf16.mxu0 0
        %3698 = vmatpush1.bf16.xpose.msra.mxu0 0
        %3699 = vmatprep.subr.bf16.mxu0 0
        %3700 = vmatpush1.bf16.xpose.msra.mxu0 0
        %3701 = vmatprep.mubr.bf16.mxu0 0
        %3702 = vmatmul.mubr.bf16.gmra.mrb[0].mxu0 %v3664
        %v3703 = vpop.f32.mrb[0].mxu0
        %v3704 = vadd.f32 0.0, %v3703
        %v3705 = vpop.f32.mrb[0].mxu0
        %v3706 = vpop.f32.mrb[0].mxu0
        %v3707 = vpop.f32.mrb[0].mxu0
        %3708 = vdwg.mxu0
        %v3709 = vsel %vm2271, %v3655, -inf
        %3710 = vmax.xlane.f32.xlu0 %v3709
        %v3711 = vpop.xlane.xlu0 %3710
        %v3712 = vsel %vm2271, %v3704, -inf
        %3713 = vmax.xlane.f32.xlu0 %v3712
        %v3714 = vpop.xlane.xlu0 %3713
        %v3715 = vsub.f32 %v3655, %v3711
        %v3716 = vsub.f32 %v3704, %v3714
        %v3717 = vmul.f32 %v3715, 1.442695
        %v3718 = vpow.pop %v3717
        %v3719 = vmul.f32 %v3716, 1.442695
        %v3720 = vpow.pop %v3719
        %v3721 = vsel %vm2271, %v3718, 0.0
        %3722 = vadd.xlane.f32.xlu0 %v3721
        %v3723 = vpop.xlane.xlu0 %3722
        %v3724 = vsel %vm2271, %v3720, 0.0
        %3725 = vadd.xlane.f32.xlu0 %v3724
        %v3726 = vpop.xlane.xlu0 %3725
        %v3727 = vrcp.pop %v3723
        %v3728 = vrcp.pop %v3726
        %v3729 = vmul.f32 %v3718, %v3727
        %v3730 = vmul.f32 %v3720, %v3728
        %v3731 = vpack.c.bf16 %v3729, %v3729
        %v3732 = vpack.c.bf16 %v3730, %v3730
        %3733 = vrot.lane.b32.xlu0 %v3609, 64
        %v3734 = vpop.permute.xlu0 %3733
        %v3736 = vsel %vm2271, %v3731, 0
        %v3739 = vsel %vm2396, %v3734, 0
        %3741 = vmatprep.subr.bf16.mxu0 0
        %3742 = vmatpush1.bf16.msra.mxu0 %v3739
        %3743 = vmatprep.subr.bf16.mxu0 0
        %3744 = vmatpush1.bf16.msra.mxu0 0
        %3745 = vmatprep.subr.bf16.mxu0 0
        %3746 = vmatpush1.bf16.msra.mxu0 0
        %3747 = vmatprep.subr.bf16.mxu0 0
        %3748 = vmatpush1.bf16.msra.mxu0 0
        %3749 = vmatprep.subr.bf16.mxu0 0
        %3750 = vmatpush1.bf16.msra.mxu0 0
        %3751 = vmatprep.subr.bf16.mxu0 0
        %3752 = vmatpush1.bf16.msra.mxu0 0
        %3753 = vmatprep.subr.bf16.mxu0 0
        %3754 = vmatpush1.bf16.msra.mxu0 0
        %3755 = vmatprep.subr.bf16.mxu0 0
        %3756 = vmatpush1.bf16.msra.mxu0 0
        %3757 = vmatprep.subr.bf16.mxu0 0
        %3758 = vmatpush1.bf16.msra.mxu0 0
        %3759 = vmatprep.subr.bf16.mxu0 0
        %3760 = vmatpush1.bf16.msra.mxu0 0
        %3761 = vmatprep.subr.bf16.mxu0 0
        %3762 = vmatpush1.bf16.msra.mxu0 0
        %3763 = vmatprep.subr.bf16.mxu0 0
        %3764 = vmatpush1.bf16.msra.mxu0 0
        %3765 = vmatprep.subr.bf16.mxu0 0
        %3766 = vmatpush1.bf16.msra.mxu0 0
        %3767 = vmatprep.subr.bf16.mxu0 0
        %3768 = vmatpush1.bf16.msra.mxu0 0
        %3769 = vmatprep.subr.bf16.mxu0 0
        %3770 = vmatpush1.bf16.msra.mxu0 0
        %3771 = vmatprep.subr.bf16.mxu0 0
        %3772 = vmatpush1.bf16.msra.mxu0 0
        %3773 = vmatprep.mubr.bf16.mxu0 0
        %3774 = vmatmul.mubr.bf16.gmra.mrb[0].mxu0 %v3736
        %v3775 = vpop.f32.mrb[0].mxu0
        %v3776 = vadd.f32 0.0, %v3775
        %v3777 = vpop.f32.mrb[0].mxu0
        %v3778 = vpop.f32.mrb[0].mxu0
        %v3779 = vpop.f32.mrb[0].mxu0
        %3780 = vdwg.mxu0
        %3781 = vrot.lane.b32.xlu0 %v3610, 64
        %v3782 = vpop.permute.xlu0 %3781
        %v3784 = vsel %vm2271, %v3732, 0
        %v3787 = vsel %vm2396, %v3782, 0
        %3789 = vmatprep.subr.bf16.mxu0 0
        %3790 = vmatpush1.bf16.msra.mxu0 %v3787
        %3791 = vmatprep.subr.bf16.mxu0 0
        %3792 = vmatpush1.bf16.msra.mxu0 0
        %3793 = vmatprep.subr.bf16.mxu0 0
        %3794 = vmatpush1.bf16.msra.mxu0 0
        %3795 = vmatprep.subr.bf16.mxu0 0
        %3796 = vmatpush1.bf16.msra.mxu0 0
        %3797 = vmatprep.subr.bf16.mxu0 0
        %3798 = vmatpush1.bf16.msra.mxu0 0
        %3799 = vmatprep.subr.bf16.mxu0 0
        %3800 = vmatpush1.bf16.msra.mxu0 0
        %3801 = vmatprep.subr.bf16.mxu0 0
        %3802 = vmatpush1.bf16.msra.mxu0 0
        %3803 = vmatprep.subr.bf16.mxu0 0
        %3804 = vmatpush1.bf16.msra.mxu0 0
        %3805 = vmatprep.subr.bf16.mxu0 0
        %3806 = vmatpush1.bf16.msra.mxu0 0
        %3807 = vmatprep.subr.bf16.mxu0 0
        %3808 = vmatpush1.bf16.msra.mxu0 0
        %3809 = vmatprep.subr.bf16.mxu0 0
        %3810 = vmatpush1.bf16.msra.mxu0 0
        %3811 = vmatprep.subr.bf16.mxu0 0
        %3812 = vmatpush1.bf16.msra.mxu0 0
        %3813 = vmatprep.subr.bf16.mxu0 0
        %3814 = vmatpush1.bf16.msra.mxu0 0
        %3815 = vmatprep.subr.bf16.mxu0 0
        %3816 = vmatpush1.bf16.msra.mxu0 0
        %3817 = vmatprep.subr.bf16.mxu0 0
        %3818 = vmatpush1.bf16.msra.mxu0 0
        %3819 = vmatprep.subr.bf16.mxu0 0
        %3820 = vmatpush1.bf16.msra.mxu0 0
        %3821 = vmatprep.mubr.bf16.mxu0 0
        %3822 = vmatmul.mubr.bf16.gmra.mrb[0].mxu0 %v3784
        %v3823 = vpop.f32.mrb[0].mxu0
        %v3824 = vadd.f32 0.0, %v3823
        %v3825 = vpop.f32.mrb[0].mxu0
        %v3826 = vpop.f32.mrb[0].mxu0
        %v3827 = vpop.f32.mrb[0].mxu0
        %3828 = vdwg.mxu0
        %3830 = vrot.lane.b32.xlu0 %v3607, 120
        %v3831 = vpop.permute.xlu0 %3830
        %3832 = vrot.lane.b32.xlu0 %v3609, 88
        %v3833 = vpop.permute.xlu0 %3832
        %v3835 = vsel %vm2271, %v3831, 0
        %v3838 = vsel %vm2271, %v3833, 0
        %3840 = vmatprep.subr.bf16.mxu0 0
        %3841 = vmatpush1.bf16.xpose.msra.mxu0 %v3838
        %3842 = vmatprep.subr.bf16.mxu0 0
        %3843 = vmatpush1.bf16.xpose.msra.mxu0 0
        %3844 = vmatprep.subr.bf16.mxu0 0
        %3845 = vmatpush1.bf16.xpose.msra.mxu0 0
        %3846 = vmatprep.subr.bf16.mxu0 0
        %3847 = vmatpush1.bf16.xpose.msra.mxu0 0
        %3848 = vmatprep.subr.bf16.mxu0 0
        %3849 = vmatpush1.bf16.xpose.msra.mxu0 0
        %3850 = vmatprep.subr.bf16.mxu0 0
        %3851 = vmatpush1.bf16.xpose.msra.mxu0 0
        %3852 = vmatprep.subr.bf16.mxu0 0
        %3853 = vmatpush1.bf16.xpose.msra.mxu0 0
        %3854 = vmatprep.subr.bf16.mxu0 0
        %3855 = vmatpush1.bf16.xpose.msra.mxu0 0
        %3856 = vmatprep.subr.bf16.mxu0 0
        %3857 = vmatpush1.bf16.xpose.msra.mxu0 0
        %3858 = vmatprep.subr.bf16.mxu0 0
        %3859 = vmatpush1.bf16.xpose.msra.mxu0 0
        %3860 = vmatprep.subr.bf16.mxu0 0
        %3861 = vmatpush1.bf16.xpose.msra.mxu0 0
        %3862 = vmatprep.subr.bf16.mxu0 0
        %3863 = vmatpush1.bf16.xpose.msra.mxu0 0
        %3864 = vmatprep.subr.bf16.mxu0 0
        %3865 = vmatpush1.bf16.xpose.msra.mxu0 0
        %3866 = vmatprep.subr.bf16.mxu0 0
        %3867 = vmatpush1.bf16.xpose.msra.mxu0 0
        %3868 = vmatprep.subr.bf16.mxu0 0
        %3869 = vmatpush1.bf16.xpose.msra.mxu0 0
        %3870 = vmatprep.subr.bf16.mxu0 0
        %3871 = vmatpush1.bf16.xpose.msra.mxu0 0
        %3872 = vmatprep.mubr.bf16.mxu0 0
        %3873 = vmatmul.mubr.bf16.gmra.mrb[0].mxu0 %v3835
        %v3874 = vpop.f32.mrb[0].mxu0
        %v3875 = vadd.f32 0.0, %v3874
        %v3876 = vpop.f32.mrb[0].mxu0
        %v3877 = vpop.f32.mrb[0].mxu0
        %v3878 = vpop.f32.mrb[0].mxu0
        %3879 = vdwg.mxu0
        %3881 = vrot.lane.b32.xlu0 %v3608, 120
        %v3882 = vpop.permute.xlu0 %3881
        %3883 = vrot.lane.b32.xlu0 %v3610, 88
        %v3884 = vpop.permute.xlu0 %3883
        %v3886 = vsel %vm2271, %v3882, 0
        %v3889 = vsel %vm2271, %v3884, 0
        %3891 = vmatprep.subr.bf16.mxu0 0
        %3892 = vmatpush1.bf16.xpose.msra.mxu0 %v3889
        %3893 = vmatprep.subr.bf16.mxu0 0
        %3894 = vmatpush1.bf16.xpose.msra.mxu0 0
        %3895 = vmatprep.subr.bf16.mxu0 0
        %3896 = vmatpush1.bf16.xpose.msra.mxu0 0
        %3897 = vmatprep.subr.bf16.mxu0 0
        %3898 = vmatpush1.bf16.xpose.msra.mxu0 0
        %3899 = vmatprep.subr.bf16.mxu0 0
        %3900 = vmatpush1.bf16.xpose.msra.mxu0 0
        %3901 = vmatprep.subr.bf16.mxu0 0
        %3902 = vmatpush1.bf16.xpose.msra.mxu0 0
        %3903 = vmatprep.subr.bf16.mxu0 0
        %3904 = vmatpush1.bf16.xpose.msra.mxu0 0
        %3905 = vmatprep.subr.bf16.mxu0 0
        %3906 = vmatpush1.bf16.xpose.msra.mxu0 0
        %3907 = vmatprep.subr.bf16.mxu0 0
        %3908 = vmatpush1.bf16.xpose.msra.mxu0 0
        %3909 = vmatprep.subr.bf16.mxu0 0
        %3910 = vmatpush1.bf16.xpose.msra.mxu0 0
        %3911 = vmatprep.subr.bf16.mxu0 0
        %3912 = vmatpush1.bf16.xpose.msra.mxu0 0
        %3913 = vmatprep.subr.bf16.mxu0 0
        %3914 = vmatpush1.bf16.xpose.msra.mxu0 0
        %3915 = vmatprep.subr.bf16.mxu0 0
        %3916 = vmatpush1.bf16.xpose.msra.mxu0 0
        %3917 = vmatprep.subr.bf16.mxu0 0
        %3918 = vmatpush1.bf16.xpose.msra.mxu0 0
        %3919 = vmatprep.subr.bf16.mxu0 0
        %3920 = vmatpush1.bf16.xpose.msra.mxu0 0
        %3921 = vmatprep.subr.bf16.mxu0 0
        %3922 = vmatpush1.bf16.xpose.msra.mxu0 0
        %3923 = vmatprep.mubr.bf16.mxu0 0
        %3924 = vmatmul.mubr.bf16.gmra.mrb[0].mxu0 %v3886
        %v3925 = vpop.f32.mrb[0].mxu0
        %v3926 = vadd.f32 0.0, %v3925
        %v3927 = vpop.f32.mrb[0].mxu0
        %v3928 = vpop.f32.mrb[0].mxu0
        %v3929 = vpop.f32.mrb[0].mxu0
        %3930 = vdwg.mxu0
        %v3931 = vsel %vm2271, %v3875, -inf
        %3932 = vmax.xlane.f32.xlu0 %v3931
        %v3933 = vpop.xlane.xlu0 %3932
        %v3934 = vsel %vm2271, %v3926, -inf
        %3935 = vmax.xlane.f32.xlu0 %v3934
        %v3936 = vpop.xlane.xlu0 %3935
        %v3937 = vsub.f32 %v3875, %v3933
        %v3938 = vsub.f32 %v3926, %v3936
        %v3939 = vmul.f32 %v3937, 1.442695
        %v3940 = vpow.pop %v3939
        %v3941 = vmul.f32 %v3938, 1.442695
        %v3942 = vpow.pop %v3941
        %v3943 = vsel %vm2271, %v3940, 0.0
        %3944 = vadd.xlane.f32.xlu0 %v3943
        %v3945 = vpop.xlane.xlu0 %3944
        %v3946 = vsel %vm2271, %v3942, 0.0
        %3947 = vadd.xlane.f32.xlu0 %v3946
        %v3948 = vpop.xlane.xlu0 %3947
        %v3949 = vrcp.pop %v3945
        %v3950 = vrcp.pop %v3948
        %v3951 = vmul.f32 %v3940, %v3949
        %v3952 = vmul.f32 %v3942, %v3950
        %v3953 = vpack.c.bf16 %v3951, %v3951
        %v3954 = vpack.c.bf16 %v3952, %v3952
        %3955 = vrot.lane.b32.xlu0 %v3609, 56
        %v3956 = vpop.permute.xlu0 %3955
        %v3958 = vsel %vm2271, %v3953, 0
        %v3961 = vsel %vm2396, %v3956, 0
        %3963 = vmatprep.subr.bf16.mxu0 0
        %3964 = vmatpush1.bf16.msra.mxu0 %v3961
        %3965 = vmatprep.subr.bf16.mxu0 0
        %3966 = vmatpush1.bf16.msra.mxu0 0
        %3967 = vmatprep.subr.bf16.mxu0 0
        %3968 = vmatpush1.bf16.msra.mxu0 0
        %3969 = vmatprep.subr.bf16.mxu0 0
        %3970 = vmatpush1.bf16.msra.mxu0 0
        %3971 = vmatprep.subr.bf16.mxu0 0
        %3972 = vmatpush1.bf16.msra.mxu0 0
        %3973 = vmatprep.subr.bf16.mxu0 0
        %3974 = vmatpush1.bf16.msra.mxu0 0
        %3975 = vmatprep.subr.bf16.mxu0 0
        %3976 = vmatpush1.bf16.msra.mxu0 0
        %3977 = vmatprep.subr.bf16.mxu0 0
        %3978 = vmatpush1.bf16.msra.mxu0 0
        %3979 = vmatprep.subr.bf16.mxu0 0
        %3980 = vmatpush1.bf16.msra.mxu0 0
        %3981 = vmatprep.subr.bf16.mxu0 0
        %3982 = vmatpush1.bf16.msra.mxu0 0
        %3983 = vmatprep.subr.bf16.mxu0 0
        %3984 = vmatpush1.bf16.msra.mxu0 0
        %3985 = vmatprep.subr.bf16.mxu0 0
        %3986 = vmatpush1.bf16.msra.mxu0 0
        %3987 = vmatprep.subr.bf16.mxu0 0
        %3988 = vmatpush1.bf16.msra.mxu0 0
        %3989 = vmatprep.subr.bf16.mxu0 0
        %3990 = vmatpush1.bf16.msra.mxu0 0
        %3991 = vmatprep.subr.bf16.mxu0 0
        %3992 = vmatpush1.bf16.msra.mxu0 0
        %3993 = vmatprep.subr.bf16.mxu0 0
        %3994 = vmatpush1.bf16.msra.mxu0 0
        %3995 = vmatprep.mubr.bf16.mxu0 0
        %3996 = vmatmul.mubr.bf16.gmra.mrb[0].mxu0 %v3958
        %v3997 = vpop.f32.mrb[0].mxu0
        %v3998 = vadd.f32 0.0, %v3997
        %v3999 = vpop.f32.mrb[0].mxu0
        %v4000 = vpop.f32.mrb[0].mxu0
        %v4001 = vpop.f32.mrb[0].mxu0
        %4002 = vdwg.mxu0
        %4003 = vrot.lane.b32.xlu0 %v3610, 56
        %v4004 = vpop.permute.xlu0 %4003
        %v4006 = vsel %vm2271, %v3954, 0
        %v4009 = vsel %vm2396, %v4004, 0
        %4011 = vmatprep.subr.bf16.mxu0 0
        %4012 = vmatpush1.bf16.msra.mxu0 %v4009
        %4013 = vmatprep.subr.bf16.mxu0 0
        %4014 = vmatpush1.bf16.msra.mxu0 0
        %4015 = vmatprep.subr.bf16.mxu0 0
        %4016 = vmatpush1.bf16.msra.mxu0 0
        %4017 = vmatprep.subr.bf16.mxu0 0
        %4018 = vmatpush1.bf16.msra.mxu0 0
        %4019 = vmatprep.subr.bf16.mxu0 0
        %4020 = vmatpush1.bf16.msra.mxu0 0
        %4021 = vmatprep.subr.bf16.mxu0 0
        %4022 = vmatpush1.bf16.msra.mxu0 0
        %4023 = vmatprep.subr.bf16.mxu0 0
        %4024 = vmatpush1.bf16.msra.mxu0 0
        %4025 = vmatprep.subr.bf16.mxu0 0
        %4026 = vmatpush1.bf16.msra.mxu0 0
        %4027 = vmatprep.subr.bf16.mxu0 0
        %4028 = vmatpush1.bf16.msra.mxu0 0
        %4029 = vmatprep.subr.bf16.mxu0 0
        %4030 = vmatpush1.bf16.msra.mxu0 0
        %4031 = vmatprep.subr.bf16.mxu0 0
        %4032 = vmatpush1.bf16.msra.mxu0 0
        %4033 = vmatprep.subr.bf16.mxu0 0
        %4034 = vmatpush1.bf16.msra.mxu0 0
        %4035 = vmatprep.subr.bf16.mxu0 0
        %4036 = vmatpush1.bf16.msra.mxu0 0
        %4037 = vmatprep.subr.bf16.mxu0 0
        %4038 = vmatpush1.bf16.msra.mxu0 0
        %4039 = vmatprep.subr.bf16.mxu0 0
        %4040 = vmatpush1.bf16.msra.mxu0 0
        %4041 = vmatprep.subr.bf16.mxu0 0
        %4042 = vmatpush1.bf16.msra.mxu0 0
        %4043 = vmatprep.mubr.bf16.mxu0 0
        %4044 = vmatmul.mubr.bf16.gmra.mrb[0].mxu0 %v4006
        %v4045 = vpop.f32.mrb[0].mxu0
        %v4046 = vadd.f32 0.0, %v4045
        %v4047 = vpop.f32.mrb[0].mxu0
        %v4048 = vpop.f32.mrb[0].mxu0
        %v4049 = vpop.f32.mrb[0].mxu0
        %4050 = vdwg.mxu0
        %4051 = vrot.lane.b32.xlu0 %v3607, 112
        %v4052 = vpop.permute.xlu0 %4051
        %4053 = vrot.lane.b32.xlu0 %v3609, 80
        %v4054 = vpop.permute.xlu0 %4053
        %v4056 = vsel %vm2271, %v4052, 0
        %v4059 = vsel %vm2271, %v4054, 0
        %4061 = vmatprep.subr.bf16.mxu0 0
        %4062 = vmatpush1.bf16.xpose.msra.mxu0 %v4059
        %4063 = vmatprep.subr.bf16.mxu0 0
        %4064 = vmatpush1.bf16.xpose.msra.mxu0 0
        %4065 = vmatprep.subr.bf16.mxu0 0
        %4066 = vmatpush1.bf16.xpose.msra.mxu0 0
        %4067 = vmatprep.subr.bf16.mxu0 0
        %4068 = vmatpush1.bf16.xpose.msra.mxu0 0
        %4069 = vmatprep.subr.bf16.mxu0 0
        %4070 = vmatpush1.bf16.xpose.msra.mxu0 0
        %4071 = vmatprep.subr.bf16.mxu0 0
        %4072 = vmatpush1.bf16.xpose.msra.mxu0 0
        %4073 = vmatprep.subr.bf16.mxu0 0
        %4074 = vmatpush1.bf16.xpose.msra.mxu0 0
        %4075 = vmatprep.subr.bf16.mxu0 0
        %4076 = vmatpush1.bf16.xpose.msra.mxu0 0
        %4077 = vmatprep.subr.bf16.mxu0 0
        %4078 = vmatpush1.bf16.xpose.msra.mxu0 0
        %4079 = vmatprep.subr.bf16.mxu0 0
        %4080 = vmatpush1.bf16.xpose.msra.mxu0 0
        %4081 = vmatprep.subr.bf16.mxu0 0
        %4082 = vmatpush1.bf16.xpose.msra.mxu0 0
        %4083 = vmatprep.subr.bf16.mxu0 0
        %4084 = vmatpush1.bf16.xpose.msra.mxu0 0
        %4085 = vmatprep.subr.bf16.mxu0 0
        %4086 = vmatpush1.bf16.xpose.msra.mxu0 0
        %4087 = vmatprep.subr.bf16.mxu0 0
        %4088 = vmatpush1.bf16.xpose.msra.mxu0 0
        %4089 = vmatprep.subr.bf16.mxu0 0
        %4090 = vmatpush1.bf16.xpose.msra.mxu0 0
        %4091 = vmatprep.subr.bf16.mxu0 0
        %4092 = vmatpush1.bf16.xpose.msra.mxu0 0
        %4093 = vmatprep.mubr.bf16.mxu0 0
        %4094 = vmatmul.mubr.bf16.gmra.mrb[0].mxu0 %v4056
        %v4095 = vpop.f32.mrb[0].mxu0
        %v4096 = vadd.f32 0.0, %v4095
        %v4097 = vpop.f32.mrb[0].mxu0
        %v4098 = vpop.f32.mrb[0].mxu0
        %v4099 = vpop.f32.mrb[0].mxu0
        %4100 = vdwg.mxu0
        %4101 = vrot.lane.b32.xlu0 %v3608, 112
        %v4102 = vpop.permute.xlu0 %4101
        %4103 = vrot.lane.b32.xlu0 %v3610, 80
        %v4104 = vpop.permute.xlu0 %4103
        %v4106 = vsel %vm2271, %v4102, 0
        %v4109 = vsel %vm2271, %v4104, 0
        %4111 = vmatprep.subr.bf16.mxu0 0
        %4112 = vmatpush1.bf16.xpose.msra.mxu0 %v4109
        %4113 = vmatprep.subr.bf16.mxu0 0
        %4114 = vmatpush1.bf16.xpose.msra.mxu0 0
        %4115 = vmatprep.subr.bf16.mxu0 0
        %4116 = vmatpush1.bf16.xpose.msra.mxu0 0
        %4117 = vmatprep.subr.bf16.mxu0 0
        %4118 = vmatpush1.bf16.xpose.msra.mxu0 0
        %4119 = vmatprep.subr.bf16.mxu0 0
        %4120 = vmatpush1.bf16.xpose.msra.mxu0 0
        %4121 = vmatprep.subr.bf16.mxu0 0
        %4122 = vmatpush1.bf16.xpose.msra.mxu0 0
        %4123 = vmatprep.subr.bf16.mxu0 0
        %4124 = vmatpush1.bf16.xpose.msra.mxu0 0
        %4125 = vmatprep.subr.bf16.mxu0 0
        %4126 = vmatpush1.bf16.xpose.msra.mxu0 0
        %4127 = vmatprep.subr.bf16.mxu0 0
        %4128 = vmatpush1.bf16.xpose.msra.mxu0 0
        %4129 = vmatprep.subr.bf16.mxu0 0
        %4130 = vmatpush1.bf16.xpose.msra.mxu0 0
        %4131 = vmatprep.subr.bf16.mxu0 0
        %4132 = vmatpush1.bf16.xpose.msra.mxu0 0
        %4133 = vmatprep.subr.bf16.mxu0 0
        %4134 = vmatpush1.bf16.xpose.msra.mxu0 0
        %4135 = vmatprep.subr.bf16.mxu0 0
        %4136 = vmatpush1.bf16.xpose.msra.mxu0 0
        %4137 = vmatprep.subr.bf16.mxu0 0
        %4138 = vmatpush1.bf16.xpose.msra.mxu0 0
        %4139 = vmatprep.subr.bf16.mxu0 0
        %4140 = vmatpush1.bf16.xpose.msra.mxu0 0
        %4141 = vmatprep.subr.bf16.mxu0 0
        %4142 = vmatpush1.bf16.xpose.msra.mxu0 0
        %4143 = vmatprep.mubr.bf16.mxu0 0
        %4144 = vmatmul.mubr.bf16.gmra.mrb[0].mxu0 %v4106
        %v4145 = vpop.f32.mrb[0].mxu0
        %v4146 = vadd.f32 0.0, %v4145
        %v4147 = vpop.f32.mrb[0].mxu0
        %v4148 = vpop.f32.mrb[0].mxu0
        %v4149 = vpop.f32.mrb[0].mxu0
        %4150 = vdwg.mxu0
        %v4151 = vsel %vm2271, %v4096, -inf
        %4152 = vmax.xlane.f32.xlu0 %v4151
        %v4153 = vpop.xlane.xlu0 %4152
        %v4154 = vsel %vm2271, %v4146, -inf
        %4155 = vmax.xlane.f32.xlu0 %v4154
        %v4156 = vpop.xlane.xlu0 %4155
        %v4157 = vsub.f32 %v4096, %v4153
        %v4158 = vsub.f32 %v4146, %v4156
        %v4159 = vmul.f32 %v4157, 1.442695
        %v4160 = vpow.pop %v4159
        %v4161 = vmul.f32 %v4158, 1.442695
        %v4162 = vpow.pop %v4161
        %v4163 = vsel %vm2271, %v4160, 0.0
        %4164 = vadd.xlane.f32.xlu0 %v4163
        %v4165 = vpop.xlane.xlu0 %4164
        %v4166 = vsel %vm2271, %v4162, 0.0
        %4167 = vadd.xlane.f32.xlu0 %v4166
        %v4168 = vpop.xlane.xlu0 %4167
        %v4169 = vrcp.pop %v4165
        %v4170 = vrcp.pop %v4168
        %v4171 = vmul.f32 %v4160, %v4169
        %v4172 = vmul.f32 %v4162, %v4170
        %v4173 = vpack.c.bf16 %v4171, %v4171
        %v4174 = vpack.c.bf16 %v4172, %v4172
        %4175 = vrot.lane.b32.xlu0 %v3609, 48
        %v4176 = vpop.permute.xlu0 %4175
        %v4178 = vsel %vm2271, %v4173, 0
        %v4181 = vsel %vm2396, %v4176, 0
        %4183 = vmatprep.subr.bf16.mxu0 0
        %4184 = vmatpush1.bf16.msra.mxu0 %v4181
        %4185 = vmatprep.subr.bf16.mxu0 0
        %4186 = vmatpush1.bf16.msra.mxu0 0
        %4187 = vmatprep.subr.bf16.mxu0 0
        %4188 = vmatpush1.bf16.msra.mxu0 0
        %4189 = vmatprep.subr.bf16.mxu0 0
        %4190 = vmatpush1.bf16.msra.mxu0 0
        %4191 = vmatprep.subr.bf16.mxu0 0
        %4192 = vmatpush1.bf16.msra.mxu0 0
        %4193 = vmatprep.subr.bf16.mxu0 0
        %4194 = vmatpush1.bf16.msra.mxu0 0
        %4195 = vmatprep.subr.bf16.mxu0 0
        %4196 = vmatpush1.bf16.msra.mxu0 0
        %4197 = vmatprep.subr.bf16.mxu0 0
        %4198 = vmatpush1.bf16.msra.mxu0 0
        %4199 = vmatprep.subr.bf16.mxu0 0
        %4200 = vmatpush1.bf16.msra.mxu0 0
        %4201 = vmatprep.subr.bf16.mxu0 0
        %4202 = vmatpush1.bf16.msra.mxu0 0
        %4203 = vmatprep.subr.bf16.mxu0 0
        %4204 = vmatpush1.bf16.msra.mxu0 0
        %4205 = vmatprep.subr.bf16.mxu0 0
        %4206 = vmatpush1.bf16.msra.mxu0 0
        %4207 = vmatprep.subr.bf16.mxu0 0
        %4208 = vmatpush1.bf16.msra.mxu0 0
        %4209 = vmatprep.subr.bf16.mxu0 0
        %4210 = vmatpush1.bf16.msra.mxu0 0
        %4211 = vmatprep.subr.bf16.mxu0 0
        %4212 = vmatpush1.bf16.msra.mxu0 0
        %4213 = vmatprep.subr.bf16.mxu0 0
        %4214 = vmatpush1.bf16.msra.mxu0 0
        %4215 = vmatprep.mubr.bf16.mxu0 0
        %4216 = vmatmul.mubr.bf16.gmra.mrb[0].mxu0 %v4178
        %v4217 = vpop.f32.mrb[0].mxu0
        %v4218 = vadd.f32 0.0, %v4217
        %v4219 = vpop.f32.mrb[0].mxu0
        %v4220 = vpop.f32.mrb[0].mxu0
        %v4221 = vpop.f32.mrb[0].mxu0
        %4222 = vdwg.mxu0
        %4223 = vrot.lane.b32.xlu0 %v3610, 48
        %v4224 = vpop.permute.xlu0 %4223
        %v4226 = vsel %vm2271, %v4174, 0
        %v4229 = vsel %vm2396, %v4224, 0
        %4231 = vmatprep.subr.bf16.mxu0 0
        %4232 = vmatpush1.bf16.msra.mxu0 %v4229
        %4233 = vmatprep.subr.bf16.mxu0 0
        %4234 = vmatpush1.bf16.msra.mxu0 0
        %4235 = vmatprep.subr.bf16.mxu0 0
        %4236 = vmatpush1.bf16.msra.mxu0 0
        %4237 = vmatprep.subr.bf16.mxu0 0
        %4238 = vmatpush1.bf16.msra.mxu0 0
        %4239 = vmatprep.subr.bf16.mxu0 0
        %4240 = vmatpush1.bf16.msra.mxu0 0
        %4241 = vmatprep.subr.bf16.mxu0 0
        %4242 = vmatpush1.bf16.msra.mxu0 0
        %4243 = vmatprep.subr.bf16.mxu0 0
        %4244 = vmatpush1.bf16.msra.mxu0 0
        %4245 = vmatprep.subr.bf16.mxu0 0
        %4246 = vmatpush1.bf16.msra.mxu0 0
        %4247 = vmatprep.subr.bf16.mxu0 0
        %4248 = vmatpush1.bf16.msra.mxu0 0
        %4249 = vmatprep.subr.bf16.mxu0 0
        %4250 = vmatpush1.bf16.msra.mxu0 0
        %4251 = vmatprep.subr.bf16.mxu0 0
        %4252 = vmatpush1.bf16.msra.mxu0 0
        %4253 = vmatprep.subr.bf16.mxu0 0
        %4254 = vmatpush1.bf16.msra.mxu0 0
        %4255 = vmatprep.subr.bf16.mxu0 0
        %4256 = vmatpush1.bf16.msra.mxu0 0
        %4257 = vmatprep.subr.bf16.mxu0 0
        %4258 = vmatpush1.bf16.msra.mxu0 0
        %4259 = vmatprep.subr.bf16.mxu0 0
        %4260 = vmatpush1.bf16.msra.mxu0 0
        %4261 = vmatprep.subr.bf16.mxu0 0
        %4262 = vmatpush1.bf16.msra.mxu0 0
        %4263 = vmatprep.mubr.bf16.mxu0 0
        %4264 = vmatmul.mubr.bf16.gmra.mrb[0].mxu0 %v4226
        %v4265 = vpop.f32.mrb[0].mxu0
        %v4266 = vadd.f32 0.0, %v4265
        %v4267 = vpop.f32.mrb[0].mxu0
        %v4268 = vpop.f32.mrb[0].mxu0
        %v4269 = vpop.f32.mrb[0].mxu0
        %4270 = vdwg.mxu0
        %4271 = vrot.lane.b32.xlu0 %v3607, 104
        %v4272 = vpop.permute.xlu0 %4271
        %4273 = vrot.lane.b32.xlu0 %v3609, 72
        %v4274 = vpop.permute.xlu0 %4273
        %v4276 = vsel %vm2271, %v4272, 0
        %v4279 = vsel %vm2271, %v4274, 0
        %4281 = vmatprep.subr.bf16.mxu0 0
        %4282 = vmatpush1.bf16.xpose.msra.mxu0 %v4279
        %4283 = vmatprep.subr.bf16.mxu0 0
        %4284 = vmatpush1.bf16.xpose.msra.mxu0 0
        %4285 = vmatprep.subr.bf16.mxu0 0
        %4286 = vmatpush1.bf16.xpose.msra.mxu0 0
        %4287 = vmatprep.subr.bf16.mxu0 0
        %4288 = vmatpush1.bf16.xpose.msra.mxu0 0
        %4289 = vmatprep.subr.bf16.mxu0 0
        %4290 = vmatpush1.bf16.xpose.msra.mxu0 0
        %4291 = vmatprep.subr.bf16.mxu0 0
        %4292 = vmatpush1.bf16.xpose.msra.mxu0 0
        %4293 = vmatprep.subr.bf16.mxu0 0
        %4294 = vmatpush1.bf16.xpose.msra.mxu0 0
        %4295 = vmatprep.subr.bf16.mxu0 0
        %4296 = vmatpush1.bf16.xpose.msra.mxu0 0
        %4297 = vmatprep.subr.bf16.mxu0 0
        %4298 = vmatpush1.bf16.xpose.msra.mxu0 0
        %4299 = vmatprep.subr.bf16.mxu0 0
        %4300 = vmatpush1.bf16.xpose.msra.mxu0 0
        %4301 = vmatprep.subr.bf16.mxu0 0
        %4302 = vmatpush1.bf16.xpose.msra.mxu0 0
        %4303 = vmatprep.subr.bf16.mxu0 0
        %4304 = vmatpush1.bf16.xpose.msra.mxu0 0
        %4305 = vmatprep.subr.bf16.mxu0 0
        %4306 = vmatpush1.bf16.xpose.msra.mxu0 0
        %4307 = vmatprep.subr.bf16.mxu0 0
        %4308 = vmatpush1.bf16.xpose.msra.mxu0 0
        %4309 = vmatprep.subr.bf16.mxu0 0
        %4310 = vmatpush1.bf16.xpose.msra.mxu0 0
        %4311 = vmatprep.subr.bf16.mxu0 0
        %4312 = vmatpush1.bf16.xpose.msra.mxu0 0
        %4313 = vmatprep.mubr.bf16.mxu0 0
        %4314 = vmatmul.mubr.bf16.gmra.mrb[0].mxu0 %v4276
        %v4315 = vpop.f32.mrb[0].mxu0
        %v4316 = vadd.f32 0.0, %v4315
        %v4317 = vpop.f32.mrb[0].mxu0
        %v4318 = vpop.f32.mrb[0].mxu0
        %v4319 = vpop.f32.mrb[0].mxu0
        %4320 = vdwg.mxu0
        %4321 = vrot.lane.b32.xlu0 %v3608, 104
        %v4322 = vpop.permute.xlu0 %4321
        %4323 = vrot.lane.b32.xlu0 %v3610, 72
        %v4324 = vpop.permute.xlu0 %4323
        %v4326 = vsel %vm2271, %v4322, 0
        %v4329 = vsel %vm2271, %v4324, 0
        %4331 = vmatprep.subr.bf16.mxu0 0
        %4332 = vmatpush1.bf16.xpose.msra.mxu0 %v4329
        %4333 = vmatprep.subr.bf16.mxu0 0
        %4334 = vmatpush1.bf16.xpose.msra.mxu0 0
        %4335 = vmatprep.subr.bf16.mxu0 0
        %4336 = vmatpush1.bf16.xpose.msra.mxu0 0
        %4337 = vmatprep.subr.bf16.mxu0 0
        %4338 = vmatpush1.bf16.xpose.msra.mxu0 0
        %4339 = vmatprep.subr.bf16.mxu0 0
        %4340 = vmatpush1.bf16.xpose.msra.mxu0 0
        %4341 = vmatprep.subr.bf16.mxu0 0
        %4342 = vmatpush1.bf16.xpose.msra.mxu0 0
        %4343 = vmatprep.subr.bf16.mxu0 0
        %4344 = vmatpush1.bf16.xpose.msra.mxu0 0
        %4345 = vmatprep.subr.bf16.mxu0 0
        %4346 = vmatpush1.bf16.xpose.msra.mxu0 0
        %4347 = vmatprep.subr.bf16.mxu0 0
        %4348 = vmatpush1.bf16.xpose.msra.mxu0 0
        %4349 = vmatprep.subr.bf16.mxu0 0
        %4350 = vmatpush1.bf16.xpose.msra.mxu0 0
        %4351 = vmatprep.subr.bf16.mxu0 0
        %4352 = vmatpush1.bf16.xpose.msra.mxu0 0
        %4353 = vmatprep.subr.bf16.mxu0 0
        %4354 = vmatpush1.bf16.xpose.msra.mxu0 0
        %4355 = vmatprep.subr.bf16.mxu0 0
        %4356 = vmatpush1.bf16.xpose.msra.mxu0 0
        %4357 = vmatprep.subr.bf16.mxu0 0
        %4358 = vmatpush1.bf16.xpose.msra.mxu0 0
        %4359 = vmatprep.subr.bf16.mxu0 0
        %4360 = vmatpush1.bf16.xpose.msra.mxu0 0
        %4361 = vmatprep.subr.bf16.mxu0 0
        %4362 = vmatpush1.bf16.xpose.msra.mxu0 0
        %4363 = vmatprep.mubr.bf16.mxu0 0
        %4364 = vmatmul.mubr.bf16.gmra.mrb[0].mxu0 %v4326
        %v4365 = vpop.f32.mrb[0].mxu0
        %v4366 = vadd.f32 0.0, %v4365
        %v4367 = vpop.f32.mrb[0].mxu0
        %v4368 = vpop.f32.mrb[0].mxu0
        %v4369 = vpop.f32.mrb[0].mxu0
        %4370 = vdwg.mxu0
        %v4371 = vsel %vm2271, %v4316, -inf
        %4372 = vmax.xlane.f32.xlu0 %v4371
        %v4373 = vpop.xlane.xlu0 %4372
        %v4374 = vsel %vm2271, %v4366, -inf
        %4375 = vmax.xlane.f32.xlu0 %v4374
        %v4376 = vpop.xlane.xlu0 %4375
        %v4377 = vsub.f32 %v4316, %v4373
        %v4378 = vsub.f32 %v4366, %v4376
        %v4379 = vmul.f32 %v4377, 1.442695
        %v4380 = vpow.pop %v4379
        %v4381 = vmul.f32 %v4378, 1.442695
        %v4382 = vpow.pop %v4381
        %v4383 = vsel %vm2271, %v4380, 0.0
        %4384 = vadd.xlane.f32.xlu0 %v4383
        %v4385 = vpop.xlane.xlu0 %4384
        %v4386 = vsel %vm2271, %v4382, 0.0
        %4387 = vadd.xlane.f32.xlu0 %v4386
        %v4388 = vpop.xlane.xlu0 %4387
        %v4389 = vrcp.pop %v4385
        %v4390 = vrcp.pop %v4388
        %v4391 = vmul.f32 %v4380, %v4389
        %v4392 = vmul.f32 %v4382, %v4390
        %v4393 = vpack.c.bf16 %v4391, %v4391
        %v4394 = vpack.c.bf16 %v4392, %v4392
        %4395 = vrot.lane.b32.xlu0 %v3609, 40
        %v4396 = vpop.permute.xlu0 %4395
        %v4398 = vsel %vm2271, %v4393, 0
        %v4401 = vsel %vm2396, %v4396, 0
        %4403 = vmatprep.subr.bf16.mxu0 0
        %4404 = vmatpush1.bf16.msra.mxu0 %v4401
        %4405 = vmatprep.subr.bf16.mxu0 0
        %4406 = vmatpush1.bf16.msra.mxu0 0
        %4407 = vmatprep.subr.bf16.mxu0 0
        %4408 = vmatpush1.bf16.msra.mxu0 0
        %4409 = vmatprep.subr.bf16.mxu0 0
        %4410 = vmatpush1.bf16.msra.mxu0 0
        %4411 = vmatprep.subr.bf16.mxu0 0
        %4412 = vmatpush1.bf16.msra.mxu0 0
        %4413 = vmatprep.subr.bf16.mxu0 0
        %4414 = vmatpush1.bf16.msra.mxu0 0
        %4415 = vmatprep.subr.bf16.mxu0 0
        %4416 = vmatpush1.bf16.msra.mxu0 0
        %4417 = vmatprep.subr.bf16.mxu0 0
        %4418 = vmatpush1.bf16.msra.mxu0 0
        %4419 = vmatprep.subr.bf16.mxu0 0
        %4420 = vmatpush1.bf16.msra.mxu0 0
        %4421 = vmatprep.subr.bf16.mxu0 0
        %4422 = vmatpush1.bf16.msra.mxu0 0
        %4423 = vmatprep.subr.bf16.mxu0 0
        %4424 = vmatpush1.bf16.msra.mxu0 0
        %4425 = vmatprep.subr.bf16.mxu0 0
        %4426 = vmatpush1.bf16.msra.mxu0 0
        %4427 = vmatprep.subr.bf16.mxu0 0
        %4428 = vmatpush1.bf16.msra.mxu0 0
        %4429 = vmatprep.subr.bf16.mxu0 0
        %4430 = vmatpush1.bf16.msra.mxu0 0
        %4431 = vmatprep.subr.bf16.mxu0 0
        %4432 = vmatpush1.bf16.msra.mxu0 0
        %4433 = vmatprep.subr.bf16.mxu0 0
        %4434 = vmatpush1.bf16.msra.mxu0 0
        %4435 = vmatprep.mubr.bf16.mxu0 0
        %4436 = vmatmul.mubr.bf16.gmra.mrb[0].mxu0 %v4398
        %v4437 = vpop.f32.mrb[0].mxu0
        %v4438 = vadd.f32 0.0, %v4437
        %v4439 = vpop.f32.mrb[0].mxu0
        %v4440 = vpop.f32.mrb[0].mxu0
        %v4441 = vpop.f32.mrb[0].mxu0
        %4442 = vdwg.mxu0
        %4443 = vrot.lane.b32.xlu0 %v3610, 40
        %v4444 = vpop.permute.xlu0 %4443
        %v4446 = vsel %vm2271, %v4394, 0
        %v4449 = vsel %vm2396, %v4444, 0
        %4451 = vmatprep.subr.bf16.mxu0 0
        %4452 = vmatpush1.bf16.msra.mxu0 %v4449
        %4453 = vmatprep.subr.bf16.mxu0 0
        %4454 = vmatpush1.bf16.msra.mxu0 0
        %4455 = vmatprep.subr.bf16.mxu0 0
        %4456 = vmatpush1.bf16.msra.mxu0 0
        %4457 = vmatprep.subr.bf16.mxu0 0
        %4458 = vmatpush1.bf16.msra.mxu0 0
        %4459 = vmatprep.subr.bf16.mxu0 0
        %4460 = vmatpush1.bf16.msra.mxu0 0
        %4461 = vmatprep.subr.bf16.mxu0 0
        %4462 = vmatpush1.bf16.msra.mxu0 0
        %4463 = vmatprep.subr.bf16.mxu0 0
        %4464 = vmatpush1.bf16.msra.mxu0 0
        %4465 = vmatprep.subr.bf16.mxu0 0
        %4466 = vmatpush1.bf16.msra.mxu0 0
        %4467 = vmatprep.subr.bf16.mxu0 0
        %4468 = vmatpush1.bf16.msra.mxu0 0
        %4469 = vmatprep.subr.bf16.mxu0 0
        %4470 = vmatpush1.bf16.msra.mxu0 0
        %4471 = vmatprep.subr.bf16.mxu0 0
        %4472 = vmatpush1.bf16.msra.mxu0 0
        %4473 = vmatprep.subr.bf16.mxu0 0
        %4474 = vmatpush1.bf16.msra.mxu0 0
        %4475 = vmatprep.subr.bf16.mxu0 0
        %4476 = vmatpush1.bf16.msra.mxu0 0
        %4477 = vmatprep.subr.bf16.mxu0 0
        %4478 = vmatpush1.bf16.msra.mxu0 0
        %4479 = vmatprep.subr.bf16.mxu0 0
        %4480 = vmatpush1.bf16.msra.mxu0 0
        %4481 = vmatprep.subr.bf16.mxu0 0
        %4482 = vmatpush1.bf16.msra.mxu0 0
        %4483 = vmatprep.mubr.bf16.mxu0 0
        %4484 = vmatmul.mubr.bf16.gmra.mrb[0].mxu0 %v4446
        %v4485 = vpop.f32.mrb[0].mxu0
        %v4486 = vadd.f32 0.0, %v4485
        %v4487 = vpop.f32.mrb[0].mxu0
        %v4488 = vpop.f32.mrb[0].mxu0
        %v4489 = vpop.f32.mrb[0].mxu0
        %4490 = vdwg.mxu0
        %4493 = vrot.lane.b32.xlu0 %v3998, 8
        %v4494 = vpop.permute.xlu0 %4493
        %4495 = vrot.lane.b32.xlu0 %v4046, 8
        %v4496 = vpop.permute.xlu0 %4495
        %4501 = vrot.lane.b32.xlu0 %v4218, 16
        %v4502 = vpop.permute.xlu0 %4501
        %4503 = vrot.lane.b32.xlu0 %v4266, 16
        %v4504 = vpop.permute.xlu0 %4503
        %4509 = vrot.lane.b32.xlu0 %v4438, 24
        %v4510 = vpop.permute.xlu0 %4509
        %4511 = vrot.lane.b32.xlu0 %v4486, 24
        %v4512 = vpop.permute.xlu0 %4511
        %v4515 = vsel %vm2271, %v3776, %v4494
        %v4516 = vsel %vm2271, %v3824, %v4496
        %v4517 = vsel %vm3176, %v4515, %v4502
        %v4518 = vsel %vm3176, %v4516, %v4504
        %v4519 = vsel %vm3179, %v4517, %v4510
        %v4520 = vsel %vm3179, %v4518, %v4512
        %v4521 = vpack.c.bf16 %v4520, %v4519
        %v4522 = vld [vmem:[%s63] sm:$0xf]
        %v4523 = vld [vmem:[%s63 + $0x4] sm:$0xf]
        %v4524 = vld [vmem:[%s63 + $0x8] sm:$0xf]
        %v4525 = vld [vmem:[%s63 + $0xc] sm:$0xf]
        %v4526 = vld [vmem:[%s59] sm:$0x1]
        %v4528 = vlaneseq
        %v4529 = vshrl.u32 %v4528, 7
        %v4530 = vsub.s32 0, %v4529
        %v4531 = vrot.slane %v4526, %v4530
        %v4537 = vunpack.c.l.b16 %v4522
        %v4538 = vunpack.c.l.b16 %v4523
        %v4539 = vunpack.c.l.b16 %v4524
        %v4540 = vunpack.c.l.b16 %v4525
        %v4541 = vpack.c.b16 %v4538, %v4537
        %v4542 = vpack.c.b16 %v4540, %v4539
        %v4546 = vsel %vm1826, %v4521, 0
        %4548 = vmatprep.subr.bf16.mxu0 0
        %4549 = vmatpush1.bf16.msra.mxu0 %v4541
        %4550 = vmatprep.subr.bf16.mxu0 0
        %4551 = vmatpush1.bf16.msra.mxu0 %v4542
        %4552 = vmatprep.subr.bf16.mxu0 0
        %4553 = vmatpush1.bf16.msra.mxu0 0
        %4554 = vmatprep.subr.bf16.mxu0 0
        %4555 = vmatpush1.bf16.msra.mxu0 0
        %4556 = vmatprep.subr.bf16.mxu0 0
        %4557 = vmatpush1.bf16.msra.mxu0 0
        %4558 = vmatprep.subr.bf16.mxu0 0
        %4559 = vmatpush1.bf16.msra.mxu0 0
        %4560 = vmatprep.subr.bf16.mxu0 0
        %4561 = vmatpush1.bf16.msra.mxu0 0
        %4562 = vmatprep.subr.bf16.mxu0 0
        %4563 = vmatpush1.bf16.msra.mxu0 0
        %4564 = vmatprep.subr.bf16.mxu0 0
        %4565 = vmatpush1.bf16.msra.mxu0 0
        %4566 = vmatprep.subr.bf16.mxu0 0
        %4567 = vmatpush1.bf16.msra.mxu0 0
        %4568 = vmatprep.subr.bf16.mxu0 0
        %4569 = vmatpush1.bf16.msra.mxu0 0
        %4570 = vmatprep.subr.bf16.mxu0 0
        %4571 = vmatpush1.bf16.msra.mxu0 0
        %4572 = vmatprep.subr.bf16.mxu0 0
        %4573 = vmatpush1.bf16.msra.mxu0 0
        %4574 = vmatprep.subr.bf16.mxu0 0
        %4575 = vmatpush1.bf16.msra.mxu0 0
        %4576 = vmatprep.subr.bf16.mxu0 0
        %4577 = vmatpush1.bf16.msra.mxu0 0
        %4578 = vmatprep.subr.bf16.mxu0 0
        %4579 = vmatpush1.bf16.msra.mxu0 0
        %4580 = vmatprep.mubr.bf16.mxu0 0
        %4581 = vmatmul.mubr.bf16.gmra.mrb[0].mxu0 %v4546
        %v4582 = vpop.f32.mrb[0].mxu0
        %v4583 = vadd.f32 %v4531, %v4582
        %v4584 = vpop.f32.mrb[0].mxu0
        %v4585 = vpop.f32.mrb[0].mxu0
        %v4586 = vadd.f32 %v4531, %v4585
        %v4587 = vpop.f32.mrb[0].mxu0
        %4588 = vdwg.mxu0
        %v4589 = vadd.f32 %v2192, %v4583
        %v4590 = vadd.f32 %v2193, %v4586
        %v4591 = vsel %vm1826, %v4589, 0.0
        %4592 = vadd.xlane.f32.xlu0 %v4591
        %v4593 = vpop.xlane.xlu0 %4592
        %v4594 = vsel %vm1826, %v4590, 0.0
        %4595 = vadd.xlane.f32.xlu0 %v4594
        %v4596 = vpop.xlane.xlu0 %4595
        %v4597 = vmul.f32 %v4593, %v1877
        %v4598 = vmul.f32 %v4596, %v1877
        %v4599 = vsub.f32 %v4589, %v4597
        %v4600 = vsub.f32 %v4590, %v4598
        %v4601 = vmul.f32 %v4599, %v4599
        %v4602 = vmul.f32 %v4600, %v4600
        %v4603 = vsel %vm1826, %v4601, 0.0
        %4604 = vadd.xlane.f32.xlu0 %v4603
        %v4605 = vpop.xlane.xlu0 %4604
        %v4606 = vsel %vm1826, %v4602, 0.0
        %4607 = vadd.xlane.f32.xlu0 %v4606
        %v4608 = vpop.xlane.xlu0 %4607
        %v4609 = vmul.f32 %v4605, %v1877
        %v4610 = vmul.f32 %v4608, %v1877
        %v4611 = vadd.f32 %v4609, 1e-05
        %v4612 = vadd.f32 %v4610, 1e-05
        %v4613 = vrsqrt.pop %v4611
        %v4614 = vrsqrt.pop %v4612
        %v4615 = vmul.f32 %v4599, %v4613
        %v4616 = vmul.f32 %v4600, %v4614
        %v4617 = vld [vmem:[%s49] sm:$0x1]
        %v4619 = vlaneseq
        %v4620 = vshrl.u32 %v4619, 7
        %v4621 = vsub.s32 0, %v4620
        %v4622 = vrot.slane %v4617, %v4621
        %v4624 = vmul.f32 %v4615, %v4622
        %v4625 = vmul.f32 %v4616, %v4622
        %v4626 = vld [vmem:[%s47] sm:$0x1]
        %v4628 = vlaneseq
        %v4629 = vshrl.u32 %v4628, 7
        %v4630 = vsub.s32 0, %v4629
        %v4631 = vrot.slane %v4626, %v4630
        %v4633 = vadd.f32 %v4624, %v4631
        %v4634 = vadd.f32 %v4625, %v4631
        %v4635 = vpack.c.bf16 %v4634, %v4633
        %v4636 = vld [vmem:[%s37] sm:$0xf]
        %v4637 = vld [vmem:[%s37 + $0x4] sm:$0xf]
        %v4638 = vld [vmem:[%s37 + $0x8] sm:$0xf]
        %v4639 = vld [vmem:[%s37 + $0xc] sm:$0xf]
        %v4640 = vld [vmem:[%s31] sm:$0x1]
        %v4642 = vlaneseq
        %v4643 = vshrl.u32 %v4642, 7
        %v4644 = vsub.s32 0, %v4643
        %v4645 = vrot.slane %v4640, %v4644
        %v4651 = vunpack.c.l.b16 %v4636
        %v4652 = vunpack.c.l.b16 %v4637
        %v4653 = vunpack.c.l.b16 %v4638
        %v4654 = vunpack.c.l.b16 %v4639
        %v4655 = vpack.c.b16 %v4652, %v4651
        %v4656 = vpack.c.b16 %v4654, %v4653
        %v4660 = vsel %vm1826, %v4635, 0
        %4662 = vmatprep.subr.bf16.mxu0 0
        %4663 = vmatpush1.bf16.msra.mxu0 %v4655
        %4664 = vmatprep.subr.bf16.mxu0 0
        %4665 = vmatpush1.bf16.msra.mxu0 %v4656
        %4666 = vmatprep.subr.bf16.mxu0 0
        %4667 = vmatpush1.bf16.msra.mxu0 0
        %4668 = vmatprep.subr.bf16.mxu0 0
        %4669 = vmatpush1.bf16.msra.mxu0 0
        %4670 = vmatprep.subr.bf16.mxu0 0
        %4671 = vmatpush1.bf16.msra.mxu0 0
        %4672 = vmatprep.subr.bf16.mxu0 0
        %4673 = vmatpush1.bf16.msra.mxu0 0
        %4674 = vmatprep.subr.bf16.mxu0 0
        %4675 = vmatpush1.bf16.msra.mxu0 0
        %4676 = vmatprep.subr.bf16.mxu0 0
        %4677 = vmatpush1.bf16.msra.mxu0 0
        %4678 = vmatprep.subr.bf16.mxu0 0
        %4679 = vmatpush1.bf16.msra.mxu0 0
        %4680 = vmatprep.subr.bf16.mxu0 0
        %4681 = vmatpush1.bf16.msra.mxu0 0
        %4682 = vmatprep.subr.bf16.mxu0 0
        %4683 = vmatpush1.bf16.msra.mxu0 0
        %4684 = vmatprep.subr.bf16.mxu0 0
        %4685 = vmatpush1.bf16.msra.mxu0 0
        %4686 = vmatprep.subr.bf16.mxu0 0
        %4687 = vmatpush1.bf16.msra.mxu0 0
        %4688 = vmatprep.subr.bf16.mxu0 0
        %4689 = vmatpush1.bf16.msra.mxu0 0
        %4690 = vmatprep.subr.bf16.mxu0 0
        %4691 = vmatpush1.bf16.msra.mxu0 0
        %4692 = vmatprep.subr.bf16.mxu0 0
        %4693 = vmatpush1.bf16.msra.mxu0 0
        %4694 = vmatprep.mubr.bf16.mxu0 0
        %4695 = vmatmul.mubr.bf16.gmra.mrb[0].mxu0 %v4660
        %v4696 = vpop.f32.mrb[0].mxu0
        %v4697 = vadd.f32 %v4645, %v4696
        %v4698 = vpop.f32.mrb[0].mxu0
        %v4699 = vpop.f32.mrb[0].mxu0
        %v4700 = vadd.f32 %v4645, %v4699
        %v4701 = vpop.f32.mrb[0].mxu0
        %4702 = vdwg.mxu0
        %v4703 = vpack.c.bf16 %v3540, %v3539
        %v4704 = vld [vmem:[%s33] sm:$0xf]
        %v4705 = vld [vmem:[%s33 + $0x4] sm:$0xf]
        %v4706 = vld [vmem:[%s33 + $0x8] sm:$0xf]
        %v4707 = vld [vmem:[%s33 + $0xc] sm:$0xf]
        %v4708 = vld [vmem:[%s27] sm:$0x1]
        %v4710 = vlaneseq
        %v4711 = vshrl.u32 %v4710, 7
        %v4712 = vsub.s32 0, %v4711
        %v4713 = vrot.slane %v4708, %v4712
        %v4719 = vunpack.c.l.b16 %v4704
        %v4720 = vunpack.c.l.b16 %v4705
        %v4721 = vunpack.c.l.b16 %v4706
        %v4722 = vunpack.c.l.b16 %v4707
        %v4723 = vpack.c.b16 %v4720, %v4719
        %v4724 = vpack.c.b16 %v4722, %v4721
        %v4728 = vsel %vm1826, %v4703, 0
        %4730 = vmatprep.subr.bf16.mxu0 0
        %4731 = vmatpush1.bf16.msra.mxu0 %v4723
        %4732 = vmatprep.subr.bf16.mxu0 0
        %4733 = vmatpush1.bf16.msra.mxu0 %v4724
        %4734 = vmatprep.subr.bf16.mxu0 0
        %4735 = vmatpush1.bf16.msra.mxu0 0
        %4736 = vmatprep.subr.bf16.mxu0 0
        %4737 = vmatpush1.bf16.msra.mxu0 0
        %4738 = vmatprep.subr.bf16.mxu0 0
        %4739 = vmatpush1.bf16.msra.mxu0 0
        %4740 = vmatprep.subr.bf16.mxu0 0
        %4741 = vmatpush1.bf16.msra.mxu0 0
        %4742 = vmatprep.subr.bf16.mxu0 0
        %4743 = vmatpush1.bf16.msra.mxu0 0
        %4744 = vmatprep.subr.bf16.mxu0 0
        %4745 = vmatpush1.bf16.msra.mxu0 0
        %4746 = vmatprep.subr.bf16.mxu0 0
        %4747 = vmatpush1.bf16.msra.mxu0 0
        %4748 = vmatprep.subr.bf16.mxu0 0
        %4749 = vmatpush1.bf16.msra.mxu0 0
        %4750 = vmatprep.subr.bf16.mxu0 0
        %4751 = vmatpush1.bf16.msra.mxu0 0
        %4752 = vmatprep.subr.bf16.mxu0 0
        %4753 = vmatpush1.bf16.msra.mxu0 0
        %4754 = vmatprep.subr.bf16.mxu0 0
        %4755 = vmatpush1.bf16.msra.mxu0 0
        %4756 = vmatprep.subr.bf16.mxu0 0
        %4757 = vmatpush1.bf16.msra.mxu0 0
        %4758 = vmatprep.subr.bf16.mxu0 0
        %4759 = vmatpush1.bf16.msra.mxu0 0
        %4760 = vmatprep.subr.bf16.mxu0 0
        %4761 = vmatpush1.bf16.msra.mxu0 0
        %4762 = vmatprep.mubr.bf16.mxu0 0
        %4763 = vmatmul.mubr.bf16.gmra.mrb[0].mxu0 %v4728
        %v4764 = vpop.f32.mrb[0].mxu0
        %v4765 = vadd.f32 %v4713, %v4764
        %v4766 = vpop.f32.mrb[0].mxu0
        %v4767 = vpop.f32.mrb[0].mxu0
        %v4768 = vadd.f32 %v4713, %v4767
        %v4769 = vpop.f32.mrb[0].mxu0
        %4770 = vdwg.mxu0
        %v4771 = vmul.f32 %v4697, 0.35355338
        %v4772 = vmul.f32 %v4700, 0.35355338
        %v4773 = vpack.c.bf16 %v4771, %v4771
        %v4774 = vpack.c.bf16 %v4772, %v4772
        %v4775 = vpack.c.bf16 %v4765, %v4765
        %v4776 = vpack.c.bf16 %v4768, %v4768
        %v4778 = vsel %vm2271, %v4773, 0
        %v4781 = vsel %vm2271, %v4775, 0
        %4783 = vmatprep.subr.bf16.mxu0 0
        %4784 = vmatpush1.bf16.xpose.msra.mxu0 %v4781
        %4785 = vmatprep.subr.bf16.mxu0 0
        %4786 = vmatpush1.bf16.xpose.msra.mxu0 0
        %4787 = vmatprep.subr.bf16.mxu0 0
        %4788 = vmatpush1.bf16.xpose.msra.mxu0 0
        %4789 = vmatprep.subr.bf16.mxu0 0
        %4790 = vmatpush1.bf16.xpose.msra.mxu0 0
        %4791 = vmatprep.subr.bf16.mxu0 0
        %4792 = vmatpush1.bf16.xpose.msra.mxu0 0
        %4793 = vmatprep.subr.bf16.mxu0 0
        %4794 = vmatpush1.bf16.xpose.msra.mxu0 0
        %4795 = vmatprep.subr.bf16.mxu0 0
        %4796 = vmatpush1.bf16.xpose.msra.mxu0 0
        %4797 = vmatprep.subr.bf16.mxu0 0
        %4798 = vmatpush1.bf16.xpose.msra.mxu0 0
        %4799 = vmatprep.subr.bf16.mxu0 0
        %4800 = vmatpush1.bf16.xpose.msra.mxu0 0
        %4801 = vmatprep.subr.bf16.mxu0 0
        %4802 = vmatpush1.bf16.xpose.msra.mxu0 0
        %4803 = vmatprep.subr.bf16.mxu0 0
        %4804 = vmatpush1.bf16.xpose.msra.mxu0 0
        %4805 = vmatprep.subr.bf16.mxu0 0
        %4806 = vmatpush1.bf16.xpose.msra.mxu0 0
        %4807 = vmatprep.subr.bf16.mxu0 0
        %4808 = vmatpush1.bf16.xpose.msra.mxu0 0
        %4809 = vmatprep.subr.bf16.mxu0 0
        %4810 = vmatpush1.bf16.xpose.msra.mxu0 0
        %4811 = vmatprep.subr.bf16.mxu0 0
        %4812 = vmatpush1.bf16.xpose.msra.mxu0 0
        %4813 = vmatprep.subr.bf16.mxu0 0
        %4814 = vmatpush1.bf16.xpose.msra.mxu0 0
        %4815 = vmatprep.mubr.bf16.mxu0 0
        %4816 = vmatmul.mubr.bf16.gmra.mrb[0].mxu0 %v4778
        %v4817 = vpop.f32.mrb[0].mxu0
        %v4818 = vadd.f32 0.0, %v4817
        %v4819 = vpop.f32.mrb[0].mxu0
        %v4820 = vpop.f32.mrb[0].mxu0
        %v4821 = vpop.f32.mrb[0].mxu0
        %4822 = vdwg.mxu0
        %v4824 = vsel %vm2271, %v4774, 0
        %v4827 = vsel %vm2271, %v4776, 0
        %4829 = vmatprep.subr.bf16.mxu0 0
        %4830 = vmatpush1.bf16.xpose.msra.mxu0 %v4827
        %4831 = vmatprep.subr.bf16.mxu0 0
        %4832 = vmatpush1.bf16.xpose.msra.mxu0 0
        %4833 = vmatprep.subr.bf16.mxu0 0
        %4834 = vmatpush1.bf16.xpose.msra.mxu0 0
        %4835 = vmatprep.subr.bf16.mxu0 0
        %4836 = vmatpush1.bf16.xpose.msra.mxu0 0
        %4837 = vmatprep.subr.bf16.mxu0 0
        %4838 = vmatpush1.bf16.xpose.msra.mxu0 0
        %4839 = vmatprep.subr.bf16.mxu0 0
        %4840 = vmatpush1.bf16.xpose.msra.mxu0 0
        %4841 = vmatprep.subr.bf16.mxu0 0
        %4842 = vmatpush1.bf16.xpose.msra.mxu0 0
        %4843 = vmatprep.subr.bf16.mxu0 0
        %4844 = vmatpush1.bf16.xpose.msra.mxu0 0
        %4845 = vmatprep.subr.bf16.mxu0 0
        %4846 = vmatpush1.bf16.xpose.msra.mxu0 0
        %4847 = vmatprep.subr.bf16.mxu0 0
        %4848 = vmatpush1.bf16.xpose.msra.mxu0 0
        %4849 = vmatprep.subr.bf16.mxu0 0
        %4850 = vmatpush1.bf16.xpose.msra.mxu0 0
        %4851 = vmatprep.subr.bf16.mxu0 0
        %4852 = vmatpush1.bf16.xpose.msra.mxu0 0
        %4853 = vmatprep.subr.bf16.mxu0 0
        %4854 = vmatpush1.bf16.xpose.msra.mxu0 0
        %4855 = vmatprep.subr.bf16.mxu0 0
        %4856 = vmatpush1.bf16.xpose.msra.mxu0 0
        %4857 = vmatprep.subr.bf16.mxu0 0
        %4858 = vmatpush1.bf16.xpose.msra.mxu0 0
        %4859 = vmatprep.subr.bf16.mxu0 0
        %4860 = vmatpush1.bf16.xpose.msra.mxu0 0
        %4861 = vmatprep.mubr.bf16.mxu0 0
        %4862 = vmatmul.mubr.bf16.gmra.mrb[0].mxu0 %v4824
        %v4863 = vpop.f32.mrb[0].mxu0
        %v4864 = vadd.f32 0.0, %v4863
        %v4865 = vpop.f32.mrb[0].mxu0
        %v4866 = vpop.f32.mrb[0].mxu0
        %v4867 = vpop.f32.mrb[0].mxu0
        %4868 = vdwg.mxu0
        %v4869 = vsel %vm2271, %v4818, -inf
        %4870 = vmax.xlane.f32.xlu0 %v4869
        %v4871 = vpop.xlane.xlu0 %4870
        %v4872 = vsel %vm2271, %v4864, -inf
        %4873 = vmax.xlane.f32.xlu0 %v4872
        %v4874 = vpop.xlane.xlu0 %4873
        %v4875 = vsub.f32 %v4818, %v4871
        %v4876 = vsub.f32 %v4864, %v4874
        %v4877 = vmul.f32 %v4875, 1.442695
        %v4878 = vpow.pop %v4877
        %v4879 = vmul.f32 %v4876, 1.442695
        %v4880 = vpow.pop %v4879
        %v4881 = vsel %vm2271, %v4878, 0.0
        %4882 = vadd.xlane.f32.xlu0 %v4881
        %v4883 = vpop.xlane.xlu0 %4882
        %v4884 = vsel %vm2271, %v4880, 0.0
        %4885 = vadd.xlane.f32.xlu0 %v4884
        %v4886 = vpop.xlane.xlu0 %4885
        %v4887 = vrcp.pop %v4883
        %v4888 = vrcp.pop %v4886
        %v4889 = vmul.f32 %v4878, %v4887
        %v4890 = vmul.f32 %v4880, %v4888
        %v4891 = vpack.c.bf16 %v4889, %v4889
        %v4892 = vpack.c.bf16 %v4890, %v4890
        %4894 = vrot.lane.b32.xlu0 %v4775, 96
        %v4895 = vpop.permute.xlu0 %4894
        %v4897 = vsel %vm2271, %v4891, 0
        %v4900 = vsel %vm2396, %v4895, 0
        %4902 = vmatprep.subr.bf16.mxu0 0
        %4903 = vmatpush1.bf16.msra.mxu0 %v4900
        %4904 = vmatprep.subr.bf16.mxu0 0
        %4905 = vmatpush1.bf16.msra.mxu0 0
        %4906 = vmatprep.subr.bf16.mxu0 0
        %4907 = vmatpush1.bf16.msra.mxu0 0
        %4908 = vmatprep.subr.bf16.mxu0 0
        %4909 = vmatpush1.bf16.msra.mxu0 0
        %4910 = vmatprep.subr.bf16.mxu0 0
        %4911 = vmatpush1.bf16.msra.mxu0 0
        %4912 = vmatprep.subr.bf16.mxu0 0
        %4913 = vmatpush1.bf16.msra.mxu0 0
        %4914 = vmatprep.subr.bf16.mxu0 0
        %4915 = vmatpush1.bf16.msra.mxu0 0
        %4916 = vmatprep.subr.bf16.mxu0 0
        %4917 = vmatpush1.bf16.msra.mxu0 0
        %4918 = vmatprep.subr.bf16.mxu0 0
        %4919 = vmatpush1.bf16.msra.mxu0 0
        %4920 = vmatprep.subr.bf16.mxu0 0
        %4921 = vmatpush1.bf16.msra.mxu0 0
        %4922 = vmatprep.subr.bf16.mxu0 0
        %4923 = vmatpush1.bf16.msra.mxu0 0
        %4924 = vmatprep.subr.bf16.mxu0 0
        %4925 = vmatpush1.bf16.msra.mxu0 0
        %4926 = vmatprep.subr.bf16.mxu0 0
        %4927 = vmatpush1.bf16.msra.mxu0 0
        %4928 = vmatprep.subr.bf16.mxu0 0
        %4929 = vmatpush1.bf16.msra.mxu0 0
        %4930 = vmatprep.subr.bf16.mxu0 0
        %4931 = vmatpush1.bf16.msra.mxu0 0
        %4932 = vmatprep.subr.bf16.mxu0 0
        %4933 = vmatpush1.bf16.msra.mxu0 0
        %4934 = vmatprep.mubr.bf16.mxu0 0
        %4935 = vmatmul.mubr.bf16.gmra.mrb[0].mxu0 %v4897
        %v4936 = vpop.f32.mrb[0].mxu0
        %v4937 = vadd.f32 0.0, %v4936
        %v4938 = vpop.f32.mrb[0].mxu0
        %v4939 = vpop.f32.mrb[0].mxu0
        %v4940 = vpop.f32.mrb[0].mxu0
        %4941 = vdwg.mxu0
        %4943 = vrot.lane.b32.xlu0 %v4776, 96
        %v4944 = vpop.permute.xlu0 %4943
        %v4946 = vsel %vm2271, %v4892, 0
        %v4949 = vsel %vm2396, %v4944, 0
        %4951 = vmatprep.subr.bf16.mxu0 0
        %4952 = vmatpush1.bf16.msra.mxu0 %v4949
        %4953 = vmatprep.subr.bf16.mxu0 0
        %4954 = vmatpush1.bf16.msra.mxu0 0
        %4955 = vmatprep.subr.bf16.mxu0 0
        %4956 = vmatpush1.bf16.msra.mxu0 0
        %4957 = vmatprep.subr.bf16.mxu0 0
        %4958 = vmatpush1.bf16.msra.mxu0 0
        %4959 = vmatprep.subr.bf16.mxu0 0
        %4960 = vmatpush1.bf16.msra.mxu0 0
        %4961 = vmatprep.subr.bf16.mxu0 0
        %4962 = vmatpush1.bf16.msra.mxu0 0
        %4963 = vmatprep.subr.bf16.mxu0 0
        %4964 = vmatpush1.bf16.msra.mxu0 0
        %4965 = vmatprep.subr.bf16.mxu0 0
        %4966 = vmatpush1.bf16.msra.mxu0 0
        %4967 = vmatprep.subr.bf16.mxu0 0
        %4968 = vmatpush1.bf16.msra.mxu0 0
        %4969 = vmatprep.subr.bf16.mxu0 0
        %4970 = vmatpush1.bf16.msra.mxu0 0
        %4971 = vmatprep.subr.bf16.mxu0 0
        %4972 = vmatpush1.bf16.msra.mxu0 0
        %4973 = vmatprep.subr.bf16.mxu0 0
        %4974 = vmatpush1.bf16.msra.mxu0 0
        %4975 = vmatprep.subr.bf16.mxu0 0
        %4976 = vmatpush1.bf16.msra.mxu0 0
        %4977 = vmatprep.subr.bf16.mxu0 0
        %4978 = vmatpush1.bf16.msra.mxu0 0
        %4979 = vmatprep.subr.bf16.mxu0 0
        %4980 = vmatpush1.bf16.msra.mxu0 0
        %4981 = vmatprep.subr.bf16.mxu0 0
        %4982 = vmatpush1.bf16.msra.mxu0 0
        %4983 = vmatprep.mubr.bf16.mxu0 0
        %4984 = vmatmul.mubr.bf16.gmra.mrb[0].mxu0 %v4946
        %v4985 = vpop.f32.mrb[0].mxu0
        %v4986 = vadd.f32 0.0, %v4985
        %v4987 = vpop.f32.mrb[0].mxu0
        %v4988 = vpop.f32.mrb[0].mxu0
        %v4989 = vpop.f32.mrb[0].mxu0
        %4990 = vdwg.mxu0
        %4992 = vrot.lane.b32.xlu0 %v4773, 120
        %v4993 = vpop.permute.xlu0 %4992
        %4994 = vrot.lane.b32.xlu0 %v4775, 120
        %v4995 = vpop.permute.xlu0 %4994
        %v4997 = vsel %vm2271, %v4993, 0
        %v5000 = vsel %vm2271, %v4995, 0
        %5002 = vmatprep.subr.bf16.mxu0 0
        %5003 = vmatpush1.bf16.xpose.msra.mxu0 %v5000
        %5004 = vmatprep.subr.bf16.mxu0 0
        %5005 = vmatpush1.bf16.xpose.msra.mxu0 0
        %5006 = vmatprep.subr.bf16.mxu0 0
        %5007 = vmatpush1.bf16.xpose.msra.mxu0 0
        %5008 = vmatprep.subr.bf16.mxu0 0
        %5009 = vmatpush1.bf16.xpose.msra.mxu0 0
        %5010 = vmatprep.subr.bf16.mxu0 0
        %5011 = vmatpush1.bf16.xpose.msra.mxu0 0
        %5012 = vmatprep.subr.bf16.mxu0 0
        %5013 = vmatpush1.bf16.xpose.msra.mxu0 0
        %5014 = vmatprep.subr.bf16.mxu0 0
        %5015 = vmatpush1.bf16.xpose.msra.mxu0 0
        %5016 = vmatprep.subr.bf16.mxu0 0
        %5017 = vmatpush1.bf16.xpose.msra.mxu0 0
        %5018 = vmatprep.subr.bf16.mxu0 0
        %5019 = vmatpush1.bf16.xpose.msra.mxu0 0
        %5020 = vmatprep.subr.bf16.mxu0 0
        %5021 = vmatpush1.bf16.xpose.msra.mxu0 0
        %5022 = vmatprep.subr.bf16.mxu0 0
        %5023 = vmatpush1.bf16.xpose.msra.mxu0 0
        %5024 = vmatprep.subr.bf16.mxu0 0
        %5025 = vmatpush1.bf16.xpose.msra.mxu0 0
        %5026 = vmatprep.subr.bf16.mxu0 0
        %5027 = vmatpush1.bf16.xpose.msra.mxu0 0
        %5028 = vmatprep.subr.bf16.mxu0 0
        %5029 = vmatpush1.bf16.xpose.msra.mxu0 0
        %5030 = vmatprep.subr.bf16.mxu0 0
        %5031 = vmatpush1.bf16.xpose.msra.mxu0 0
        %5032 = vmatprep.subr.bf16.mxu0 0
        %5033 = vmatpush1.bf16.xpose.msra.mxu0 0
        %5034 = vmatprep.mubr.bf16.mxu0 0
        %5035 = vmatmul.mubr.bf16.gmra.mrb[0].mxu0 %v4997
        %v5036 = vpop.f32.mrb[0].mxu0
        %v5037 = vadd.f32 0.0, %v5036
        %v5038 = vpop.f32.mrb[0].mxu0
        %v5039 = vpop.f32.mrb[0].mxu0
        %v5040 = vpop.f32.mrb[0].mxu0
        %5041 = vdwg.mxu0
        %5043 = vrot.lane.b32.xlu0 %v4774, 120
        %v5044 = vpop.permute.xlu0 %5043
        %5045 = vrot.lane.b32.xlu0 %v4776, 120
        %v5046 = vpop.permute.xlu0 %5045
        %v5048 = vsel %vm2271, %v5044, 0
        %v5051 = vsel %vm2271, %v5046, 0
        %5053 = vmatprep.subr.bf16.mxu0 0
        %5054 = vmatpush1.bf16.xpose.msra.mxu0 %v5051
        %5055 = vmatprep.subr.bf16.mxu0 0
        %5056 = vmatpush1.bf16.xpose.msra.mxu0 0
        %5057 = vmatprep.subr.bf16.mxu0 0
        %5058 = vmatpush1.bf16.xpose.msra.mxu0 0
        %5059 = vmatprep.subr.bf16.mxu0 0
        %5060 = vmatpush1.bf16.xpose.msra.mxu0 0
        %5061 = vmatprep.subr.bf16.mxu0 0
        %5062 = vmatpush1.bf16.xpose.msra.mxu0 0
        %5063 = vmatprep.subr.bf16.mxu0 0
        %5064 = vmatpush1.bf16.xpose.msra.mxu0 0
        %5065 = vmatprep.subr.bf16.mxu0 0
        %5066 = vmatpush1.bf16.xpose.msra.mxu0 0
        %5067 = vmatprep.subr.bf16.mxu0 0
        %5068 = vmatpush1.bf16.xpose.msra.mxu0 0
        %5069 = vmatprep.subr.bf16.mxu0 0
        %5070 = vmatpush1.bf16.xpose.msra.mxu0 0
        %5071 = vmatprep.subr.bf16.mxu0 0
        %5072 = vmatpush1.bf16.xpose.msra.mxu0 0
        %5073 = vmatprep.subr.bf16.mxu0 0
        %5074 = vmatpush1.bf16.xpose.msra.mxu0 0
        %5075 = vmatprep.subr.bf16.mxu0 0
        %5076 = vmatpush1.bf16.xpose.msra.mxu0 0
        %5077 = vmatprep.subr.bf16.mxu0 0
        %5078 = vmatpush1.bf16.xpose.msra.mxu0 0
        %5079 = vmatprep.subr.bf16.mxu0 0
        %5080 = vmatpush1.bf16.xpose.msra.mxu0 0
        %5081 = vmatprep.subr.bf16.mxu0 0
        %5082 = vmatpush1.bf16.xpose.msra.mxu0 0
        %5083 = vmatprep.subr.bf16.mxu0 0
        %5084 = vmatpush1.bf16.xpose.msra.mxu0 0
        %5085 = vmatprep.mubr.bf16.mxu0 0
        %5086 = vmatmul.mubr.bf16.gmra.mrb[0].mxu0 %v5048
        %v5087 = vpop.f32.mrb[0].mxu0
        %v5088 = vadd.f32 0.0, %v5087
        %v5089 = vpop.f32.mrb[0].mxu0
        %v5090 = vpop.f32.mrb[0].mxu0
        %v5091 = vpop.f32.mrb[0].mxu0
        %5092 = vdwg.mxu0
        %v5093 = vsel %vm2271, %v5037, -inf
        %5094 = vmax.xlane.f32.xlu0 %v5093
        %v5095 = vpop.xlane.xlu0 %5094
        %v5096 = vsel %vm2271, %v5088, -inf
        %5097 = vmax.xlane.f32.xlu0 %v5096
        %v5098 = vpop.xlane.xlu0 %5097
        %v5099 = vsub.f32 %v5037, %v5095
        %v5100 = vsub.f32 %v5088, %v5098
        %v5101 = vmul.f32 %v5099, 1.442695
        %v5102 = vpow.pop %v5101
        %v5103 = vmul.f32 %v5100, 1.442695
        %v5104 = vpow.pop %v5103
        %v5105 = vsel %vm2271, %v5102, 0.0
        %5106 = vadd.xlane.f32.xlu0 %v5105
        %v5107 = vpop.xlane.xlu0 %5106
        %v5108 = vsel %vm2271, %v5104, 0.0
        %5109 = vadd.xlane.f32.xlu0 %v5108
        %v5110 = vpop.xlane.xlu0 %5109
        %v5111 = vrcp.pop %v5107
        %v5112 = vrcp.pop %v5110
        %v5113 = vmul.f32 %v5102, %v5111
        %v5114 = vmul.f32 %v5104, %v5112
        %v5115 = vpack.c.bf16 %v5113, %v5113
        %v5116 = vpack.c.bf16 %v5114, %v5114
        %5117 = vrot.lane.b32.xlu0 %v4775, 88
        %v5118 = vpop.permute.xlu0 %5117
        %v5120 = vsel %vm2271, %v5115, 0
        %v5123 = vsel %vm2396, %v5118, 0
        %5125 = vmatprep.subr.bf16.mxu0 0
        %5126 = vmatpush1.bf16.msra.mxu0 %v5123
        %5127 = vmatprep.subr.bf16.mxu0 0
        %5128 = vmatpush1.bf16.msra.mxu0 0
        %5129 = vmatprep.subr.bf16.mxu0 0
        %5130 = vmatpush1.bf16.msra.mxu0 0
        %5131 = vmatprep.subr.bf16.mxu0 0
        %5132 = vmatpush1.bf16.msra.mxu0 0
        %5133 = vmatprep.subr.bf16.mxu0 0
        %5134 = vmatpush1.bf16.msra.mxu0 0
        %5135 = vmatprep.subr.bf16.mxu0 0
        %5136 = vmatpush1.bf16.msra.mxu0 0
        %5137 = vmatprep.subr.bf16.mxu0 0
        %5138 = vmatpush1.bf16.msra.mxu0 0
        %5139 = vmatprep.subr.bf16.mxu0 0
        %5140 = vmatpush1.bf16.msra.mxu0 0
        %5141 = vmatprep.subr.bf16.mxu0 0
        %5142 = vmatpush1.bf16.msra.mxu0 0
        %5143 = vmatprep.subr.bf16.mxu0 0
        %5144 = vmatpush1.bf16.msra.mxu0 0
        %5145 = vmatprep.subr.bf16.mxu0 0
        %5146 = vmatpush1.bf16.msra.mxu0 0
        %5147 = vmatprep.subr.bf16.mxu0 0
        %5148 = vmatpush1.bf16.msra.mxu0 0
        %5149 = vmatprep.subr.bf16.mxu0 0
        %5150 = vmatpush1.bf16.msra.mxu0 0
        %5151 = vmatprep.subr.bf16.mxu0 0
        %5152 = vmatpush1.bf16.msra.mxu0 0
        %5153 = vmatprep.subr.bf16.mxu0 0
        %5154 = vmatpush1.bf16.msra.mxu0 0
        %5155 = vmatprep.subr.bf16.mxu0 0
        %5156 = vmatpush1.bf16.msra.mxu0 0
        %5157 = vmatprep.mubr.bf16.mxu0 0
        %5158 = vmatmul.mubr.bf16.gmra.mrb[0].mxu0 %v5120
        %v5159 = vpop.f32.mrb[0].mxu0
        %v5160 = vadd.f32 0.0, %v5159
        %v5161 = vpop.f32.mrb[0].mxu0
        %v5162 = vpop.f32.mrb[0].mxu0
        %v5163 = vpop.f32.mrb[0].mxu0
        %5164 = vdwg.mxu0
        %5165 = vrot.lane.b32.xlu0 %v4776, 88
        %v5166 = vpop.permute.xlu0 %5165
        %v5168 = vsel %vm2271, %v5116, 0
        %v5171 = vsel %vm2396, %v5166, 0
        %5173 = vmatprep.subr.bf16.mxu0 0
        %5174 = vmatpush1.bf16.msra.mxu0 %v5171
        %5175 = vmatprep.subr.bf16.mxu0 0
        %5176 = vmatpush1.bf16.msra.mxu0 0
        %5177 = vmatprep.subr.bf16.mxu0 0
        %5178 = vmatpush1.bf16.msra.mxu0 0
        %5179 = vmatprep.subr.bf16.mxu0 0
        %5180 = vmatpush1.bf16.msra.mxu0 0
        %5181 = vmatprep.subr.bf16.mxu0 0
        %5182 = vmatpush1.bf16.msra.mxu0 0
        %5183 = vmatprep.subr.bf16.mxu0 0
        %5184 = vmatpush1.bf16.msra.mxu0 0
        %5185 = vmatprep.subr.bf16.mxu0 0
        %5186 = vmatpush1.bf16.msra.mxu0 0
        %5187 = vmatprep.subr.bf16.mxu0 0
        %5188 = vmatpush1.bf16.msra.mxu0 0
        %5189 = vmatprep.subr.bf16.mxu0 0
        %5190 = vmatpush1.bf16.msra.mxu0 0
        %5191 = vmatprep.subr.bf16.mxu0 0
        %5192 = vmatpush1.bf16.msra.mxu0 0
        %5193 = vmatprep.subr.bf16.mxu0 0
        %5194 = vmatpush1.bf16.msra.mxu0 0
        %5195 = vmatprep.subr.bf16.mxu0 0
        %5196 = vmatpush1.bf16.msra.mxu0 0
        %5197 = vmatprep.subr.bf16.mxu0 0
        %5198 = vmatpush1.bf16.msra.mxu0 0
        %5199 = vmatprep.subr.bf16.mxu0 0
        %5200 = vmatpush1.bf16.msra.mxu0 0
        %5201 = vmatprep.subr.bf16.mxu0 0
        %5202 = vmatpush1.bf16.msra.mxu0 0
        %5203 = vmatprep.subr.bf16.mxu0 0
        %5204 = vmatpush1.bf16.msra.mxu0 0
        %5205 = vmatprep.mubr.bf16.mxu0 0
        %5206 = vmatmul.mubr.bf16.gmra.mrb[0].mxu0 %v5168
        %v5207 = vpop.f32.mrb[0].mxu0
        %v5208 = vadd.f32 0.0, %v5207
        %v5209 = vpop.f32.mrb[0].mxu0
        %v5210 = vpop.f32.mrb[0].mxu0
        %v5211 = vpop.f32.mrb[0].mxu0
        %5212 = vdwg.mxu0
        %5213 = vrot.lane.b32.xlu0 %v4773, 112
        %v5214 = vpop.permute.xlu0 %5213
        %5215 = vrot.lane.b32.xlu0 %v4775, 112
        %v5216 = vpop.permute.xlu0 %5215
        %v5218 = vsel %vm2271, %v5214, 0
        %v5221 = vsel %vm2271, %v5216, 0
        %5223 = vmatprep.subr.bf16.mxu0 0
        %5224 = vmatpush1.bf16.xpose.msra.mxu0 %v5221
        %5225 = vmatprep.subr.bf16.mxu0 0
        %5226 = vmatpush1.bf16.xpose.msra.mxu0 0
        %5227 = vmatprep.subr.bf16.mxu0 0
        %5228 = vmatpush1.bf16.xpose.msra.mxu0 0
        %5229 = vmatprep.subr.bf16.mxu0 0
        %5230 = vmatpush1.bf16.xpose.msra.mxu0 0
        %5231 = vmatprep.subr.bf16.mxu0 0
        %5232 = vmatpush1.bf16.xpose.msra.mxu0 0
        %5233 = vmatprep.subr.bf16.mxu0 0
        %5234 = vmatpush1.bf16.xpose.msra.mxu0 0
        %5235 = vmatprep.subr.bf16.mxu0 0
        %5236 = vmatpush1.bf16.xpose.msra.mxu0 0
        %5237 = vmatprep.subr.bf16.mxu0 0
        %5238 = vmatpush1.bf16.xpose.msra.mxu0 0
        %5239 = vmatprep.subr.bf16.mxu0 0
        %5240 = vmatpush1.bf16.xpose.msra.mxu0 0
        %5241 = vmatprep.subr.bf16.mxu0 0
        %5242 = vmatpush1.bf16.xpose.msra.mxu0 0
        %5243 = vmatprep.subr.bf16.mxu0 0
        %5244 = vmatpush1.bf16.xpose.msra.mxu0 0
        %5245 = vmatprep.subr.bf16.mxu0 0
        %5246 = vmatpush1.bf16.xpose.msra.mxu0 0
        %5247 = vmatprep.subr.bf16.mxu0 0
        %5248 = vmatpush1.bf16.xpose.msra.mxu0 0
        %5249 = vmatprep.subr.bf16.mxu0 0
        %5250 = vmatpush1.bf16.xpose.msra.mxu0 0
        %5251 = vmatprep.subr.bf16.mxu0 0
        %5252 = vmatpush1.bf16.xpose.msra.mxu0 0
        %5253 = vmatprep.subr.bf16.mxu0 0
        %5254 = vmatpush1.bf16.xpose.msra.mxu0 0
        %5255 = vmatprep.mubr.bf16.mxu0 0
        %5256 = vmatmul.mubr.bf16.gmra.mrb[0].mxu0 %v5218
        %v5257 = vpop.f32.mrb[0].mxu0
        %v5258 = vadd.f32 0.0, %v5257
        %v5259 = vpop.f32.mrb[0].mxu0
        %v5260 = vpop.f32.mrb[0].mxu0
        %v5261 = vpop.f32.mrb[0].mxu0
        %5262 = vdwg.mxu0
        %5263 = vrot.lane.b32.xlu0 %v4774, 112
        %v5264 = vpop.permute.xlu0 %5263
        %5265 = vrot.lane.b32.xlu0 %v4776, 112
        %v5266 = vpop.permute.xlu0 %5265
        %v5268 = vsel %vm2271, %v5264, 0
        %v5271 = vsel %vm2271, %v5266, 0
        %5273 = vmatprep.subr.bf16.mxu0 0
        %5274 = vmatpush1.bf16.xpose.msra.mxu0 %v5271
        %5275 = vmatprep.subr.bf16.mxu0 0
        %5276 = vmatpush1.bf16.xpose.msra.mxu0 0
        %5277 = vmatprep.subr.bf16.mxu0 0
        %5278 = vmatpush1.bf16.xpose.msra.mxu0 0
        %5279 = vmatprep.subr.bf16.mxu0 0
        %5280 = vmatpush1.bf16.xpose.msra.mxu0 0
        %5281 = vmatprep.subr.bf16.mxu0 0
        %5282 = vmatpush1.bf16.xpose.msra.mxu0 0
        %5283 = vmatprep.subr.bf16.mxu0 0
        %5284 = vmatpush1.bf16.xpose.msra.mxu0 0
        %5285 = vmatprep.subr.bf16.mxu0 0
        %5286 = vmatpush1.bf16.xpose.msra.mxu0 0
        %5287 = vmatprep.subr.bf16.mxu0 0
        %5288 = vmatpush1.bf16.xpose.msra.mxu0 0
        %5289 = vmatprep.subr.bf16.mxu0 0
        %5290 = vmatpush1.bf16.xpose.msra.mxu0 0
        %5291 = vmatprep.subr.bf16.mxu0 0
        %5292 = vmatpush1.bf16.xpose.msra.mxu0 0
        %5293 = vmatprep.subr.bf16.mxu0 0
        %5294 = vmatpush1.bf16.xpose.msra.mxu0 0
        %5295 = vmatprep.subr.bf16.mxu0 0
        %5296 = vmatpush1.bf16.xpose.msra.mxu0 0
        %5297 = vmatprep.subr.bf16.mxu0 0
        %5298 = vmatpush1.bf16.xpose.msra.mxu0 0
        %5299 = vmatprep.subr.bf16.mxu0 0
        %5300 = vmatpush1.bf16.xpose.msra.mxu0 0
        %5301 = vmatprep.subr.bf16.mxu0 0
        %5302 = vmatpush1.bf16.xpose.msra.mxu0 0
        %5303 = vmatprep.subr.bf16.mxu0 0
        %5304 = vmatpush1.bf16.xpose.msra.mxu0 0
        %5305 = vmatprep.mubr.bf16.mxu0 0
        %5306 = vmatmul.mubr.bf16.gmra.mrb[0].mxu0 %v5268
        %v5307 = vpop.f32.mrb[0].mxu0
        %v5308 = vadd.f32 0.0, %v5307
        %v5309 = vpop.f32.mrb[0].mxu0
        %v5310 = vpop.f32.mrb[0].mxu0
        %v5311 = vpop.f32.mrb[0].mxu0
        %5312 = vdwg.mxu0
        %v5313 = vsel %vm2271, %v5258, -inf
        %5314 = vmax.xlane.f32.xlu0 %v5313
        %v5315 = vpop.xlane.xlu0 %5314
        %v5316 = vsel %vm2271, %v5308, -inf
        %5317 = vmax.xlane.f32.xlu0 %v5316
        %v5318 = vpop.xlane.xlu0 %5317
        %v5319 = vsub.f32 %v5258, %v5315
        %v5320 = vsub.f32 %v5308, %v5318
        %v5321 = vmul.f32 %v5319, 1.442695
        %v5322 = vpow.pop %v5321
        %v5323 = vmul.f32 %v5320, 1.442695
        %v5324 = vpow.pop %v5323
        %v5325 = vsel %vm2271, %v5322, 0.0
        %5326 = vadd.xlane.f32.xlu0 %v5325
        %v5327 = vpop.xlane.xlu0 %5326
        %v5328 = vsel %vm2271, %v5324, 0.0
        %5329 = vadd.xlane.f32.xlu0 %v5328
        %v5330 = vpop.xlane.xlu0 %5329
        %v5331 = vrcp.pop %v5327
        %v5332 = vrcp.pop %v5330
        %v5333 = vmul.f32 %v5322, %v5331
        %v5334 = vmul.f32 %v5324, %v5332
        %v5335 = vpack.c.bf16 %v5333, %v5333
        %v5336 = vpack.c.bf16 %v5334, %v5334
        %5337 = vrot.lane.b32.xlu0 %v4775, 80
        %v5338 = vpop.permute.xlu0 %5337
        %v5340 = vsel %vm2271, %v5335, 0
        %v5343 = vsel %vm2396, %v5338, 0
        %5345 = vmatprep.subr.bf16.mxu0 0
        %5346 = vmatpush1.bf16.msra.mxu0 %v5343
        %5347 = vmatprep.subr.bf16.mxu0 0
        %5348 = vmatpush1.bf16.msra.mxu0 0
        %5349 = vmatprep.subr.bf16.mxu0 0
        %5350 = vmatpush1.bf16.msra.mxu0 0
        %5351 = vmatprep.subr.bf16.mxu0 0
        %5352 = vmatpush1.bf16.msra.mxu0 0
        %5353 = vmatprep.subr.bf16.mxu0 0
        %5354 = vmatpush1.bf16.msra.mxu0 0
        %5355 = vmatprep.subr.bf16.mxu0 0
        %5356 = vmatpush1.bf16.msra.mxu0 0
        %5357 = vmatprep.subr.bf16.mxu0 0
        %5358 = vmatpush1.bf16.msra.mxu0 0
        %5359 = vmatprep.subr.bf16.mxu0 0
        %5360 = vmatpush1.bf16.msra.mxu0 0
        %5361 = vmatprep.subr.bf16.mxu0 0
        %5362 = vmatpush1.bf16.msra.mxu0 0
        %5363 = vmatprep.subr.bf16.mxu0 0
        %5364 = vmatpush1.bf16.msra.mxu0 0
        %5365 = vmatprep.subr.bf16.mxu0 0
        %5366 = vmatpush1.bf16.msra.mxu0 0
        %5367 = vmatprep.subr.bf16.mxu0 0
        %5368 = vmatpush1.bf16.msra.mxu0 0
        %5369 = vmatprep.subr.bf16.mxu0 0
        %5370 = vmatpush1.bf16.msra.mxu0 0
        %5371 = vmatprep.subr.bf16.mxu0 0
        %5372 = vmatpush1.bf16.msra.mxu0 0
        %5373 = vmatprep.subr.bf16.mxu0 0
        %5374 = vmatpush1.bf16.msra.mxu0 0
        %5375 = vmatprep.subr.bf16.mxu0 0
        %5376 = vmatpush1.bf16.msra.mxu0 0
        %5377 = vmatprep.mubr.bf16.mxu0 0
        %5378 = vmatmul.mubr.bf16.gmra.mrb[0].mxu0 %v5340
        %v5379 = vpop.f32.mrb[0].mxu0
        %v5380 = vadd.f32 0.0, %v5379
        %v5381 = vpop.f32.mrb[0].mxu0
        %v5382 = vpop.f32.mrb[0].mxu0
        %v5383 = vpop.f32.mrb[0].mxu0
        %5384 = vdwg.mxu0
        %5385 = vrot.lane.b32.xlu0 %v4776, 80
        %v5386 = vpop.permute.xlu0 %5385
        %v5388 = vsel %vm2271, %v5336, 0
        %v5391 = vsel %vm2396, %v5386, 0
        %5393 = vmatprep.subr.bf16.mxu0 0
        %5394 = vmatpush1.bf16.msra.mxu0 %v5391
        %5395 = vmatprep.subr.bf16.mxu0 0
        %5396 = vmatpush1.bf16.msra.mxu0 0
        %5397 = vmatprep.subr.bf16.mxu0 0
        %5398 = vmatpush1.bf16.msra.mxu0 0
        %5399 = vmatprep.subr.bf16.mxu0 0
        %5400 = vmatpush1.bf16.msra.mxu0 0
        %5401 = vmatprep.subr.bf16.mxu0 0
        %5402 = vmatpush1.bf16.msra.mxu0 0
        %5403 = vmatprep.subr.bf16.mxu0 0
        %5404 = vmatpush1.bf16.msra.mxu0 0
        %5405 = vmatprep.subr.bf16.mxu0 0
        %5406 = vmatpush1.bf16.msra.mxu0 0
        %5407 = vmatprep.subr.bf16.mxu0 0
        %5408 = vmatpush1.bf16.msra.mxu0 0
        %5409 = vmatprep.subr.bf16.mxu0 0
        %5410 = vmatpush1.bf16.msra.mxu0 0
        %5411 = vmatprep.subr.bf16.mxu0 0
        %5412 = vmatpush1.bf16.msra.mxu0 0
        %5413 = vmatprep.subr.bf16.mxu0 0
        %5414 = vmatpush1.bf16.msra.mxu0 0
        %5415 = vmatprep.subr.bf16.mxu0 0
        %5416 = vmatpush1.bf16.msra.mxu0 0
        %5417 = vmatprep.subr.bf16.mxu0 0
        %5418 = vmatpush1.bf16.msra.mxu0 0
        %5419 = vmatprep.subr.bf16.mxu0 0
        %5420 = vmatpush1.bf16.msra.mxu0 0
        %5421 = vmatprep.subr.bf16.mxu0 0
        %5422 = vmatpush1.bf16.msra.mxu0 0
        %5423 = vmatprep.subr.bf16.mxu0 0
        %5424 = vmatpush1.bf16.msra.mxu0 0
        %5425 = vmatprep.mubr.bf16.mxu0 0
        %5426 = vmatmul.mubr.bf16.gmra.mrb[0].mxu0 %v5388
        %v5427 = vpop.f32.mrb[0].mxu0
        %v5428 = vadd.f32 0.0, %v5427
        %v5429 = vpop.f32.mrb[0].mxu0
        %v5430 = vpop.f32.mrb[0].mxu0
        %v5431 = vpop.f32.mrb[0].mxu0
        %5432 = vdwg.mxu0
        %5433 = vrot.lane.b32.xlu0 %v4773, 104
        %v5434 = vpop.permute.xlu0 %5433
        %5435 = vrot.lane.b32.xlu0 %v4775, 104
        %v5436 = vpop.permute.xlu0 %5435
        %v5438 = vsel %vm2271, %v5434, 0
        %v5441 = vsel %vm2271, %v5436, 0
        %5443 = vmatprep.subr.bf16.mxu0 0
        %5444 = vmatpush1.bf16.xpose.msra.mxu0 %v5441
        %5445 = vmatprep.subr.bf16.mxu0 0
        %5446 = vmatpush1.bf16.xpose.msra.mxu0 0
        %5447 = vmatprep.subr.bf16.mxu0 0
        %5448 = vmatpush1.bf16.xpose.msra.mxu0 0
        %5449 = vmatprep.subr.bf16.mxu0 0
        %5450 = vmatpush1.bf16.xpose.msra.mxu0 0
        %5451 = vmatprep.subr.bf16.mxu0 0
        %5452 = vmatpush1.bf16.xpose.msra.mxu0 0
        %5453 = vmatprep.subr.bf16.mxu0 0
        %5454 = vmatpush1.bf16.xpose.msra.mxu0 0
        %5455 = vmatprep.subr.bf16.mxu0 0
        %5456 = vmatpush1.bf16.xpose.msra.mxu0 0
        %5457 = vmatprep.subr.bf16.mxu0 0
        %5458 = vmatpush1.bf16.xpose.msra.mxu0 0
        %5459 = vmatprep.subr.bf16.mxu0 0
        %5460 = vmatpush1.bf16.xpose.msra.mxu0 0
        %5461 = vmatprep.subr.bf16.mxu0 0
        %5462 = vmatpush1.bf16.xpose.msra.mxu0 0
        %5463 = vmatprep.subr.bf16.mxu0 0
        %5464 = vmatpush1.bf16.xpose.msra.mxu0 0
        %5465 = vmatprep.subr.bf16.mxu0 0
        %5466 = vmatpush1.bf16.xpose.msra.mxu0 0
        %5467 = vmatprep.subr.bf16.mxu0 0
        %5468 = vmatpush1.bf16.xpose.msra.mxu0 0
        %5469 = vmatprep.subr.bf16.mxu0 0
        %5470 = vmatpush1.bf16.xpose.msra.mxu0 0
        %5471 = vmatprep.subr.bf16.mxu0 0
        %5472 = vmatpush1.bf16.xpose.msra.mxu0 0
        %5473 = vmatprep.subr.bf16.mxu0 0
        %5474 = vmatpush1.bf16.xpose.msra.mxu0 0
        %5475 = vmatprep.mubr.bf16.mxu0 0
        %5476 = vmatmul.mubr.bf16.gmra.mrb[0].mxu0 %v5438
        %v5477 = vpop.f32.mrb[0].mxu0
        %v5478 = vadd.f32 0.0, %v5477
        %v5479 = vpop.f32.mrb[0].mxu0
        %v5480 = vpop.f32.mrb[0].mxu0
        %v5481 = vpop.f32.mrb[0].mxu0
        %5482 = vdwg.mxu0
        %5483 = vrot.lane.b32.xlu0 %v4774, 104
        %v5484 = vpop.permute.xlu0 %5483
        %5485 = vrot.lane.b32.xlu0 %v4776, 104
        %v5486 = vpop.permute.xlu0 %5485
        %v5488 = vsel %vm2271, %v5484, 0
        %v5491 = vsel %vm2271, %v5486, 0
        %5493 = vmatprep.subr.bf16.mxu0 0
        %5494 = vmatpush1.bf16.xpose.msra.mxu0 %v5491
        %5495 = vmatprep.subr.bf16.mxu0 0
        %5496 = vmatpush1.bf16.xpose.msra.mxu0 0
        %5497 = vmatprep.subr.bf16.mxu0 0
        %5498 = vmatpush1.bf16.xpose.msra.mxu0 0
        %5499 = vmatprep.subr.bf16.mxu0 0
        %5500 = vmatpush1.bf16.xpose.msra.mxu0 0
        %5501 = vmatprep.subr.bf16.mxu0 0
        %5502 = vmatpush1.bf16.xpose.msra.mxu0 0
        %5503 = vmatprep.subr.bf16.mxu0 0
        %5504 = vmatpush1.bf16.xpose.msra.mxu0 0
        %5505 = vmatprep.subr.bf16.mxu0 0
        %5506 = vmatpush1.bf16.xpose.msra.mxu0 0
        %5507 = vmatprep.subr.bf16.mxu0 0
        %5508 = vmatpush1.bf16.xpose.msra.mxu0 0
        %5509 = vmatprep.subr.bf16.mxu0 0
        %5510 = vmatpush1.bf16.xpose.msra.mxu0 0
        %5511 = vmatprep.subr.bf16.mxu0 0
        %5512 = vmatpush1.bf16.xpose.msra.mxu0 0
        %5513 = vmatprep.subr.bf16.mxu0 0
        %5514 = vmatpush1.bf16.xpose.msra.mxu0 0
        %5515 = vmatprep.subr.bf16.mxu0 0
        %5516 = vmatpush1.bf16.xpose.msra.mxu0 0
        %5517 = vmatprep.subr.bf16.mxu0 0
        %5518 = vmatpush1.bf16.xpose.msra.mxu0 0
        %5519 = vmatprep.subr.bf16.mxu0 0
        %5520 = vmatpush1.bf16.xpose.msra.mxu0 0
        %5521 = vmatprep.subr.bf16.mxu0 0
        %5522 = vmatpush1.bf16.xpose.msra.mxu0 0
        %5523 = vmatprep.subr.bf16.mxu0 0
        %5524 = vmatpush1.bf16.xpose.msra.mxu0 0
        %5525 = vmatprep.mubr.bf16.mxu0 0
        %5526 = vmatmul.mubr.bf16.gmra.mrb[0].mxu0 %v5488
        %v5527 = vpop.f32.mrb[0].mxu0
        %v5528 = vadd.f32 0.0, %v5527
        %v5529 = vpop.f32.mrb[0].mxu0
        %v5530 = vpop.f32.mrb[0].mxu0
        %v5531 = vpop.f32.mrb[0].mxu0
        %5532 = vdwg.mxu0
        %v5533 = vsel %vm2271, %v5478, -inf
        %5534 = vmax.xlane.f32.xlu0 %v5533
        %v5535 = vpop.xlane.xlu0 %5534
        %v5536 = vsel %vm2271, %v5528, -inf
        %5537 = vmax.xlane.f32.xlu0 %v5536
        %v5538 = vpop.xlane.xlu0 %5537
        %v5539 = vsub.f32 %v5478, %v5535
        %v5540 = vsub.f32 %v5528, %v5538
        %v5541 = vmul.f32 %v5539, 1.442695
        %v5542 = vpow.pop %v5541
        %v5543 = vmul.f32 %v5540, 1.442695
        %v5544 = vpow.pop %v5543
        %v5545 = vsel %vm2271, %v5542, 0.0
        %5546 = vadd.xlane.f32.xlu0 %v5545
        %v5547 = vpop.xlane.xlu0 %5546
        %v5548 = vsel %vm2271, %v5544, 0.0
        %5549 = vadd.xlane.f32.xlu0 %v5548
        %v5550 = vpop.xlane.xlu0 %5549
        %v5551 = vrcp.pop %v5547
        %v5552 = vrcp.pop %v5550
        %v5553 = vmul.f32 %v5542, %v5551
        %v5554 = vmul.f32 %v5544, %v5552
        %v5555 = vpack.c.bf16 %v5553, %v5553
        %v5556 = vpack.c.bf16 %v5554, %v5554
        %5557 = vrot.lane.b32.xlu0 %v4775, 72
        %v5558 = vpop.permute.xlu0 %5557
        %v5560 = vsel %vm2271, %v5555, 0
        %v5563 = vsel %vm2396, %v5558, 0
        %5565 = vmatprep.subr.bf16.mxu0 0
        %5566 = vmatpush1.bf16.msra.mxu0 %v5563
        %5567 = vmatprep.subr.bf16.mxu0 0
        %5568 = vmatpush1.bf16.msra.mxu0 0
        %5569 = vmatprep.subr.bf16.mxu0 0
        %5570 = vmatpush1.bf16.msra.mxu0 0
        %5571 = vmatprep.subr.bf16.mxu0 0
        %5572 = vmatpush1.bf16.msra.mxu0 0
        %5573 = vmatprep.subr.bf16.mxu0 0
        %5574 = vmatpush1.bf16.msra.mxu0 0
        %5575 = vmatprep.subr.bf16.mxu0 0
        %5576 = vmatpush1.bf16.msra.mxu0 0
        %5577 = vmatprep.subr.bf16.mxu0 0
        %5578 = vmatpush1.bf16.msra.mxu0 0
        %5579 = vmatprep.subr.bf16.mxu0 0
        %5580 = vmatpush1.bf16.msra.mxu0 0
        %5581 = vmatprep.subr.bf16.mxu0 0
        %5582 = vmatpush1.bf16.msra.mxu0 0
        %5583 = vmatprep.subr.bf16.mxu0 0
        %5584 = vmatpush1.bf16.msra.mxu0 0
        %5585 = vmatprep.subr.bf16.mxu0 0
        %5586 = vmatpush1.bf16.msra.mxu0 0
        %5587 = vmatprep.subr.bf16.mxu0 0
        %5588 = vmatpush1.bf16.msra.mxu0 0
        %5589 = vmatprep.subr.bf16.mxu0 0
        %5590 = vmatpush1.bf16.msra.mxu0 0
        %5591 = vmatprep.subr.bf16.mxu0 0
        %5592 = vmatpush1.bf16.msra.mxu0 0
        %5593 = vmatprep.subr.bf16.mxu0 0
        %5594 = vmatpush1.bf16.msra.mxu0 0
        %5595 = vmatprep.subr.bf16.mxu0 0
        %5596 = vmatpush1.bf16.msra.mxu0 0
        %5597 = vmatprep.mubr.bf16.mxu0 0
        %5598 = vmatmul.mubr.bf16.gmra.mrb[0].mxu0 %v5560
        %v5599 = vpop.f32.mrb[0].mxu0
        %v5600 = vadd.f32 0.0, %v5599
        %v5601 = vpop.f32.mrb[0].mxu0
        %v5602 = vpop.f32.mrb[0].mxu0
        %v5603 = vpop.f32.mrb[0].mxu0
        %5604 = vdwg.mxu0
        %5605 = vrot.lane.b32.xlu0 %v4776, 72
        %v5606 = vpop.permute.xlu0 %5605
        %v5608 = vsel %vm2271, %v5556, 0
        %v5611 = vsel %vm2396, %v5606, 0
        %5613 = vmatprep.subr.bf16.mxu0 0
        %5614 = vmatpush1.bf16.msra.mxu0 %v5611
        %5615 = vmatprep.subr.bf16.mxu0 0
        %5616 = vmatpush1.bf16.msra.mxu0 0
        %5617 = vmatprep.subr.bf16.mxu0 0
        %5618 = vmatpush1.bf16.msra.mxu0 0
        %5619 = vmatprep.subr.bf16.mxu0 0
        %5620 = vmatpush1.bf16.msra.mxu0 0
        %5621 = vmatprep.subr.bf16.mxu0 0
        %5622 = vmatpush1.bf16.msra.mxu0 0
        %5623 = vmatprep.subr.bf16.mxu0 0
        %5624 = vmatpush1.bf16.msra.mxu0 0
        %5625 = vmatprep.subr.bf16.mxu0 0
        %5626 = vmatpush1.bf16.msra.mxu0 0
        %5627 = vmatprep.subr.bf16.mxu0 0
        %5628 = vmatpush1.bf16.msra.mxu0 0
        %5629 = vmatprep.subr.bf16.mxu0 0
        %5630 = vmatpush1.bf16.msra.mxu0 0
        %5631 = vmatprep.subr.bf16.mxu0 0
        %5632 = vmatpush1.bf16.msra.mxu0 0
        %5633 = vmatprep.subr.bf16.mxu0 0
        %5634 = vmatpush1.bf16.msra.mxu0 0
        %5635 = vmatprep.subr.bf16.mxu0 0
        %5636 = vmatpush1.bf16.msra.mxu0 0
        %5637 = vmatprep.subr.bf16.mxu0 0
        %5638 = vmatpush1.bf16.msra.mxu0 0
        %5639 = vmatprep.subr.bf16.mxu0 0
        %5640 = vmatpush1.bf16.msra.mxu0 0
        %5641 = vmatprep.subr.bf16.mxu0 0
        %5642 = vmatpush1.bf16.msra.mxu0 0
        %5643 = vmatprep.subr.bf16.mxu0 0
        %5644 = vmatpush1.bf16.msra.mxu0 0
        %5645 = vmatprep.mubr.bf16.mxu0 0
        %5646 = vmatmul.mubr.bf16.gmra.mrb[0].mxu0 %v5608
        %v5647 = vpop.f32.mrb[0].mxu0
        %v5648 = vadd.f32 0.0, %v5647
        %v5649 = vpop.f32.mrb[0].mxu0
        %v5650 = vpop.f32.mrb[0].mxu0
        %v5651 = vpop.f32.mrb[0].mxu0
        %5652 = vdwg.mxu0
        %5655 = vrot.lane.b32.xlu0 %v5160, 8
        %v5656 = vpop.permute.xlu0 %5655
        %5657 = vrot.lane.b32.xlu0 %v5208, 8
        %v5658 = vpop.permute.xlu0 %5657
        %5663 = vrot.lane.b32.xlu0 %v5380, 16
        %v5664 = vpop.permute.xlu0 %5663
        %5665 = vrot.lane.b32.xlu0 %v5428, 16
        %v5666 = vpop.permute.xlu0 %5665
        %5671 = vrot.lane.b32.xlu0 %v5600, 24
        %v5672 = vpop.permute.xlu0 %5671
        %5673 = vrot.lane.b32.xlu0 %v5648, 24
        %v5674 = vpop.permute.xlu0 %5673
        %v5677 = vsel %vm2271, %v4937, %v5656
        %v5678 = vsel %vm2271, %v4986, %v5658
        %v5679 = vsel %vm3176, %v5677, %v5664
        %v5680 = vsel %vm3176, %v5678, %v5666
        %v5681 = vsel %vm3179, %v5679, %v5672
        %v5682 = vsel %vm3179, %v5680, %v5674
        %v5683 = vpack.c.bf16 %v5682, %v5681
        %v5684 = vld [vmem:[%s35] sm:$0xf]
        %v5685 = vld [vmem:[%s35 + $0x4] sm:$0xf]
        %v5686 = vld [vmem:[%s35 + $0x8] sm:$0xf]
        %v5687 = vld [vmem:[%s35 + $0xc] sm:$0xf]
        %v5688 = vld [vmem:[%s29] sm:$0x1]
        %v5690 = vlaneseq
        %v5691 = vshrl.u32 %v5690, 7
        %v5692 = vsub.s32 0, %v5691
        %v5693 = vrot.slane %v5688, %v5692
        %v5699 = vunpack.c.l.b16 %v5684
        %v5700 = vunpack.c.l.b16 %v5685
        %v5701 = vunpack.c.l.b16 %v5686
        %v5702 = vunpack.c.l.b16 %v5687
        %v5703 = vpack.c.b16 %v5700, %v5699
        %v5704 = vpack.c.b16 %v5702, %v5701
        %v5708 = vsel %vm1826, %v5683, 0
        %5710 = vmatprep.subr.bf16.mxu0 0
        %5711 = vmatpush1.bf16.msra.mxu0 %v5703
        %5712 = vmatprep.subr.bf16.mxu0 0
        %5713 = vmatpush1.bf16.msra.mxu0 %v5704
        %5714 = vmatprep.subr.bf16.mxu0 0
        %5715 = vmatpush1.bf16.msra.mxu0 0
        %5716 = vmatprep.subr.bf16.mxu0 0
        %5717 = vmatpush1.bf16.msra.mxu0 0
        %5718 = vmatprep.subr.bf16.mxu0 0
        %5719 = vmatpush1.bf16.msra.mxu0 0
        %5720 = vmatprep.subr.bf16.mxu0 0
        %5721 = vmatpush1.bf16.msra.mxu0 0
        %5722 = vmatprep.subr.bf16.mxu0 0
        %5723 = vmatpush1.bf16.msra.mxu0 0
        %5724 = vmatprep.subr.bf16.mxu0 0
        %5725 = vmatpush1.bf16.msra.mxu0 0
        %5726 = vmatprep.subr.bf16.mxu0 0
        %5727 = vmatpush1.bf16.msra.mxu0 0
        %5728 = vmatprep.subr.bf16.mxu0 0
        %5729 = vmatpush1.bf16.msra.mxu0 0
        %5730 = vmatprep.subr.bf16.mxu0 0
        %5731 = vmatpush1.bf16.msra.mxu0 0
        %5732 = vmatprep.subr.bf16.mxu0 0
        %5733 = vmatpush1.bf16.msra.mxu0 0
        %5734 = vmatprep.subr.bf16.mxu0 0
        %5735 = vmatpush1.bf16.msra.mxu0 0
        %5736 = vmatprep.subr.bf16.mxu0 0
        %5737 = vmatpush1.bf16.msra.mxu0 0
        %5738 = vmatprep.subr.bf16.mxu0 0
        %5739 = vmatpush1.bf16.msra.mxu0 0
        %5740 = vmatprep.subr.bf16.mxu0 0
        %5741 = vmatpush1.bf16.msra.mxu0 0
        %5742 = vmatprep.mubr.bf16.mxu0 0
        %5743 = vmatmul.mubr.bf16.gmra.mrb[0].mxu0 %v5708
        %v5744 = vpop.f32.mrb[0].mxu0
        %v5745 = vadd.f32 %v5693, %v5744
        %v5746 = vpop.f32.mrb[0].mxu0
        %v5747 = vpop.f32.mrb[0].mxu0
        %v5748 = vadd.f32 %v5693, %v5747
        %v5749 = vpop.f32.mrb[0].mxu0
        %5750 = vdwg.mxu0
        %v5751 = vadd.f32 %v4633, %v5745
        %v5752 = vadd.f32 %v4634, %v5748
        %v5753 = vsel %vm1826, %v5751, 0.0
        %5754 = vadd.xlane.f32.xlu0 %v5753
        %v5755 = vpop.xlane.xlu0 %5754
        %v5756 = vsel %vm1826, %v5752, 0.0
        %5757 = vadd.xlane.f32.xlu0 %v5756
        %v5758 = vpop.xlane.xlu0 %5757
        %v5759 = vmul.f32 %v5755, %v1877
        %v5760 = vmul.f32 %v5758, %v1877
        %v5761 = vsub.f32 %v5751, %v5759
        %v5762 = vsub.f32 %v5752, %v5760
        %v5763 = vmul.f32 %v5761, %v5761
        %v5764 = vmul.f32 %v5762, %v5762
        %v5765 = vsel %vm1826, %v5763, 0.0
        %5766 = vadd.xlane.f32.xlu0 %v5765
        %v5767 = vpop.xlane.xlu0 %5766
        %v5768 = vsel %vm1826, %v5764, 0.0
        %5769 = vadd.xlane.f32.xlu0 %v5768
        %v5770 = vpop.xlane.xlu0 %5769
        %v5771 = vmul.f32 %v5767, %v1877
        %v5772 = vmul.f32 %v5770, %v1877
        %v5773 = vadd.f32 %v5771, 1e-05
        %v5774 = vadd.f32 %v5772, 1e-05
        %v5775 = vrsqrt.pop %v5773
        %v5776 = vrsqrt.pop %v5774
        %v5777 = vmul.f32 %v5761, %v5775
        %v5778 = vmul.f32 %v5762, %v5776
        %v5779 = vld [vmem:[%s53] sm:$0x1]
        %v5781 = vlaneseq
        %v5782 = vshrl.u32 %v5781, 7
        %v5783 = vsub.s32 0, %v5782
        %v5784 = vrot.slane %v5779, %v5783
        %v5786 = vmul.f32 %v5777, %v5784
        %v5787 = vmul.f32 %v5778, %v5784
        %v5788 = vld [vmem:[%s51] sm:$0x1]
        %v5790 = vlaneseq
        %v5791 = vshrl.u32 %v5790, 7
        %v5792 = vsub.s32 0, %v5791
        %v5793 = vrot.slane %v5788, %v5792
        %v5795 = vadd.f32 %v5786, %v5793
        %v5796 = vadd.f32 %v5787, %v5793
        %v5797 = vpack.c.bf16 %v5796, %v5795
        %v5798 = vld [vmem:[%s41] sm:$0xf]
        %v5799 = vld [vmem:[%s41 + $0x4] sm:$0xf]
        %v5800 = vld [vmem:[%s41 + $0x8] sm:$0xf]
        %v5801 = vld [vmem:[%s41 + $0xc] sm:$0xf]
        %v5802 = vld [vmem:[%s39] sm:$0x1]
        %v5804 = vlaneseq
        %v5805 = vshrl.u32 %v5804, 7
        %v5806 = vsub.s32 0, %v5805
        %v5807 = vrot.slane %v5802, %v5806
        %v5813 = vunpack.c.l.b16 %v5798
        %v5814 = vunpack.c.l.b16 %v5799
        %v5815 = vunpack.c.l.b16 %v5800
        %v5816 = vunpack.c.l.b16 %v5801
        %v5817 = vpack.c.b16 %v5814, %v5813
        %v5818 = vpack.c.b16 %v5816, %v5815
        %v5822 = vsel %vm1826, %v5797, 0
        %5824 = vmatprep.subr.bf16.mxu0 0
        %5825 = vmatpush1.bf16.msra.mxu0 %v5817
        %5826 = vmatprep.subr.bf16.mxu0 0
        %5827 = vmatpush1.bf16.msra.mxu0 %v5818
        %5828 = vmatprep.subr.bf16.mxu0 0
        %5829 = vmatpush1.bf16.msra.mxu0 0
        %5830 = vmatprep.subr.bf16.mxu0 0
        %5831 = vmatpush1.bf16.msra.mxu0 0
        %5832 = vmatprep.subr.bf16.mxu0 0
        %5833 = vmatpush1.bf16.msra.mxu0 0
        %5834 = vmatprep.subr.bf16.mxu0 0
        %5835 = vmatpush1.bf16.msra.mxu0 0
        %5836 = vmatprep.subr.bf16.mxu0 0
        %5837 = vmatpush1.bf16.msra.mxu0 0
        %5838 = vmatprep.subr.bf16.mxu0 0
        %5839 = vmatpush1.bf16.msra.mxu0 0
        %5840 = vmatprep.subr.bf16.mxu0 0
        %5841 = vmatpush1.bf16.msra.mxu0 0
        %5842 = vmatprep.subr.bf16.mxu0 0
        %5843 = vmatpush1.bf16.msra.mxu0 0
        %5844 = vmatprep.subr.bf16.mxu0 0
        %5845 = vmatpush1.bf16.msra.mxu0 0
        %5846 = vmatprep.subr.bf16.mxu0 0
        %5847 = vmatpush1.bf16.msra.mxu0 0
        %5848 = vmatprep.subr.bf16.mxu0 0
        %5849 = vmatpush1.bf16.msra.mxu0 0
        %5850 = vmatprep.subr.bf16.mxu0 0
        %5851 = vmatpush1.bf16.msra.mxu0 0
        %5852 = vmatprep.subr.bf16.mxu0 0
        %5853 = vmatpush1.bf16.msra.mxu0 0
        %5854 = vmatprep.subr.bf16.mxu0 0
        %5855 = vmatpush1.bf16.msra.mxu0 0
        %5856 = vmatprep.mubr.bf16.mxu0 0
        %5857 = vmatmul.mubr.bf16.gmra.mrb[0].mxu0 %v5822
        %v5858 = vpop.f32.mrb[0].mxu0
        %v5859 = vadd.f32 %v5807, %v5858
        %v5860 = vpop.f32.mrb[0].mxu0
        %v5861 = vpop.f32.mrb[0].mxu0
        %v5862 = vadd.f32 %v5807, %v5861
        %v5863 = vpop.f32.mrb[0].mxu0
        %5864 = vdwg.mxu0
        %v5865 = vmax.f32 %v5859, 0.0
        %v5866 = vmax.f32 %v5862, 0.0
        %v5867 = vpack.c.bf16 %v5866, %v5865
        %v5868 = vld [vmem:[%s45] sm:$0xf]
        %v5869 = vld [vmem:[%s45 + $0x4] sm:$0xf]
        %v5870 = vld [vmem:[%s45 + $0x8] sm:$0xf]
        %v5871 = vld [vmem:[%s45 + $0xc] sm:$0xf]
        %v5872 = vld [vmem:[%s45 + $0x10] sm:$0xf]
        %v5873 = vld [vmem:[%s45 + $0x14] sm:$0xf]
        %v5874 = vld [vmem:[%s45 + $0x18] sm:$0xf]
        %v5875 = vld [vmem:[%s45 + $0x1c] sm:$0xf]
        %v5876 = vld [vmem:[%s43] sm:$0x1]
        %v5878 = vlaneseq
        %v5879 = vshrl.u32 %v5878, 7
        %v5880 = vsub.s32 0, %v5879
        %v5881 = vrot.slane %v5876, %v5880
        %v5891 = vunpack.c.l.b16 %v5868
        %v5892 = vunpack.c.l.b16 %v5869
        %v5893 = vunpack.c.l.b16 %v5870
        %v5894 = vunpack.c.l.b16 %v5871
        %v5895 = vunpack.c.l.b16 %v5872
        %v5896 = vunpack.c.l.b16 %v5873
        %v5897 = vunpack.c.l.b16 %v5874
        %v5898 = vunpack.c.l.b16 %v5875
        %v5899 = vpack.c.b16 %v5892, %v5891
        %v5900 = vpack.c.b16 %v5894, %v5893
        %v5901 = vpack.c.b16 %v5896, %v5895
        %v5902 = vpack.c.b16 %v5898, %v5897
        %v5908 = vsel %vm3406, %v5867, 0
        %5910 = vmatprep.subr.bf16.mxu0 0
        %5911 = vmatpush1.bf16.msra.mxu0 %v5899
        %5912 = vmatprep.subr.bf16.mxu0 0
        %5913 = vmatpush1.bf16.msra.mxu0 %v5900
        %5914 = vmatprep.subr.bf16.mxu0 0
        %5915 = vmatpush1.bf16.msra.mxu0 %v5901
        %5916 = vmatprep.subr.bf16.mxu0 0
        %5917 = vmatpush1.bf16.msra.mxu0 %v5902
        %5918 = vmatprep.subr.bf16.mxu0 0
        %5919 = vmatpush1.bf16.msra.mxu0 0
        %5920 = vmatprep.subr.bf16.mxu0 0
        %5921 = vmatpush1.bf16.msra.mxu0 0
        %5922 = vmatprep.subr.bf16.mxu0 0
        %5923 = vmatpush1.bf16.msra.mxu0 0
        %5924 = vmatprep.subr.bf16.mxu0 0
        %5925 = vmatpush1.bf16.msra.mxu0 0
        %5926 = vmatprep.subr.bf16.mxu0 0
        %5927 = vmatpush1.bf16.msra.mxu0 0
        %5928 = vmatprep.subr.bf16.mxu0 0
        %5929 = vmatpush1.bf16.msra.mxu0 0
        %5930 = vmatprep.subr.bf16.mxu0 0
        %5931 = vmatpush1.bf16.msra.mxu0 0
        %5932 = vmatprep.subr.bf16.mxu0 0
        %5933 = vmatpush1.bf16.msra.mxu0 0
        %5934 = vmatprep.subr.bf16.mxu0 0
        %5935 = vmatpush1.bf16.msra.mxu0 0
        %5936 = vmatprep.subr.bf16.mxu0 0
        %5937 = vmatpush1.bf16.msra.mxu0 0
        %5938 = vmatprep.subr.bf16.mxu0 0
        %5939 = vmatpush1.bf16.msra.mxu0 0
        %5940 = vmatprep.subr.bf16.mxu0 0
        %5941 = vmatpush1.bf16.msra.mxu0 0
        %5942 = vmatprep.mubr.bf16.mxu0 0
        %5943 = vmatmul.mubr.bf16.gmra.mrb[0].mxu0 %v5908
        %v5944 = vpop.f32.mrb[0].mxu0
        %v5945 = vadd.f32 %v5881, %v5944
        %v5946 = vpop.f32.mrb[0].mxu0
        %v5947 = vpop.f32.mrb[0].mxu0
        %v5948 = vadd.f32 %v5881, %v5947
        %v5949 = vpop.f32.mrb[0].mxu0
        %5950 = vdwg.mxu0
        %v5951 = vadd.f32 %v5795, %v5945
        %v5952 = vadd.f32 %v5796, %v5948
        %v5953 = vsel %vm1826, %v5951, 0.0
        %5954 = vadd.xlane.f32.xlu0 %v5953
        %v5955 = vpop.xlane.xlu0 %5954
        %v5956 = vsel %vm1826, %v5952, 0.0
        %5957 = vadd.xlane.f32.xlu0 %v5956
        %v5958 = vpop.xlane.xlu0 %5957
        %v5959 = vmul.f32 %v5955, %v1877
        %v5960 = vmul.f32 %v5958, %v1877
        %v5961 = vsub.f32 %v5951, %v5959
        %v5962 = vsub.f32 %v5952, %v5960
        %v5963 = vmul.f32 %v5961, %v5961
        %v5964 = vmul.f32 %v5962, %v5962
        %v5965 = vsel %vm1826, %v5963, 0.0
        %5966 = vadd.xlane.f32.xlu0 %v5965
        %v5967 = vpop.xlane.xlu0 %5966
        %v5968 = vsel %vm1826, %v5964, 0.0
        %5969 = vadd.xlane.f32.xlu0 %v5968
        %v5970 = vpop.xlane.xlu0 %5969
        %v5971 = vmul.f32 %v5967, %v1877
        %v5972 = vmul.f32 %v5970, %v1877
        %v5973 = vadd.f32 %v5971, 1e-05
        %v5974 = vadd.f32 %v5972, 1e-05
        %v5975 = vrsqrt.pop %v5973
        %v5976 = vrsqrt.pop %v5974
        %v5977 = vmul.f32 %v5961, %v5975
        %v5978 = vmul.f32 %v5962, %v5976
        %v5979 = vld [vmem:[%s57] sm:$0x1]
        %v5981 = vlaneseq
        %v5982 = vshrl.u32 %v5981, 7
        %v5983 = vsub.s32 0, %v5982
        %v5984 = vrot.slane %v5979, %v5983
        %v5986 = vmul.f32 %v5977, %v5984
        %v5987 = vmul.f32 %v5978, %v5984
        %v5988 = vld [vmem:[%s55] sm:$0x1]
        %v5990 = vlaneseq
        %v5991 = vshrl.u32 %v5990, 7
        %v5992 = vsub.s32 0, %v5991
        %v5993 = vrot.slane %v5988, %v5992
        %v5995 = vadd.f32 %v5986, %v5993
        %v5996 = vadd.f32 %v5987, %v5993
        %v5997 = vsel %vm1826, %v5995, 0.0
        %5998 = vadd.xlane.f32.xlu0 %v5997
        %v5999 = vpop.xlane.xlu0 %5998
        %v6000 = vsel %vm1826, %v5996, 0.0
        %6001 = vadd.xlane.f32.xlu0 %v6000
        %v6002 = vpop.xlane.xlu0 %6001
        %v6003 = vmul.f32 %v5999, %v1877
        %v6004 = vmul.f32 %v6002, %v1877
        %v6005 = vsub.f32 %v5995, %v6003
        %v6006 = vsub.f32 %v5996, %v6004
        %v6007 = vmul.f32 %v6005, %v6005
        %v6008 = vmul.f32 %v6006, %v6006
        %v6009 = vsel %vm1826, %v6007, 0.0
        %6010 = vadd.xlane.f32.xlu0 %v6009
        %v6011 = vpop.xlane.xlu0 %6010
        %v6012 = vsel %vm1826, %v6008, 0.0
        %6013 = vadd.xlane.f32.xlu0 %v6012
        %v6014 = vpop.xlane.xlu0 %6013
        %v6015 = vmul.f32 %v6011, %v1877
        %v6016 = vmul.f32 %v6014, %v1877
        %v6017 = vadd.f32 %v6015, 1e-05
        %v6018 = vadd.f32 %v6016, 1e-05
        %v6019 = vrsqrt.pop %v6017
        %v6020 = vrsqrt.pop %v6018
        %v6021 = vmul.f32 %v6005, %v6019
        %v6022 = vmul.f32 %v6006, %v6020
        %v6023 = vld [vmem:[%s69] sm:$0x1]
        %v6025 = vlaneseq
        %v6026 = vshrl.u32 %v6025, 7
        %v6027 = vsub.s32 0, %v6026
        %v6028 = vrot.slane %v6023, %v6027
        %v6030 = vmul.f32 %v6021, %v6028
        %v6031 = vmul.f32 %v6022, %v6028
        %v6032 = vld [vmem:[%s67] sm:$0x1]
        %v6034 = vlaneseq
        %v6035 = vshrl.u32 %v6034, 7
        %v6036 = vsub.s32 0, %v6035
        %v6037 = vrot.slane %v6032, %v6036
        %v6039 = vadd.f32 %v6030, %v6037
        %v6040 = vadd.f32 %v6031, %v6037
        %v6041 = vsel %vm1826, %v6039, 0.0
        %6042 = vadd.xlane.f32.xlu0 %v6041
        %v6043 = vpop.xlane.xlu0 %6042
        %v6044 = vsel %vm1826, %v6040, 0.0
        %6045 = vadd.xlane.f32.xlu0 %v6044
        %v6046 = vpop.xlane.xlu0 %6045
        %v6047 = vmul.f32 %v6043, %v1877
        %v6048 = vmul.f32 %v6046, %v1877
        %v6049 = vsub.f32 %v6039, %v6047
        %v6050 = vsub.f32 %v6040, %v6048
        %v6051 = vmul.f32 %v6049, %v6049
        %v6052 = vmul.f32 %v6050, %v6050
        %v6053 = vsel %vm1826, %v6051, 0.0
        %6054 = vadd.xlane.f32.xlu0 %v6053
        %v6055 = vpop.xlane.xlu0 %6054
        %v6056 = vsel %vm1826, %v6052, 0.0
        %6057 = vadd.xlane.f32.xlu0 %v6056
        %v6058 = vpop.xlane.xlu0 %6057
        %v6059 = vmul.f32 %v6055, %v1877
        %v6060 = vmul.f32 %v6058, %v1877
        %v6061 = vadd.f32 %v6059, 1e-05
        %v6062 = vadd.f32 %v6060, 1e-05
        %v6063 = vrsqrt.pop %v6061
        %v6064 = vrsqrt.pop %v6062
        %v6065 = vmul.f32 %v6049, %v6063
        %v6066 = vmul.f32 %v6050, %v6064
        %v6067 = vld [vmem:[#allocation19] sm:$0x1]
        %v6069 = vlaneseq
        %v6070 = vshrl.u32 %v6069, 7
        %v6071 = vsub.s32 0, %v6070
        %v6072 = vrot.slane %v6067, %v6071
        %v6074 = vmul.f32 %v6065, %v6072
        %v6075 = vmul.f32 %v6066, %v6072
        %v6076 = vld [vmem:[#allocation18] sm:$0x1]
        %v6078 = vlaneseq
        %v6079 = vshrl.u32 %v6078, 7
        %v6080 = vsub.s32 0, %v6079
        %v6081 = vrot.slane %v6076, %v6080
        %v6083 = vadd.f32 %v6074, %v6081
        %v6084 = vadd.f32 %v6075, %v6081
        %v6085 = vmul.f32 %v6083, 0.5
        %v6086 = vmul.f32 %v6084, 0.5
        %v6087 = vmul.f32 %v6083, 0.044715
        %v6088 = vmul.f32 %v6084, 0.044715
        %v6089 = vmul.f32 %v6087, %v6083
        %v6090 = vmul.f32 %v6088, %v6084
        %v6091 = vmul.f32 %v6089, %v6083
        %v6092 = vmul.f32 %v6090, %v6084
        %v6093 = vadd.f32 %v6083, %v6091
        %v6094 = vadd.f32 %v6084, %v6092
        %v6095 = vmul.f32 %v6093, 0.7978846
        %v6096 = vmul.f32 %v6094, 0.7978846
        %v6097 = vtanh.pop %v6095
        %v6098 = vtanh.pop %v6096
        %v6099 = vadd.f32 %v6097, 1.0
        %v6100 = vadd.f32 %v6098, 1.0
        %v6101 = vmul.f32 %v6085, %v6099
        %v6102 = vmul.f32 %v6086, %v6100
        %v6103 = vpack.c.bf16 %v6102, %v6101
        %v6104 = vld [vmem:[%s101] sm:$0xf]
        %v6105 = vld [vmem:[%s101 + $0x4] sm:$0xf]
        %v6106 = vld [vmem:[%s101 + $0x8] sm:$0xf]
        %v6107 = vld [vmem:[%s101 + $0xc] sm:$0xf]
        %v6108 = vld [vmem:[#allocation16] sm:$0x1]
        %v6110 = vlaneseq
        %v6111 = vshrl.u32 %v6110, 7
        %v6112 = vsub.s32 0, %v6111
        %v6113 = vrot.slane %v6108, %v6112
        %v6119 = vunpack.c.l.b16 %v6104
        %v6120 = vunpack.c.l.b16 %v6105
        %v6121 = vunpack.c.l.b16 %v6106
        %v6122 = vunpack.c.l.b16 %v6107
        %v6123 = vpack.c.b16 %v6120, %v6119
        %v6124 = vpack.c.b16 %v6122, %v6121
        %v6128 = vsel %vm1826, %v6103, 0
        %6130 = vmatprep.subr.bf16.mxu0 0
        %6131 = vmatpush1.bf16.msra.mxu0 %v6123
        %6132 = vmatprep.subr.bf16.mxu0 0
        %6133 = vmatpush1.bf16.msra.mxu0 %v6124
        %6134 = vmatprep.subr.bf16.mxu0 0
        %6135 = vmatpush1.bf16.msra.mxu0 0
        %6136 = vmatprep.subr.bf16.mxu0 0
        %6137 = vmatpush1.bf16.msra.mxu0 0
        %6138 = vmatprep.subr.bf16.mxu0 0
        %6139 = vmatpush1.bf16.msra.mxu0 0
        %6140 = vmatprep.subr.bf16.mxu0 0
        %6141 = vmatpush1.bf16.msra.mxu0 0
        %6142 = vmatprep.subr.bf16.mxu0 0
        %6143 = vmatpush1.bf16.msra.mxu0 0
        %6144 = vmatprep.subr.bf16.mxu0 0
        %6145 = vmatpush1.bf16.msra.mxu0 0
        %6146 = vmatprep.subr.bf16.mxu0 0
        %6147 = vmatpush1.bf16.msra.mxu0 0
        %6148 = vmatprep.subr.bf16.mxu0 0
        %6149 = vmatpush1.bf16.msra.mxu0 0
        %6150 = vmatprep.subr.bf16.mxu0 0
        %6151 = vmatpush1.bf16.msra.mxu0 0
        %6152 = vmatprep.subr.bf16.mxu0 0
        %6153 = vmatpush1.bf16.msra.mxu0 0
        %6154 = vmatprep.subr.bf16.mxu0 0
        %6155 = vmatpush1.bf16.msra.mxu0 0
        %6156 = vmatprep.subr.bf16.mxu0 0
        %6157 = vmatpush1.bf16.msra.mxu0 0
        %6158 = vmatprep.subr.bf16.mxu0 0
        %6159 = vmatpush1.bf16.msra.mxu0 0
        %6160 = vmatprep.subr.bf16.mxu0 0
        %6161 = vmatpush1.bf16.msra.mxu0 0
        %6162 = vmatprep.mubr.bf16.mxu0 0
        %6163 = vmatmul.mubr.bf16.gmra.mrb[0].mxu0 %v6128
        %v6164 = vpop.f32.mrb[0].mxu0
        %v6165 = vadd.f32 %v6113, %v6164
        %v6166 = vpop.f32.mrb[0].mxu0
        %v6167 = vpop.f32.mrb[0].mxu0
        %v6168 = vadd.f32 %v6113, %v6167
        %v6169 = vpop.f32.mrb[0].mxu0
        %6170 = vdwg.mxu0
        %6171 = vmax.xlane.f32.xlu0 %v6165
        %v6172 = vpop.xlane.xlu0 %6171
        %6173 = vmax.xlane.f32.xlu0 %v6168
        %v6174 = vpop.xlane.xlu0 %6173
        %v6175 = vsub.f32 %v6165, %v6172
        %v6176 = vsub.f32 %v6168, %v6174
        %v6177 = vmul.f32 %v6175, 1.442695
        %v6178 = vpow.pop %v6177
        %v6179 = vmul.f32 %v6176, 1.442695
        %v6180 = vpow.pop %v6179
        %6181 = vadd.xlane.f32.xlu0 %v6178
        %v6182 = vpop.xlane.xlu0 %6181
        %6183 = vadd.xlane.f32.xlu0 %v6180
        %v6184 = vpop.xlane.xlu0 %6183
        %v6185 = vlog2.pop %v6182
        %v6186 = vmul.f32 %v6185, 0.6931472
        %v6187 = vlog2.pop %v6184
        %v6188 = vmul.f32 %v6187, 0.6931472
        %v6189 = vsub.f32 %v6175, %v6186
        %v6190 = vsub.f32 %v6176, %v6188
        %6191 = vst [vmem:[%s1730] sm:$0xff] %v6189
        %6192 = vst [vmem:[%s1730 + $0x8] sm:$0xff] %v6190
        %s6193 = smul.u32 2, %s125
        %p6194 = scmp.lt.s32.totalorder %s6193, 3
        %s6195 = scalar_select %p6194, %s6193, 3
        %s6196 = smul.addr %s6195, 8
        %s6197 = scalar_lea.vmem %s107, %s6196
        // Predicated region
        $region281: #{forward.1} parent=231 // pred_check
          %p6198 = pneg %p1261
        $region282: #{forward.1} parent=231 // pred_check_branch
          %6200 = sbr.rel (%p6198) target = $region284
        $region283: #{forward.1} parent=231 // pred_region
          %s6201 = smul.u32 2, %s125
        $region284: #{forward.1} parent=231 // pred_fallthru
          _
      $region232: #{forward.1} parent=5 // pred_fallthru
        _
      %p6202 = scmp.le.s32.totalorder 2, %s120
      // Predicated region
      $region285: #{forward.1} parent=5 // pred_check
        %p6203 = pneg %p6202
      $region286: #{forward.1} parent=5 // pred_check_branch
        %6205 = sbr.rel (%p6203) target = $region288
      $region287: #{forward.1} parent=5 // pred_region
        %s6206 = ssub.s32 %s120, 2
        // Predicated region
        $region289: #{forward.1} parent=287 // pred_check
          %p6207 = pneg %p1267
        $region290: #{forward.1} parent=287 // pred_check_branch
          %6209 = sbr.rel (%p6207) target = $region292
        $region291: #{forward.1} parent=287 // pred_region
          %s6210 = smul.u32 2, %s126
          %p6211 = scmp.lt.s32.totalorder %s6210, 3
          %s6212 = scalar_select %p6211, %s6210, 3
          %s6213 = smul.addr %s6212, 8
          %s6214 = scalar_lea.vmem %s107, %s6213
        $region292: #{forward.1} parent=287 // pred_fallthru
          _
      $region288: #{forward.1} parent=5 // pred_fallthru
        _
    $region6: #{forward.1} parent=1 // loop_footer
      %s124 = sadd.s32 1, %s120
    $region7: #{forward.1} parent=1 // loop_footer_branch
      %119 = sbr.rel target = $region3
    $region8: #{forward.1} parent=1 // loop_exit
      _
    %6215 = vsyncpa [#allocation3], 1
    %s6216 = scalar_lea.sflag [#allocation3], 1
    %6217 = vsyncpa %s6216, 1
    %6218 = vsyncpa [#allocation5], 1
    %6219 = vsyncpa [#allocation8], 1
    %6220 = vsyncpa [#allocation11], 1
    %6221 = vsyncpa [#allocation14], 1
    %6222 = vsyncpa [#allocation17], 1
    %6223 = vsyncpa [#allocation20], 1

</llo_original>
